<compile_context>
chip_gen: v6e
topology: v6e:2x2x1
jax: 0.10.0
libtpu: 0.0.40
codegen_flags: <defaults>
</compile_context>

<pallas_src>
import numpy as np
import jax
import jax.numpy as jnp
from jax.experimental import pallas as pl
from jax.experimental.pallas import tpu as pltpu


# ---------------------------------------------------------------------------
# Host-side constant builders (trace time only; shapes are static).
# ---------------------------------------------------------------------------
def _interp_matrix(n):
    """Align-corners bilinear interpolation matrix mapping length n -> 2n."""
    out_n = 2 * n
    if n == 1:
        return np.ones((out_n, n), np.float32)
    i = np.arange(out_n)
    src = i * (n - 1) / (out_n - 1)
    i0 = np.minimum(np.floor(src).astype(np.int64), n - 2)
    frac = (src - i0).astype(np.float32)
    m = np.zeros((out_n, n), np.float32)
    m[i, i0] += 1.0 - frac
    m[i, i0 + 1] += frac
    return m


def _upsample_kron(h, w):
    """(2h*2w, h*w) matrix: the separable 2x upsample on flattened pixels."""
    return jnp.asarray(np.kron(_interp_matrix(h), _interp_matrix(w)), jnp.float32)


def _col_masks(H, W):
    """Column-validity masks for the 3x3 conv taps, flattened-pixel order."""
    j = np.arange(H * W) % W
    ml = (j >= 1).astype(np.float32).reshape(H * W, 1)       # source col j-1 valid
    mr = (j <= W - 2).astype(np.float32).reshape(H * W, 1)   # source col j+1 valid
    return jnp.asarray(ml), jnp.asarray(mr)


# ---------------------------------------------------------------------------
# Fused decoder-level Pallas kernel
# ---------------------------------------------------------------------------
def _make_level_kernel(M, C, W, PAD):
    """One fused decoder level for one batch element.

    Ref shapes (per grid step):
      low_ref  : (m, Clow)      f32   previous level output, flattened pixels
      skip_ref : (M, Cskip)     f32   encoder skip feature, flattened pixels
      up_ref   : (M, m)         f32   kron(Mh, Mw) bilinear 2x upsample matrix
      ml_ref   : (M, 1)         f32   mask for ox = -1 taps (pixel col j >= 1)
      mr_ref   : (M, 1)         f32   mask for ox = +1 taps (pixel col j <= W-2)
      w1t_ref  : (Clow, C)      bf16  1x1 weights, upsampled branch (BN folded)
      w1b_ref  : (Cskip, C)     bf16  1x1 weights, skip branch (BN folded)
      t1_ref   : (1, C)         f32   folded 1x1 bias
      w2_ref   : (9, C, C)      bf16  3x3 weights, tap-major (BN folded)
      t2_ref   : (1, C)         f32   folded 3x3 bias
      o_ref    : (M, C)         f32   level output, flattened pixels
      ypad_ref : (M + 2*PAD, C) f32   scratch: zero-padded 1x1 output
    """
    def kernel(low_ref, skip_ref, up_ref, ml_ref, mr_ref,
               w1t_ref, w1b_ref, t1_ref, w2_ref, t2_ref,
               o_ref, ypad_ref):
        # ---- 1x1 conv + folded BN + ReLU ---------------------------------
        # conv1x1 commutes with the linear upsample: apply the upsampled-branch
        # half of the weight at low resolution, then upsample the small result.
        a = jnp.dot(low_ref[...].astype(jnp.bfloat16), w1t_ref[...],
                    preferred_element_type=jnp.float32)                 # (m, C)
        up = jnp.dot(up_ref[...], a,
                     preferred_element_type=jnp.float32)                # (M, C)
        b = jnp.dot(skip_ref[...].astype(jnp.bfloat16), w1b_ref[...],
                    preferred_element_type=jnp.float32)                 # (M, C)
        y1 = jnp.maximum(up + b + t1_ref[...], 0.0)                     # (M, C)

        # ---- 3x3 conv + folded BN + ReLU ---------------------------------
        # Zero-padded flat copy of y1 so every tap (oy, ox) is a plain
        # contiguous row window at offset oy*W + ox.  Stores are 8-row aligned.
        zpad = jnp.zeros((PAD, C), jnp.float32)
        ypad_ref[0:PAD, :] = zpad
        ypad_ref[PAD + M:PAD + M + PAD, :] = zpad
        ypad_ref[PAD:PAD + M, :] = y1

        ml = ml_ref[...]
        mr = mr_ref[...]
        acc = jnp.zeros((M, C), jnp.float32)
        tap = 0
        for oy in (-1, 0, 1):
            for ox in (-1, 0, 1):
                s = oy * W + ox
                shifted = ypad_ref[PAD + s:PAD + s + M, :]
                if ox == -1:
                    shifted = shifted * ml      # zero wrapped left-border reads
                elif ox == 1:
                    shifted = shifted * mr      # zero wrapped right-border reads
                acc = acc + jnp.dot(shifted.astype(jnp.bfloat16), w2_ref[tap],
                                    preferred_element_type=jnp.float32)
                tap += 1
        o_ref[...] = jnp.maximum(acc + t2_ref[...], 0.0).astype(o_ref.dtype)

    return kernel


def _fused_level(low2d, skip2d, w1t, w1b, t1, w2, t2, h, w):
    """One decoder level: up2x + concat + 1x1 conv/BN/ReLU + 3x3 conv/BN/ReLU."""
    N, m, Clow = low2d.shape
    _, M, Cskip = skip2d.shape
    C = int(w1t.shape[1])
    H, W = 2 * h, 2 * w
    assert m == h * w and M == H * W
    PAD = ((W + 1 + 7) // 8) * 8          # sublane-aligned halo for the 3x3 taps
    U = _upsample_kron(h, w)              # (M, m)
    ml, mr = _col_masks(H, W)             # (M, 1) each

    kernel = _make_level_kernel(M=M, C=C, W=W, PAD=PAD)
    return pl.pallas_call(
        kernel,
        out_shape=jax.ShapeDtypeStruct((N, M, C), jnp.float32),
        grid=(N,),
        in_specs=[
            pl.BlockSpec((None, m, Clow), lambda n: (n, 0, 0)),
            pl.BlockSpec((None, M, Cskip), lambda n: (n, 0, 0)),
            pl.BlockSpec((M, m), lambda n: (0, 0)),
            pl.BlockSpec((M, 1), lambda n: (0, 0)),
            pl.BlockSpec((M, 1), lambda n: (0, 0)),
            pl.BlockSpec((Clow, C), lambda n: (0, 0)),
            pl.BlockSpec((Cskip, C), lambda n: (0, 0)),
            pl.BlockSpec((1, C), lambda n: (0, 0)),
            pl.BlockSpec((9, C, C), lambda n: (0, 0, 0)),
            pl.BlockSpec((1, C), lambda n: (0, 0)),
        ],
        out_specs=pl.BlockSpec((None, M, C), lambda n: (n, 0, 0)),
        scratch_shapes=[pltpu.VMEM((M + 2 * PAD, C), jnp.float32)],
        compiler_params=pltpu.CompilerParams(
            dimension_semantics=("parallel",),
            vmem_limit_bytes=48 * 1024 * 1024),
    )(low2d, skip2d, U, ml, mr, w1t, w1b, t1, w2, t2)


# ---------------------------------------------------------------------------
# Parameters (matches BaseConv init: w ~ N(0, 0.01), b = 0; BatchNorm in eval
# mode with gamma=1, beta=0, mean=0, var=1, eps=1e-5, folded into the weights).
# ---------------------------------------------------------------------------
_LEVEL_SPECS = ((1024, 256), (512, 128), (256, 64))   # (1x1 Cin, level width)


def _fold_bn(cout, conv_bias, eps=1e-5):
    gamma = jnp.ones((cout,), jnp.float32)
    beta = jnp.zeros((cout,), jnp.float32)
    running_mean = jnp.zeros((cout,), jnp.float32)
    running_var = jnp.ones((cout,), jnp.float32)
    s = gamma / jnp.sqrt(running_var + eps)
    t = (conv_bias - running_mean) * s + beta
    return s, t.reshape(1, cout)


def init_params(key):
    """Returns (kernel_params, reference_params).  Kernel weights are BN-folded,
    split for the removed channel-concat, and cast to bf16 (f32 accumulation).
    """
    klevels, rlevels = [], []
    for li, (cin1, cmid) in enumerate(_LEVEL_SPECS):
        k1 = jax.random.fold_in(key, 2 * li)
        k2 = jax.random.fold_in(key, 2 * li + 1)
        w1 = 0.01 * jax.random.normal(k1, (1, 1, cin1, cmid), jnp.float32)
        w2 = 0.01 * jax.random.normal(k2, (3, 3, cmid, cmid), jnp.float32)
        zero_bias = jnp.zeros((cmid,), jnp.float32)
        s1, t1 = _fold_bn(cmid, zero_bias)
        s2, t2 = _fold_bn(cmid, zero_bias)
        w1f = w1 * s1                       # fold BN scale into conv weights
        w2f = w2 * s2
        clow = cin1 // 2                    # upsampled-branch channels come first
        klevels.append(dict(
            w1t=w1f[0, 0, :clow, :].astype(jnp.bfloat16),
            w1b=w1f[0, 0, clow:, :].astype(jnp.bfloat16),
            t1=t1,
            w2=w2f.reshape(9, cmid, cmid).astype(jnp.bfloat16),
            t2=t2,
        ))
        rlevels.append(dict(w1=w1f, t1=t1, w2=w2f, t2=t2))
    return {"levels": klevels}, rlevels


# ---------------------------------------------------------------------------
# BackEnd forward
# ---------------------------------------------------------------------------
@jax.jit
def backend_forward(params, conv1_2, conv2_2, conv3_3, conv4_3, conv5_3):
    del conv1_2                             # accepted but unused (as in PyTorch)
    N, h, w, _ = conv5_3.shape
    low2d = conv5_3.reshape(N, h * w, conv5_3.shape[-1])   # free bitcast reshape
    feats = []
    for lvl, skip in zip(params["levels"], (conv4_3, conv3_3, conv2_2)):
        H, W, Cs = skip.shape[1], skip.shape[2], skip.shape[3]
        skip2d = skip.reshape(N, H * W, Cs)
        out2d = _fused_level(low2d, skip2d, lvl["w1t"], lvl["w1b"], lvl["t1"],
                             lvl["w2"], lvl["t2"], h, w)
        feats.append(out2d.reshape(N, H, W, out2d.shape[-1]))
        low2d = out2d                        # next level consumes the flat form
        h, w = H, W
    x4, x3, x2 = feats
    return (conv2_2, conv3_3, conv4_3, conv5_3, x2, x3, x4)


# ---------------------------------------------------------------------------
# Pure-JAX reference (XLA convs, f32, HIGHEST precision) for a numerics check.
# ---------------------------------------------------------------------------
def reference_forward(ref_levels, conv2_2, conv3_3, conv4_3, conv5_3):
    hp = jax.lax.Precision.HIGHEST
    dn = ("NHWC", "HWIO", "NHWC")
    x = conv5_3
    feats = []
    for p, skip in zip(ref_levels, (conv4_3, conv3_3, conv2_2)):
        h, w = x.shape[1], x.shape[2]
        mh = jnp.asarray(_interp_matrix(h))
        mw = jnp.asarray(_interp_matrix(w))
        up = jnp.einsum("Hh,nhwc->nHwc", mh, x, precision=hp)
        up = jnp.einsum("Ww,nHwc->nHWc", mw, up, precision=hp)
        cat = jnp.concatenate([up, skip], axis=-1)
        y1 = jax.lax.conv_general_dilated(cat, p["w1"], (1, 1), ((0, 0), (0, 0)),
                                          dimension_numbers=dn, precision=hp)
        y1 = jnp.maximum(y1 + p["t1"].reshape(1, 1, 1, -1), 0.0)
        y2 = jax.lax.conv_general_dilated(y1, p["w2"], (1, 1), ((1, 1), (1, 1)),
                                          dimension_numbers=dn, precision=hp)
        y2 = jnp.maximum(y2 + p["t2"].reshape(1, 1, 1, -1), 0.0)
        feats.append(y2)
        x = y2
    return feats   # [x4, x3, x2]


# ---------------------------------------------------------------------------
if __name__ == "__main__":
    key = jax.random.PRNGKey(0)
    pkey, dkey = jax.random.split(key)
    params, ref_params = init_params(pkey)

    N = 2
    ks = jax.random.split(dkey, 5)
    # VGG-style feature pyramid (NHWC): each level halves spatial, doubles C.
    conv1_2 = jax.random.normal(ks[0], (N, 32, 32, 64), jnp.float32)   # unused
    conv2_2 = jax.random.normal(ks[1], (N, 16, 16, 128), jnp.float32)
    conv3_3 = jax.random.normal(ks[2], (N, 8, 8, 256), jnp.float32)
    conv4_3 = jax.random.normal(ks[3], (N, 4, 4, 512), jnp.float32)
    conv5_3 = jax.random.normal(ks[4], (N, 2, 2, 512), jnp.float32)

    outs = backend_forward(params, conv1_2, conv2_2, conv3_3, conv4_3, conv5_3)
    outs = jax.block_until_ready(outs)
    c2, c3, c4, c5, x2, x3, x4 = outs

    assert x4.shape == (N, 4, 4, 256)
    assert x3.shape == (N, 8, 8, 128)
    assert x2.shape == (N, 16, 16, 64)

    # Numerics check against the XLA reference (bf16 weights/activations at the
    # MXU, f32 accumulation -> loose tolerance).
    ref_x4, ref_x3, ref_x2 = reference_forward(
        ref_params, conv2_2, conv3_3, conv4_3, conv5_3)
    np.testing.assert_allclose(np.asarray(x4), np.asarray(ref_x4),
                               rtol=0.1, atol=5e-3)
    np.testing.assert_allclose(np.asarray(x3), np.asarray(ref_x3),
                               rtol=0.1, atol=5e-3)
    np.testing.assert_allclose(np.asarray(x2), np.asarray(ref_x2),
                               rtol=0.1, atol=5e-3)

    print("KERNEL_OK")
</pallas_src>

<mosaic_0001>
module attributes {stable_mosaic.version = 11 : i64} {
  func.func @kernel(%arg0: i32, %arg1: memref<1x4x512xf32, #tpu.memory_space<vmem>>, %arg2: memref<1x16x512xf32, #tpu.memory_space<vmem>>, %arg3: memref<16x4xf32, #tpu.memory_space<vmem>>, %arg4: memref<16x1xf32, #tpu.memory_space<vmem>>, %arg5: memref<16x1xf32, #tpu.memory_space<vmem>>, %arg6: memref<512x256xbf16, #tpu.memory_space<vmem>>, %arg7: memref<512x256xbf16, #tpu.memory_space<vmem>>, %arg8: memref<1x256xf32, #tpu.memory_space<vmem>>, %arg9: memref<9x256x256xbf16, #tpu.memory_space<vmem>>, %arg10: memref<1x256xf32, #tpu.memory_space<vmem>>, %arg11: memref<1x16x256xf32, #tpu.memory_space<vmem>>, %arg12: memref<32x256xf32, #tpu.memory_space<vmem>>) attributes {dimension_semantics = [#tpu.dimension_semantics<parallel>], iteration_bounds = array<i64: 2>, scalar_prefetch = 0 : i64, scratch_operands = 1 : i64, tpu.core_type = #tpu.core_type<tc>, window_params = [{transform_indices = @transform_0, window_bounds = array<i64: 1, 4, 512>}, {transform_indices = @transform_1, window_bounds = array<i64: 1, 16, 512>}, {pipeline_mode = #tpu.pipeline_mode<synchronous>, transform_indices = @transform_2, window_bounds = array<i64: 16, 4>}, {pipeline_mode = #tpu.pipeline_mode<synchronous>, transform_indices = @transform_3, window_bounds = array<i64: 16, 1>}, {pipeline_mode = #tpu.pipeline_mode<synchronous>, transform_indices = @transform_4, window_bounds = array<i64: 16, 1>}, {pipeline_mode = #tpu.pipeline_mode<synchronous>, transform_indices = @transform_5, window_bounds = array<i64: 512, 256>}, {pipeline_mode = #tpu.pipeline_mode<synchronous>, transform_indices = @transform_6, window_bounds = array<i64: 512, 256>}, {pipeline_mode = #tpu.pipeline_mode<synchronous>, transform_indices = @transform_7, window_bounds = array<i64: 1, 256>}, {pipeline_mode = #tpu.pipeline_mode<synchronous>, transform_indices = @transform_8, window_bounds = array<i64: 9, 256, 256>}, {pipeline_mode = #tpu.pipeline_mode<synchronous>, transform_indices = @transform_9, window_bounds = array<i64: 1, 256>}, {transform_indices = @transform_10, window_bounds = array<i64: 1, 16, 256>}]} {
    %c0 = arith.constant 0 : index
    %c0_0 = arith.constant 0 : index
    %c0_1 = arith.constant 0 : index
    %0 = vector.load %arg1[%c0, %c0_0, %c0_1] : memref<1x4x512xf32, #tpu.memory_space<vmem>>, vector<1x4x512xf32>
    %1 = vector.shape_cast %0 : vector<1x4x512xf32> to vector<4x512xf32>
    %2 = arith.truncf %1 : vector<4x512xf32> to vector<4x512xbf16>
    %c0_2 = arith.constant 0 : index
    %c0_3 = arith.constant 0 : index
    %3 = vector.load %arg6[%c0_2, %c0_3] : memref<512x256xbf16, #tpu.memory_space<vmem>>, vector<512x256xbf16>
    %cst = arith.constant dense<0.000000e+00> : vector<4x256xf32>
    %4 = tpu.matmul %2, %3, %cst {dimension_numbers = #tpu.dot_dimension_numbers<[1], [0], [0], [1], [0, 0, 1, 1], [], []>} : vector<4x512xbf16>, vector<512x256xbf16>, vector<4x256xf32> -> vector<4x256xf32>
    %c0_4 = arith.constant 0 : index
    %c0_5 = arith.constant 0 : index
    %5 = vector.load %arg3[%c0_4, %c0_5] : memref<16x4xf32, #tpu.memory_space<vmem>>, vector<16x4xf32>
    %cst_6 = arith.constant dense<0.000000e+00> : vector<16x256xf32>
    %6 = tpu.matmul %5, %4, %cst_6 {dimension_numbers = #tpu.dot_dimension_numbers<[1], [0], [0], [1], [0, 0, 1, 1], [], []>} : vector<16x4xf32>, vector<4x256xf32>, vector<16x256xf32> -> vector<16x256xf32>
    %c0_7 = arith.constant 0 : index
    %c0_8 = arith.constant 0 : index
    %c0_9 = arith.constant 0 : index
    %7 = vector.load %arg2[%c0_7, %c0_8, %c0_9] : memref<1x16x512xf32, #tpu.memory_space<vmem>>, vector<1x16x512xf32>
    %8 = vector.shape_cast %7 : vector<1x16x512xf32> to vector<16x512xf32>
    %9 = arith.truncf %8 : vector<16x512xf32> to vector<16x512xbf16>
    %c0_10 = arith.constant 0 : index
    %c0_11 = arith.constant 0 : index
    %10 = vector.load %arg7[%c0_10, %c0_11] : memref<512x256xbf16, #tpu.memory_space<vmem>>, vector<512x256xbf16>
    %cst_12 = arith.constant dense<0.000000e+00> : vector<16x256xf32>
    %11 = tpu.matmul %9, %10, %cst_12 {dimension_numbers = #tpu.dot_dimension_numbers<[1], [0], [0], [1], [0, 0, 1, 1], [], []>} : vector<16x512xbf16>, vector<512x256xbf16>, vector<16x256xf32> -> vector<16x256xf32>
    %12 = arith.addf %6, %11 : vector<16x256xf32>
    %c0_13 = arith.constant 0 : index
    %c0_14 = arith.constant 0 : index
    %13 = vector.load %arg8[%c0_13, %c0_14] : memref<1x256xf32, #tpu.memory_space<vmem>>, vector<1x256xf32>
    %14 = vector.broadcast %13 : vector<1x256xf32> to vector<16x256xf32>
    %15 = arith.addf %12, %14 : vector<16x256xf32>
    %cst_15 = arith.constant 0.000000e+00 : f32
    %16 = vector.broadcast %cst_15 : f32 to vector<16x256xf32>
    %17 = arith.maximumf %15, %16 : vector<16x256xf32>
    %cst_16 = arith.constant 0.000000e+00 : f32
    %18 = vector.broadcast %cst_16 : f32 to vector<8x256xf32>
    %c0_17 = arith.constant 0 : index
    %c0_18 = arith.constant 0 : index
    %19 = vector.load %arg12[%c0_17, %c0_18] : memref<32x256xf32, #tpu.memory_space<vmem>>, vector<8x256xf32>
    tpu.vector_store %arg12[%c0_17, %c0_18], %18 {strides = array<i32>} : memref<32x256xf32, #tpu.memory_space<vmem>>, vector<8x256xf32>,
    %c24 = arith.constant 24 : index
    %c0_19 = arith.constant 0 : index
    %20 = vector.load %arg12[%c24, %c0_19] : memref<32x256xf32, #tpu.memory_space<vmem>>, vector<8x256xf32>
    tpu.vector_store %arg12[%c24, %c0_19], %18 {strides = array<i32>} : memref<32x256xf32, #tpu.memory_space<vmem>>, vector<8x256xf32>,
    %c8 = arith.constant 8 : index
    %c0_20 = arith.constant 0 : index
    %21 = vector.load %arg12[%c8, %c0_20] : memref<32x256xf32, #tpu.memory_space<vmem>>, vector<16x256xf32>
    tpu.vector_store %arg12[%c8, %c0_20], %17 {strides = array<i32>} : memref<32x256xf32, #tpu.memory_space<vmem>>, vector<16x256xf32>,
    %c0_21 = arith.constant 0 : index
    %c0_22 = arith.constant 0 : index
    %22 = vector.load %arg4[%c0_21, %c0_22] : memref<16x1xf32, #tpu.memory_space<vmem>>, vector<16x1xf32>
    %c0_23 = arith.constant 0 : index
    %c0_24 = arith.constant 0 : index
    %23 = vector.load %arg5[%c0_23, %c0_24] : memref<16x1xf32, #tpu.memory_space<vmem>>, vector<16x1xf32>
    %cst_25 = arith.constant 0.000000e+00 : f32
    %24 = vector.broadcast %cst_25 : f32 to vector<16x256xf32>
    %c3 = arith.constant 3 : index
    %c0_26 = arith.constant 0 : index
    %25 = vector.load %arg12[%c3, %c0_26] : memref<32x256xf32, #tpu.memory_space<vmem>>, vector<16x256xf32>
    %26 = vector.broadcast %22 : vector<16x1xf32> to vector<16x256xf32>
    %27 = arith.mulf %25, %26 : vector<16x256xf32>
    %28 = arith.truncf %27 : vector<16x256xf32> to vector<16x256xbf16>
    %c0_27 = arith.constant 0 : index
    %c0_28 = arith.constant 0 : index
    %c0_29 = arith.constant 0 : index
    %29 = vector.load %arg9[%c0_27, %c0_28, %c0_29] : memref<9x256x256xbf16, #tpu.memory_space<vmem>>, vector<1x256x256xbf16>
    %30 = vector.shape_cast %29 : vector<1x256x256xbf16> to vector<256x256xbf16>
    %cst_30 = arith.constant dense<0.000000e+00> : vector<16x256xf32>
    %31 = tpu.matmul %28, %30, %cst_30 {dimension_numbers = #tpu.dot_dimension_numbers<[1], [0], [0], [1], [0, 0, 1, 1], [], []>} : vector<16x256xbf16>, vector<256x256xbf16>, vector<16x256xf32> -> vector<16x256xf32>
    %32 = arith.addf %24, %31 : vector<16x256xf32>
    %c4 = arith.constant 4 : index
    %c0_31 = arith.constant 0 : index
    %33 = vector.load %arg12[%c4, %c0_31] : memref<32x256xf32, #tpu.memory_space<vmem>>, vector<16x256xf32>
    %34 = arith.truncf %33 : vector<16x256xf32> to vector<16x256xbf16>
    %c1 = arith.constant 1 : index
    %c0_32 = arith.constant 0 : index
    %c0_33 = arith.constant 0 : index
    %35 = vector.load %arg9[%c1, %c0_32, %c0_33] : memref<9x256x256xbf16, #tpu.memory_space<vmem>>, vector<1x256x256xbf16>
    %36 = vector.shape_cast %35 : vector<1x256x256xbf16> to vector<256x256xbf16>
    %cst_34 = arith.constant dense<0.000000e+00> : vector<16x256xf32>
    %37 = tpu.matmul %34, %36, %cst_34 {dimension_numbers = #tpu.dot_dimension_numbers<[1], [0], [0], [1], [0, 0, 1, 1], [], []>} : vector<16x256xbf16>, vector<256x256xbf16>, vector<16x256xf32> -> vector<16x256xf32>
    %38 = arith.addf %32, %37 : vector<16x256xf32>
    %c5 = arith.constant 5 : index
    %c0_35 = arith.constant 0 : index
    %39 = vector.load %arg12[%c5, %c0_35] : memref<32x256xf32, #tpu.memory_space<vmem>>, vector<16x256xf32>
    %40 = vector.broadcast %23 : vector<16x1xf32> to vector<16x256xf32>
    %41 = arith.mulf %39, %40 : vector<16x256xf32>
    %42 = arith.truncf %41 : vector<16x256xf32> to vector<16x256xbf16>
    %c2 = arith.constant 2 : index
    %c0_36 = arith.constant 0 : index
    %c0_37 = arith.constant 0 : index
    %43 = vector.load %arg9[%c2, %c0_36, %c0_37] : memref<9x256x256xbf16, #tpu.memory_space<vmem>>, vector<1x256x256xbf16>
    %44 = vector.shape_cast %43 : vector<1x256x256xbf16> to vector<256x256xbf16>
    %cst_38 = arith.constant dense<0.000000e+00> : vector<16x256xf32>
    %45 = tpu.matmul %42, %44, %cst_38 {dimension_numbers = #tpu.dot_dimension_numbers<[1], [0], [0], [1], [0, 0, 1, 1], [], []>} : vector<16x256xbf16>, vector<256x256xbf16>, vector<16x256xf32> -> vector<16x256xf32>
    %46 = arith.addf %38, %45 : vector<16x256xf32>
    %c7 = arith.constant 7 : index
    %c0_39 = arith.constant 0 : index
    %47 = vector.load %arg12[%c7, %c0_39] : memref<32x256xf32, #tpu.memory_space<vmem>>, vector<16x256xf32>
    %48 = vector.broadcast %22 : vector<16x1xf32> to vector<16x256xf32>
    %49 = arith.mulf %47, %48 : vector<16x256xf32>
    %50 = arith.truncf %49 : vector<16x256xf32> to vector<16x256xbf16>
    %c3_40 = arith.constant 3 : index
    %c0_41 = arith.constant 0 : index
    %c0_42 = arith.constant 0 : index
    %51 = vector.load %arg9[%c3_40, %c0_41, %c0_42] : memref<9x256x256xbf16, #tpu.memory_space<vmem>>, vector<1x256x256xbf16>
    %52 = vector.shape_cast %51 : vector<1x256x256xbf16> to vector<256x256xbf16>
    %cst_43 = arith.constant dense<0.000000e+00> : vector<16x256xf32>
    %53 = tpu.matmul %50, %52, %cst_43 {dimension_numbers = #tpu.dot_dimension_numbers<[1], [0], [0], [1], [0, 0, 1, 1], [], []>} : vector<16x256xbf16>, vector<256x256xbf16>, vector<16x256xf32> -> vector<16x256xf32>
    %54 = arith.addf %46, %53 : vector<16x256xf32>
    %c8_44 = arith.constant 8 : index
    %c0_45 = arith.constant 0 : index
    %55 = vector.load %arg12[%c8_44, %c0_45] : memref<32x256xf32, #tpu.memory_space<vmem>>, vector<16x256xf32>
    %56 = arith.truncf %55 : vector<16x256xf32> to vector<16x256xbf16>
    %c4_46 = arith.constant 4 : index
    %c0_47 = arith.constant 0 : index
    %c0_48 = arith.constant 0 : index
    %57 = vector.load %arg9[%c4_46, %c0_47, %c0_48] : memref<9x256x256xbf16, #tpu.memory_space<vmem>>, vector<1x256x256xbf16>
    %58 = vector.shape_cast %57 : vector<1x256x256xbf16> to vector<256x256xbf16>
    %cst_49 = arith.constant dense<0.000000e+00> : vector<16x256xf32>
    %59 = tpu.matmul %56, %58, %cst_49 {dimension_numbers = #tpu.dot_dimension_numbers<[1], [0], [0], [1], [0, 0, 1, 1], [], []>} : vector<16x256xbf16>, vector<256x256xbf16>, vector<16x256xf32> -> vector<16x256xf32>
    %60 = arith.addf %54, %59 : vector<16x256xf32>
    %c9 = arith.constant 9 : index
    %c0_50 = arith.constant 0 : index
    %61 = vector.load %arg12[%c9, %c0_50] : memref<32x256xf32, #tpu.memory_space<vmem>>, vector<16x256xf32>
    %62 = vector.broadcast %23 : vector<16x1xf32> to vector<16x256xf32>
    %63 = arith.mulf %61, %62 : vector<16x256xf32>
    %64 = arith.truncf %63 : vector<16x256xf32> to vector<16x256xbf16>
    %c5_51 = arith.constant 5 : index
    %c0_52 = arith.constant 0 : index
    %c0_53 = arith.constant 0 : index
    %65 = vector.load %arg9[%c5_51, %c0_52, %c0_53] : memref<9x256x256xbf16, #tpu.memory_space<vmem>>, vector<1x256x256xbf16>
    %66 = vector.shape_cast %65 : vector<1x256x256xbf16> to vector<256x256xbf16>
    %cst_54 = arith.constant dense<0.000000e+00> : vector<16x256xf32>
    %67 = tpu.matmul %64, %66, %cst_54 {dimension_numbers = #tpu.dot_dimension_numbers<[1], [0], [0], [1], [0, 0, 1, 1], [], []>} : vector<16x256xbf16>, vector<256x256xbf16>, vector<16x256xf32> -> vector<16x256xf32>
    %68 = arith.addf %60, %67 : vector<16x256xf32>
    %c11 = arith.constant 11 : index
    %c0_55 = arith.constant 0 : index
    %69 = vector.load %arg12[%c11, %c0_55] : memref<32x256xf32, #tpu.memory_space<vmem>>, vector<16x256xf32>
    %70 = vector.broadcast %22 : vector<16x1xf32> to vector<16x256xf32>
    %71 = arith.mulf %69, %70 : vector<16x256xf32>
    %72 = arith.truncf %71 : vector<16x256xf32> to vector<16x256xbf16>
    %c6 = arith.constant 6 : index
    %c0_56 = arith.constant 0 : index
    %c0_57 = arith.constant 0 : index
    %73 = vector.load %arg9[%c6, %c0_56, %c0_57] : memref<9x256x256xbf16, #tpu.memory_space<vmem>>, vector<1x256x256xbf16>
    %74 = vector.shape_cast %73 : vector<1x256x256xbf16> to vector<256x256xbf16>
    %cst_58 = arith.constant dense<0.000000e+00> : vector<16x256xf32>
    %75 = tpu.matmul %72, %74, %cst_58 {dimension_numbers = #tpu.dot_dimension_numbers<[1], [0], [0], [1], [0, 0, 1, 1], [], []>} : vector<16x256xbf16>, vector<256x256xbf16>, vector<16x256xf32> -> vector<16x256xf32>
    %76 = arith.addf %68, %75 : vector<16x256xf32>
    %c12 = arith.constant 12 : index
    %c0_59 = arith.constant 0 : index
    %77 = vector.load %arg12[%c12, %c0_59] : memref<32x256xf32, #tpu.memory_space<vmem>>, vector<16x256xf32>
    %78 = arith.truncf %77 : vector<16x256xf32> to vector<16x256xbf16>
    %c7_60 = arith.constant 7 : index
    %c0_61 = arith.constant 0 : index
    %c0_62 = arith.constant 0 : index
    %79 = vector.load %arg9[%c7_60, %c0_61, %c0_62] : memref<9x256x256xbf16, #tpu.memory_space<vmem>>, vector<1x256x256xbf16>
    %80 = vector.shape_cast %79 : vector<1x256x256xbf16> to vector<256x256xbf16>
    %cst_63 = arith.constant dense<0.000000e+00> : vector<16x256xf32>
    %81 = tpu.matmul %78, %80, %cst_63 {dimension_numbers = #tpu.dot_dimension_numbers<[1], [0], [0], [1], [0, 0, 1, 1], [], []>} : vector<16x256xbf16>, vector<256x256xbf16>, vector<16x256xf32> -> vector<16x256xf32>
    %82 = arith.addf %76, %81 : vector<16x256xf32>
    %c13 = arith.constant 13 : index
    %c0_64 = arith.constant 0 : index
    %83 = vector.load %arg12[%c13, %c0_64] : memref<32x256xf32, #tpu.memory_space<vmem>>, vector<16x256xf32>
    %84 = vector.broadcast %23 : vector<16x1xf32> to vector<16x256xf32>
    %85 = arith.mulf %83, %84 : vector<16x256xf32>
    %86 = arith.truncf %85 : vector<16x256xf32> to vector<16x256xbf16>
    %c8_65 = arith.constant 8 : index
    %c0_66 = arith.constant 0 : index
    %c0_67 = arith.constant 0 : index
    %87 = vector.load %arg9[%c8_65, %c0_66, %c0_67] : memref<9x256x256xbf16, #tpu.memory_space<vmem>>, vector<1x256x256xbf16>
    %88 = vector.shape_cast %87 : vector<1x256x256xbf16> to vector<256x256xbf16>
    %cst_68 = arith.constant dense<0.000000e+00> : vector<16x256xf32>
    %89 = tpu.matmul %86, %88, %cst_68 {dimension_numbers = #tpu.dot_dimension_numbers<[1], [0], [0], [1], [0, 0, 1, 1], [], []>} : vector<16x256xbf16>, vector<256x256xbf16>, vector<16x256xf32> -> vector<16x256xf32>
    %90 = arith.addf %82, %89 : vector<16x256xf32>
    %c0_69 = arith.constant 0 : index
    %c0_70 = arith.constant 0 : index
    %91 = vector.load %arg10[%c0_69, %c0_70] : memref<1x256xf32, #tpu.memory_space<vmem>>, vector<1x256xf32>
    %92 = vector.broadcast %91 : vector<1x256xf32> to vector<16x256xf32>
    %93 = arith.addf %90, %92 : vector<16x256xf32>
    %cst_71 = arith.constant 0.000000e+00 : f32
    %94 = vector.broadcast %cst_71 : f32 to vector<16x256xf32>
    %95 = arith.maximumf %93, %94 : vector<16x256xf32>
    %c0_72 = arith.constant 0 : index
    %c0_73 = arith.constant 0 : index
    %c0_74 = arith.constant 0 : index
    %96 = vector.load %arg11[%c0_72, %c0_73, %c0_74] : memref<1x16x256xf32, #tpu.memory_space<vmem>>, vector<1x16x256xf32>
    %97 = vector.shape_cast %96 : vector<1x16x256xf32> to vector<16x256xf32>
    %98 = vector.shape_cast %95 : vector<16x256xf32> to vector<1x16x256xf32>
    tpu.vector_store %arg11[%c0_72, %c0_73, %c0_74], %98 {strides = array<i32>} : memref<1x16x256xf32, #tpu.memory_space<vmem>>, vector<1x16x256xf32>,
    return
  }
  func.func @transform_0(%arg0: i32) -> (i32, i32, i32) {
    %c0_i32 = arith.constant 0 : i32
    %c0_i32_0 = arith.constant 0 : i32
    %c0_i32_1 = arith.constant 0 : i32
    return %arg0, %c0_i32, %c0_i32_0 : i32, i32, i32
  }
  func.func @transform_1(%arg0: i32) -> (i32, i32, i32) {
    %c0_i32 = arith.constant 0 : i32
    %c0_i32_0 = arith.constant 0 : i32
    %c0_i32_1 = arith.constant 0 : i32
    return %arg0, %c0_i32, %c0_i32_0 : i32, i32, i32
  }
  func.func @transform_2(%arg0: i32) -> (i32, i32) {
    %c0_i32 = arith.constant 0 : i32
    %c0_i32_0 = arith.constant 0 : i32
    %c0_i32_1 = arith.constant 0 : i32
    return %c0_i32, %c0_i32_0 : i32, i32
  }
  func.func @transform_3(%arg0: i32) -> (i32, i32) {
    %c0_i32 = arith.constant 0 : i32
    %c0_i32_0 = arith.constant 0 : i32
    %c0_i32_1 = arith.constant 0 : i32
    return %c0_i32, %c0_i32_0 : i32, i32
  }
  func.func @transform_4(%arg0: i32) -> (i32, i32) {
    %c0_i32 = arith.constant 0 : i32
    %c0_i32_0 = arith.constant 0 : i32
    %c0_i32_1 = arith.constant 0 : i32
    return %c0_i32, %c0_i32_0 : i32, i32
  }
  func.func @transform_5(%arg0: i32) -> (i32, i32) {
    %c0_i32 = arith.constant 0 : i32
    %c0_i32_0 = arith.constant 0 : i32
    %c0_i32_1 = arith.constant 0 : i32
    return %c0_i32, %c0_i32_0 : i32, i32
  }
  func.func @transform_6(%arg0: i32) -> (i32, i32) {
    %c0_i32 = arith.constant 0 : i32
    %c0_i32_0 = arith.constant 0 : i32
    %c0_i32_1 = arith.constant 0 : i32
    return %c0_i32, %c0_i32_0 : i32, i32
  }
  func.func @transform_7(%arg0: i32) -> (i32, i32) {
    %c0_i32 = arith.constant 0 : i32
    %c0_i32_0 = arith.constant 0 : i32
    %c0_i32_1 = arith.constant 0 : i32
    return %c0_i32, %c0_i32_0 : i32, i32
  }
  func.func @transform_8(%arg0: i32) -> (i32, i32, i32) {
    %c0_i32 = arith.constant 0 : i32
    %c0_i32_0 = arith.constant 0 : i32
    %c0_i32_1 = arith.constant 0 : i32
    %c0_i32_2 = arith.constant 0 : i32
    return %c0_i32, %c0_i32_0, %c0_i32_1 : i32, i32, i32
  }
  func.func @transform_9(%arg0: i32) -> (i32, i32) {
    %c0_i32 = arith.constant 0 : i32
    %c0_i32_0 = arith.constant 0 : i32
    %c0_i32_1 = arith.constant 0 : i32
    return %c0_i32, %c0_i32_0 : i32, i32
  }
  func.func @transform_10(%arg0: i32) -> (i32, i32, i32) {
    %c0_i32 = arith.constant 0 : i32
    %c0_i32_0 = arith.constant 0 : i32
    %c0_i32_1 = arith.constant 0 : i32
    return %arg0, %c0_i32, %c0_i32_0 : i32, i32, i32
  }
}

module attributes {stable_mosaic.version = 11 : i64} {
  func.func @kernel(%arg0: i32, %arg1: memref<1x64x128xf32, #tpu.memory_space<vmem>>, %arg2: memref<1x256x128xf32, #tpu.memory_space<vmem>>, %arg3: memref<256x64xf32, #tpu.memory_space<vmem>>, %arg4: memref<256x1xf32, #tpu.memory_space<vmem>>, %arg5: memref<256x1xf32, #tpu.memory_space<vmem>>, %arg6: memref<128x64xbf16, #tpu.memory_space<vmem>>, %arg7: memref<128x64xbf16, #tpu.memory_space<vmem>>, %arg8: memref<1x64xf32, #tpu.memory_space<vmem>>, %arg9: memref<9x64x64xbf16, #tpu.memory_space<vmem>>, %arg10: memref<1x64xf32, #tpu.memory_space<vmem>>, %arg11: memref<1x256x64xf32, #tpu.memory_space<vmem>>, %arg12: memref<304x64xf32, #tpu.memory_space<vmem>>) attributes {dimension_semantics = [#tpu.dimension_semantics<parallel>], iteration_bounds = array<i64: 2>, scalar_prefetch = 0 : i64, scratch_operands = 1 : i64, tpu.core_type = #tpu.core_type<tc>, window_params = [{transform_indices = @transform_0, window_bounds = array<i64: 1, 64, 128>}, {transform_indices = @transform_1, window_bounds = array<i64: 1, 256, 128>}, {pipeline_mode = #tpu.pipeline_mode<synchronous>, transform_indices = @transform_2, window_bounds = array<i64: 256, 64>}, {pipeline_mode = #tpu.pipeline_mode<synchronous>, transform_indices = @transform_3, window_bounds = array<i64: 256, 1>}, {pipeline_mode = #tpu.pipeline_mode<synchronous>, transform_indices = @transform_4, window_bounds = array<i64: 256, 1>}, {pipeline_mode = #tpu.pipeline_mode<synchronous>, transform_indices = @transform_5, window_bounds = array<i64: 128, 64>}, {pipeline_mode = #tpu.pipeline_mode<synchronous>, transform_indices = @transform_6, window_bounds = array<i64: 128, 64>}, {pipeline_mode = #tpu.pipeline_mode<synchronous>, transform_indices = @transform_7, window_bounds = array<i64: 1, 64>}, {pipeline_mode = #tpu.pipeline_mode<synchronous>, transform_indices = @transform_8, window_bounds = array<i64: 9, 64, 64>}, {pipeline_mode = #tpu.pipeline_mode<synchronous>, transform_indices = @transform_9, window_bounds = array<i64: 1, 64>}, {transform_indices = @transform_10, window_bounds = array<i64: 1, 256, 64>}]} {
    %c0 = arith.constant 0 : index
    %c0_0 = arith.constant 0 : index
    %c0_1 = arith.constant 0 : index
    %0 = vector.load %arg1[%c0, %c0_0, %c0_1] : memref<1x64x128xf32, #tpu.memory_space<vmem>>, vector<1x64x128xf32>
    %1 = vector.shape_cast %0 : vector<1x64x128xf32> to vector<64x128xf32>
    %2 = arith.truncf %1 : vector<64x128xf32> to vector<64x128xbf16>
    %c0_2 = arith.constant 0 : index
    %c0_3 = arith.constant 0 : index
    %3 = vector.load %arg6[%c0_2, %c0_3] : memref<128x64xbf16, #tpu.memory_space<vmem>>, vector<128x64xbf16>
    %cst = arith.constant dense<0.000000e+00> : vector<64x64xf32>
    %4 = tpu.matmul %2, %3, %cst {dimension_numbers = #tpu.dot_dimension_numbers<[1], [0], [0], [1], [0, 0, 1, 1], [], []>} : vector<64x128xbf16>, vector<128x64xbf16>, vector<64x64xf32> -> vector<64x64xf32>
    %c0_4 = arith.constant 0 : index
    %c0_5 = arith.constant 0 : index
    %5 = vector.load %arg3[%c0_4, %c0_5] : memref<256x64xf32, #tpu.memory_space<vmem>>, vector<256x64xf32>
    %cst_6 = arith.constant dense<0.000000e+00> : vector<256x64xf32>
    %6 = tpu.matmul %5, %4, %cst_6 {dimension_numbers = #tpu.dot_dimension_numbers<[1], [0], [0], [1], [0, 0, 1, 1], [], []>} : vector<256x64xf32>, vector<64x64xf32>, vector<256x64xf32> -> vector<256x64xf32>
    %c0_7 = arith.constant 0 : index
    %c0_8 = arith.constant 0 : index
    %c0_9 = arith.constant 0 : index
    %7 = vector.load %arg2[%c0_7, %c0_8, %c0_9] : memref<1x256x128xf32, #tpu.memory_space<vmem>>, vector<1x256x128xf32>
    %8 = vector.shape_cast %7 : vector<1x256x128xf32> to vector<256x128xf32>
    %9 = arith.truncf %8 : vector<256x128xf32> to vector<256x128xbf16>
    %c0_10 = arith.constant 0 : index
    %c0_11 = arith.constant 0 : index
    %10 = vector.load %arg7[%c0_10, %c0_11] : memref<128x64xbf16, #tpu.memory_space<vmem>>, vector<128x64xbf16>
    %cst_12 = arith.constant dense<0.000000e+00> : vector<256x64xf32>
    %11 = tpu.matmul %9, %10, %cst_12 {dimension_numbers = #tpu.dot_dimension_numbers<[1], [0], [0], [1], [0, 0, 1, 1], [], []>} : vector<256x128xbf16>, vector<128x64xbf16>, vector<256x64xf32> -> vector<256x64xf32>
    %12 = arith.addf %6, %11 : vector<256x64xf32>
    %c0_13 = arith.constant 0 : index
    %c0_14 = arith.constant 0 : index
    %13 = vector.load %arg8[%c0_13, %c0_14] : memref<1x64xf32, #tpu.memory_space<vmem>>, vector<1x64xf32>
    %14 = vector.broadcast %13 : vector<1x64xf32> to vector<256x64xf32>
    %15 = arith.addf %12, %14 : vector<256x64xf32>
    %cst_15 = arith.constant 0.000000e+00 : f32
    %16 = vector.broadcast %cst_15 : f32 to vector<256x64xf32>
    %17 = arith.maximumf %15, %16 : vector<256x64xf32>
    %cst_16 = arith.constant 0.000000e+00 : f32
    %18 = vector.broadcast %cst_16 : f32 to vector<24x64xf32>
    %c0_17 = arith.constant 0 : index
    %c0_18 = arith.constant 0 : index
    %19 = vector.load %arg12[%c0_17, %c0_18] : memref<304x64xf32, #tpu.memory_space<vmem>>, vector<24x64xf32>
    tpu.vector_store %arg12[%c0_17, %c0_18], %18 {strides = array<i32>} : memref<304x64xf32, #tpu.memory_space<vmem>>, vector<24x64xf32>,
    %c280 = arith.constant 280 : index
    %c0_19 = arith.constant 0 : index
    %20 = vector.load %arg12[%c280, %c0_19] : memref<304x64xf32, #tpu.memory_space<vmem>>, vector<24x64xf32>
    tpu.vector_store %arg12[%c280, %c0_19], %18 {strides = array<i32>} : memref<304x64xf32, #tpu.memory_space<vmem>>, vector<24x64xf32>,
    %c24 = arith.constant 24 : index
    %c0_20 = arith.constant 0 : index
    %21 = vector.load %arg12[%c24, %c0_20] : memref<304x64xf32, #tpu.memory_space<vmem>>, vector<256x64xf32>
    tpu.vector_store %arg12[%c24, %c0_20], %17 {strides = array<i32>} : memref<304x64xf32, #tpu.memory_space<vmem>>, vector<256x64xf32>,
    %c0_21 = arith.constant 0 : index
    %c0_22 = arith.constant 0 : index
    %22 = vector.load %arg4[%c0_21, %c0_22] : memref<256x1xf32, #tpu.memory_space<vmem>>, vector<256x1xf32>
    %c0_23 = arith.constant 0 : index
    %c0_24 = arith.constant 0 : index
    %23 = vector.load %arg5[%c0_23, %c0_24] : memref<256x1xf32, #tpu.memory_space<vmem>>, vector<256x1xf32>
    %cst_25 = arith.constant 0.000000e+00 : f32
    %24 = vector.broadcast %cst_25 : f32 to vector<256x64xf32>
    %c7 = arith.constant 7 : index
    %c0_26 = arith.constant 0 : index
    %25 = vector.load %arg12[%c7, %c0_26] : memref<304x64xf32, #tpu.memory_space<vmem>>, vector<256x64xf32>
    %26 = vector.broadcast %22 : vector<256x1xf32> to vector<256x64xf32>
    %27 = arith.mulf %25, %26 : vector<256x64xf32>
    %28 = arith.truncf %27 : vector<256x64xf32> to vector<256x64xbf16>
    %c0_27 = arith.constant 0 : index
    %c0_28 = arith.constant 0 : index
    %c0_29 = arith.constant 0 : index
    %29 = vector.load %arg9[%c0_27, %c0_28, %c0_29] : memref<9x64x64xbf16, #tpu.memory_space<vmem>>, vector<1x64x64xbf16>
    %30 = vector.shape_cast %29 : vector<1x64x64xbf16> to vector<64x64xbf16>
    %cst_30 = arith.constant dense<0.000000e+00> : vector<256x64xf32>
    %31 = tpu.matmul %28, %30, %cst_30 {dimension_numbers = #tpu.dot_dimension_numbers<[1], [0], [0], [1], [0, 0, 1, 1], [], []>} : vector<256x64xbf16>, vector<64x64xbf16>, vector<256x64xf32> -> vector<256x64xf32>
    %32 = arith.addf %24, %31 : vector<256x64xf32>
    %c8 = arith.constant 8 : index
    %c0_31 = arith.constant 0 : index
    %33 = vector.load %arg12[%c8, %c0_31] : memref<304x64xf32, #tpu.memory_space<vmem>>, vector<256x64xf32>
    %34 = arith.truncf %33 : vector<256x64xf32> to vector<256x64xbf16>
    %c1 = arith.constant 1 : index
    %c0_32 = arith.constant 0 : index
    %c0_33 = arith.constant 0 : index
    %35 = vector.load %arg9[%c1, %c0_32, %c0_33] : memref<9x64x64xbf16, #tpu.memory_space<vmem>>, vector<1x64x64xbf16>
    %36 = vector.shape_cast %35 : vector<1x64x64xbf16> to vector<64x64xbf16>
    %cst_34 = arith.constant dense<0.000000e+00> : vector<256x64xf32>
    %37 = tpu.matmul %34, %36, %cst_34 {dimension_numbers = #tpu.dot_dimension_numbers<[1], [0], [0], [1], [0, 0, 1, 1], [], []>} : vector<256x64xbf16>, vector<64x64xbf16>, vector<256x64xf32> -> vector<256x64xf32>
    %38 = arith.addf %32, %37 : vector<256x64xf32>
    %c9 = arith.constant 9 : index
    %c0_35 = arith.constant 0 : index
    %39 = vector.load %arg12[%c9, %c0_35] : memref<304x64xf32, #tpu.memory_space<vmem>>, vector<256x64xf32>
    %40 = vector.broadcast %23 : vector<256x1xf32> to vector<256x64xf32>
    %41 = arith.mulf %39, %40 : vector<256x64xf32>
    %42 = arith.truncf %41 : vector<256x64xf32> to vector<256x64xbf16>
    %c2 = arith.constant 2 : index
    %c0_36 = arith.constant 0 : index
    %c0_37 = arith.constant 0 : index
    %43 = vector.load %arg9[%c2, %c0_36, %c0_37] : memref<9x64x64xbf16, #tpu.memory_space<vmem>>, vector<1x64x64xbf16>
    %44 = vector.shape_cast %43 : vector<1x64x64xbf16> to vector<64x64xbf16>
    %cst_38 = arith.constant dense<0.000000e+00> : vector<256x64xf32>
    %45 = tpu.matmul %42, %44, %cst_38 {dimension_numbers = #tpu.dot_dimension_numbers<[1], [0], [0], [1], [0, 0, 1, 1], [], []>} : vector<256x64xbf16>, vector<64x64xbf16>, vector<256x64xf32> -> vector<256x64xf32>
    %46 = arith.addf %38, %45 : vector<256x64xf32>
    %c23 = arith.constant 23 : index
    %c0_39 = arith.constant 0 : index
    %47 = vector.load %arg12[%c23, %c0_39] : memref<304x64xf32, #tpu.memory_space<vmem>>, vector<256x64xf32>
    %48 = vector.broadcast %22 : vector<256x1xf32> to vector<256x64xf32>
    %49 = arith.mulf %47, %48 : vector<256x64xf32>
    %50 = arith.truncf %49 : vector<256x64xf32> to vector<256x64xbf16>
    %c3 = arith.constant 3 : index
    %c0_40 = arith.constant 0 : index
    %c0_41 = arith.constant 0 : index
    %51 = vector.load %arg9[%c3, %c0_40, %c0_41] : memref<9x64x64xbf16, #tpu.memory_space<vmem>>, vector<1x64x64xbf16>
    %52 = vector.shape_cast %51 : vector<1x64x64xbf16> to vector<64x64xbf16>
    %cst_42 = arith.constant dense<0.000000e+00> : vector<256x64xf32>
    %53 = tpu.matmul %50, %52, %cst_42 {dimension_numbers = #tpu.dot_dimension_numbers<[1], [0], [0], [1], [0, 0, 1, 1], [], []>} : vector<256x64xbf16>, vector<64x64xbf16>, vector<256x64xf32> -> vector<256x64xf32>
    %54 = arith.addf %46, %53 : vector<256x64xf32>
    %c24_43 = arith.constant 24 : index
    %c0_44 = arith.constant 0 : index
    %55 = vector.load %arg12[%c24_43, %c0_44] : memref<304x64xf32, #tpu.memory_space<vmem>>, vector<256x64xf32>
    %56 = arith.truncf %55 : vector<256x64xf32> to vector<256x64xbf16>
    %c4 = arith.constant 4 : index
    %c0_45 = arith.constant 0 : index
    %c0_46 = arith.constant 0 : index
    %57 = vector.load %arg9[%c4, %c0_45, %c0_46] : memref<9x64x64xbf16, #tpu.memory_space<vmem>>, vector<1x64x64xbf16>
    %58 = vector.shape_cast %57 : vector<1x64x64xbf16> to vector<64x64xbf16>
    %cst_47 = arith.constant dense<0.000000e+00> : vector<256x64xf32>
    %59 = tpu.matmul %56, %58, %cst_47 {dimension_numbers = #tpu.dot_dimension_numbers<[1], [0], [0], [1], [0, 0, 1, 1], [], []>} : vector<256x64xbf16>, vector<64x64xbf16>, vector<256x64xf32> -> vector<256x64xf32>
    %60 = arith.addf %54, %59 : vector<256x64xf32>
    %c25 = arith.constant 25 : index
    %c0_48 = arith.constant 0 : index
    %61 = vector.load %arg12[%c25, %c0_48] : memref<304x64xf32, #tpu.memory_space<vmem>>, vector<256x64xf32>
    %62 = vector.broadcast %23 : vector<256x1xf32> to vector<256x64xf32>
    %63 = arith.mulf %61, %62 : vector<256x64xf32>
    %64 = arith.truncf %63 : vector<256x64xf32> to vector<256x64xbf16>
    %c5 = arith.constant 5 : index
    %c0_49 = arith.constant 0 : index
    %c0_50 = arith.constant 0 : index
    %65 = vector.load %arg9[%c5, %c0_49, %c0_50] : memref<9x64x64xbf16, #tpu.memory_space<vmem>>, vector<1x64x64xbf16>
    %66 = vector.shape_cast %65 : vector<1x64x64xbf16> to vector<64x64xbf16>
    %cst_51 = arith.constant dense<0.000000e+00> : vector<256x64xf32>
    %67 = tpu.matmul %64, %66, %cst_51 {dimension_numbers = #tpu.dot_dimension_numbers<[1], [0], [0], [1], [0, 0, 1, 1], [], []>} : vector<256x64xbf16>, vector<64x64xbf16>, vector<256x64xf32> -> vector<256x64xf32>
    %68 = arith.addf %60, %67 : vector<256x64xf32>
    %c39 = arith.constant 39 : index
    %c0_52 = arith.constant 0 : index
    %69 = vector.load %arg12[%c39, %c0_52] : memref<304x64xf32, #tpu.memory_space<vmem>>, vector<256x64xf32>
    %70 = vector.broadcast %22 : vector<256x1xf32> to vector<256x64xf32>
    %71 = arith.mulf %69, %70 : vector<256x64xf32>
    %72 = arith.truncf %71 : vector<256x64xf32> to vector<256x64xbf16>
    %c6 = arith.constant 6 : index
    %c0_53 = arith.constant 0 : index
    %c0_54 = arith.constant 0 : index
    %73 = vector.load %arg9[%c6, %c0_53, %c0_54] : memref<9x64x64xbf16, #tpu.memory_space<vmem>>, vector<1x64x64xbf16>
    %74 = vector.shape_cast %73 : vector<1x64x64xbf16> to vector<64x64xbf16>
    %cst_55 = arith.constant dense<0.000000e+00> : vector<256x64xf32>
    %75 = tpu.matmul %72, %74, %cst_55 {dimension_numbers = #tpu.dot_dimension_numbers<[1], [0], [0], [1], [0, 0, 1, 1], [], []>} : vector<256x64xbf16>, vector<64x64xbf16>, vector<256x64xf32> -> vector<256x64xf32>
    %76 = arith.addf %68, %75 : vector<256x64xf32>
    %c40 = arith.constant 40 : index
    %c0_56 = arith.constant 0 : index
    %77 = vector.load %arg12[%c40, %c0_56] : memref<304x64xf32, #tpu.memory_space<vmem>>, vector<256x64xf32>
    %78 = arith.truncf %77 : vector<256x64xf32> to vector<256x64xbf16>
    %c7_57 = arith.constant 7 : index
    %c0_58 = arith.constant 0 : index
    %c0_59 = arith.constant 0 : index
    %79 = vector.load %arg9[%c7_57, %c0_58, %c0_59] : memref<9x64x64xbf16, #tpu.memory_space<vmem>>, vector<1x64x64xbf16>
    %80 = vector.shape_cast %79 : vector<1x64x64xbf16> to vector<64x64xbf16>
    %cst_60 = arith.constant dense<0.000000e+00> : vector<256x64xf32>
    %81 = tpu.matmul %78, %80, %cst_60 {dimension_numbers = #tpu.dot_dimension_numbers<[1], [0], [0], [1], [0, 0, 1, 1], [], []>} : vector<256x64xbf16>, vector<64x64xbf16>, vector<256x64xf32> -> vector<256x64xf32>
    %82 = arith.addf %76, %81 : vector<256x64xf32>
    %c41 = arith.constant 41 : index
    %c0_61 = arith.constant 0 : index
    %83 = vector.load %arg12[%c41, %c0_61] : memref<304x64xf32, #tpu.memory_space<vmem>>, vector<256x64xf32>
    %84 = vector.broadcast %23 : vector<256x1xf32> to vector<256x64xf32>
    %85 = arith.mulf %83, %84 : vector<256x64xf32>
    %86 = arith.truncf %85 : vector<256x64xf32> to vector<256x64xbf16>
    %c8_62 = arith.constant 8 : index
    %c0_63 = arith.constant 0 : index
    %c0_64 = arith.constant 0 : index
    %87 = vector.load %arg9[%c8_62, %c0_63, %c0_64] : memref<9x64x64xbf16, #tpu.memory_space<vmem>>, vector<1x64x64xbf16>
    %88 = vector.shape_cast %87 : vector<1x64x64xbf16> to vector<64x64xbf16>
    %cst_65 = arith.constant dense<0.000000e+00> : vector<256x64xf32>
    %89 = tpu.matmul %86, %88, %cst_65 {dimension_numbers = #tpu.dot_dimension_numbers<[1], [0], [0], [1], [0, 0, 1, 1], [], []>} : vector<256x64xbf16>, vector<64x64xbf16>, vector<256x64xf32> -> vector<256x64xf32>
    %90 = arith.addf %82, %89 : vector<256x64xf32>
    %c0_66 = arith.constant 0 : index
    %c0_67 = arith.constant 0 : index
    %91 = vector.load %arg10[%c0_66, %c0_67] : memref<1x64xf32, #tpu.memory_space<vmem>>, vector<1x64xf32>
    %92 = vector.broadcast %91 : vector<1x64xf32> to vector<256x64xf32>
    %93 = arith.addf %90, %92 : vector<256x64xf32>
    %cst_68 = arith.constant 0.000000e+00 : f32
    %94 = vector.broadcast %cst_68 : f32 to vector<256x64xf32>
    %95 = arith.maximumf %93, %94 : vector<256x64xf32>
    %c0_69 = arith.constant 0 : index
    %c0_70 = arith.constant 0 : index
    %c0_71 = arith.constant 0 : index
    %96 = vector.load %arg11[%c0_69, %c0_70, %c0_71] : memref<1x256x64xf32, #tpu.memory_space<vmem>>, vector<1x256x64xf32>
    %97 = vector.shape_cast %96 : vector<1x256x64xf32> to vector<256x64xf32>
    %98 = vector.shape_cast %95 : vector<256x64xf32> to vector<1x256x64xf32>
    tpu.vector_store %arg11[%c0_69, %c0_70, %c0_71], %98 {strides = array<i32>} : memref<1x256x64xf32, #tpu.memory_space<vmem>>, vector<1x256x64xf32>,
    return
  }
  func.func @transform_0(%arg0: i32) -> (i32, i32, i32) {
    %c0_i32 = arith.constant 0 : i32
    %c0_i32_0 = arith.constant 0 : i32
    %c0_i32_1 = arith.constant 0 : i32
    return %arg0, %c0_i32, %c0_i32_0 : i32, i32, i32
  }
  func.func @transform_1(%arg0: i32) -> (i32, i32, i32) {
    %c0_i32 = arith.constant 0 : i32
    %c0_i32_0 = arith.constant 0 : i32
    %c0_i32_1 = arith.constant 0 : i32
    return %arg0, %c0_i32, %c0_i32_0 : i32, i32, i32
  }
  func.func @transform_2(%arg0: i32) -> (i32, i32) {
    %c0_i32 = arith.constant 0 : i32
    %c0_i32_0 = arith.constant 0 : i32
    %c0_i32_1 = arith.constant 0 : i32
    return %c0_i32, %c0_i32_0 : i32, i32
  }
  func.func @transform_3(%arg0: i32) -> (i32, i32) {
    %c0_i32 = arith.constant 0 : i32
    %c0_i32_0 = arith.constant 0 : i32
    %c0_i32_1 = arith.constant 0 : i32
    return %c0_i32, %c0_i32_0 : i32, i32
  }
  func.func @transform_4(%arg0: i32) -> (i32, i32) {
    %c0_i32 = arith.constant 0 : i32
    %c0_i32_0 = arith.constant 0 : i32
    %c0_i32_1 = arith.constant 0 : i32
    return %c0_i32, %c0_i32_0 : i32, i32
  }
  func.func @transform_5(%arg0: i32) -> (i32, i32) {
    %c0_i32 = arith.constant 0 : i32
    %c0_i32_0 = arith.constant 0 : i32
    %c0_i32_1 = arith.constant 0 : i32
    return %c0_i32, %c0_i32_0 : i32, i32
  }
  func.func @transform_6(%arg0: i32) -> (i32, i32) {
    %c0_i32 = arith.constant 0 : i32
    %c0_i32_0 = arith.constant 0 : i32
    %c0_i32_1 = arith.constant 0 : i32
    return %c0_i32, %c0_i32_0 : i32, i32
  }
  func.func @transform_7(%arg0: i32) -> (i32, i32) {
    %c0_i32 = arith.constant 0 : i32
    %c0_i32_0 = arith.constant 0 : i32
    %c0_i32_1 = arith.constant 0 : i32
    return %c0_i32, %c0_i32_0 : i32, i32
  }
  func.func @transform_8(%arg0: i32) -> (i32, i32, i32) {
    %c0_i32 = arith.constant 0 : i32
    %c0_i32_0 = arith.constant 0 : i32
    %c0_i32_1 = arith.constant 0 : i32
    %c0_i32_2 = arith.constant 0 : i32
    return %c0_i32, %c0_i32_0, %c0_i32_1 : i32, i32, i32
  }
  func.func @transform_9(%arg0: i32) -> (i32, i32) {
    %c0_i32 = arith.constant 0 : i32
    %c0_i32_0 = arith.constant 0 : i32
    %c0_i32_1 = arith.constant 0 : i32
    return %c0_i32, %c0_i32_0 : i32, i32
  }
  func.func @transform_10(%arg0: i32) -> (i32, i32, i32) {
    %c0_i32 = arith.constant 0 : i32
    %c0_i32_0 = arith.constant 0 : i32
    %c0_i32_1 = arith.constant 0 : i32
    return %arg0, %c0_i32, %c0_i32_0 : i32, i32, i32
  }
}

module attributes {stable_mosaic.version = 11 : i64} {
  func.func @kernel(%arg0: i32, %arg1: memref<1x16x256xf32, #tpu.memory_space<vmem>>, %arg2: memref<1x64x256xf32, #tpu.memory_space<vmem>>, %arg3: memref<64x16xf32, #tpu.memory_space<vmem>>, %arg4: memref<64x1xf32, #tpu.memory_space<vmem>>, %arg5: memref<64x1xf32, #tpu.memory_space<vmem>>, %arg6: memref<256x128xbf16, #tpu.memory_space<vmem>>, %arg7: memref<256x128xbf16, #tpu.memory_space<vmem>>, %arg8: memref<1x128xf32, #tpu.memory_space<vmem>>, %arg9: memref<9x128x128xbf16, #tpu.memory_space<vmem>>, %arg10: memref<1x128xf32, #tpu.memory_space<vmem>>, %arg11: memref<1x64x128xf32, #tpu.memory_space<vmem>>, %arg12: memref<96x128xf32, #tpu.memory_space<vmem>>) attributes {dimension_semantics = [#tpu.dimension_semantics<parallel>], iteration_bounds = array<i64: 2>, scalar_prefetch = 0 : i64, scratch_operands = 1 : i64, tpu.core_type = #tpu.core_type<tc>, window_params = [{transform_indices = @transform_0, window_bounds = array<i64: 1, 16, 256>}, {transform_indices = @transform_1, window_bounds = array<i64: 1, 64, 256>}, {pipeline_mode = #tpu.pipeline_mode<synchronous>, transform_indices = @transform_2, window_bounds = array<i64: 64, 16>}, {pipeline_mode = #tpu.pipeline_mode<synchronous>, transform_indices = @transform_3, window_bounds = array<i64: 64, 1>}, {pipeline_mode = #tpu.pipeline_mode<synchronous>, transform_indices = @transform_4, window_bounds = array<i64: 64, 1>}, {pipeline_mode = #tpu.pipeline_mode<synchronous>, transform_indices = @transform_5, window_bounds = array<i64: 256, 128>}, {pipeline_mode = #tpu.pipeline_mode<synchronous>, transform_indices = @transform_6, window_bounds = array<i64: 256, 128>}, {pipeline_mode = #tpu.pipeline_mode<synchronous>, transform_indices = @transform_7, window_bounds = array<i64: 1, 128>}, {pipeline_mode = #tpu.pipeline_mode<synchronous>, transform_indices = @transform_8, window_bounds = array<i64: 9, 128, 128>}, {pipeline_mode = #tpu.pipeline_mode<synchronous>, transform_indices = @transform_9, window_bounds = array<i64: 1, 128>}, {transform_indices = @transform_10, window_bounds = array<i64: 1, 64, 128>}]} {
    %c0 = arith.constant 0 : index
    %c0_0 = arith.constant 0 : index
    %c0_1 = arith.constant 0 : index
    %0 = vector.load %arg1[%c0, %c0_0, %c0_1] : memref<1x16x256xf32, #tpu.memory_space<vmem>>, vector<1x16x256xf32>
    %1 = vector.shape_cast %0 : vector<1x16x256xf32> to vector<16x256xf32>
    %2 = arith.truncf %1 : vector<16x256xf32> to vector<16x256xbf16>
    %c0_2 = arith.constant 0 : index
    %c0_3 = arith.constant 0 : index
    %3 = vector.load %arg6[%c0_2, %c0_3] : memref<256x128xbf16, #tpu.memory_space<vmem>>, vector<256x128xbf16>
    %cst = arith.constant dense<0.000000e+00> : vector<16x128xf32>
    %4 = tpu.matmul %2, %3, %cst {dimension_numbers = #tpu.dot_dimension_numbers<[1], [0], [0], [1], [0, 0, 1, 1], [], []>} : vector<16x256xbf16>, vector<256x128xbf16>, vector<16x128xf32> -> vector<16x128xf32>
    %c0_4 = arith.constant 0 : index
    %c0_5 = arith.constant 0 : index
    %5 = vector.load %arg3[%c0_4, %c0_5] : memref<64x16xf32, #tpu.memory_space<vmem>>, vector<64x16xf32>
    %cst_6 = arith.constant dense<0.000000e+00> : vector<64x128xf32>
    %6 = tpu.matmul %5, %4, %cst_6 {dimension_numbers = #tpu.dot_dimension_numbers<[1], [0], [0], [1], [0, 0, 1, 1], [], []>} : vector<64x16xf32>, vector<16x128xf32>, vector<64x128xf32> -> vector<64x128xf32>
    %c0_7 = arith.constant 0 : index
    %c0_8 = arith.constant 0 : index
    %c0_9 = arith.constant 0 : index
    %7 = vector.load %arg2[%c0_7, %c0_8, %c0_9] : memref<1x64x256xf32, #tpu.memory_space<vmem>>, vector<1x64x256xf32>
    %8 = vector.shape_cast %7 : vector<1x64x256xf32> to vector<64x256xf32>
    %9 = arith.truncf %8 : vector<64x256xf32> to vector<64x256xbf16>
    %c0_10 = arith.constant 0 : index
    %c0_11 = arith.constant 0 : index
    %10 = vector.load %arg7[%c0_10, %c0_11] : memref<256x128xbf16, #tpu.memory_space<vmem>>, vector<256x128xbf16>
    %cst_12 = arith.constant dense<0.000000e+00> : vector<64x128xf32>
    %11 = tpu.matmul %9, %10, %cst_12 {dimension_numbers = #tpu.dot_dimension_numbers<[1], [0], [0], [1], [0, 0, 1, 1], [], []>} : vector<64x256xbf16>, vector<256x128xbf16>, vector<64x128xf32> -> vector<64x128xf32>
    %12 = arith.addf %6, %11 : vector<64x128xf32>
    %c0_13 = arith.constant 0 : index
    %c0_14 = arith.constant 0 : index
    %13 = vector.load %arg8[%c0_13, %c0_14] : memref<1x128xf32, #tpu.memory_space<vmem>>, vector<1x128xf32>
    %14 = vector.broadcast %13 : vector<1x128xf32> to vector<64x128xf32>
    %15 = arith.addf %12, %14 : vector<64x128xf32>
    %cst_15 = arith.constant 0.000000e+00 : f32
    %16 = vector.broadcast %cst_15 : f32 to vector<64x128xf32>
    %17 = arith.maximumf %15, %16 : vector<64x128xf32>
    %cst_16 = arith.constant 0.000000e+00 : f32
    %18 = vector.broadcast %cst_16 : f32 to vector<16x128xf32>
    %c0_17 = arith.constant 0 : index
    %c0_18 = arith.constant 0 : index
    %19 = vector.load %arg12[%c0_17, %c0_18] : memref<96x128xf32, #tpu.memory_space<vmem>>, vector<16x128xf32>
    tpu.vector_store %arg12[%c0_17, %c0_18], %18 {strides = array<i32>} : memref<96x128xf32, #tpu.memory_space<vmem>>, vector<16x128xf32>,
    %c80 = arith.constant 80 : index
    %c0_19 = arith.constant 0 : index
    %20 = vector.load %arg12[%c80, %c0_19] : memref<96x128xf32, #tpu.memory_space<vmem>>, vector<16x128xf32>
    tpu.vector_store %arg12[%c80, %c0_19], %18 {strides = array<i32>} : memref<96x128xf32, #tpu.memory_space<vmem>>, vector<16x128xf32>,
    %c16 = arith.constant 16 : index
    %c0_20 = arith.constant 0 : index
    %21 = vector.load %arg12[%c16, %c0_20] : memref<96x128xf32, #tpu.memory_space<vmem>>, vector<64x128xf32>
    tpu.vector_store %arg12[%c16, %c0_20], %17 {strides = array<i32>} : memref<96x128xf32, #tpu.memory_space<vmem>>, vector<64x128xf32>,
    %c0_21 = arith.constant 0 : index
    %c0_22 = arith.constant 0 : index
    %22 = vector.load %arg4[%c0_21, %c0_22] : memref<64x1xf32, #tpu.memory_space<vmem>>, vector<64x1xf32>
    %c0_23 = arith.constant 0 : index
    %c0_24 = arith.constant 0 : index
    %23 = vector.load %arg5[%c0_23, %c0_24] : memref<64x1xf32, #tpu.memory_space<vmem>>, vector<64x1xf32>
    %cst_25 = arith.constant 0.000000e+00 : f32
    %24 = vector.broadcast %cst_25 : f32 to vector<64x128xf32>
    %c7 = arith.constant 7 : index
    %c0_26 = arith.constant 0 : index
    %25 = vector.load %arg12[%c7, %c0_26] : memref<96x128xf32, #tpu.memory_space<vmem>>, vector<64x128xf32>
    %26 = vector.broadcast %22 : vector<64x1xf32> to vector<64x128xf32>
    %27 = arith.mulf %25, %26 : vector<64x128xf32>
    %28 = arith.truncf %27 : vector<64x128xf32> to vector<64x128xbf16>
    %c0_27 = arith.constant 0 : index
    %c0_28 = arith.constant 0 : index
    %c0_29 = arith.constant 0 : index
    %29 = vector.load %arg9[%c0_27, %c0_28, %c0_29] : memref<9x128x128xbf16, #tpu.memory_space<vmem>>, vector<1x128x128xbf16>
    %30 = vector.shape_cast %29 : vector<1x128x128xbf16> to vector<128x128xbf16>
    %cst_30 = arith.constant dense<0.000000e+00> : vector<64x128xf32>
    %31 = tpu.matmul %28, %30, %cst_30 {dimension_numbers = #tpu.dot_dimension_numbers<[1], [0], [0], [1], [0, 0, 1, 1], [], []>} : vector<64x128xbf16>, vector<128x128xbf16>, vector<64x128xf32> -> vector<64x128xf32>
    %32 = arith.addf %24, %31 : vector<64x128xf32>
    %c8 = arith.constant 8 : index
    %c0_31 = arith.constant 0 : index
    %33 = vector.load %arg12[%c8, %c0_31] : memref<96x128xf32, #tpu.memory_space<vmem>>, vector<64x128xf32>
    %34 = arith.truncf %33 : vector<64x128xf32> to vector<64x128xbf16>
    %c1 = arith.constant 1 : index
    %c0_32 = arith.constant 0 : index
    %c0_33 = arith.constant 0 : index
    %35 = vector.load %arg9[%c1, %c0_32, %c0_33] : memref<9x128x128xbf16, #tpu.memory_space<vmem>>, vector<1x128x128xbf16>
    %36 = vector.shape_cast %35 : vector<1x128x128xbf16> to vector<128x128xbf16>
    %cst_34 = arith.constant dense<0.000000e+00> : vector<64x128xf32>
    %37 = tpu.matmul %34, %36, %cst_34 {dimension_numbers = #tpu.dot_dimension_numbers<[1], [0], [0], [1], [0, 0, 1, 1], [], []>} : vector<64x128xbf16>, vector<128x128xbf16>, vector<64x128xf32> -> vector<64x128xf32>
    %38 = arith.addf %32, %37 : vector<64x128xf32>
    %c9 = arith.constant 9 : index
    %c0_35 = arith.constant 0 : index
    %39 = vector.load %arg12[%c9, %c0_35] : memref<96x128xf32, #tpu.memory_space<vmem>>, vector<64x128xf32>
    %40 = vector.broadcast %23 : vector<64x1xf32> to vector<64x128xf32>
    %41 = arith.mulf %39, %40 : vector<64x128xf32>
    %42 = arith.truncf %41 : vector<64x128xf32> to vector<64x128xbf16>
    %c2 = arith.constant 2 : index
    %c0_36 = arith.constant 0 : index
    %c0_37 = arith.constant 0 : index
    %43 = vector.load %arg9[%c2, %c0_36, %c0_37] : memref<9x128x128xbf16, #tpu.memory_space<vmem>>, vector<1x128x128xbf16>
    %44 = vector.shape_cast %43 : vector<1x128x128xbf16> to vector<128x128xbf16>
    %cst_38 = arith.constant dense<0.000000e+00> : vector<64x128xf32>
    %45 = tpu.matmul %42, %44, %cst_38 {dimension_numbers = #tpu.dot_dimension_numbers<[1], [0], [0], [1], [0, 0, 1, 1], [], []>} : vector<64x128xbf16>, vector<128x128xbf16>, vector<64x128xf32> -> vector<64x128xf32>
    %46 = arith.addf %38, %45 : vector<64x128xf32>
    %c15 = arith.constant 15 : index
    %c0_39 = arith.constant 0 : index
    %47 = vector.load %arg12[%c15, %c0_39] : memref<96x128xf32, #tpu.memory_space<vmem>>, vector<64x128xf32>
    %48 = vector.broadcast %22 : vector<64x1xf32> to vector<64x128xf32>
    %49 = arith.mulf %47, %48 : vector<64x128xf32>
    %50 = arith.truncf %49 : vector<64x128xf32> to vector<64x128xbf16>
    %c3 = arith.constant 3 : index
    %c0_40 = arith.constant 0 : index
    %c0_41 = arith.constant 0 : index
    %51 = vector.load %arg9[%c3, %c0_40, %c0_41] : memref<9x128x128xbf16, #tpu.memory_space<vmem>>, vector<1x128x128xbf16>
    %52 = vector.shape_cast %51 : vector<1x128x128xbf16> to vector<128x128xbf16>
    %cst_42 = arith.constant dense<0.000000e+00> : vector<64x128xf32>
    %53 = tpu.matmul %50, %52, %cst_42 {dimension_numbers = #tpu.dot_dimension_numbers<[1], [0], [0], [1], [0, 0, 1, 1], [], []>} : vector<64x128xbf16>, vector<128x128xbf16>, vector<64x128xf32> -> vector<64x128xf32>
    %54 = arith.addf %46, %53 : vector<64x128xf32>
    %c16_43 = arith.constant 16 : index
    %c0_44 = arith.constant 0 : index
    %55 = vector.load %arg12[%c16_43, %c0_44] : memref<96x128xf32, #tpu.memory_space<vmem>>, vector<64x128xf32>
    %56 = arith.truncf %55 : vector<64x128xf32> to vector<64x128xbf16>
    %c4 = arith.constant 4 : index
    %c0_45 = arith.constant 0 : index
    %c0_46 = arith.constant 0 : index
    %57 = vector.load %arg9[%c4, %c0_45, %c0_46] : memref<9x128x128xbf16, #tpu.memory_space<vmem>>, vector<1x128x128xbf16>
    %58 = vector.shape_cast %57 : vector<1x128x128xbf16> to vector<128x128xbf16>
    %cst_47 = arith.constant dense<0.000000e+00> : vector<64x128xf32>
    %59 = tpu.matmul %56, %58, %cst_47 {dimension_numbers = #tpu.dot_dimension_numbers<[1], [0], [0], [1], [0, 0, 1, 1], [], []>} : vector<64x128xbf16>, vector<128x128xbf16>, vector<64x128xf32> -> vector<64x128xf32>
    %60 = arith.addf %54, %59 : vector<64x128xf32>
    %c17 = arith.constant 17 : index
    %c0_48 = arith.constant 0 : index
    %61 = vector.load %arg12[%c17, %c0_48] : memref<96x128xf32, #tpu.memory_space<vmem>>, vector<64x128xf32>
    %62 = vector.broadcast %23 : vector<64x1xf32> to vector<64x128xf32>
    %63 = arith.mulf %61, %62 : vector<64x128xf32>
    %64 = arith.truncf %63 : vector<64x128xf32> to vector<64x128xbf16>
    %c5 = arith.constant 5 : index
    %c0_49 = arith.constant 0 : index
    %c0_50 = arith.constant 0 : index
    %65 = vector.load %arg9[%c5, %c0_49, %c0_50] : memref<9x128x128xbf16, #tpu.memory_space<vmem>>, vector<1x128x128xbf16>
    %66 = vector.shape_cast %65 : vector<1x128x128xbf16> to vector<128x128xbf16>
    %cst_51 = arith.constant dense<0.000000e+00> : vector<64x128xf32>
    %67 = tpu.matmul %64, %66, %cst_51 {dimension_numbers = #tpu.dot_dimension_numbers<[1], [0], [0], [1], [0, 0, 1, 1], [], []>} : vector<64x128xbf16>, vector<128x128xbf16>, vector<64x128xf32> -> vector<64x128xf32>
    %68 = arith.addf %60, %67 : vector<64x128xf32>
    %c23 = arith.constant 23 : index
    %c0_52 = arith.constant 0 : index
    %69 = vector.load %arg12[%c23, %c0_52] : memref<96x128xf32, #tpu.memory_space<vmem>>, vector<64x128xf32>
    %70 = vector.broadcast %22 : vector<64x1xf32> to vector<64x128xf32>
    %71 = arith.mulf %69, %70 : vector<64x128xf32>
    %72 = arith.truncf %71 : vector<64x128xf32> to vector<64x128xbf16>
    %c6 = arith.constant 6 : index
    %c0_53 = arith.constant 0 : index
    %c0_54 = arith.constant 0 : index
    %73 = vector.load %arg9[%c6, %c0_53, %c0_54] : memref<9x128x128xbf16, #tpu.memory_space<vmem>>, vector<1x128x128xbf16>
    %74 = vector.shape_cast %73 : vector<1x128x128xbf16> to vector<128x128xbf16>
    %cst_55 = arith.constant dense<0.000000e+00> : vector<64x128xf32>
    %75 = tpu.matmul %72, %74, %cst_55 {dimension_numbers = #tpu.dot_dimension_numbers<[1], [0], [0], [1], [0, 0, 1, 1], [], []>} : vector<64x128xbf16>, vector<128x128xbf16>, vector<64x128xf32> -> vector<64x128xf32>
    %76 = arith.addf %68, %75 : vector<64x128xf32>
    %c24 = arith.constant 24 : index
    %c0_56 = arith.constant 0 : index
    %77 = vector.load %arg12[%c24, %c0_56] : memref<96x128xf32, #tpu.memory_space<vmem>>, vector<64x128xf32>
    %78 = arith.truncf %77 : vector<64x128xf32> to vector<64x128xbf16>
    %c7_57 = arith.constant 7 : index
    %c0_58 = arith.constant 0 : index
    %c0_59 = arith.constant 0 : index
    %79 = vector.load %arg9[%c7_57, %c0_58, %c0_59] : memref<9x128x128xbf16, #tpu.memory_space<vmem>>, vector<1x128x128xbf16>
    %80 = vector.shape_cast %79 : vector<1x128x128xbf16> to vector<128x128xbf16>
    %cst_60 = arith.constant dense<0.000000e+00> : vector<64x128xf32>
    %81 = tpu.matmul %78, %80, %cst_60 {dimension_numbers = #tpu.dot_dimension_numbers<[1], [0], [0], [1], [0, 0, 1, 1], [], []>} : vector<64x128xbf16>, vector<128x128xbf16>, vector<64x128xf32> -> vector<64x128xf32>
    %82 = arith.addf %76, %81 : vector<64x128xf32>
    %c25 = arith.constant 25 : index
    %c0_61 = arith.constant 0 : index
    %83 = vector.load %arg12[%c25, %c0_61] : memref<96x128xf32, #tpu.memory_space<vmem>>, vector<64x128xf32>
    %84 = vector.broadcast %23 : vector<64x1xf32> to vector<64x128xf32>
    %85 = arith.mulf %83, %84 : vector<64x128xf32>
    %86 = arith.truncf %85 : vector<64x128xf32> to vector<64x128xbf16>
    %c8_62 = arith.constant 8 : index
    %c0_63 = arith.constant 0 : index
    %c0_64 = arith.constant 0 : index
    %87 = vector.load %arg9[%c8_62, %c0_63, %c0_64] : memref<9x128x128xbf16, #tpu.memory_space<vmem>>, vector<1x128x128xbf16>
    %88 = vector.shape_cast %87 : vector<1x128x128xbf16> to vector<128x128xbf16>
    %cst_65 = arith.constant dense<0.000000e+00> : vector<64x128xf32>
    %89 = tpu.matmul %86, %88, %cst_65 {dimension_numbers = #tpu.dot_dimension_numbers<[1], [0], [0], [1], [0, 0, 1, 1], [], []>} : vector<64x128xbf16>, vector<128x128xbf16>, vector<64x128xf32> -> vector<64x128xf32>
    %90 = arith.addf %82, %89 : vector<64x128xf32>
    %c0_66 = arith.constant 0 : index
    %c0_67 = arith.constant 0 : index
    %91 = vector.load %arg10[%c0_66, %c0_67] : memref<1x128xf32, #tpu.memory_space<vmem>>, vector<1x128xf32>
    %92 = vector.broadcast %91 : vector<1x128xf32> to vector<64x128xf32>
    %93 = arith.addf %90, %92 : vector<64x128xf32>
    %cst_68 = arith.constant 0.000000e+00 : f32
    %94 = vector.broadcast %cst_68 : f32 to vector<64x128xf32>
    %95 = arith.maximumf %93, %94 : vector<64x128xf32>
    %c0_69 = arith.constant 0 : index
    %c0_70 = arith.constant 0 : index
    %c0_71 = arith.constant 0 : index
    %96 = vector.load %arg11[%c0_69, %c0_70, %c0_71] : memref<1x64x128xf32, #tpu.memory_space<vmem>>, vector<1x64x128xf32>
    %97 = vector.shape_cast %96 : vector<1x64x128xf32> to vector<64x128xf32>
    %98 = vector.shape_cast %95 : vector<64x128xf32> to vector<1x64x128xf32>
    tpu.vector_store %arg11[%c0_69, %c0_70, %c0_71], %98 {strides = array<i32>} : memref<1x64x128xf32, #tpu.memory_space<vmem>>, vector<1x64x128xf32>,
    return
  }
  func.func @transform_0(%arg0: i32) -> (i32, i32, i32) {
    %c0_i32 = arith.constant 0 : i32
    %c0_i32_0 = arith.constant 0 : i32
    %c0_i32_1 = arith.constant 0 : i32
    return %arg0, %c0_i32, %c0_i32_0 : i32, i32, i32
  }
  func.func @transform_1(%arg0: i32) -> (i32, i32, i32) {
    %c0_i32 = arith.constant 0 : i32
    %c0_i32_0 = arith.constant 0 : i32
    %c0_i32_1 = arith.constant 0 : i32
    return %arg0, %c0_i32, %c0_i32_0 : i32, i32, i32
  }
  func.func @transform_2(%arg0: i32) -> (i32, i32) {
    %c0_i32 = arith.constant 0 : i32
    %c0_i32_0 = arith.constant 0 : i32
    %c0_i32_1 = arith.constant 0 : i32
    return %c0_i32, %c0_i32_0 : i32, i32
  }
  func.func @transform_3(%arg0: i32) -> (i32, i32) {
    %c0_i32 = arith.constant 0 : i32
    %c0_i32_0 = arith.constant 0 : i32
    %c0_i32_1 = arith.constant 0 : i32
    return %c0_i32, %c0_i32_0 : i32, i32
  }
  func.func @transform_4(%arg0: i32) -> (i32, i32) {
    %c0_i32 = arith.constant 0 : i32
    %c0_i32_0 = arith.constant 0 : i32
    %c0_i32_1 = arith.constant 0 : i32
    return %c0_i32, %c0_i32_0 : i32, i32
  }
  func.func @transform_5(%arg0: i32) -> (i32, i32) {
    %c0_i32 = arith.constant 0 : i32
    %c0_i32_0 = arith.constant 0 : i32
    %c0_i32_1 = arith.constant 0 : i32
    return %c0_i32, %c0_i32_0 : i32, i32
  }
  func.func @transform_6(%arg0: i32) -> (i32, i32) {
    %c0_i32 = arith.constant 0 : i32
    %c0_i32_0 = arith.constant 0 : i32
    %c0_i32_1 = arith.constant 0 : i32
    return %c0_i32, %c0_i32_0 : i32, i32
  }
  func.func @transform_7(%arg0: i32) -> (i32, i32) {
    %c0_i32 = arith.constant 0 : i32
    %c0_i32_0 = arith.constant 0 : i32
    %c0_i32_1 = arith.constant 0 : i32
    return %c0_i32, %c0_i32_0 : i32, i32
  }
  func.func @transform_8(%arg0: i32) -> (i32, i32, i32) {
    %c0_i32 = arith.constant 0 : i32
    %c0_i32_0 = arith.constant 0 : i32
    %c0_i32_1 = arith.constant 0 : i32
    %c0_i32_2 = arith.constant 0 : i32
    return %c0_i32, %c0_i32_0, %c0_i32_1 : i32, i32, i32
  }
  func.func @transform_9(%arg0: i32) -> (i32, i32) {
    %c0_i32 = arith.constant 0 : i32
    %c0_i32_0 = arith.constant 0 : i32
    %c0_i32_1 = arith.constant 0 : i32
    return %c0_i32, %c0_i32_0 : i32, i32
  }
  func.func @transform_10(%arg0: i32) -> (i32, i32, i32) {
    %c0_i32 = arith.constant 0 : i32
    %c0_i32_0 = arith.constant 0 : i32
    %c0_i32_1 = arith.constant 0 : i32
    return %arg0, %c0_i32, %c0_i32_0 : i32, i32, i32
  }
}

</mosaic_0001>

<llo_original>
// kernel: backend_forward.5
$region0: #{backend_forward.5}
  #allocation0 [shape = 'u32[]', space=smem, size = 0x4, offset = 0x4, fixed_abs, tag = 'smem constant byte address 0x4 - core index']
  #allocation1 [shape = 'u32[144,128]{1,0:T(1,128)}', space=vmem, size = 0x12000, scoped, tag = 'internal scratch']
  #allocation2 [shape = 'f32[304,64]{1,0:T(8,128)}', space=vmem, size = 0x26000, scoped, tag = 'scratch operand']
  %s0 = inlined_call_operand.vmem [shape: f32[2,64,128], index: 0, kind: input, shape index: {}]
  %s1 = inlined_call_operand.vmem [shape: f32[2,256,128], index: 1, kind: input, shape index: {}]
  %s2 = inlined_call_operand.vmem [shape: f32[256,64], index: 2, kind: input, shape index: {}]
  %s3 = inlined_call_operand.vmem [shape: f32[256,1], index: 3, kind: input, shape index: {}]
  %s4 = inlined_call_operand.vmem [shape: f32[256,1], index: 4, kind: input, shape index: {}]
  %s5 = inlined_call_operand.vmem [shape: bf16[128,64], index: 5, kind: input, shape index: {}]
  %s6 = inlined_call_operand.vmem [shape: bf16[128,64], index: 6, kind: input, shape index: {}]
  %s7 = inlined_call_operand.vmem [shape: f32[1,64], index: 7, kind: input, shape index: {}]
  %s8 = inlined_call_operand.vmem [shape: bf16[9,64,64], index: 8, kind: input, shape index: {}]
  %s9 = inlined_call_operand.vmem [shape: f32[1,64], index: 9, kind: input, shape index: {}]
  %s10 = inlined_call_operand.hbm [shape: f32[2,256,64], index: 10, kind: output, shape index: {}]
  %s11 = sld [smem:[#allocation0]]
  $region73: #{backend_forward.5} parent=0
    _
  %s13 = ssub.s32 1, %s11
  %s14 = scalar_select 0, %s13, %s11
  $region1: #{backend_forward.5} parent=0
    #allocation3 [shape = 'u8[262144]{0}', space=vmem, size = 0x40000, scoped, tag = 'output window, operand 0']
    #allocation4 [shape = 's32[2]{0}', space=sflag, size = 0x8, scoped, tag = 'scoped memory for backend_forward.5']
    %15 = vsyncpa [#allocation4], 0
    %s16 = scalar_lea.sflag [#allocation4], 1
    %17 = vsyncpa %s16, 0
    loop: start=0, step=1, limit=4
    $region2: #{backend_forward.5} parent=1 // loop_pre_header
      _
    $region3: #{backend_forward.5} parent=1 // loop_header
      %s19 = sphi 0, %s23
      %p20 = scmp.ge.s32.totalorder %s19, 4
      %s29 = sphi 0, %s31
      %s32 = sphi 0, %s29
      %s33 = sphi 0, %s32
      %s49 = sphi 0, %s33
      %s55 = sphi 0, %s57
      %s58 = sphi 0, %s55
      %s59 = sphi 0, %s58
      %s75 = sphi 0, %s59
      %s79 = sphi 0, %s79
      %s81 = sphi 0, %s79
      %s82 = sphi 0, %s81
      %s96 = sphi 0, %s82
      %s100 = sphi 0, %s100
      %s102 = sphi 0, %s100
      %s103 = sphi 0, %s102
      %s117 = sphi 0, %s103
      %s121 = sphi 0, %s121
      %s123 = sphi 0, %s121
      %s124 = sphi 0, %s123
      %s138 = sphi 0, %s124
      %s142 = sphi 0, %s142
      %s144 = sphi 0, %s142
      %s145 = sphi 0, %s144
      %s159 = sphi 0, %s145
      %s163 = sphi 0, %s163
      %s165 = sphi 0, %s163
      %s166 = sphi 0, %s165
      %s180 = sphi 0, %s166
      %s184 = sphi 0, %s184
      %s186 = sphi 0, %s184
      %s187 = sphi 0, %s186
      %s201 = sphi 0, %s187
      %s205 = sphi 0, %s205
      %s207 = sphi 0, %s205
      %s208 = sphi 0, %s207
      %s222 = sphi 0, %s208
      %s226 = sphi 0, %s226
      %s228 = sphi 0, %s226
      %s229 = sphi 0, %s228
      %s243 = sphi 0, %s229
      %s249 = sphi 0, %s251
      %s252 = sphi 0, %s249
      %s253 = sphi 0, %s252
      %s269 = sphi 0, %s253
    $region4: #{backend_forward.5} parent=1 // loop_header_branch
      %22 = sbr.rel (%p20) target = $region8
    $region5: #{backend_forward.5} parent=1 // loop_body
      %s24 = ssub.s32 %s19, 1
      %s25 = ssub.s32 %s19, 2
      %s26 = sadd.s32 %s19, 1
      %s27 = ssub.s32 %s19, %s26
      %p28 = scmp.eq.s32.totalorder %s27, 0
      %s30 = sadd.s32 %s29, 1
      %s31 = scalar_select %p28, %s29, %s30
      %p34 = pneg %p28
      %p35 = scmp.eq.s32.totalorder %s19, 1
      %p36 = por %p34, %p35
      %p37 = scmp.ne.s32.totalorder %s29, %s32
      %p38 = scmp.eq.s32.totalorder %s19, 0
      %p39 = por %p37, %p38
      %p40 = scmp.ne.s32.totalorder %s29, %s32
      %p41 = scmp.eq.s32.totalorder %s24, 1
      %p42 = por %p40, %p41
      %p43 = scmp.ne.s32.totalorder %s32, %s33
      %p44 = scmp.eq.s32.totalorder %s24, 0
      %p45 = por %p43, %p44
      %p46 = scmp.ne.s32.totalorder %s32, %s33
      %p47 = scmp.eq.s32.totalorder %s25, 1
      %p48 = por %p46, %p47
      %p50 = scmp.ne.s32.totalorder %s33, %s49
      %p51 = scmp.eq.s32.totalorder %s25, 0
      %p52 = por %p50, %p51
      %s53 = ssub.s32 %s19, %s26
      %p54 = scmp.eq.s32.totalorder %s53, 0
      %s56 = sadd.s32 %s55, 1
      %s57 = scalar_select %p54, %s55, %s56
      %p60 = pneg %p54
      %p61 = scmp.eq.s32.totalorder %s19, 1
      %p62 = por %p60, %p61
      %p63 = scmp.ne.s32.totalorder %s55, %s58
      %p64 = scmp.eq.s32.totalorder %s19, 0
      %p65 = por %p63, %p64
      %p66 = scmp.ne.s32.totalorder %s55, %s58
      %p67 = scmp.eq.s32.totalorder %s24, 1
      %p68 = por %p66, %p67
      %p69 = scmp.ne.s32.totalorder %s58, %s59
      %p70 = scmp.eq.s32.totalorder %s24, 0
      %p71 = por %p69, %p70
      %p72 = scmp.ne.s32.totalorder %s58, %s59
      %p73 = scmp.eq.s32.totalorder %s25, 1
      %p74 = por %p72, %p73
      %p76 = scmp.ne.s32.totalorder %s59, %s75
      %p77 = scmp.eq.s32.totalorder %s25, 0
      %p78 = por %p76, %p77
      %s80 = sadd.s32 %s79, 1
      %p83 = scmp.eq.s32.totalorder %s19, 1
      %p84 = scmp.ne.s32.totalorder %s79, %s81
      %p85 = scmp.eq.s32.totalorder %s19, 0
      %p86 = por %p84, %p85
      %p87 = scmp.ne.s32.totalorder %s79, %s81
      %p88 = scmp.eq.s32.totalorder %s24, 1
      %p89 = por %p87, %p88
      %p90 = scmp.ne.s32.totalorder %s81, %s82
      %p91 = scmp.eq.s32.totalorder %s24, 0
      %p92 = por %p90, %p91
      %p93 = scmp.ne.s32.totalorder %s81, %s82
      %p94 = scmp.eq.s32.totalorder %s25, 1
      %p95 = por %p93, %p94
      %p97 = scmp.ne.s32.totalorder %s82, %s96
      %p98 = scmp.eq.s32.totalorder %s25, 0
      %p99 = por %p97, %p98
      %s101 = sadd.s32 %s100, 1
      %p104 = scmp.eq.s32.totalorder %s19, 1
      %p105 = scmp.ne.s32.totalorder %s100, %s102
      %p106 = scmp.eq.s32.totalorder %s19, 0
      %p107 = por %p105, %p106
      %p108 = scmp.ne.s32.totalorder %s100, %s102
      %p109 = scmp.eq.s32.totalorder %s24, 1
      %p110 = por %p108, %p109
      %p111 = scmp.ne.s32.totalorder %s102, %s103
      %p112 = scmp.eq.s32.totalorder %s24, 0
      %p113 = por %p111, %p112
      %p114 = scmp.ne.s32.totalorder %s102, %s103
      %p115 = scmp.eq.s32.totalorder %s25, 1
      %p116 = por %p114, %p115
      %p118 = scmp.ne.s32.totalorder %s103, %s117
      %p119 = scmp.eq.s32.totalorder %s25, 0
      %p120 = por %p118, %p119
      %s122 = sadd.s32 %s121, 1
      %p125 = scmp.eq.s32.totalorder %s19, 1
      %p126 = scmp.ne.s32.totalorder %s121, %s123
      %p127 = scmp.eq.s32.totalorder %s19, 0
      %p128 = por %p126, %p127
      %p129 = scmp.ne.s32.totalorder %s121, %s123
      %p130 = scmp.eq.s32.totalorder %s24, 1
      %p131 = por %p129, %p130
      %p132 = scmp.ne.s32.totalorder %s123, %s124
      %p133 = scmp.eq.s32.totalorder %s24, 0
      %p134 = por %p132, %p133
      %p135 = scmp.ne.s32.totalorder %s123, %s124
      %p136 = scmp.eq.s32.totalorder %s25, 1
      %p137 = por %p135, %p136
      %p139 = scmp.ne.s32.totalorder %s124, %s138
      %p140 = scmp.eq.s32.totalorder %s25, 0
      %p141 = por %p139, %p140
      %s143 = sadd.s32 %s142, 1
      %p146 = scmp.eq.s32.totalorder %s19, 1
      %p147 = scmp.ne.s32.totalorder %s142, %s144
      %p148 = scmp.eq.s32.totalorder %s19, 0
      %p149 = por %p147, %p148
      %p150 = scmp.ne.s32.totalorder %s142, %s144
      %p151 = scmp.eq.s32.totalorder %s24, 1
      %p152 = por %p150, %p151
      %p153 = scmp.ne.s32.totalorder %s144, %s145
      %p154 = scmp.eq.s32.totalorder %s24, 0
      %p155 = por %p153, %p154
      %p156 = scmp.ne.s32.totalorder %s144, %s145
      %p157 = scmp.eq.s32.totalorder %s25, 1
      %p158 = por %p156, %p157
      %p160 = scmp.ne.s32.totalorder %s145, %s159
      %p161 = scmp.eq.s32.totalorder %s25, 0
      %p162 = por %p160, %p161
      %s164 = sadd.s32 %s163, 1
      %p167 = scmp.eq.s32.totalorder %s19, 1
      %p168 = scmp.ne.s32.totalorder %s163, %s165
      %p169 = scmp.eq.s32.totalorder %s19, 0
      %p170 = por %p168, %p169
      %p171 = scmp.ne.s32.totalorder %s163, %s165
      %p172 = scmp.eq.s32.totalorder %s24, 1
      %p173 = por %p171, %p172
      %p174 = scmp.ne.s32.totalorder %s165, %s166
      %p175 = scmp.eq.s32.totalorder %s24, 0
      %p176 = por %p174, %p175
      %p177 = scmp.ne.s32.totalorder %s165, %s166
      %p178 = scmp.eq.s32.totalorder %s25, 1
      %p179 = por %p177, %p178
      %p181 = scmp.ne.s32.totalorder %s166, %s180
      %p182 = scmp.eq.s32.totalorder %s25, 0
      %p183 = por %p181, %p182
      %s185 = sadd.s32 %s184, 1
      %p188 = scmp.eq.s32.totalorder %s19, 1
      %p189 = scmp.ne.s32.totalorder %s184, %s186
      %p190 = scmp.eq.s32.totalorder %s19, 0
      %p191 = por %p189, %p190
      %p192 = scmp.ne.s32.totalorder %s184, %s186
      %p193 = scmp.eq.s32.totalorder %s24, 1
      %p194 = por %p192, %p193
      %p195 = scmp.ne.s32.totalorder %s186, %s187
      %p196 = scmp.eq.s32.totalorder %s24, 0
      %p197 = por %p195, %p196
      %p198 = scmp.ne.s32.totalorder %s186, %s187
      %p199 = scmp.eq.s32.totalorder %s25, 1
      %p200 = por %p198, %p199
      %p202 = scmp.ne.s32.totalorder %s187, %s201
      %p203 = scmp.eq.s32.totalorder %s25, 0
      %p204 = por %p202, %p203
      %s206 = sadd.s32 %s205, 1
      %p209 = scmp.eq.s32.totalorder %s19, 1
      %p210 = scmp.ne.s32.totalorder %s205, %s207
      %p211 = scmp.eq.s32.totalorder %s19, 0
      %p212 = por %p210, %p211
      %p213 = scmp.ne.s32.totalorder %s205, %s207
      %p214 = scmp.eq.s32.totalorder %s24, 1
      %p215 = por %p213, %p214
      %p216 = scmp.ne.s32.totalorder %s207, %s208
      %p217 = scmp.eq.s32.totalorder %s24, 0
      %p218 = por %p216, %p217
      %p219 = scmp.ne.s32.totalorder %s207, %s208
      %p220 = scmp.eq.s32.totalorder %s25, 1
      %p221 = por %p219, %p220
      %p223 = scmp.ne.s32.totalorder %s208, %s222
      %p224 = scmp.eq.s32.totalorder %s25, 0
      %p225 = por %p223, %p224
      %s227 = sadd.s32 %s226, 1
      %p230 = scmp.eq.s32.totalorder %s19, 1
      %p231 = scmp.ne.s32.totalorder %s226, %s228
      %p232 = scmp.eq.s32.totalorder %s19, 0
      %p233 = por %p231, %p232
      %p234 = scmp.ne.s32.totalorder %s226, %s228
      %p235 = scmp.eq.s32.totalorder %s24, 1
      %p236 = por %p234, %p235
      %p237 = scmp.ne.s32.totalorder %s228, %s229
      %p238 = scmp.eq.s32.totalorder %s24, 0
      %p239 = por %p237, %p238
      %p240 = scmp.ne.s32.totalorder %s228, %s229
      %p241 = scmp.eq.s32.totalorder %s25, 1
      %p242 = por %p240, %p241
      %p244 = scmp.ne.s32.totalorder %s229, %s243
      %p245 = scmp.eq.s32.totalorder %s25, 0
      %p246 = por %p244, %p245
      %s247 = ssub.s32 %s19, %s26
      %p248 = scmp.eq.s32.totalorder %s247, 0
      %s250 = sadd.s32 %s249, 1
      %s251 = scalar_select %p248, %s249, %s250
      %p254 = pneg %p248
      %p255 = scmp.eq.s32.totalorder %s19, 1
      %p256 = por %p254, %p255
      %p257 = scmp.ne.s32.totalorder %s249, %s252
      %p258 = scmp.eq.s32.totalorder %s19, 0
      %p259 = por %p257, %p258
      %p260 = scmp.ne.s32.totalorder %s249, %s252
      %p261 = scmp.eq.s32.totalorder %s24, 1
      %p262 = por %p260, %p261
      %p263 = scmp.ne.s32.totalorder %s252, %s253
      %p264 = scmp.eq.s32.totalorder %s24, 0
      %p265 = por %p263, %p264
      %p266 = scmp.ne.s32.totalorder %s252, %s253
      %p267 = scmp.eq.s32.totalorder %s25, 1
      %p268 = por %p266, %p267
      %p270 = scmp.ne.s32.totalorder %s253, %s269
      %p271 = scmp.eq.s32.totalorder %s25, 0
      %p272 = por %p270, %p271
      %p273 = scmp.le.s32.totalorder 1, %s19
      %p274 = scmp.lt.s32.totalorder %s19, 3
      %p275 = pnand %p273, %p274
      %p276 = pneg %p275
      // Predicated region
      $region9: #{backend_forward.5} parent=5 // pred_check
        _
      $region10: #{backend_forward.5} parent=5 // pred_check_branch
        %278 = sbr.rel (%p275) target = $region12
      $region11: #{backend_forward.5} parent=5 // pred_region
        %s279 = ssub.s32 %s19, 1
        // Predicated region
        $region13: #{backend_forward.5} parent=11 // pred_check
          %p280 = pneg %p92
        $region14: #{backend_forward.5} parent=11 // pred_check_branch
          %282 = sbr.rel (%p280) target = $region16
        $region15: #{backend_forward.5} parent=11 // pred_region
          _
        $region16: #{backend_forward.5} parent=11 // pred_fallthru
          _
        // Predicated region
        $region17: #{backend_forward.5} parent=11 // pred_check
          %p283 = pneg %p113
        $region18: #{backend_forward.5} parent=11 // pred_check_branch
          %285 = sbr.rel (%p283) target = $region20
        $region19: #{backend_forward.5} parent=11 // pred_region
          _
        $region20: #{backend_forward.5} parent=11 // pred_fallthru
          _
        // Predicated region
        $region21: #{backend_forward.5} parent=11 // pred_check
          %p286 = pneg %p134
        $region22: #{backend_forward.5} parent=11 // pred_check_branch
          %288 = sbr.rel (%p286) target = $region24
        $region23: #{backend_forward.5} parent=11 // pred_region
          _
        $region24: #{backend_forward.5} parent=11 // pred_fallthru
          _
        // Predicated region
        $region25: #{backend_forward.5} parent=11 // pred_check
          %p289 = pneg %p155
        $region26: #{backend_forward.5} parent=11 // pred_check_branch
          %291 = sbr.rel (%p289) target = $region28
        $region27: #{backend_forward.5} parent=11 // pred_region
          _
        $region28: #{backend_forward.5} parent=11 // pred_fallthru
          _
        // Predicated region
        $region29: #{backend_forward.5} parent=11 // pred_check
          %p292 = pneg %p176
        $region30: #{backend_forward.5} parent=11 // pred_check_branch
          %294 = sbr.rel (%p292) target = $region32
        $region31: #{backend_forward.5} parent=11 // pred_region
          _
        $region32: #{backend_forward.5} parent=11 // pred_fallthru
          _
        // Predicated region
        $region33: #{backend_forward.5} parent=11 // pred_check
          %p295 = pneg %p197
        $region34: #{backend_forward.5} parent=11 // pred_check_branch
          %297 = sbr.rel (%p295) target = $region36
        $region35: #{backend_forward.5} parent=11 // pred_region
          _
        $region36: #{backend_forward.5} parent=11 // pred_fallthru
          _
        // Predicated region
        $region37: #{backend_forward.5} parent=11 // pred_check
          %p298 = pneg %p218
        $region38: #{backend_forward.5} parent=11 // pred_check_branch
          %300 = sbr.rel (%p298) target = $region40
        $region39: #{backend_forward.5} parent=11 // pred_region
          _
        $region40: #{backend_forward.5} parent=11 // pred_fallthru
          _
        // Predicated region
        $region41: #{backend_forward.5} parent=11 // pred_check
          %p301 = pneg %p239
        $region42: #{backend_forward.5} parent=11 // pred_check_branch
          %303 = sbr.rel (%p301) target = $region44
        $region43: #{backend_forward.5} parent=11 // pred_region
          _
        $region44: #{backend_forward.5} parent=11 // pred_fallthru
          _
      $region12: #{backend_forward.5} parent=5 // pred_fallthru
        _
      %p304 = scmp.lt.s32.totalorder %s19, 2
      // Predicated region
      $region45: #{backend_forward.5} parent=5 // pred_check
        %p305 = pneg %p304
      $region46: #{backend_forward.5} parent=5 // pred_check_branch
        %307 = sbr.rel (%p305) target = $region48
      $region47: #{backend_forward.5} parent=5 // pred_region
        // Predicated region
        $region49: #{backend_forward.5} parent=47 // pred_check
          %p308 = pneg %p39
        $region50: #{backend_forward.5} parent=47 // pred_check_branch
          %310 = sbr.rel (%p308) target = $region52
        $region51: #{backend_forward.5} parent=47 // pred_region
          %p311 = scmp.lt.s32.totalorder %s19, 1
          %s312 = scalar_select %p311, %s19, 1
          %s313 = smul.addr %s312, 8
          %s314 = smul.addr %s313, 8
          %s315 = scalar_lea.vmem %s0, %s314
        $region52: #{backend_forward.5} parent=47 // pred_fallthru
          _
        // Predicated region
        $region53: #{backend_forward.5} parent=47 // pred_check
          %p316 = pneg %p65
        $region54: #{backend_forward.5} parent=47 // pred_check_branch
          %318 = sbr.rel (%p316) target = $region56
        $region55: #{backend_forward.5} parent=47 // pred_region
          %p319 = scmp.lt.s32.totalorder %s19, 1
          %s320 = scalar_select %p319, %s19, 1
          %s321 = smul.addr %s320, 32
          %s322 = smul.addr %s321, 8
          %s323 = scalar_lea.vmem %s1, %s322
        $region56: #{backend_forward.5} parent=47 // pred_fallthru
          _
      $region48: #{backend_forward.5} parent=5 // pred_fallthru
        _
      %p324 = scmp.le.s32.totalorder 1, %s19
      %p325 = scmp.lt.s32.totalorder %s19, 3
      %p326 = pnand %p324, %p325
      %p327 = pneg %p326
      // Predicated region
      $region57: #{backend_forward.5} parent=5 // pred_check
        _
      $region58: #{backend_forward.5} parent=5 // pred_check_branch
        %329 = sbr.rel (%p326) target = $region60
      $region59: #{backend_forward.5} parent=5 // pred_region
        %s330 = ssub.s32 %s19, 1
        %p331 = scmp.lt.s32.totalorder %s24, 1
        %s332 = scalar_select %p331, %s24, 1
        %s333 = smul.addr %s332, 8
        %s334 = smul.addr %s333, 8
        %s335 = scalar_lea.vmem %s0, %s334
        %p336 = pneg %p45
        %p337 = pneg %p42
        %p338 = scmp.lt.s32.totalorder %s24, 1
        %s339 = scalar_select %p338, %s24, 1
        %s340 = smul.addr %s339, 32
        %s341 = smul.addr %s340, 8
        %s342 = scalar_lea.vmem %s1, %s341
        %p343 = pneg %p71
        %p344 = pneg %p68
        %p345 = pneg %p92
        %p346 = pneg %p89
        %p347 = pneg %p113
        %p348 = pneg %p110
        %p349 = pneg %p134
        %p350 = pneg %p131
        %p351 = pneg %p155
        %p352 = pneg %p152
        %p353 = pneg %p176
        %p354 = pneg %p173
        %p355 = pneg %p197
        %p356 = pneg %p194
        %p357 = pneg %p218
        %p358 = pneg %p215
        %p359 = pneg %p239
        %p360 = pneg %p236
        %p361 = pneg %p265
        %p362 = pneg %p262
        %s363 = sand.u32 %s252, 1
        %s364 = scalar_lea.sflag [#allocation4], %s363
        %s365 = sand.u32 %s252, 1
        %s366 = smul.addr %s365, 256
        %s367 = scalar_lea.vmem [#allocation3], %s366
        %p368 = scmp.lt.s32.totalorder %s24, 1
        %s369 = scalar_select %p368, %s24, 1
        %s370 = smul.addr %s369, 8
        %s371 = smul.addr %s370, 8
        %s372 = scalar_lea.vmem %s0, %s371
        %p373 = scmp.lt.s32.totalorder %s24, 1
        %s374 = scalar_select %p373, %s24, 1
        %s375 = smul.addr %s374, 32
        %s376 = smul.addr %s375, 8
        %s377 = scalar_lea.vmem %s1, %s376
        %v379 = vld [vmem:[%s372] sm:$0xff]
        %v380 = vld [vmem:[%s372 + $0x8] sm:$0xff]
        %v381 = vld [vmem:[%s372 + $0x10] sm:$0xff]
        %v382 = vld [vmem:[%s372 + $0x18] sm:$0xff]
        %v383 = vld [vmem:[%s372 + $0x20] sm:$0xff]
        %v384 = vld [vmem:[%s372 + $0x28] sm:$0xff]
        %v385 = vld [vmem:[%s372 + $0x30] sm:$0xff]
        %v386 = vld [vmem:[%s372 + $0x38] sm:$0xff]
        %v387 = vpack.c.bf16 %v380, %v379
        %v388 = vpack.c.bf16 %v382, %v381
        %v389 = vpack.c.bf16 %v384, %v383
        %v390 = vpack.c.bf16 %v386, %v385
        %v391 = vld [vmem:[%s5] sm:$0xf]
        %v392 = vld [vmem:[%s5 + $0x4] sm:$0xf]
        %v393 = vld [vmem:[%s5 + $0x8] sm:$0xf]
        %v394 = vld [vmem:[%s5 + $0xc] sm:$0xf]
        %v395 = vld [vmem:[%s5 + $0x10] sm:$0xf]
        %v396 = vld [vmem:[%s5 + $0x14] sm:$0xf]
        %v397 = vld [vmem:[%s5 + $0x18] sm:$0xf]
        %v398 = vld [vmem:[%s5 + $0x1c] sm:$0xf]
        %v399 = vld [vmem:[%s5 + $0x20] sm:$0xf]
        %v400 = vld [vmem:[%s5 + $0x24] sm:$0xf]
        %v401 = vld [vmem:[%s5 + $0x28] sm:$0xf]
        %v402 = vld [vmem:[%s5 + $0x2c] sm:$0xf]
        %v403 = vld [vmem:[%s5 + $0x30] sm:$0xf]
        %v404 = vld [vmem:[%s5 + $0x34] sm:$0xf]
        %v405 = vld [vmem:[%s5 + $0x38] sm:$0xf]
        %v406 = vld [vmem:[%s5 + $0x3c] sm:$0xf]
        %v423 = vunpack.c.l.b16 %v391
        %v424 = vunpack.c.l.b16 %v392
        %v425 = vunpack.c.l.b16 %v393
        %v426 = vunpack.c.l.b16 %v394
        %v427 = vunpack.c.l.b16 %v395
        %v428 = vunpack.c.l.b16 %v396
        %v429 = vunpack.c.l.b16 %v397
        %v430 = vunpack.c.l.b16 %v398
        %v431 = vunpack.c.l.b16 %v399
        %v432 = vunpack.c.l.b16 %v400
        %v433 = vunpack.c.l.b16 %v401
        %v434 = vunpack.c.l.b16 %v402
        %v435 = vunpack.c.l.b16 %v403
        %v436 = vunpack.c.l.b16 %v404
        %v437 = vunpack.c.l.b16 %v405
        %v438 = vunpack.c.l.b16 %v406
        %v439 = vpack.c.b16 %v424, %v423
        %v440 = vpack.c.b16 %v426, %v425
        %v441 = vpack.c.b16 %v428, %v427
        %v442 = vpack.c.b16 %v430, %v429
        %v443 = vpack.c.b16 %v432, %v431
        %v444 = vpack.c.b16 %v434, %v433
        %v445 = vpack.c.b16 %v436, %v435
        %v446 = vpack.c.b16 %v438, %v437
        %455 = vmatprep.subr.bf16.mxu0 0
        %456 = vmatpush1.bf16.msra.mxu0 %v446
        %457 = vmatprep.subr.bf16.mxu0 0
        %458 = vmatpush1.bf16.msra.mxu0 %v445
        %459 = vmatprep.subr.bf16.mxu0 0
        %460 = vmatpush1.bf16.msra.mxu0 %v444
        %461 = vmatprep.subr.bf16.mxu0 0
        %462 = vmatpush1.bf16.msra.mxu0 %v443
        %463 = vmatprep.subr.bf16.mxu0 0
        %464 = vmatpush1.bf16.msra.mxu0 %v442
        %465 = vmatprep.subr.bf16.mxu0 0
        %466 = vmatpush1.bf16.msra.mxu0 %v441
        %467 = vmatprep.subr.bf16.mxu0 0
        %468 = vmatpush1.bf16.msra.mxu0 %v440
        %469 = vmatprep.subr.bf16.mxu0 0
        %470 = vmatpush1.bf16.msra.mxu0 %v439
        %471 = vmatprep.subr.bf16.mxu0 0
        %472 = vmatpush2.bf16.msra.mxu0 0
        %473 = vmatprep.subr.bf16.mxu0 0
        %474 = vmatpush2.bf16.msra.mxu0 0
        %475 = vmatprep.subr.bf16.mxu0 0
        %476 = vmatpush2.bf16.msra.mxu0 0
        %477 = vmatprep.subr.bf16.mxu0 0
        %478 = vmatpush2.bf16.msra.mxu0 0
        %479 = vmatprep.subr.bf16.mxu0 0
        %480 = vmatpush2.bf16.msra.mxu0 0
        %481 = vmatprep.subr.bf16.mxu0 0
        %482 = vmatpush2.bf16.msra.mxu0 0
        %483 = vmatprep.subr.bf16.mxu0 0
        %484 = vmatpush2.bf16.msra.mxu0 0
        %485 = vmatprep.subr.bf16.mxu0 0
        %486 = vmatpush2.bf16.msra.mxu0 0
        %487 = vmatprep.mubr.bf16.mxu0 0
        %488 = vmatmul.mubr.bf16.gmra.mxu0 %v387
        %v489 = vpop.f32.mrf.mxu0
        %v490 = vadd.f32 0.0, %v489
        %v491 = vpop.f32.mrf.mxu0
        %v492 = vpop.f32.mrf.mxu0
        %v493 = vadd.f32 0.0, %v492
        %v494 = vpop.f32.mrf.mxu0
        %495 = vmatprep.mubr.bf16.mxu0 0
        %496 = vmatmul.mubr.bf16.gmra.mxu0 %v388
        %v497 = vpop.f32.mrf.mxu0
        %v498 = vadd.f32 0.0, %v497
        %v499 = vpop.f32.mrf.mxu0
        %v500 = vpop.f32.mrf.mxu0
        %v501 = vadd.f32 0.0, %v500
        %v502 = vpop.f32.mrf.mxu0
        %503 = vmatprep.mubr.bf16.mxu0 0
        %504 = vmatmul.mubr.bf16.gmra.mxu0 %v389
        %v505 = vpop.f32.mrf.mxu0
        %v506 = vadd.f32 0.0, %v505
        %v507 = vpop.f32.mrf.mxu0
        %v508 = vpop.f32.mrf.mxu0
        %v509 = vadd.f32 0.0, %v508
        %v510 = vpop.f32.mrf.mxu0
        %511 = vmatprep.mubr.bf16.mxu0 0
        %512 = vmatmul.mubr.bf16.gmra.mxu0 %v390
        %v513 = vpop.f32.mrf.mxu0
        %v514 = vadd.f32 0.0, %v513
        %v515 = vpop.f32.mrf.mxu0
        %v516 = vpop.f32.mrf.mxu0
        %v517 = vadd.f32 0.0, %v516
        %v518 = vpop.f32.mrf.mxu0
        %519 = vdwg.mxu0
        %v520 = vld [vmem:[%s2] sm:$0xff]
        %v521 = vld [vmem:[%s2 + $0x8] sm:$0xff]
        %v522 = vld [vmem:[%s2 + $0x10] sm:$0xff]
        %v523 = vld [vmem:[%s2 + $0x18] sm:$0xff]
        %v524 = vld [vmem:[%s2 + $0x20] sm:$0xff]
        %v525 = vld [vmem:[%s2 + $0x28] sm:$0xff]
        %v526 = vld [vmem:[%s2 + $0x30] sm:$0xff]
        %v527 = vld [vmem:[%s2 + $0x38] sm:$0xff]
        %v528 = vld [vmem:[%s2 + $0x40] sm:$0xff]
        %v529 = vld [vmem:[%s2 + $0x48] sm:$0xff]
        %v530 = vld [vmem:[%s2 + $0x50] sm:$0xff]
        %v531 = vld [vmem:[%s2 + $0x58] sm:$0xff]
        %v532 = vld [vmem:[%s2 + $0x60] sm:$0xff]
        %v533 = vld [vmem:[%s2 + $0x68] sm:$0xff]
        %v534 = vld [vmem:[%s2 + $0x70] sm:$0xff]
        %v535 = vld [vmem:[%s2 + $0x78] sm:$0xff]
        %v536 = vld [vmem:[%s2 + $0x80] sm:$0xff]
        %v537 = vld [vmem:[%s2 + $0x88] sm:$0xff]
        %v538 = vld [vmem:[%s2 + $0x90] sm:$0xff]
        %v539 = vld [vmem:[%s2 + $0x98] sm:$0xff]
        %v540 = vld [vmem:[%s2 + $0xa0] sm:$0xff]
        %v541 = vld [vmem:[%s2 + $0xa8] sm:$0xff]
        %v542 = vld [vmem:[%s2 + $0xb0] sm:$0xff]
        %v543 = vld [vmem:[%s2 + $0xb8] sm:$0xff]
        %v544 = vld [vmem:[%s2 + $0xc0] sm:$0xff]
        %v545 = vld [vmem:[%s2 + $0xc8] sm:$0xff]
        %v546 = vld [vmem:[%s2 + $0xd0] sm:$0xff]
        %v547 = vld [vmem:[%s2 + $0xd8] sm:$0xff]
        %v548 = vld [vmem:[%s2 + $0xe0] sm:$0xff]
        %v549 = vld [vmem:[%s2 + $0xe8] sm:$0xff]
        %v550 = vld [vmem:[%s2 + $0xf0] sm:$0xff]
        %v551 = vld [vmem:[%s2 + $0xf8] sm:$0xff]
        %v552 = vld [vmem:[%s377] sm:$0xff]
        %v553 = vld [vmem:[%s377 + $0x8] sm:$0xff]
        %v554 = vld [vmem:[%s377 + $0x10] sm:$0xff]
        %v555 = vld [vmem:[%s377 + $0x18] sm:$0xff]
        %v556 = vld [vmem:[%s377 + $0x20] sm:$0xff]
        %v557 = vld [vmem:[%s377 + $0x28] sm:$0xff]
        %v558 = vld [vmem:[%s377 + $0x30] sm:$0xff]
        %v559 = vld [vmem:[%s377 + $0x38] sm:$0xff]
        %v560 = vld [vmem:[%s377 + $0x40] sm:$0xff]
        %v561 = vld [vmem:[%s377 + $0x48] sm:$0xff]
        %v562 = vld [vmem:[%s377 + $0x50] sm:$0xff]
        %v563 = vld [vmem:[%s377 + $0x58] sm:$0xff]
        %v564 = vld [vmem:[%s377 + $0x60] sm:$0xff]
        %v565 = vld [vmem:[%s377 + $0x68] sm:$0xff]
        %v566 = vld [vmem:[%s377 + $0x70] sm:$0xff]
        %v567 = vld [vmem:[%s377 + $0x78] sm:$0xff]
        %v568 = vld [vmem:[%s377 + $0x80] sm:$0xff]
        %v569 = vld [vmem:[%s377 + $0x88] sm:$0xff]
        %v570 = vld [vmem:[%s377 + $0x90] sm:$0xff]
        %v571 = vld [vmem:[%s377 + $0x98] sm:$0xff]
        %v572 = vld [vmem:[%s377 + $0xa0] sm:$0xff]
        %v573 = vld [vmem:[%s377 + $0xa8] sm:$0xff]
        %v574 = vld [vmem:[%s377 + $0xb0] sm:$0xff]
        %v575 = vld [vmem:[%s377 + $0xb8] sm:$0xff]
        %v576 = vld [vmem:[%s377 + $0xc0] sm:$0xff]
        %v577 = vld [vmem:[%s377 + $0xc8] sm:$0xff]
        %v578 = vld [vmem:[%s377 + $0xd0] sm:$0xff]
        %v579 = vld [vmem:[%s377 + $0xd8] sm:$0xff]
        %v580 = vld [vmem:[%s377 + $0xe0] sm:$0xff]
        %v581 = vld [vmem:[%s377 + $0xe8] sm:$0xff]
        %v582 = vld [vmem:[%s377 + $0xf0] sm:$0xff]
        %v583 = vld [vmem:[%s377 + $0xf8] sm:$0xff]
        %v584 = vpack.c.bf16 %v553, %v552
        %v585 = vpack.c.bf16 %v555, %v554
        %v586 = vpack.c.bf16 %v557, %v556
        %v587 = vpack.c.bf16 %v559, %v558
        %v588 = vpack.c.bf16 %v561, %v560
        %v589 = vpack.c.bf16 %v563, %v562
        %v590 = vpack.c.bf16 %v565, %v564
        %v591 = vpack.c.bf16 %v567, %v566
        %v592 = vpack.c.bf16 %v569, %v568
        %v593 = vpack.c.bf16 %v571, %v570
        %v594 = vpack.c.bf16 %v573, %v572
        %v595 = vpack.c.bf16 %v575, %v574
        %v596 = vpack.c.bf16 %v577, %v576
        %v597 = vpack.c.bf16 %v579, %v578
        %v598 = vpack.c.bf16 %v581, %v580
        %v599 = vpack.c.bf16 %v583, %v582
        %v600 = vld [vmem:[%s6] sm:$0xf]
        %v601 = vld [vmem:[%s6 + $0x4] sm:$0xf]
        %v602 = vld [vmem:[%s6 + $0x8] sm:$0xf]
        %v603 = vld [vmem:[%s6 + $0xc] sm:$0xf]
        %v604 = vld [vmem:[%s6 + $0x10] sm:$0xf]
        %v605 = vld [vmem:[%s6 + $0x14] sm:$0xf]
        %v606 = vld [vmem:[%s6 + $0x18] sm:$0xf]
        %v607 = vld [vmem:[%s6 + $0x1c] sm:$0xf]
        %v608 = vld [vmem:[%s6 + $0x20] sm:$0xf]
        %v609 = vld [vmem:[%s6 + $0x24] sm:$0xf]
        %v610 = vld [vmem:[%s6 + $0x28] sm:$0xf]
        %v611 = vld [vmem:[%s6 + $0x2c] sm:$0xf]
        %v612 = vld [vmem:[%s6 + $0x30] sm:$0xf]
        %v613 = vld [vmem:[%s6 + $0x34] sm:$0xf]
        %v614 = vld [vmem:[%s6 + $0x38] sm:$0xf]
        %v615 = vld [vmem:[%s6 + $0x3c] sm:$0xf]
        %v632 = vunpack.c.l.b16 %v600
        %v633 = vunpack.c.l.b16 %v601
        %v634 = vunpack.c.l.b16 %v602
        %v635 = vunpack.c.l.b16 %v603
        %v636 = vunpack.c.l.b16 %v604
        %v637 = vunpack.c.l.b16 %v605
        %v638 = vunpack.c.l.b16 %v606
        %v639 = vunpack.c.l.b16 %v607
        %v640 = vunpack.c.l.b16 %v608
        %v641 = vunpack.c.l.b16 %v609
        %v642 = vunpack.c.l.b16 %v610
        %v643 = vunpack.c.l.b16 %v611
        %v644 = vunpack.c.l.b16 %v612
        %v645 = vunpack.c.l.b16 %v613
        %v646 = vunpack.c.l.b16 %v614
        %v647 = vunpack.c.l.b16 %v615
        %v648 = vpack.c.b16 %v633, %v632
        %v649 = vpack.c.b16 %v635, %v634
        %v650 = vpack.c.b16 %v637, %v636
        %v651 = vpack.c.b16 %v639, %v638
        %v652 = vpack.c.b16 %v641, %v640
        %v653 = vpack.c.b16 %v643, %v642
        %v654 = vpack.c.b16 %v645, %v644
        %v655 = vpack.c.b16 %v647, %v646
        %664 = vmatprep.subr.bf16.mxu0 0
        %665 = vmatpush1.bf16.msra.mxu0 %v655
        %666 = vmatprep.subr.bf16.mxu0 0
        %667 = vmatpush1.bf16.msra.mxu0 %v654
        %668 = vmatprep.subr.bf16.mxu0 0
        %669 = vmatpush1.bf16.msra.mxu0 %v653
        %670 = vmatprep.subr.bf16.mxu0 0
        %671 = vmatpush1.bf16.msra.mxu0 %v652
        %672 = vmatprep.subr.bf16.mxu0 0
        %673 = vmatpush1.bf16.msra.mxu0 %v651
        %674 = vmatprep.subr.bf16.mxu0 0
        %675 = vmatpush1.bf16.msra.mxu0 %v650
        %676 = vmatprep.subr.bf16.mxu0 0
        %677 = vmatpush1.bf16.msra.mxu0 %v649
        %678 = vmatprep.subr.bf16.mxu0 0
        %679 = vmatpush1.bf16.msra.mxu0 %v648
        %680 = vmatprep.subr.bf16.mxu0 0
        %681 = vmatpush2.bf16.msra.mxu0 0
        %682 = vmatprep.subr.bf16.mxu0 0
        %683 = vmatpush2.bf16.msra.mxu0 0
        %684 = vmatprep.subr.bf16.mxu0 0
        %685 = vmatpush2.bf16.msra.mxu0 0
        %686 = vmatprep.subr.bf16.mxu0 0
        %687 = vmatpush2.bf16.msra.mxu0 0
        %688 = vmatprep.subr.bf16.mxu0 0
        %689 = vmatpush2.bf16.msra.mxu0 0
        %690 = vmatprep.subr.bf16.mxu0 0
        %691 = vmatpush2.bf16.msra.mxu0 0
        %692 = vmatprep.subr.bf16.mxu0 0
        %693 = vmatpush2.bf16.msra.mxu0 0
        %694 = vmatprep.subr.bf16.mxu0 0
        %695 = vmatpush2.bf16.msra.mxu0 0
        %696 = vmatprep.mubr.bf16.mxu0 0
        %697 = vmatmul.mubr.bf16.gmra.mxu0 %v584
        %v698 = vpop.f32.mrf.mxu0
        %v699 = vadd.f32 0.0, %v698
        %v700 = vpop.f32.mrf.mxu0
        %v701 = vpop.f32.mrf.mxu0
        %v702 = vadd.f32 0.0, %v701
        %v703 = vpop.f32.mrf.mxu0
        %704 = vmatprep.mubr.bf16.mxu0 0
        %705 = vmatmul.mubr.bf16.gmra.mxu0 %v585
        %v706 = vpop.f32.mrf.mxu0
        %v707 = vadd.f32 0.0, %v706
        %v708 = vpop.f32.mrf.mxu0
        %v709 = vpop.f32.mrf.mxu0
        %v710 = vadd.f32 0.0, %v709
        %v711 = vpop.f32.mrf.mxu0
        %712 = vmatprep.mubr.bf16.mxu0 0
        %713 = vmatmul.mubr.bf16.gmra.mxu0 %v586
        %v714 = vpop.f32.mrf.mxu0
        %v715 = vadd.f32 0.0, %v714
        %v716 = vpop.f32.mrf.mxu0
        %v717 = vpop.f32.mrf.mxu0
        %v718 = vadd.f32 0.0, %v717
        %v719 = vpop.f32.mrf.mxu0
        %720 = vmatprep.mubr.bf16.mxu0 0
        %721 = vmatmul.mubr.bf16.gmra.mxu0 %v587
        %v722 = vpop.f32.mrf.mxu0
        %v723 = vadd.f32 0.0, %v722
        %v724 = vpop.f32.mrf.mxu0
        %v725 = vpop.f32.mrf.mxu0
        %v726 = vadd.f32 0.0, %v725
        %v727 = vpop.f32.mrf.mxu0
        %728 = vmatprep.mubr.bf16.mxu0 0
        %729 = vmatmul.mubr.bf16.gmra.mxu0 %v588
        %v730 = vpop.f32.mrf.mxu0
        %v731 = vadd.f32 0.0, %v730
        %v732 = vpop.f32.mrf.mxu0
        %v733 = vpop.f32.mrf.mxu0
        %v734 = vadd.f32 0.0, %v733
        %v735 = vpop.f32.mrf.mxu0
        %736 = vmatprep.mubr.bf16.mxu0 0
        %737 = vmatmul.mubr.bf16.gmra.mxu0 %v589
        %v738 = vpop.f32.mrf.mxu0
        %v739 = vadd.f32 0.0, %v738
        %v740 = vpop.f32.mrf.mxu0
        %v741 = vpop.f32.mrf.mxu0
        %v742 = vadd.f32 0.0, %v741
        %v743 = vpop.f32.mrf.mxu0
        %744 = vmatprep.mubr.bf16.mxu0 0
        %745 = vmatmul.mubr.bf16.gmra.mxu0 %v590
        %v746 = vpop.f32.mrf.mxu0
        %v747 = vadd.f32 0.0, %v746
        %v748 = vpop.f32.mrf.mxu0
        %v749 = vpop.f32.mrf.mxu0
        %v750 = vadd.f32 0.0, %v749
        %v751 = vpop.f32.mrf.mxu0
        %752 = vmatprep.mubr.bf16.mxu0 0
        %753 = vmatmul.mubr.bf16.gmra.mxu0 %v591
        %v754 = vpop.f32.mrf.mxu0
        %v755 = vadd.f32 0.0, %v754
        %v756 = vpop.f32.mrf.mxu0
        %v757 = vpop.f32.mrf.mxu0
        %v758 = vadd.f32 0.0, %v757
        %v759 = vpop.f32.mrf.mxu0
        %760 = vmatprep.mubr.bf16.mxu0 0
        %761 = vmatmul.mubr.bf16.gmra.mxu0 %v592
        %v762 = vpop.f32.mrf.mxu0
        %v763 = vadd.f32 0.0, %v762
        %v764 = vpop.f32.mrf.mxu0
        %v765 = vpop.f32.mrf.mxu0
        %v766 = vadd.f32 0.0, %v765
        %v767 = vpop.f32.mrf.mxu0
        %768 = vmatprep.mubr.bf16.mxu0 0
        %769 = vmatmul.mubr.bf16.gmra.mxu0 %v593
        %v770 = vpop.f32.mrf.mxu0
        %v771 = vadd.f32 0.0, %v770
        %v772 = vpop.f32.mrf.mxu0
        %v773 = vpop.f32.mrf.mxu0
        %v774 = vadd.f32 0.0, %v773
        %v775 = vpop.f32.mrf.mxu0
        %776 = vmatprep.mubr.bf16.mxu0 0
        %777 = vmatmul.mubr.bf16.gmra.mxu0 %v594
        %v778 = vpop.f32.mrf.mxu0
        %v779 = vadd.f32 0.0, %v778
        %v780 = vpop.f32.mrf.mxu0
        %v781 = vpop.f32.mrf.mxu0
        %v782 = vadd.f32 0.0, %v781
        %v783 = vpop.f32.mrf.mxu0
        %784 = vmatprep.mubr.bf16.mxu0 0
        %785 = vmatmul.mubr.bf16.gmra.mxu0 %v595
        %v786 = vpop.f32.mrf.mxu0
        %v787 = vadd.f32 0.0, %v786
        %v788 = vpop.f32.mrf.mxu0
        %v789 = vpop.f32.mrf.mxu0
        %v790 = vadd.f32 0.0, %v789
        %v791 = vpop.f32.mrf.mxu0
        %792 = vmatprep.mubr.bf16.mxu0 0
        %793 = vmatmul.mubr.bf16.gmra.mxu0 %v596
        %v794 = vpop.f32.mrf.mxu0
        %v795 = vadd.f32 0.0, %v794
        %v796 = vpop.f32.mrf.mxu0
        %v797 = vpop.f32.mrf.mxu0
        %v798 = vadd.f32 0.0, %v797
        %v799 = vpop.f32.mrf.mxu0
        %800 = vmatprep.mubr.bf16.mxu0 0
        %801 = vmatmul.mubr.bf16.gmra.mxu0 %v597
        %v802 = vpop.f32.mrf.mxu0
        %v803 = vadd.f32 0.0, %v802
        %v804 = vpop.f32.mrf.mxu0
        %v805 = vpop.f32.mrf.mxu0
        %v806 = vadd.f32 0.0, %v805
        %v807 = vpop.f32.mrf.mxu0
        %808 = vmatprep.mubr.bf16.mxu0 0
        %809 = vmatmul.mubr.bf16.gmra.mxu0 %v598
        %v810 = vpop.f32.mrf.mxu0
        %v811 = vadd.f32 0.0, %v810
        %v812 = vpop.f32.mrf.mxu0
        %v813 = vpop.f32.mrf.mxu0
        %v814 = vadd.f32 0.0, %v813
        %v815 = vpop.f32.mrf.mxu0
        %816 = vmatprep.mubr.bf16.mxu0 0
        %817 = vmatmul.mubr.bf16.gmra.mxu0 %v599
        %v818 = vpop.f32.mrf.mxu0
        %v819 = vadd.f32 0.0, %v818
        %v820 = vpop.f32.mrf.mxu0
        %v821 = vpop.f32.mrf.mxu0
        %v822 = vadd.f32 0.0, %v821
        %v823 = vpop.f32.mrf.mxu0
        %824 = vdwg.mxu0
        %vm825 = vcmask 523264
        %v827 = vsel %vm825, %v520, 0
        %v830 = vsel %vm825, %v521, 0
        %v833 = vsel %vm825, %v522, 0
        %v836 = vsel %vm825, %v523, 0
        %v839 = vsel %vm825, %v524, 0
        %v842 = vsel %vm825, %v525, 0
        %v845 = vsel %vm825, %v526, 0
        %v848 = vsel %vm825, %v527, 0
        %v851 = vsel %vm825, %v528, 0
        %v854 = vsel %vm825, %v529, 0
        %v857 = vsel %vm825, %v530, 0
        %v860 = vsel %vm825, %v531, 0
        %v863 = vsel %vm825, %v532, 0
        %v866 = vsel %vm825, %v533, 0
        %v869 = vsel %vm825, %v534, 0
        %v872 = vsel %vm825, %v535, 0
        %v875 = vsel %vm825, %v536, 0
        %v878 = vsel %vm825, %v537, 0
        %v881 = vsel %vm825, %v538, 0
        %v884 = vsel %vm825, %v539, 0
        %v887 = vsel %vm825, %v540, 0
        %v890 = vsel %vm825, %v541, 0
        %v893 = vsel %vm825, %v542, 0
        %v896 = vsel %vm825, %v543, 0
        %v899 = vsel %vm825, %v544, 0
        %v902 = vsel %vm825, %v545, 0
        %v905 = vsel %vm825, %v546, 0
        %v908 = vsel %vm825, %v547, 0
        %v911 = vsel %vm825, %v548, 0
        %v914 = vsel %vm825, %v549, 0
        %v917 = vsel %vm825, %v550, 0
        %v920 = vsel %vm825, %v551, 0
        %922 = vmatprep.subr.mxu0 0.0
        %923 = vmatpush1.msra.mxu0 0.0
        %924 = vmatprep.subr.mxu0 0.0
        %925 = vmatpush1.msra.mxu0 0.0
        %926 = vmatprep.subr.mxu0 0.0
        %927 = vmatpush1.msra.mxu0 0.0
        %928 = vmatprep.subr.mxu0 0.0
        %929 = vmatpush1.msra.mxu0 0.0
        %930 = vmatprep.subr.mxu0 0.0
        %931 = vmatpush1.msra.mxu0 0.0
        %932 = vmatprep.subr.mxu0 0.0
        %933 = vmatpush1.msra.mxu0 0.0
        %934 = vmatprep.subr.mxu0 0.0
        %935 = vmatpush1.msra.mxu0 0.0
        %936 = vmatprep.subr.mxu0 0.0
        %937 = vmatpush1.msra.mxu0 0.0
        %938 = vmatprep.subr.mxu0 0.0
        %939 = vmatpush1.msra.mxu0 %v517
        %940 = vmatprep.subr.mxu0 0.0
        %941 = vmatpush1.msra.mxu0 %v514
        %942 = vmatprep.subr.mxu0 0.0
        %943 = vmatpush1.msra.mxu0 %v509
        %944 = vmatprep.subr.mxu0 0.0
        %945 = vmatpush1.msra.mxu0 %v506
        %946 = vmatprep.subr.mxu0 0.0
        %947 = vmatpush1.msra.mxu0 %v501
        %948 = vmatprep.subr.mxu0 0.0
        %949 = vmatpush1.msra.mxu0 %v498
        %950 = vmatprep.subr.mxu0 0.0
        %951 = vmatpush1.msra.mxu0 %v493
        %952 = vmatprep.subr.mxu0 0.0
        %953 = vmatpush1.msra.mxu0 %v490
        %954 = vmatprep.subr.mxu0 0.0
        %955 = vmatpush2.msra.mxu0 0.0
        %956 = vmatprep.subr.mxu0 0.0
        %957 = vmatpush2.msra.mxu0 0.0
        %958 = vmatprep.subr.mxu0 0.0
        %959 = vmatpush2.msra.mxu0 0.0
        %960 = vmatprep.subr.mxu0 0.0
        %961 = vmatpush2.msra.mxu0 0.0
        %962 = vmatprep.subr.mxu0 0.0
        %963 = vmatpush2.msra.mxu0 0.0
        %964 = vmatprep.subr.mxu0 0.0
        %965 = vmatpush2.msra.mxu0 0.0
        %966 = vmatprep.subr.mxu0 0.0
        %967 = vmatpush2.msra.mxu0 0.0
        %968 = vmatprep.subr.mxu0 0.0
        %969 = vmatpush2.msra.mxu0 0.0
        %970 = vmatprep.subr.mxu0 0.0
        %971 = vmatpush2.msra.mxu0 0.0
        %972 = vmatprep.subr.mxu0 0.0
        %973 = vmatpush2.msra.mxu0 0.0
        %974 = vmatprep.subr.mxu0 0.0
        %975 = vmatpush2.msra.mxu0 0.0
        %976 = vmatprep.subr.mxu0 0.0
        %977 = vmatpush2.msra.mxu0 0.0
        %978 = vmatprep.subr.mxu0 0.0
        %979 = vmatpush2.msra.mxu0 0.0
        %980 = vmatprep.subr.mxu0 0.0
        %981 = vmatpush2.msra.mxu0 0.0
        %982 = vmatprep.subr.mxu0 0.0
        %983 = vmatpush2.msra.mxu0 0.0
        %984 = vmatprep.subr.mxu0 0.0
        %985 = vmatpush2.msra.mxu0 0.0
        %986 = vmatprep.mubr.f32.mxu0 0.0
        %987 = vmatmul.mubr.f32.gmra.mxu0 %v827
        %v988 = vpop.f32.mrf.mxu0
        %v989 = vadd.f32 %v699, %v988
        %v990 = vpop.f32.mrf.mxu0
        %991 = vmatprep.mubr.f32.mxu0 0.0
        %992 = vmatmul.mubr.f32.gmra.mxu0 %v830
        %v993 = vpop.f32.mrf.mxu0
        %v994 = vadd.f32 %v702, %v993
        %v995 = vpop.f32.mrf.mxu0
        %996 = vmatprep.mubr.f32.mxu0 0.0
        %997 = vmatmul.mubr.f32.gmra.mxu0 %v833
        %v998 = vpop.f32.mrf.mxu0
        %v999 = vadd.f32 %v707, %v998
        %v1000 = vpop.f32.mrf.mxu0
        %1001 = vmatprep.mubr.f32.mxu0 0.0
        %1002 = vmatmul.mubr.f32.gmra.mxu0 %v836
        %v1003 = vpop.f32.mrf.mxu0
        %v1004 = vadd.f32 %v710, %v1003
        %v1005 = vpop.f32.mrf.mxu0
        %1006 = vmatprep.mubr.f32.mxu0 0.0
        %1007 = vmatmul.mubr.f32.gmra.mxu0 %v839
        %v1008 = vpop.f32.mrf.mxu0
        %v1009 = vadd.f32 %v715, %v1008
        %v1010 = vpop.f32.mrf.mxu0
        %1011 = vmatprep.mubr.f32.mxu0 0.0
        %1012 = vmatmul.mubr.f32.gmra.mxu0 %v842
        %v1013 = vpop.f32.mrf.mxu0
        %v1014 = vadd.f32 %v718, %v1013
        %v1015 = vpop.f32.mrf.mxu0
        %1016 = vmatprep.mubr.f32.mxu0 0.0
        %1017 = vmatmul.mubr.f32.gmra.mxu0 %v845
        %v1018 = vpop.f32.mrf.mxu0
        %v1019 = vadd.f32 %v723, %v1018
        %v1020 = vpop.f32.mrf.mxu0
        %1021 = vmatprep.mubr.f32.mxu0 0.0
        %1022 = vmatmul.mubr.f32.gmra.mxu0 %v848
        %v1023 = vpop.f32.mrf.mxu0
        %v1024 = vadd.f32 %v726, %v1023
        %v1025 = vpop.f32.mrf.mxu0
        %1026 = vmatprep.mubr.f32.mxu0 0.0
        %1027 = vmatmul.mubr.f32.gmra.mxu0 %v851
        %v1028 = vpop.f32.mrf.mxu0
        %v1029 = vadd.f32 %v731, %v1028
        %v1030 = vpop.f32.mrf.mxu0
        %1031 = vmatprep.mubr.f32.mxu0 0.0
        %1032 = vmatmul.mubr.f32.gmra.mxu0 %v854
        %v1033 = vpop.f32.mrf.mxu0
        %v1034 = vadd.f32 %v734, %v1033
        %v1035 = vpop.f32.mrf.mxu0
        %1036 = vmatprep.mubr.f32.mxu0 0.0
        %1037 = vmatmul.mubr.f32.gmra.mxu0 %v857
        %v1038 = vpop.f32.mrf.mxu0
        %v1039 = vadd.f32 %v739, %v1038
        %v1040 = vpop.f32.mrf.mxu0
        %1041 = vmatprep.mubr.f32.mxu0 0.0
        %1042 = vmatmul.mubr.f32.gmra.mxu0 %v860
        %v1043 = vpop.f32.mrf.mxu0
        %v1044 = vadd.f32 %v742, %v1043
        %v1045 = vpop.f32.mrf.mxu0
        %1046 = vmatprep.mubr.f32.mxu0 0.0
        %1047 = vmatmul.mubr.f32.gmra.mxu0 %v863
        %v1048 = vpop.f32.mrf.mxu0
        %v1049 = vadd.f32 %v747, %v1048
        %v1050 = vpop.f32.mrf.mxu0
        %1051 = vmatprep.mubr.f32.mxu0 0.0
        %1052 = vmatmul.mubr.f32.gmra.mxu0 %v866
        %v1053 = vpop.f32.mrf.mxu0
        %v1054 = vadd.f32 %v750, %v1053
        %v1055 = vpop.f32.mrf.mxu0
        %1056 = vmatprep.mubr.f32.mxu0 0.0
        %1057 = vmatmul.mubr.f32.gmra.mxu0 %v869
        %v1058 = vpop.f32.mrf.mxu0
        %v1059 = vadd.f32 %v755, %v1058
        %v1060 = vpop.f32.mrf.mxu0
        %1061 = vmatprep.mubr.f32.mxu0 0.0
        %1062 = vmatmul.mubr.f32.gmra.mxu0 %v872
        %v1063 = vpop.f32.mrf.mxu0
        %v1064 = vadd.f32 %v758, %v1063
        %v1065 = vpop.f32.mrf.mxu0
        %1066 = vmatprep.mubr.f32.mxu0 0.0
        %1067 = vmatmul.mubr.f32.gmra.mxu0 %v875
        %v1068 = vpop.f32.mrf.mxu0
        %v1069 = vadd.f32 %v763, %v1068
        %v1070 = vpop.f32.mrf.mxu0
        %1071 = vmatprep.mubr.f32.mxu0 0.0
        %1072 = vmatmul.mubr.f32.gmra.mxu0 %v878
        %v1073 = vpop.f32.mrf.mxu0
        %v1074 = vadd.f32 %v766, %v1073
        %v1075 = vpop.f32.mrf.mxu0
        %1076 = vmatprep.mubr.f32.mxu0 0.0
        %1077 = vmatmul.mubr.f32.gmra.mxu0 %v881
        %v1078 = vpop.f32.mrf.mxu0
        %v1079 = vadd.f32 %v771, %v1078
        %v1080 = vpop.f32.mrf.mxu0
        %1081 = vmatprep.mubr.f32.mxu0 0.0
        %1082 = vmatmul.mubr.f32.gmra.mxu0 %v884
        %v1083 = vpop.f32.mrf.mxu0
        %v1084 = vadd.f32 %v774, %v1083
        %v1085 = vpop.f32.mrf.mxu0
        %1086 = vmatprep.mubr.f32.mxu0 0.0
        %1087 = vmatmul.mubr.f32.gmra.mxu0 %v887
        %v1088 = vpop.f32.mrf.mxu0
        %v1089 = vadd.f32 %v779, %v1088
        %v1090 = vpop.f32.mrf.mxu0
        %1091 = vmatprep.mubr.f32.mxu0 0.0
        %1092 = vmatmul.mubr.f32.gmra.mxu0 %v890
        %v1093 = vpop.f32.mrf.mxu0
        %v1094 = vadd.f32 %v782, %v1093
        %v1095 = vpop.f32.mrf.mxu0
        %1096 = vmatprep.mubr.f32.mxu0 0.0
        %1097 = vmatmul.mubr.f32.gmra.mxu0 %v893
        %v1098 = vpop.f32.mrf.mxu0
        %v1099 = vadd.f32 %v787, %v1098
        %v1100 = vpop.f32.mrf.mxu0
        %1101 = vmatprep.mubr.f32.mxu0 0.0
        %1102 = vmatmul.mubr.f32.gmra.mxu0 %v896
        %v1103 = vpop.f32.mrf.mxu0
        %v1104 = vadd.f32 %v790, %v1103
        %v1105 = vpop.f32.mrf.mxu0
        %1106 = vmatprep.mubr.f32.mxu0 0.0
        %1107 = vmatmul.mubr.f32.gmra.mxu0 %v899
        %v1108 = vpop.f32.mrf.mxu0
        %v1109 = vadd.f32 %v795, %v1108
        %v1110 = vpop.f32.mrf.mxu0
        %1111 = vmatprep.mubr.f32.mxu0 0.0
        %1112 = vmatmul.mubr.f32.gmra.mxu0 %v902
        %v1113 = vpop.f32.mrf.mxu0
        %v1114 = vadd.f32 %v798, %v1113
        %v1115 = vpop.f32.mrf.mxu0
        %1116 = vmatprep.mubr.f32.mxu0 0.0
        %1117 = vmatmul.mubr.f32.gmra.mxu0 %v905
        %v1118 = vpop.f32.mrf.mxu0
        %v1119 = vadd.f32 %v803, %v1118
        %v1120 = vpop.f32.mrf.mxu0
        %1121 = vmatprep.mubr.f32.mxu0 0.0
        %1122 = vmatmul.mubr.f32.gmra.mxu0 %v908
        %v1123 = vpop.f32.mrf.mxu0
        %v1124 = vadd.f32 %v806, %v1123
        %v1125 = vpop.f32.mrf.mxu0
        %1126 = vmatprep.mubr.f32.mxu0 0.0
        %1127 = vmatmul.mubr.f32.gmra.mxu0 %v911
        %v1128 = vpop.f32.mrf.mxu0
        %v1129 = vadd.f32 %v811, %v1128
        %v1130 = vpop.f32.mrf.mxu0
        %1131 = vmatprep.mubr.f32.mxu0 0.0
        %1132 = vmatmul.mubr.f32.gmra.mxu0 %v914
        %v1133 = vpop.f32.mrf.mxu0
        %v1134 = vadd.f32 %v814, %v1133
        %v1135 = vpop.f32.mrf.mxu0
        %1136 = vmatprep.mubr.f32.mxu0 0.0
        %1137 = vmatmul.mubr.f32.gmra.mxu0 %v917
        %v1138 = vpop.f32.mrf.mxu0
        %v1139 = vadd.f32 %v819, %v1138
        %v1140 = vpop.f32.mrf.mxu0
        %1141 = vmatprep.mubr.f32.mxu0 0.0
        %1142 = vmatmul.mubr.f32.gmra.mxu0 %v920
        %v1143 = vpop.f32.mrf.mxu0
        %v1144 = vadd.f32 %v822, %v1143
        %v1145 = vpop.f32.mrf.mxu0
        %1146 = vdwg.mxu0
        %v1147 = vld [vmem:[%s7] sm:$0x1]
        %v1149 = vlaneseq
        %v1150 = vshrl.u32 %v1149, 7
        %v1151 = vsub.s32 0, %v1150
        %v1152 = vrot.slane %v1147, %v1151
        %v1154 = vadd.f32 %v989, %v1152
        %v1155 = vadd.f32 %v994, %v1152
        %v1156 = vadd.f32 %v999, %v1152
        %v1157 = vadd.f32 %v1004, %v1152
        %v1158 = vadd.f32 %v1009, %v1152
        %v1159 = vadd.f32 %v1014, %v1152
        %v1160 = vadd.f32 %v1019, %v1152
        %v1161 = vadd.f32 %v1024, %v1152
        %v1162 = vadd.f32 %v1029, %v1152
        %v1163 = vadd.f32 %v1034, %v1152
        %v1164 = vadd.f32 %v1039, %v1152
        %v1165 = vadd.f32 %v1044, %v1152
        %v1166 = vadd.f32 %v1049, %v1152
        %v1167 = vadd.f32 %v1054, %v1152
        %v1168 = vadd.f32 %v1059, %v1152
        %v1169 = vadd.f32 %v1064, %v1152
        %v1170 = vadd.f32 %v1069, %v1152
        %v1171 = vadd.f32 %v1074, %v1152
        %v1172 = vadd.f32 %v1079, %v1152
        %v1173 = vadd.f32 %v1084, %v1152
        %v1174 = vadd.f32 %v1089, %v1152
        %v1175 = vadd.f32 %v1094, %v1152
        %v1176 = vadd.f32 %v1099, %v1152
        %v1177 = vadd.f32 %v1104, %v1152
        %v1178 = vadd.f32 %v1109, %v1152
        %v1179 = vadd.f32 %v1114, %v1152
        %v1180 = vadd.f32 %v1119, %v1152
        %v1181 = vadd.f32 %v1124, %v1152
        %v1182 = vadd.f32 %v1129, %v1152
        %v1183 = vadd.f32 %v1134, %v1152
        %v1184 = vadd.f32 %v1139, %v1152
        %v1185 = vadd.f32 %v1144, %v1152
        %v1186 = vmax.f32 %v1154, 0.0
        %v1187 = vmax.f32 %v1155, 0.0
        %v1188 = vmax.f32 %v1156, 0.0
        %v1189 = vmax.f32 %v1157, 0.0
        %v1190 = vmax.f32 %v1158, 0.0
        %v1191 = vmax.f32 %v1159, 0.0
        %v1192 = vmax.f32 %v1160, 0.0
        %v1193 = vmax.f32 %v1161, 0.0
        %v1194 = vmax.f32 %v1162, 0.0
        %v1195 = vmax.f32 %v1163, 0.0
        %v1196 = vmax.f32 %v1164, 0.0
        %v1197 = vmax.f32 %v1165, 0.0
        %v1198 = vmax.f32 %v1166, 0.0
        %v1199 = vmax.f32 %v1167, 0.0
        %v1200 = vmax.f32 %v1168, 0.0
        %v1201 = vmax.f32 %v1169, 0.0
        %v1202 = vmax.f32 %v1170, 0.0
        %v1203 = vmax.f32 %v1171, 0.0
        %v1204 = vmax.f32 %v1172, 0.0
        %v1205 = vmax.f32 %v1173, 0.0
        %v1206 = vmax.f32 %v1174, 0.0
        %v1207 = vmax.f32 %v1175, 0.0
        %v1208 = vmax.f32 %v1176, 0.0
        %v1209 = vmax.f32 %v1177, 0.0
        %v1210 = vmax.f32 %v1178, 0.0
        %v1211 = vmax.f32 %v1179, 0.0
        %v1212 = vmax.f32 %v1180, 0.0
        %v1213 = vmax.f32 %v1181, 0.0
        %v1214 = vmax.f32 %v1182, 0.0
        %v1215 = vmax.f32 %v1183, 0.0
        %v1216 = vmax.f32 %v1184, 0.0
        %v1217 = vmax.f32 %v1185, 0.0
        %1218 = vst.msk [vmem:[#allocation2] sm:$0xff] %vm825, 0.0
        %1219 = vst.msk [vmem:[#allocation2 + $0x8] sm:$0xff] %vm825, 0.0
        %1220 = vst.msk [vmem:[#allocation2 + $0x10] sm:$0xff] %vm825, 0.0
        %1221 = vst.msk [vmem:[#allocation2 + $0x118] sm:$0xff] %vm825, 0.0
        %1222 = vst.msk [vmem:[#allocation2 + $0x120] sm:$0xff] %vm825, 0.0
        %1223 = vst.msk [vmem:[#allocation2 + $0x128] sm:$0xff] %vm825, 0.0
        %1224 = vst.msk [vmem:[#allocation2 + $0x18] sm:$0xff] %vm825, %v1186
        %1225 = vst.msk [vmem:[#allocation2 + $0x20] sm:$0xff] %vm825, %v1187
        %1226 = vst.msk [vmem:[#allocation2 + $0x28] sm:$0xff] %vm825, %v1188
        %1227 = vst.msk [vmem:[#allocation2 + $0x30] sm:$0xff] %vm825, %v1189
        %1228 = vst.msk [vmem:[#allocation2 + $0x38] sm:$0xff] %vm825, %v1190
        %1229 = vst.msk [vmem:[#allocation2 + $0x40] sm:$0xff] %vm825, %v1191
        %1230 = vst.msk [vmem:[#allocation2 + $0x48] sm:$0xff] %vm825, %v1192
        %1231 = vst.msk [vmem:[#allocation2 + $0x50] sm:$0xff] %vm825, %v1193
        %1232 = vst.msk [vmem:[#allocation2 + $0x58] sm:$0xff] %vm825, %v1194
        %1233 = vst.msk [vmem:[#allocation2 + $0x60] sm:$0xff] %vm825, %v1195
        %1234 = vst.msk [vmem:[#allocation2 + $0x68] sm:$0xff] %vm825, %v1196
        %1235 = vst.msk [vmem:[#allocation2 + $0x70] sm:$0xff] %vm825, %v1197
        %1236 = vst.msk [vmem:[#allocation2 + $0x78] sm:$0xff] %vm825, %v1198
        %1237 = vst.msk [vmem:[#allocation2 + $0x80] sm:$0xff] %vm825, %v1199
        %1238 = vst.msk [vmem:[#allocation2 + $0x88] sm:$0xff] %vm825, %v1200
        %1239 = vst.msk [vmem:[#allocation2 + $0x90] sm:$0xff] %vm825, %v1201
        %1240 = vst.msk [vmem:[#allocation2 + $0x98] sm:$0xff] %vm825, %v1202
        %1241 = vst.msk [vmem:[#allocation2 + $0xa0] sm:$0xff] %vm825, %v1203
        %1242 = vst.msk [vmem:[#allocation2 + $0xa8] sm:$0xff] %vm825, %v1204
        %1243 = vst.msk [vmem:[#allocation2 + $0xb0] sm:$0xff] %vm825, %v1205
        %1244 = vst.msk [vmem:[#allocation2 + $0xb8] sm:$0xff] %vm825, %v1206
        %1245 = vst.msk [vmem:[#allocation2 + $0xc0] sm:$0xff] %vm825, %v1207
        %1246 = vst.msk [vmem:[#allocation2 + $0xc8] sm:$0xff] %vm825, %v1208
        %1247 = vst.msk [vmem:[#allocation2 + $0xd0] sm:$0xff] %vm825, %v1209
        %1248 = vst.msk [vmem:[#allocation2 + $0xd8] sm:$0xff] %vm825, %v1210
        %1249 = vst.msk [vmem:[#allocation2 + $0xe0] sm:$0xff] %vm825, %v1211
        %1250 = vst.msk [vmem:[#allocation2 + $0xe8] sm:$0xff] %vm825, %v1212
        %1251 = vst.msk [vmem:[#allocation2 + $0xf0] sm:$0xff] %vm825, %v1213
        %1252 = vst.msk [vmem:[#allocation2 + $0xf8] sm:$0xff] %vm825, %v1214
        %1253 = vst.msk [vmem:[#allocation2 + $0x100] sm:$0xff] %vm825, %v1215
        %1254 = vst.msk [vmem:[#allocation2 + $0x108] sm:$0xff] %vm825, %v1216
        %1255 = vst.msk [vmem:[#allocation2 + $0x110] sm:$0xff] %vm825, %v1217
        %v1256 = vld [vmem:[%s3] sm:$0xff]
        %v1257 = vld [vmem:[%s3 + $0x8] sm:$0xff]
        %v1258 = vld [vmem:[%s3 + $0x10] sm:$0xff]
        %v1259 = vld [vmem:[%s3 + $0x18] sm:$0xff]
        %v1260 = vld [vmem:[%s3 + $0x20] sm:$0xff]
        %v1261 = vld [vmem:[%s3 + $0x28] sm:$0xff]
        %v1262 = vld [vmem:[%s3 + $0x30] sm:$0xff]
        %v1263 = vld [vmem:[%s3 + $0x38] sm:$0xff]
        %v1264 = vld [vmem:[%s3 + $0x40] sm:$0xff]
        %v1265 = vld [vmem:[%s3 + $0x48] sm:$0xff]
        %v1266 = vld [vmem:[%s3 + $0x50] sm:$0xff]
        %v1267 = vld [vmem:[%s3 + $0x58] sm:$0xff]
        %v1268 = vld [vmem:[%s3 + $0x60] sm:$0xff]
        %v1269 = vld [vmem:[%s3 + $0x68] sm:$0xff]
        %v1270 = vld [vmem:[%s3 + $0x70] sm:$0xff]
        %v1271 = vld [vmem:[%s3 + $0x78] sm:$0xff]
        %v1272 = vld [vmem:[%s3 + $0x80] sm:$0xff]
        %v1273 = vld [vmem:[%s3 + $0x88] sm:$0xff]
        %v1274 = vld [vmem:[%s3 + $0x90] sm:$0xff]
        %v1275 = vld [vmem:[%s3 + $0x98] sm:$0xff]
        %v1276 = vld [vmem:[%s3 + $0xa0] sm:$0xff]
        %v1277 = vld [vmem:[%s3 + $0xa8] sm:$0xff]
        %v1278 = vld [vmem:[%s3 + $0xb0] sm:$0xff]
        %v1279 = vld [vmem:[%s3 + $0xb8] sm:$0xff]
        %v1280 = vld [vmem:[%s3 + $0xc0] sm:$0xff]
        %v1281 = vld [vmem:[%s3 + $0xc8] sm:$0xff]
        %v1282 = vld [vmem:[%s3 + $0xd0] sm:$0xff]
        %v1283 = vld [vmem:[%s3 + $0xd8] sm:$0xff]
        %v1284 = vld [vmem:[%s3 + $0xe0] sm:$0xff]
        %v1285 = vld [vmem:[%s3 + $0xe8] sm:$0xff]
        %v1286 = vld [vmem:[%s3 + $0xf0] sm:$0xff]
        %v1287 = vld [vmem:[%s3 + $0xf8] sm:$0xff]
        %v1288 = vld [vmem:[%s4] sm:$0xff]
        %v1289 = vld [vmem:[%s4 + $0x8] sm:$0xff]
        %v1290 = vld [vmem:[%s4 + $0x10] sm:$0xff]
        %v1291 = vld [vmem:[%s4 + $0x18] sm:$0xff]
        %v1292 = vld [vmem:[%s4 + $0x20] sm:$0xff]
        %v1293 = vld [vmem:[%s4 + $0x28] sm:$0xff]
        %v1294 = vld [vmem:[%s4 + $0x30] sm:$0xff]
        %v1295 = vld [vmem:[%s4 + $0x38] sm:$0xff]
        %v1296 = vld [vmem:[%s4 + $0x40] sm:$0xff]
        %v1297 = vld [vmem:[%s4 + $0x48] sm:$0xff]
        %v1298 = vld [vmem:[%s4 + $0x50] sm:$0xff]
        %v1299 = vld [vmem:[%s4 + $0x58] sm:$0xff]
        %v1300 = vld [vmem:[%s4 + $0x60] sm:$0xff]
        %v1301 = vld [vmem:[%s4 + $0x68] sm:$0xff]
        %v1302 = vld [vmem:[%s4 + $0x70] sm:$0xff]
        %v1303 = vld [vmem:[%s4 + $0x78] sm:$0xff]
        %v1304 = vld [vmem:[%s4 + $0x80] sm:$0xff]
        %v1305 = vld [vmem:[%s4 + $0x88] sm:$0xff]
        %v1306 = vld [vmem:[%s4 + $0x90] sm:$0xff]
        %v1307 = vld [vmem:[%s4 + $0x98] sm:$0xff]
        %v1308 = vld [vmem:[%s4 + $0xa0] sm:$0xff]
        %v1309 = vld [vmem:[%s4 + $0xa8] sm:$0xff]
        %v1310 = vld [vmem:[%s4 + $0xb0] sm:$0xff]
        %v1311 = vld [vmem:[%s4 + $0xb8] sm:$0xff]
        %v1312 = vld [vmem:[%s4 + $0xc0] sm:$0xff]
        %v1313 = vld [vmem:[%s4 + $0xc8] sm:$0xff]
        %v1314 = vld [vmem:[%s4 + $0xd0] sm:$0xff]
        %v1315 = vld [vmem:[%s4 + $0xd8] sm:$0xff]
        %v1316 = vld [vmem:[%s4 + $0xe0] sm:$0xff]
        %v1317 = vld [vmem:[%s4 + $0xe8] sm:$0xff]
        %v1318 = vld [vmem:[%s4 + $0xf0] sm:$0xff]
        %v1319 = vld [vmem:[%s4 + $0xf8] sm:$0xff]
        %v1320 = vld [vmem:[#allocation2 + $0x7] sm:$0xff]
        %v1321 = vld [vmem:[#allocation2 + $0xf] sm:$0xff]
        %v1322 = vld [vmem:[#allocation2 + $0x17] sm:$0xff]
        %v1323 = vld [vmem:[#allocation2 + $0x1f] sm:$0xff]
        %v1324 = vld [vmem:[#allocation2 + $0x27] sm:$0xff]
        %v1325 = vld [vmem:[#allocation2 + $0x2f] sm:$0xff]
        %v1326 = vld [vmem:[#allocation2 + $0x37] sm:$0xff]
        %v1327 = vld [vmem:[#allocation2 + $0x3f] sm:$0xff]
        %v1328 = vld [vmem:[#allocation2 + $0x47] sm:$0xff]
        %v1329 = vld [vmem:[#allocation2 + $0x4f] sm:$0xff]
        %v1330 = vld [vmem:[#allocation2 + $0x57] sm:$0xff]
        %v1331 = vld [vmem:[#allocation2 + $0x5f] sm:$0xff]
        %v1332 = vld [vmem:[#allocation2 + $0x67] sm:$0xff]
        %v1333 = vld [vmem:[#allocation2 + $0x6f] sm:$0xff]
        %v1334 = vld [vmem:[#allocation2 + $0x77] sm:$0xff]
        %v1335 = vld [vmem:[#allocation2 + $0x7f] sm:$0xff]
        %v1336 = vld [vmem:[#allocation2 + $0x87] sm:$0xff]
        %v1337 = vld [vmem:[#allocation2 + $0x8f] sm:$0xff]
        %v1338 = vld [vmem:[#allocation2 + $0x97] sm:$0xff]
        %v1339 = vld [vmem:[#allocation2 + $0x9f] sm:$0xff]
        %v1340 = vld [vmem:[#allocation2 + $0xa7] sm:$0xff]
        %v1341 = vld [vmem:[#allocation2 + $0xaf] sm:$0xff]
        %v1342 = vld [vmem:[#allocation2 + $0xb7] sm:$0xff]
        %v1343 = vld [vmem:[#allocation2 + $0xbf] sm:$0xff]
        %v1344 = vld [vmem:[#allocation2 + $0xc7] sm:$0xff]
        %v1345 = vld [vmem:[#allocation2 + $0xcf] sm:$0xff]
        %v1346 = vld [vmem:[#allocation2 + $0xd7] sm:$0xff]
        %v1347 = vld [vmem:[#allocation2 + $0xdf] sm:$0xff]
        %v1348 = vld [vmem:[#allocation2 + $0xe7] sm:$0xff]
        %v1349 = vld [vmem:[#allocation2 + $0xef] sm:$0xff]
        %v1350 = vld [vmem:[#allocation2 + $0xf7] sm:$0xff]
        %v1351 = vld [vmem:[#allocation2 + $0xff] sm:$0xff]
        %1353 = vset.pattern.permute.xlu0 0
        %1354 = vperm.xlu0 %1353, %v1256
        %v1355 = vpop.permute.xlu0 %1354
        %1358 = vset.pattern.permute.xlu0 0
        %1359 = vperm.xlu0 %1358, %v1257
        %v1360 = vpop.permute.xlu0 %1359
        %1363 = vset.pattern.permute.xlu0 0
        %1364 = vperm.xlu0 %1363, %v1258
        %v1365 = vpop.permute.xlu0 %1364
        %1368 = vset.pattern.permute.xlu0 0
        %1369 = vperm.xlu0 %1368, %v1259
        %v1370 = vpop.permute.xlu0 %1369
        %1373 = vset.pattern.permute.xlu0 0
        %1374 = vperm.xlu0 %1373, %v1260
        %v1375 = vpop.permute.xlu0 %1374
        %1378 = vset.pattern.permute.xlu0 0
        %1379 = vperm.xlu0 %1378, %v1261
        %v1380 = vpop.permute.xlu0 %1379
        %1383 = vset.pattern.permute.xlu0 0
        %1384 = vperm.xlu0 %1383, %v1262
        %v1385 = vpop.permute.xlu0 %1384
        %1388 = vset.pattern.permute.xlu0 0
        %1389 = vperm.xlu0 %1388, %v1263
        %v1390 = vpop.permute.xlu0 %1389
        %1393 = vset.pattern.permute.xlu0 0
        %1394 = vperm.xlu0 %1393, %v1264
        %v1395 = vpop.permute.xlu0 %1394
        %1398 = vset.pattern.permute.xlu0 0
        %1399 = vperm.xlu0 %1398, %v1265
        %v1400 = vpop.permute.xlu0 %1399
        %1403 = vset.pattern.permute.xlu0 0
        %1404 = vperm.xlu0 %1403, %v1266
        %v1405 = vpop.permute.xlu0 %1404
        %1408 = vset.pattern.permute.xlu0 0
        %1409 = vperm.xlu0 %1408, %v1267
        %v1410 = vpop.permute.xlu0 %1409
        %1413 = vset.pattern.permute.xlu0 0
        %1414 = vperm.xlu0 %1413, %v1268
        %v1415 = vpop.permute.xlu0 %1414
        %1418 = vset.pattern.permute.xlu0 0
        %1419 = vperm.xlu0 %1418, %v1269
        %v1420 = vpop.permute.xlu0 %1419
        %1423 = vset.pattern.permute.xlu0 0
        %1424 = vperm.xlu0 %1423, %v1270
        %v1425 = vpop.permute.xlu0 %1424
        %1428 = vset.pattern.permute.xlu0 0
        %1429 = vperm.xlu0 %1428, %v1271
        %v1430 = vpop.permute.xlu0 %1429
        %1433 = vset.pattern.permute.xlu0 0
        %1434 = vperm.xlu0 %1433, %v1272
        %v1435 = vpop.permute.xlu0 %1434
        %1438 = vset.pattern.permute.xlu0 0
        %1439 = vperm.xlu0 %1438, %v1273
        %v1440 = vpop.permute.xlu0 %1439
        %1443 = vset.pattern.permute.xlu0 0
        %1444 = vperm.xlu0 %1443, %v1274
        %v1445 = vpop.permute.xlu0 %1444
        %1448 = vset.pattern.permute.xlu0 0
        %1449 = vperm.xlu0 %1448, %v1275
        %v1450 = vpop.permute.xlu0 %1449
        %1453 = vset.pattern.permute.xlu0 0
        %1454 = vperm.xlu0 %1453, %v1276
        %v1455 = vpop.permute.xlu0 %1454
        %1458 = vset.pattern.permute.xlu0 0
        %1459 = vperm.xlu0 %1458, %v1277
        %v1460 = vpop.permute.xlu0 %1459
        %1463 = vset.pattern.permute.xlu0 0
        %1464 = vperm.xlu0 %1463, %v1278
        %v1465 = vpop.permute.xlu0 %1464
        %1468 = vset.pattern.permute.xlu0 0
        %1469 = vperm.xlu0 %1468, %v1279
        %v1470 = vpop.permute.xlu0 %1469
        %1473 = vset.pattern.permute.xlu0 0
        %1474 = vperm.xlu0 %1473, %v1280
        %v1475 = vpop.permute.xlu0 %1474
        %1478 = vset.pattern.permute.xlu0 0
        %1479 = vperm.xlu0 %1478, %v1281
        %v1480 = vpop.permute.xlu0 %1479
        %1483 = vset.pattern.permute.xlu0 0
        %1484 = vperm.xlu0 %1483, %v1282
        %v1485 = vpop.permute.xlu0 %1484
        %1488 = vset.pattern.permute.xlu0 0
        %1489 = vperm.xlu0 %1488, %v1283
        %v1490 = vpop.permute.xlu0 %1489
        %1493 = vset.pattern.permute.xlu0 0
        %1494 = vperm.xlu0 %1493, %v1284
        %v1495 = vpop.permute.xlu0 %1494
        %1498 = vset.pattern.permute.xlu0 0
        %1499 = vperm.xlu0 %1498, %v1285
        %v1500 = vpop.permute.xlu0 %1499
        %1503 = vset.pattern.permute.xlu0 0
        %1504 = vperm.xlu0 %1503, %v1286
        %v1505 = vpop.permute.xlu0 %1504
        %1508 = vset.pattern.permute.xlu0 0
        %1509 = vperm.xlu0 %1508, %v1287
        %v1510 = vpop.permute.xlu0 %1509
        %v1512 = vmul.f32 %v1320, %v1355
        %v1513 = vmul.f32 %v1321, %v1360
        %v1514 = vmul.f32 %v1322, %v1365
        %v1515 = vmul.f32 %v1323, %v1370
        %v1516 = vmul.f32 %v1324, %v1375
        %v1517 = vmul.f32 %v1325, %v1380
        %v1518 = vmul.f32 %v1326, %v1385
        %v1519 = vmul.f32 %v1327, %v1390
        %v1520 = vmul.f32 %v1328, %v1395
        %v1521 = vmul.f32 %v1329, %v1400
        %v1522 = vmul.f32 %v1330, %v1405
        %v1523 = vmul.f32 %v1331, %v1410
        %v1524 = vmul.f32 %v1332, %v1415
        %v1525 = vmul.f32 %v1333, %v1420
        %v1526 = vmul.f32 %v1334, %v1425
        %v1527 = vmul.f32 %v1335, %v1430
        %v1528 = vmul.f32 %v1336, %v1435
        %v1529 = vmul.f32 %v1337, %v1440
        %v1530 = vmul.f32 %v1338, %v1445
        %v1531 = vmul.f32 %v1339, %v1450
        %v1532 = vmul.f32 %v1340, %v1455
        %v1533 = vmul.f32 %v1341, %v1460
        %v1534 = vmul.f32 %v1342, %v1465
        %v1535 = vmul.f32 %v1343, %v1470
        %v1536 = vmul.f32 %v1344, %v1475
        %v1537 = vmul.f32 %v1345, %v1480
        %v1538 = vmul.f32 %v1346, %v1485
        %v1539 = vmul.f32 %v1347, %v1490
        %v1540 = vmul.f32 %v1348, %v1495
        %v1541 = vmul.f32 %v1349, %v1500
        %v1542 = vmul.f32 %v1350, %v1505
        %v1543 = vmul.f32 %v1351, %v1510
        %v1544 = vpack.c.bf16 %v1513, %v1512
        %v1545 = vpack.c.bf16 %v1515, %v1514
        %v1546 = vpack.c.bf16 %v1517, %v1516
        %v1547 = vpack.c.bf16 %v1519, %v1518
        %v1548 = vpack.c.bf16 %v1521, %v1520
        %v1549 = vpack.c.bf16 %v1523, %v1522
        %v1550 = vpack.c.bf16 %v1525, %v1524
        %v1551 = vpack.c.bf16 %v1527, %v1526
        %v1552 = vpack.c.bf16 %v1529, %v1528
        %v1553 = vpack.c.bf16 %v1531, %v1530
        %v1554 = vpack.c.bf16 %v1533, %v1532
        %v1555 = vpack.c.bf16 %v1535, %v1534
        %v1556 = vpack.c.bf16 %v1537, %v1536
        %v1557 = vpack.c.bf16 %v1539, %v1538
        %v1558 = vpack.c.bf16 %v1541, %v1540
        %v1559 = vpack.c.bf16 %v1543, %v1542
        %v1560 = vld [vmem:[%s8] sm:$0xf]
        %v1561 = vld [vmem:[%s8 + $0x4] sm:$0xf]
        %v1562 = vld [vmem:[%s8 + $0x8] sm:$0xf]
        %v1563 = vld [vmem:[%s8 + $0xc] sm:$0xf]
        %v1564 = vld [vmem:[%s8 + $0x10] sm:$0xf]
        %v1565 = vld [vmem:[%s8 + $0x14] sm:$0xf]
        %v1566 = vld [vmem:[%s8 + $0x18] sm:$0xf]
        %v1567 = vld [vmem:[%s8 + $0x1c] sm:$0xf]
        %v1568 = vld [vmem:[#allocation2 + $0x8] sm:$0xff]
        %v1569 = vld [vmem:[#allocation2 + $0x10] sm:$0xff]
        %v1570 = vld [vmem:[#allocation2 + $0x18] sm:$0xff]
        %v1571 = vld [vmem:[#allocation2 + $0x20] sm:$0xff]
        %v1572 = vld [vmem:[#allocation2 + $0x28] sm:$0xff]
        %v1573 = vld [vmem:[#allocation2 + $0x30] sm:$0xff]
        %v1574 = vld [vmem:[#allocation2 + $0x38] sm:$0xff]
        %v1575 = vld [vmem:[#allocation2 + $0x40] sm:$0xff]
        %v1576 = vld [vmem:[#allocation2 + $0x48] sm:$0xff]
        %v1577 = vld [vmem:[#allocation2 + $0x50] sm:$0xff]
        %v1578 = vld [vmem:[#allocation2 + $0x58] sm:$0xff]
        %v1579 = vld [vmem:[#allocation2 + $0x60] sm:$0xff]
        %v1580 = vld [vmem:[#allocation2 + $0x68] sm:$0xff]
        %v1581 = vld [vmem:[#allocation2 + $0x70] sm:$0xff]
        %v1582 = vld [vmem:[#allocation2 + $0x78] sm:$0xff]
        %v1583 = vld [vmem:[#allocation2 + $0x80] sm:$0xff]
        %v1584 = vld [vmem:[#allocation2 + $0x88] sm:$0xff]
        %v1585 = vld [vmem:[#allocation2 + $0x90] sm:$0xff]
        %v1586 = vld [vmem:[#allocation2 + $0x98] sm:$0xff]
        %v1587 = vld [vmem:[#allocation2 + $0xa0] sm:$0xff]
        %v1588 = vld [vmem:[#allocation2 + $0xa8] sm:$0xff]
        %v1589 = vld [vmem:[#allocation2 + $0xb0] sm:$0xff]
        %v1590 = vld [vmem:[#allocation2 + $0xb8] sm:$0xff]
        %v1591 = vld [vmem:[#allocation2 + $0xc0] sm:$0xff]
        %v1592 = vld [vmem:[#allocation2 + $0xc8] sm:$0xff]
        %v1593 = vld [vmem:[#allocation2 + $0xd0] sm:$0xff]
        %v1594 = vld [vmem:[#allocation2 + $0xd8] sm:$0xff]
        %v1595 = vld [vmem:[#allocation2 + $0xe0] sm:$0xff]
        %v1596 = vld [vmem:[#allocation2 + $0xe8] sm:$0xff]
        %v1597 = vld [vmem:[#allocation2 + $0xf0] sm:$0xff]
        %v1598 = vld [vmem:[#allocation2 + $0xf8] sm:$0xff]
        %v1599 = vld [vmem:[#allocation2 + $0x100] sm:$0xff]
        %v1600 = vpack.c.bf16 %v1569, %v1568
        %v1601 = vpack.c.bf16 %v1571, %v1570
        %v1602 = vpack.c.bf16 %v1573, %v1572
        %v1603 = vpack.c.bf16 %v1575, %v1574
        %v1604 = vpack.c.bf16 %v1577, %v1576
        %v1605 = vpack.c.bf16 %v1579, %v1578
        %v1606 = vpack.c.bf16 %v1581, %v1580
        %v1607 = vpack.c.bf16 %v1583, %v1582
        %v1608 = vpack.c.bf16 %v1585, %v1584
        %v1609 = vpack.c.bf16 %v1587, %v1586
        %v1610 = vpack.c.bf16 %v1589, %v1588
        %v1611 = vpack.c.bf16 %v1591, %v1590
        %v1612 = vpack.c.bf16 %v1593, %v1592
        %v1613 = vpack.c.bf16 %v1595, %v1594
        %v1614 = vpack.c.bf16 %v1597, %v1596
        %v1615 = vpack.c.bf16 %v1599, %v1598
        %s1616 = scalar_lea.vmem %s8, 32
        %v1617 = vld [vmem:[%s1616] sm:$0xf]
        %v1618 = vld [vmem:[%s1616 + $0x4] sm:$0xf]
        %v1619 = vld [vmem:[%s1616 + $0x8] sm:$0xf]
        %v1620 = vld [vmem:[%s1616 + $0xc] sm:$0xf]
        %v1621 = vld [vmem:[%s1616 + $0x10] sm:$0xf]
        %v1622 = vld [vmem:[%s1616 + $0x14] sm:$0xf]
        %v1623 = vld [vmem:[%s1616 + $0x18] sm:$0xf]
        %v1624 = vld [vmem:[%s1616 + $0x1c] sm:$0xf]
        %v1633 = vunpack.c.l.b16 %v1617
        %v1634 = vunpack.c.l.b16 %v1618
        %v1635 = vunpack.c.l.b16 %v1619
        %v1636 = vunpack.c.l.b16 %v1620
        %v1637 = vunpack.c.l.b16 %v1621
        %v1638 = vunpack.c.l.b16 %v1622
        %v1639 = vunpack.c.l.b16 %v1623
        %v1640 = vunpack.c.l.b16 %v1624
        %v1641 = vpack.c.b16 %v1634, %v1633
        %v1642 = vpack.c.b16 %v1636, %v1635
        %v1643 = vpack.c.b16 %v1638, %v1637
        %v1644 = vpack.c.b16 %v1640, %v1639
        %v1650 = vsel %vm825, %v1600, 0
        %v1653 = vsel %vm825, %v1601, 0
        %v1656 = vsel %vm825, %v1602, 0
        %v1659 = vsel %vm825, %v1603, 0
        %v1662 = vsel %vm825, %v1604, 0
        %v1665 = vsel %vm825, %v1605, 0
        %v1668 = vsel %vm825, %v1606, 0
        %v1671 = vsel %vm825, %v1607, 0
        %v1674 = vsel %vm825, %v1608, 0
        %v1677 = vsel %vm825, %v1609, 0
        %v1680 = vsel %vm825, %v1610, 0
        %v1683 = vsel %vm825, %v1611, 0
        %v1686 = vsel %vm825, %v1612, 0
        %v1689 = vsel %vm825, %v1613, 0
        %v1692 = vsel %vm825, %v1614, 0
        %v1695 = vsel %vm825, %v1615, 0
        %1697 = vmatprep.subr.bf16.mxu0 0
        %1698 = vmatpush1.bf16.msra.mxu0 0
        %1699 = vmatprep.subr.bf16.mxu0 0
        %1700 = vmatpush1.bf16.msra.mxu0 0
        %1701 = vmatprep.subr.bf16.mxu0 0
        %1702 = vmatpush1.bf16.msra.mxu0 0
        %1703 = vmatprep.subr.bf16.mxu0 0
        %1704 = vmatpush1.bf16.msra.mxu0 0
        %1705 = vmatprep.subr.bf16.mxu0 0
        %1706 = vmatpush1.bf16.msra.mxu0 %v1644
        %1707 = vmatprep.subr.bf16.mxu0 0
        %1708 = vmatpush1.bf16.msra.mxu0 %v1643
        %1709 = vmatprep.subr.bf16.mxu0 0
        %1710 = vmatpush1.bf16.msra.mxu0 %v1642
        %1711 = vmatprep.subr.bf16.mxu0 0
        %1712 = vmatpush1.bf16.msra.mxu0 %v1641
        %1713 = vmatprep.subr.bf16.mxu0 0
        %1714 = vmatpush2.bf16.msra.mxu0 0
        %1715 = vmatprep.subr.bf16.mxu0 0
        %1716 = vmatpush2.bf16.msra.mxu0 0
        %1717 = vmatprep.subr.bf16.mxu0 0
        %1718 = vmatpush2.bf16.msra.mxu0 0
        %1719 = vmatprep.subr.bf16.mxu0 0
        %1720 = vmatpush2.bf16.msra.mxu0 0
        %1721 = vmatprep.subr.bf16.mxu0 0
        %1722 = vmatpush2.bf16.msra.mxu0 0
        %1723 = vmatprep.subr.bf16.mxu0 0
        %1724 = vmatpush2.bf16.msra.mxu0 0
        %1725 = vmatprep.subr.bf16.mxu0 0
        %1726 = vmatpush2.bf16.msra.mxu0 0
        %1727 = vmatprep.subr.bf16.mxu0 0
        %1728 = vmatpush2.bf16.msra.mxu0 0
        %1729 = vmatprep.mubr.bf16.mxu0 0
        %1730 = vmatmul.mubr.bf16.gmra.mxu0 %v1650
        %v1731 = vpop.f32.mrf.mxu0
        %v1732 = vadd.f32 0.0, %v1731
        %v1733 = vpop.f32.mrf.mxu0
        %v1734 = vpop.f32.mrf.mxu0
        %v1735 = vadd.f32 0.0, %v1734
        %v1736 = vpop.f32.mrf.mxu0
        %1737 = vmatprep.mubr.bf16.mxu0 0
        %1738 = vmatmul.mubr.bf16.gmra.mxu0 %v1653
        %v1739 = vpop.f32.mrf.mxu0
        %v1740 = vadd.f32 0.0, %v1739
        %v1741 = vpop.f32.mrf.mxu0
        %v1742 = vpop.f32.mrf.mxu0
        %v1743 = vadd.f32 0.0, %v1742
        %v1744 = vpop.f32.mrf.mxu0
        %1745 = vmatprep.mubr.bf16.mxu0 0
        %1746 = vmatmul.mubr.bf16.gmra.mxu0 %v1656
        %v1747 = vpop.f32.mrf.mxu0
        %v1748 = vadd.f32 0.0, %v1747
        %v1749 = vpop.f32.mrf.mxu0
        %v1750 = vpop.f32.mrf.mxu0
        %v1751 = vadd.f32 0.0, %v1750
        %v1752 = vpop.f32.mrf.mxu0
        %1753 = vmatprep.mubr.bf16.mxu0 0
        %1754 = vmatmul.mubr.bf16.gmra.mxu0 %v1659
        %v1755 = vpop.f32.mrf.mxu0
        %v1756 = vadd.f32 0.0, %v1755
        %v1757 = vpop.f32.mrf.mxu0
        %v1758 = vpop.f32.mrf.mxu0
        %v1759 = vadd.f32 0.0, %v1758
        %v1760 = vpop.f32.mrf.mxu0
        %1761 = vmatprep.mubr.bf16.mxu0 0
        %1762 = vmatmul.mubr.bf16.gmra.mxu0 %v1662
        %v1763 = vpop.f32.mrf.mxu0
        %v1764 = vadd.f32 0.0, %v1763
        %v1765 = vpop.f32.mrf.mxu0
        %v1766 = vpop.f32.mrf.mxu0
        %v1767 = vadd.f32 0.0, %v1766
        %v1768 = vpop.f32.mrf.mxu0
        %1769 = vmatprep.mubr.bf16.mxu0 0
        %1770 = vmatmul.mubr.bf16.gmra.mxu0 %v1665
        %v1771 = vpop.f32.mrf.mxu0
        %v1772 = vadd.f32 0.0, %v1771
        %v1773 = vpop.f32.mrf.mxu0
        %v1774 = vpop.f32.mrf.mxu0
        %v1775 = vadd.f32 0.0, %v1774
        %v1776 = vpop.f32.mrf.mxu0
        %1777 = vmatprep.mubr.bf16.mxu0 0
        %1778 = vmatmul.mubr.bf16.gmra.mxu0 %v1668
        %v1779 = vpop.f32.mrf.mxu0
        %v1780 = vadd.f32 0.0, %v1779
        %v1781 = vpop.f32.mrf.mxu0
        %v1782 = vpop.f32.mrf.mxu0
        %v1783 = vadd.f32 0.0, %v1782
        %v1784 = vpop.f32.mrf.mxu0
        %1785 = vmatprep.mubr.bf16.mxu0 0
        %1786 = vmatmul.mubr.bf16.gmra.mxu0 %v1671
        %v1787 = vpop.f32.mrf.mxu0
        %v1788 = vadd.f32 0.0, %v1787
        %v1789 = vpop.f32.mrf.mxu0
        %v1790 = vpop.f32.mrf.mxu0
        %v1791 = vadd.f32 0.0, %v1790
        %v1792 = vpop.f32.mrf.mxu0
        %1793 = vmatprep.mubr.bf16.mxu0 0
        %1794 = vmatmul.mubr.bf16.gmra.mxu0 %v1674
        %v1795 = vpop.f32.mrf.mxu0
        %v1796 = vadd.f32 0.0, %v1795
        %v1797 = vpop.f32.mrf.mxu0
        %v1798 = vpop.f32.mrf.mxu0
        %v1799 = vadd.f32 0.0, %v1798
        %v1800 = vpop.f32.mrf.mxu0
        %1801 = vmatprep.mubr.bf16.mxu0 0
        %1802 = vmatmul.mubr.bf16.gmra.mxu0 %v1677
        %v1803 = vpop.f32.mrf.mxu0
        %v1804 = vadd.f32 0.0, %v1803
        %v1805 = vpop.f32.mrf.mxu0
        %v1806 = vpop.f32.mrf.mxu0
        %v1807 = vadd.f32 0.0, %v1806
        %v1808 = vpop.f32.mrf.mxu0
        %1809 = vmatprep.mubr.bf16.mxu0 0
        %1810 = vmatmul.mubr.bf16.gmra.mxu0 %v1680
        %v1811 = vpop.f32.mrf.mxu0
        %v1812 = vadd.f32 0.0, %v1811
        %v1813 = vpop.f32.mrf.mxu0
        %v1814 = vpop.f32.mrf.mxu0
        %v1815 = vadd.f32 0.0, %v1814
        %v1816 = vpop.f32.mrf.mxu0
        %1817 = vmatprep.mubr.bf16.mxu0 0
        %1818 = vmatmul.mubr.bf16.gmra.mxu0 %v1683
        %v1819 = vpop.f32.mrf.mxu0
        %v1820 = vadd.f32 0.0, %v1819
        %v1821 = vpop.f32.mrf.mxu0
        %v1822 = vpop.f32.mrf.mxu0
        %v1823 = vadd.f32 0.0, %v1822
        %v1824 = vpop.f32.mrf.mxu0
        %1825 = vmatprep.mubr.bf16.mxu0 0
        %1826 = vmatmul.mubr.bf16.gmra.mxu0 %v1686
        %v1827 = vpop.f32.mrf.mxu0
        %v1828 = vadd.f32 0.0, %v1827
        %v1829 = vpop.f32.mrf.mxu0
        %v1830 = vpop.f32.mrf.mxu0
        %v1831 = vadd.f32 0.0, %v1830
        %v1832 = vpop.f32.mrf.mxu0
        %1833 = vmatprep.mubr.bf16.mxu0 0
        %1834 = vmatmul.mubr.bf16.gmra.mxu0 %v1689
        %v1835 = vpop.f32.mrf.mxu0
        %v1836 = vadd.f32 0.0, %v1835
        %v1837 = vpop.f32.mrf.mxu0
        %v1838 = vpop.f32.mrf.mxu0
        %v1839 = vadd.f32 0.0, %v1838
        %v1840 = vpop.f32.mrf.mxu0
        %1841 = vmatprep.mubr.bf16.mxu0 0
        %1842 = vmatmul.mubr.bf16.gmra.mxu0 %v1692
        %v1843 = vpop.f32.mrf.mxu0
        %v1844 = vadd.f32 0.0, %v1843
        %v1845 = vpop.f32.mrf.mxu0
        %v1846 = vpop.f32.mrf.mxu0
        %v1847 = vadd.f32 0.0, %v1846
        %v1848 = vpop.f32.mrf.mxu0
        %1849 = vmatprep.mubr.bf16.mxu0 0
        %1850 = vmatmul.mubr.bf16.gmra.mxu0 %v1695
        %v1851 = vpop.f32.mrf.mxu0
        %v1852 = vadd.f32 0.0, %v1851
        %v1853 = vpop.f32.mrf.mxu0
        %v1854 = vpop.f32.mrf.mxu0
        %v1855 = vadd.f32 0.0, %v1854
        %v1856 = vpop.f32.mrf.mxu0
        %1857 = vdwg.mxu0
        %v1866 = vunpack.c.l.b16 %v1560
        %v1867 = vunpack.c.l.b16 %v1561
        %v1868 = vunpack.c.l.b16 %v1562
        %v1869 = vunpack.c.l.b16 %v1563
        %v1870 = vunpack.c.l.b16 %v1564
        %v1871 = vunpack.c.l.b16 %v1565
        %v1872 = vunpack.c.l.b16 %v1566
        %v1873 = vunpack.c.l.b16 %v1567
        %v1874 = vpack.c.b16 %v1867, %v1866
        %v1875 = vpack.c.b16 %v1869, %v1868
        %v1876 = vpack.c.b16 %v1871, %v1870
        %v1877 = vpack.c.b16 %v1873, %v1872
        %v1883 = vsel %vm825, %v1544, 0
        %v1886 = vsel %vm825, %v1545, 0
        %v1889 = vsel %vm825, %v1546, 0
        %v1892 = vsel %vm825, %v1547, 0
        %v1895 = vsel %vm825, %v1548, 0
        %v1898 = vsel %vm825, %v1549, 0
        %v1901 = vsel %vm825, %v1550, 0
        %v1904 = vsel %vm825, %v1551, 0
        %v1907 = vsel %vm825, %v1552, 0
        %v1910 = vsel %vm825, %v1553, 0
        %v1913 = vsel %vm825, %v1554, 0
        %v1916 = vsel %vm825, %v1555, 0
        %v1919 = vsel %vm825, %v1556, 0
        %v1922 = vsel %vm825, %v1557, 0
        %v1925 = vsel %vm825, %v1558, 0
        %v1928 = vsel %vm825, %v1559, 0
        %1930 = vmatprep.subr.bf16.mxu0 0
        %1931 = vmatpush1.bf16.msra.mxu0 0
        %1932 = vmatprep.subr.bf16.mxu0 0
        %1933 = vmatpush1.bf16.msra.mxu0 0
        %1934 = vmatprep.subr.bf16.mxu0 0
        %1935 = vmatpush1.bf16.msra.mxu0 0
        %1936 = vmatprep.subr.bf16.mxu0 0
        %1937 = vmatpush1.bf16.msra.mxu0 0
        %1938 = vmatprep.subr.bf16.mxu0 0
        %1939 = vmatpush1.bf16.msra.mxu0 %v1877
        %1940 = vmatprep.subr.bf16.mxu0 0
        %1941 = vmatpush1.bf16.msra.mxu0 %v1876
        %1942 = vmatprep.subr.bf16.mxu0 0
        %1943 = vmatpush1.bf16.msra.mxu0 %v1875
        %1944 = vmatprep.subr.bf16.mxu0 0
        %1945 = vmatpush1.bf16.msra.mxu0 %v1874
        %1946 = vmatprep.subr.bf16.mxu0 0
        %1947 = vmatpush2.bf16.msra.mxu0 0
        %1948 = vmatprep.subr.bf16.mxu0 0
        %1949 = vmatpush2.bf16.msra.mxu0 0
        %1950 = vmatprep.subr.bf16.mxu0 0
        %1951 = vmatpush2.bf16.msra.mxu0 0
        %1952 = vmatprep.subr.bf16.mxu0 0
        %1953 = vmatpush2.bf16.msra.mxu0 0
        %1954 = vmatprep.subr.bf16.mxu0 0
        %1955 = vmatpush2.bf16.msra.mxu0 0
        %1956 = vmatprep.subr.bf16.mxu0 0
        %1957 = vmatpush2.bf16.msra.mxu0 0
        %1958 = vmatprep.subr.bf16.mxu0 0
        %1959 = vmatpush2.bf16.msra.mxu0 0
        %1960 = vmatprep.subr.bf16.mxu0 0
        %1961 = vmatpush2.bf16.msra.mxu0 0
        %1962 = vmatprep.mubr.bf16.mxu0 0
        %1963 = vmatmul.mubr.bf16.gmra.mxu0 %v1883
        %v1964 = vpop.f32.mrf.mxu0
        %v1965 = vadd.f32 %v1732, %v1964
        %v1966 = vpop.f32.mrf.mxu0
        %v1967 = vpop.f32.mrf.mxu0
        %v1968 = vadd.f32 %v1735, %v1967
        %v1969 = vpop.f32.mrf.mxu0
        %1970 = vmatprep.mubr.bf16.mxu0 0
        %1971 = vmatmul.mubr.bf16.gmra.mxu0 %v1886
        %v1972 = vpop.f32.mrf.mxu0
        %v1973 = vadd.f32 %v1740, %v1972
        %v1974 = vpop.f32.mrf.mxu0
        %v1975 = vpop.f32.mrf.mxu0
        %v1976 = vadd.f32 %v1743, %v1975
        %v1977 = vpop.f32.mrf.mxu0
        %1978 = vmatprep.mubr.bf16.mxu0 0
        %1979 = vmatmul.mubr.bf16.gmra.mxu0 %v1889
        %v1980 = vpop.f32.mrf.mxu0
        %v1981 = vadd.f32 %v1748, %v1980
        %v1982 = vpop.f32.mrf.mxu0
        %v1983 = vpop.f32.mrf.mxu0
        %v1984 = vadd.f32 %v1751, %v1983
        %v1985 = vpop.f32.mrf.mxu0
        %1986 = vmatprep.mubr.bf16.mxu0 0
        %1987 = vmatmul.mubr.bf16.gmra.mxu0 %v1892
        %v1988 = vpop.f32.mrf.mxu0
        %v1989 = vadd.f32 %v1756, %v1988
        %v1990 = vpop.f32.mrf.mxu0
        %v1991 = vpop.f32.mrf.mxu0
        %v1992 = vadd.f32 %v1759, %v1991
        %v1993 = vpop.f32.mrf.mxu0
        %1994 = vmatprep.mubr.bf16.mxu0 0
        %1995 = vmatmul.mubr.bf16.gmra.mxu0 %v1895
        %v1996 = vpop.f32.mrf.mxu0
        %v1997 = vadd.f32 %v1764, %v1996
        %v1998 = vpop.f32.mrf.mxu0
        %v1999 = vpop.f32.mrf.mxu0
        %v2000 = vadd.f32 %v1767, %v1999
        %v2001 = vpop.f32.mrf.mxu0
        %2002 = vmatprep.mubr.bf16.mxu0 0
        %2003 = vmatmul.mubr.bf16.gmra.mxu0 %v1898
        %v2004 = vpop.f32.mrf.mxu0
        %v2005 = vadd.f32 %v1772, %v2004
        %v2006 = vpop.f32.mrf.mxu0
        %v2007 = vpop.f32.mrf.mxu0
        %v2008 = vadd.f32 %v1775, %v2007
        %v2009 = vpop.f32.mrf.mxu0
        %2010 = vmatprep.mubr.bf16.mxu0 0
        %2011 = vmatmul.mubr.bf16.gmra.mxu0 %v1901
        %v2012 = vpop.f32.mrf.mxu0
        %v2013 = vadd.f32 %v1780, %v2012
        %v2014 = vpop.f32.mrf.mxu0
        %v2015 = vpop.f32.mrf.mxu0
        %v2016 = vadd.f32 %v1783, %v2015
        %v2017 = vpop.f32.mrf.mxu0
        %2018 = vmatprep.mubr.bf16.mxu0 0
        %2019 = vmatmul.mubr.bf16.gmra.mxu0 %v1904
        %v2020 = vpop.f32.mrf.mxu0
        %v2021 = vadd.f32 %v1788, %v2020
        %v2022 = vpop.f32.mrf.mxu0
        %v2023 = vpop.f32.mrf.mxu0
        %v2024 = vadd.f32 %v1791, %v2023
        %v2025 = vpop.f32.mrf.mxu0
        %2026 = vmatprep.mubr.bf16.mxu0 0
        %2027 = vmatmul.mubr.bf16.gmra.mxu0 %v1907
        %v2028 = vpop.f32.mrf.mxu0
        %v2029 = vadd.f32 %v1796, %v2028
        %v2030 = vpop.f32.mrf.mxu0
        %v2031 = vpop.f32.mrf.mxu0
        %v2032 = vadd.f32 %v1799, %v2031
        %v2033 = vpop.f32.mrf.mxu0
        %2034 = vmatprep.mubr.bf16.mxu0 0
        %2035 = vmatmul.mubr.bf16.gmra.mxu0 %v1910
        %v2036 = vpop.f32.mrf.mxu0
        %v2037 = vadd.f32 %v1804, %v2036
        %v2038 = vpop.f32.mrf.mxu0
        %v2039 = vpop.f32.mrf.mxu0
        %v2040 = vadd.f32 %v1807, %v2039
        %v2041 = vpop.f32.mrf.mxu0
        %2042 = vmatprep.mubr.bf16.mxu0 0
        %2043 = vmatmul.mubr.bf16.gmra.mxu0 %v1913
        %v2044 = vpop.f32.mrf.mxu0
        %v2045 = vadd.f32 %v1812, %v2044
        %v2046 = vpop.f32.mrf.mxu0
        %v2047 = vpop.f32.mrf.mxu0
        %v2048 = vadd.f32 %v1815, %v2047
        %v2049 = vpop.f32.mrf.mxu0
        %2050 = vmatprep.mubr.bf16.mxu0 0
        %2051 = vmatmul.mubr.bf16.gmra.mxu0 %v1916
        %v2052 = vpop.f32.mrf.mxu0
        %v2053 = vadd.f32 %v1820, %v2052
        %v2054 = vpop.f32.mrf.mxu0
        %v2055 = vpop.f32.mrf.mxu0
        %v2056 = vadd.f32 %v1823, %v2055
        %v2057 = vpop.f32.mrf.mxu0
        %2058 = vmatprep.mubr.bf16.mxu0 0
        %2059 = vmatmul.mubr.bf16.gmra.mxu0 %v1919
        %v2060 = vpop.f32.mrf.mxu0
        %v2061 = vadd.f32 %v1828, %v2060
        %v2062 = vpop.f32.mrf.mxu0
        %v2063 = vpop.f32.mrf.mxu0
        %v2064 = vadd.f32 %v1831, %v2063
        %v2065 = vpop.f32.mrf.mxu0
        %2066 = vmatprep.mubr.bf16.mxu0 0
        %2067 = vmatmul.mubr.bf16.gmra.mxu0 %v1922
        %v2068 = vpop.f32.mrf.mxu0
        %v2069 = vadd.f32 %v1836, %v2068
        %v2070 = vpop.f32.mrf.mxu0
        %v2071 = vpop.f32.mrf.mxu0
        %v2072 = vadd.f32 %v1839, %v2071
        %v2073 = vpop.f32.mrf.mxu0
        %2074 = vmatprep.mubr.bf16.mxu0 0
        %2075 = vmatmul.mubr.bf16.gmra.mxu0 %v1925
        %v2076 = vpop.f32.mrf.mxu0
        %v2077 = vadd.f32 %v1844, %v2076
        %v2078 = vpop.f32.mrf.mxu0
        %v2079 = vpop.f32.mrf.mxu0
        %v2080 = vadd.f32 %v1847, %v2079
        %v2081 = vpop.f32.mrf.mxu0
        %2082 = vmatprep.mubr.bf16.mxu0 0
        %2083 = vmatmul.mubr.bf16.gmra.mxu0 %v1928
        %v2084 = vpop.f32.mrf.mxu0
        %v2085 = vadd.f32 %v1852, %v2084
        %v2086 = vpop.f32.mrf.mxu0
        %v2087 = vpop.f32.mrf.mxu0
        %v2088 = vadd.f32 %v1855, %v2087
        %v2089 = vpop.f32.mrf.mxu0
        %2090 = vdwg.mxu0
        %v2091 = vld [vmem:[#allocation2 + $0x9] sm:$0xff]
        %v2092 = vld [vmem:[#allocation2 + $0x11] sm:$0xff]
        %v2093 = vld [vmem:[#allocation2 + $0x19] sm:$0xff]
        %v2094 = vld [vmem:[#allocation2 + $0x21] sm:$0xff]
        %v2095 = vld [vmem:[#allocation2 + $0x29] sm:$0xff]
        %v2096 = vld [vmem:[#allocation2 + $0x31] sm:$0xff]
        %v2097 = vld [vmem:[#allocation2 + $0x39] sm:$0xff]
        %v2098 = vld [vmem:[#allocation2 + $0x41] sm:$0xff]
        %v2099 = vld [vmem:[#allocation2 + $0x49] sm:$0xff]
        %v2100 = vld [vmem:[#allocation2 + $0x51] sm:$0xff]
        %v2101 = vld [vmem:[#allocation2 + $0x59] sm:$0xff]
        %v2102 = vld [vmem:[#allocation2 + $0x61] sm:$0xff]
        %v2103 = vld [vmem:[#allocation2 + $0x69] sm:$0xff]
        %v2104 = vld [vmem:[#allocation2 + $0x71] sm:$0xff]
        %v2105 = vld [vmem:[#allocation2 + $0x79] sm:$0xff]
        %v2106 = vld [vmem:[#allocation2 + $0x81] sm:$0xff]
        %v2107 = vld [vmem:[#allocation2 + $0x89] sm:$0xff]
        %v2108 = vld [vmem:[#allocation2 + $0x91] sm:$0xff]
        %v2109 = vld [vmem:[#allocation2 + $0x99] sm:$0xff]
        %v2110 = vld [vmem:[#allocation2 + $0xa1] sm:$0xff]
        %v2111 = vld [vmem:[#allocation2 + $0xa9] sm:$0xff]
        %v2112 = vld [vmem:[#allocation2 + $0xb1] sm:$0xff]
        %v2113 = vld [vmem:[#allocation2 + $0xb9] sm:$0xff]
        %v2114 = vld [vmem:[#allocation2 + $0xc1] sm:$0xff]
        %v2115 = vld [vmem:[#allocation2 + $0xc9] sm:$0xff]
        %v2116 = vld [vmem:[#allocation2 + $0xd1] sm:$0xff]
        %v2117 = vld [vmem:[#allocation2 + $0xd9] sm:$0xff]
        %v2118 = vld [vmem:[#allocation2 + $0xe1] sm:$0xff]
        %v2119 = vld [vmem:[#allocation2 + $0xe9] sm:$0xff]
        %v2120 = vld [vmem:[#allocation2 + $0xf1] sm:$0xff]
        %v2121 = vld [vmem:[#allocation2 + $0xf9] sm:$0xff]
        %v2122 = vld [vmem:[#allocation2 + $0x101] sm:$0xff]
        %2124 = vset.pattern.permute.xlu0 0
        %2125 = vperm.xlu0 %2124, %v1288
        %v2126 = vpop.permute.xlu0 %2125
        %2129 = vset.pattern.permute.xlu0 0
        %2130 = vperm.xlu0 %2129, %v1289
        %v2131 = vpop.permute.xlu0 %2130
        %2134 = vset.pattern.permute.xlu0 0
        %2135 = vperm.xlu0 %2134, %v1290
        %v2136 = vpop.permute.xlu0 %2135
        %2139 = vset.pattern.permute.xlu0 0
        %2140 = vperm.xlu0 %2139, %v1291
        %v2141 = vpop.permute.xlu0 %2140
        %2144 = vset.pattern.permute.xlu0 0
        %2145 = vperm.xlu0 %2144, %v1292
        %v2146 = vpop.permute.xlu0 %2145
        %2149 = vset.pattern.permute.xlu0 0
        %2150 = vperm.xlu0 %2149, %v1293
        %v2151 = vpop.permute.xlu0 %2150
        %2154 = vset.pattern.permute.xlu0 0
        %2155 = vperm.xlu0 %2154, %v1294
        %v2156 = vpop.permute.xlu0 %2155
        %2159 = vset.pattern.permute.xlu0 0
        %2160 = vperm.xlu0 %2159, %v1295
        %v2161 = vpop.permute.xlu0 %2160
        %2164 = vset.pattern.permute.xlu0 0
        %2165 = vperm.xlu0 %2164, %v1296
        %v2166 = vpop.permute.xlu0 %2165
        %2169 = vset.pattern.permute.xlu0 0
        %2170 = vperm.xlu0 %2169, %v1297
        %v2171 = vpop.permute.xlu0 %2170
        %2174 = vset.pattern.permute.xlu0 0
        %2175 = vperm.xlu0 %2174, %v1298
        %v2176 = vpop.permute.xlu0 %2175
        %2179 = vset.pattern.permute.xlu0 0
        %2180 = vperm.xlu0 %2179, %v1299
        %v2181 = vpop.permute.xlu0 %2180
        %2184 = vset.pattern.permute.xlu0 0
        %2185 = vperm.xlu0 %2184, %v1300
        %v2186 = vpop.permute.xlu0 %2185
        %2189 = vset.pattern.permute.xlu0 0
        %2190 = vperm.xlu0 %2189, %v1301
        %v2191 = vpop.permute.xlu0 %2190
        %2194 = vset.pattern.permute.xlu0 0
        %2195 = vperm.xlu0 %2194, %v1302
        %v2196 = vpop.permute.xlu0 %2195
        %2199 = vset.pattern.permute.xlu0 0
        %2200 = vperm.xlu0 %2199, %v1303
        %v2201 = vpop.permute.xlu0 %2200
        %2204 = vset.pattern.permute.xlu0 0
        %2205 = vperm.xlu0 %2204, %v1304
        %v2206 = vpop.permute.xlu0 %2205
        %2209 = vset.pattern.permute.xlu0 0
        %2210 = vperm.xlu0 %2209, %v1305
        %v2211 = vpop.permute.xlu0 %2210
        %2214 = vset.pattern.permute.xlu0 0
        %2215 = vperm.xlu0 %2214, %v1306
        %v2216 = vpop.permute.xlu0 %2215
        %2219 = vset.pattern.permute.xlu0 0
        %2220 = vperm.xlu0 %2219, %v1307
        %v2221 = vpop.permute.xlu0 %2220
        %2224 = vset.pattern.permute.xlu0 0
        %2225 = vperm.xlu0 %2224, %v1308
        %v2226 = vpop.permute.xlu0 %2225
        %2229 = vset.pattern.permute.xlu0 0
        %2230 = vperm.xlu0 %2229, %v1309
        %v2231 = vpop.permute.xlu0 %2230
        %2234 = vset.pattern.permute.xlu0 0
        %2235 = vperm.xlu0 %2234, %v1310
        %v2236 = vpop.permute.xlu0 %2235
        %2239 = vset.pattern.permute.xlu0 0
        %2240 = vperm.xlu0 %2239, %v1311
        %v2241 = vpop.permute.xlu0 %2240
        %2244 = vset.pattern.permute.xlu0 0
        %2245 = vperm.xlu0 %2244, %v1312
        %v2246 = vpop.permute.xlu0 %2245
        %2249 = vset.pattern.permute.xlu0 0
        %2250 = vperm.xlu0 %2249, %v1313
        %v2251 = vpop.permute.xlu0 %2250
        %2254 = vset.pattern.permute.xlu0 0
        %2255 = vperm.xlu0 %2254, %v1314
        %v2256 = vpop.permute.xlu0 %2255
        %2259 = vset.pattern.permute.xlu0 0
        %2260 = vperm.xlu0 %2259, %v1315
        %v2261 = vpop.permute.xlu0 %2260
        %2264 = vset.pattern.permute.xlu0 0
        %2265 = vperm.xlu0 %2264, %v1316
        %v2266 = vpop.permute.xlu0 %2265
        %2269 = vset.pattern.permute.xlu0 0
        %2270 = vperm.xlu0 %2269, %v1317
        %v2271 = vpop.permute.xlu0 %2270
        %2274 = vset.pattern.permute.xlu0 0
        %2275 = vperm.xlu0 %2274, %v1318
        %v2276 = vpop.permute.xlu0 %2275
        %2279 = vset.pattern.permute.xlu0 0
        %2280 = vperm.xlu0 %2279, %v1319
        %v2281 = vpop.permute.xlu0 %2280
        %v2283 = vmul.f32 %v2091, %v2126
        %v2284 = vmul.f32 %v2092, %v2131
        %v2285 = vmul.f32 %v2093, %v2136
        %v2286 = vmul.f32 %v2094, %v2141
        %v2287 = vmul.f32 %v2095, %v2146
        %v2288 = vmul.f32 %v2096, %v2151
        %v2289 = vmul.f32 %v2097, %v2156
        %v2290 = vmul.f32 %v2098, %v2161
        %v2291 = vmul.f32 %v2099, %v2166
        %v2292 = vmul.f32 %v2100, %v2171
        %v2293 = vmul.f32 %v2101, %v2176
        %v2294 = vmul.f32 %v2102, %v2181
        %v2295 = vmul.f32 %v2103, %v2186
        %v2296 = vmul.f32 %v2104, %v2191
        %v2297 = vmul.f32 %v2105, %v2196
        %v2298 = vmul.f32 %v2106, %v2201
        %v2299 = vmul.f32 %v2107, %v2206
        %v2300 = vmul.f32 %v2108, %v2211
        %v2301 = vmul.f32 %v2109, %v2216
        %v2302 = vmul.f32 %v2110, %v2221
        %v2303 = vmul.f32 %v2111, %v2226
        %v2304 = vmul.f32 %v2112, %v2231
        %v2305 = vmul.f32 %v2113, %v2236
        %v2306 = vmul.f32 %v2114, %v2241
        %v2307 = vmul.f32 %v2115, %v2246
        %v2308 = vmul.f32 %v2116, %v2251
        %v2309 = vmul.f32 %v2117, %v2256
        %v2310 = vmul.f32 %v2118, %v2261
        %v2311 = vmul.f32 %v2119, %v2266
        %v2312 = vmul.f32 %v2120, %v2271
        %v2313 = vmul.f32 %v2121, %v2276
        %v2314 = vmul.f32 %v2122, %v2281
        %v2315 = vpack.c.bf16 %v2284, %v2283
        %v2316 = vpack.c.bf16 %v2286, %v2285
        %v2317 = vpack.c.bf16 %v2288, %v2287
        %v2318 = vpack.c.bf16 %v2290, %v2289
        %v2319 = vpack.c.bf16 %v2292, %v2291
        %v2320 = vpack.c.bf16 %v2294, %v2293
        %v2321 = vpack.c.bf16 %v2296, %v2295
        %v2322 = vpack.c.bf16 %v2298, %v2297
        %v2323 = vpack.c.bf16 %v2300, %v2299
        %v2324 = vpack.c.bf16 %v2302, %v2301
        %v2325 = vpack.c.bf16 %v2304, %v2303
        %v2326 = vpack.c.bf16 %v2306, %v2305
        %v2327 = vpack.c.bf16 %v2308, %v2307
        %v2328 = vpack.c.bf16 %v2310, %v2309
        %v2329 = vpack.c.bf16 %v2312, %v2311
        %v2330 = vpack.c.bf16 %v2314, %v2313
        %s2331 = scalar_lea.vmem %s8, 64
        %v2332 = vld [vmem:[%s2331] sm:$0xf]
        %v2333 = vld [vmem:[%s2331 + $0x4] sm:$0xf]
        %v2334 = vld [vmem:[%s2331 + $0x8] sm:$0xf]
        %v2335 = vld [vmem:[%s2331 + $0xc] sm:$0xf]
        %v2336 = vld [vmem:[%s2331 + $0x10] sm:$0xf]
        %v2337 = vld [vmem:[%s2331 + $0x14] sm:$0xf]
        %v2338 = vld [vmem:[%s2331 + $0x18] sm:$0xf]
        %v2339 = vld [vmem:[%s2331 + $0x1c] sm:$0xf]
        %v2348 = vunpack.c.l.b16 %v2332
        %v2349 = vunpack.c.l.b16 %v2333
        %v2350 = vunpack.c.l.b16 %v2334
        %v2351 = vunpack.c.l.b16 %v2335
        %v2352 = vunpack.c.l.b16 %v2336
        %v2353 = vunpack.c.l.b16 %v2337
        %v2354 = vunpack.c.l.b16 %v2338
        %v2355 = vunpack.c.l.b16 %v2339
        %v2356 = vpack.c.b16 %v2349, %v2348
        %v2357 = vpack.c.b16 %v2351, %v2350
        %v2358 = vpack.c.b16 %v2353, %v2352
        %v2359 = vpack.c.b16 %v2355, %v2354
        %v2365 = vsel %vm825, %v2315, 0
        %v2368 = vsel %vm825, %v2316, 0
        %v2371 = vsel %vm825, %v2317, 0
        %v2374 = vsel %vm825, %v2318, 0
        %v2377 = vsel %vm825, %v2319, 0
        %v2380 = vsel %vm825, %v2320, 0
        %v2383 = vsel %vm825, %v2321, 0
        %v2386 = vsel %vm825, %v2322, 0
        %v2389 = vsel %vm825, %v2323, 0
        %v2392 = vsel %vm825, %v2324, 0
        %v2395 = vsel %vm825, %v2325, 0
        %v2398 = vsel %vm825, %v2326, 0
        %v2401 = vsel %vm825, %v2327, 0
        %v2404 = vsel %vm825, %v2328, 0
        %v2407 = vsel %vm825, %v2329, 0
        %v2410 = vsel %vm825, %v2330, 0
        %2412 = vmatprep.subr.bf16.mxu0 0
        %2413 = vmatpush1.bf16.msra.mxu0 0
        %2414 = vmatprep.subr.bf16.mxu0 0
        %2415 = vmatpush1.bf16.msra.mxu0 0
        %2416 = vmatprep.subr.bf16.mxu0 0
        %2417 = vmatpush1.bf16.msra.mxu0 0
        %2418 = vmatprep.subr.bf16.mxu0 0
        %2419 = vmatpush1.bf16.msra.mxu0 0
        %2420 = vmatprep.subr.bf16.mxu0 0
        %2421 = vmatpush1.bf16.msra.mxu0 %v2359
        %2422 = vmatprep.subr.bf16.mxu0 0
        %2423 = vmatpush1.bf16.msra.mxu0 %v2358
        %2424 = vmatprep.subr.bf16.mxu0 0
        %2425 = vmatpush1.bf16.msra.mxu0 %v2357
        %2426 = vmatprep.subr.bf16.mxu0 0
        %2427 = vmatpush1.bf16.msra.mxu0 %v2356
        %2428 = vmatprep.subr.bf16.mxu0 0
        %2429 = vmatpush2.bf16.msra.mxu0 0
        %2430 = vmatprep.subr.bf16.mxu0 0
        %2431 = vmatpush2.bf16.msra.mxu0 0
        %2432 = vmatprep.subr.bf16.mxu0 0
        %2433 = vmatpush2.bf16.msra.mxu0 0
        %2434 = vmatprep.subr.bf16.mxu0 0
        %2435 = vmatpush2.bf16.msra.mxu0 0
        %2436 = vmatprep.subr.bf16.mxu0 0
        %2437 = vmatpush2.bf16.msra.mxu0 0
        %2438 = vmatprep.subr.bf16.mxu0 0
        %2439 = vmatpush2.bf16.msra.mxu0 0
        %2440 = vmatprep.subr.bf16.mxu0 0
        %2441 = vmatpush2.bf16.msra.mxu0 0
        %2442 = vmatprep.subr.bf16.mxu0 0
        %2443 = vmatpush2.bf16.msra.mxu0 0
        %2444 = vmatprep.mubr.bf16.mxu0 0
        %2445 = vmatmul.mubr.bf16.gmra.mxu0 %v2365
        %v2446 = vpop.f32.mrf.mxu0
        %v2447 = vadd.f32 0.0, %v2446
        %v2448 = vpop.f32.mrf.mxu0
        %v2449 = vpop.f32.mrf.mxu0
        %v2450 = vadd.f32 0.0, %v2449
        %v2451 = vpop.f32.mrf.mxu0
        %2452 = vmatprep.mubr.bf16.mxu0 0
        %2453 = vmatmul.mubr.bf16.gmra.mxu0 %v2368
        %v2454 = vpop.f32.mrf.mxu0
        %v2455 = vadd.f32 0.0, %v2454
        %v2456 = vpop.f32.mrf.mxu0
        %v2457 = vpop.f32.mrf.mxu0
        %v2458 = vadd.f32 0.0, %v2457
        %v2459 = vpop.f32.mrf.mxu0
        %2460 = vmatprep.mubr.bf16.mxu0 0
        %2461 = vmatmul.mubr.bf16.gmra.mxu0 %v2371
        %v2462 = vpop.f32.mrf.mxu0
        %v2463 = vadd.f32 0.0, %v2462
        %v2464 = vpop.f32.mrf.mxu0
        %v2465 = vpop.f32.mrf.mxu0
        %v2466 = vadd.f32 0.0, %v2465
        %v2467 = vpop.f32.mrf.mxu0
        %2468 = vmatprep.mubr.bf16.mxu0 0
        %2469 = vmatmul.mubr.bf16.gmra.mxu0 %v2374
        %v2470 = vpop.f32.mrf.mxu0
        %v2471 = vadd.f32 0.0, %v2470
        %v2472 = vpop.f32.mrf.mxu0
        %v2473 = vpop.f32.mrf.mxu0
        %v2474 = vadd.f32 0.0, %v2473
        %v2475 = vpop.f32.mrf.mxu0
        %2476 = vmatprep.mubr.bf16.mxu0 0
        %2477 = vmatmul.mubr.bf16.gmra.mxu0 %v2377
        %v2478 = vpop.f32.mrf.mxu0
        %v2479 = vadd.f32 0.0, %v2478
        %v2480 = vpop.f32.mrf.mxu0
        %v2481 = vpop.f32.mrf.mxu0
        %v2482 = vadd.f32 0.0, %v2481
        %v2483 = vpop.f32.mrf.mxu0
        %2484 = vmatprep.mubr.bf16.mxu0 0
        %2485 = vmatmul.mubr.bf16.gmra.mxu0 %v2380
        %v2486 = vpop.f32.mrf.mxu0
        %v2487 = vadd.f32 0.0, %v2486
        %v2488 = vpop.f32.mrf.mxu0
        %v2489 = vpop.f32.mrf.mxu0
        %v2490 = vadd.f32 0.0, %v2489
        %v2491 = vpop.f32.mrf.mxu0
        %2492 = vmatprep.mubr.bf16.mxu0 0
        %2493 = vmatmul.mubr.bf16.gmra.mxu0 %v2383
        %v2494 = vpop.f32.mrf.mxu0
        %v2495 = vadd.f32 0.0, %v2494
        %v2496 = vpop.f32.mrf.mxu0
        %v2497 = vpop.f32.mrf.mxu0
        %v2498 = vadd.f32 0.0, %v2497
        %v2499 = vpop.f32.mrf.mxu0
        %2500 = vmatprep.mubr.bf16.mxu0 0
        %2501 = vmatmul.mubr.bf16.gmra.mxu0 %v2386
        %v2502 = vpop.f32.mrf.mxu0
        %v2503 = vadd.f32 0.0, %v2502
        %v2504 = vpop.f32.mrf.mxu0
        %v2505 = vpop.f32.mrf.mxu0
        %v2506 = vadd.f32 0.0, %v2505
        %v2507 = vpop.f32.mrf.mxu0
        %2508 = vmatprep.mubr.bf16.mxu0 0
        %2509 = vmatmul.mubr.bf16.gmra.mxu0 %v2389
        %v2510 = vpop.f32.mrf.mxu0
        %v2511 = vadd.f32 0.0, %v2510
        %v2512 = vpop.f32.mrf.mxu0
        %v2513 = vpop.f32.mrf.mxu0
        %v2514 = vadd.f32 0.0, %v2513
        %v2515 = vpop.f32.mrf.mxu0
        %2516 = vmatprep.mubr.bf16.mxu0 0
        %2517 = vmatmul.mubr.bf16.gmra.mxu0 %v2392
        %v2518 = vpop.f32.mrf.mxu0
        %v2519 = vadd.f32 0.0, %v2518
        %v2520 = vpop.f32.mrf.mxu0
        %v2521 = vpop.f32.mrf.mxu0
        %v2522 = vadd.f32 0.0, %v2521
        %v2523 = vpop.f32.mrf.mxu0
        %2524 = vmatprep.mubr.bf16.mxu0 0
        %2525 = vmatmul.mubr.bf16.gmra.mxu0 %v2395
        %v2526 = vpop.f32.mrf.mxu0
        %v2527 = vadd.f32 0.0, %v2526
        %v2528 = vpop.f32.mrf.mxu0
        %v2529 = vpop.f32.mrf.mxu0
        %v2530 = vadd.f32 0.0, %v2529
        %v2531 = vpop.f32.mrf.mxu0
        %2532 = vmatprep.mubr.bf16.mxu0 0
        %2533 = vmatmul.mubr.bf16.gmra.mxu0 %v2398
        %v2534 = vpop.f32.mrf.mxu0
        %v2535 = vadd.f32 0.0, %v2534
        %v2536 = vpop.f32.mrf.mxu0
        %v2537 = vpop.f32.mrf.mxu0
        %v2538 = vadd.f32 0.0, %v2537
        %v2539 = vpop.f32.mrf.mxu0
        %2540 = vmatprep.mubr.bf16.mxu0 0
        %2541 = vmatmul.mubr.bf16.gmra.mxu0 %v2401
        %v2542 = vpop.f32.mrf.mxu0
        %v2543 = vadd.f32 0.0, %v2542
        %v2544 = vpop.f32.mrf.mxu0
        %v2545 = vpop.f32.mrf.mxu0
        %v2546 = vadd.f32 0.0, %v2545
        %v2547 = vpop.f32.mrf.mxu0
        %2548 = vmatprep.mubr.bf16.mxu0 0
        %2549 = vmatmul.mubr.bf16.gmra.mxu0 %v2404
        %v2550 = vpop.f32.mrf.mxu0
        %v2551 = vadd.f32 0.0, %v2550
        %v2552 = vpop.f32.mrf.mxu0
        %v2553 = vpop.f32.mrf.mxu0
        %v2554 = vadd.f32 0.0, %v2553
        %v2555 = vpop.f32.mrf.mxu0
        %2556 = vmatprep.mubr.bf16.mxu0 0
        %2557 = vmatmul.mubr.bf16.gmra.mxu0 %v2407
        %v2558 = vpop.f32.mrf.mxu0
        %v2559 = vadd.f32 0.0, %v2558
        %v2560 = vpop.f32.mrf.mxu0
        %v2561 = vpop.f32.mrf.mxu0
        %v2562 = vadd.f32 0.0, %v2561
        %v2563 = vpop.f32.mrf.mxu0
        %2564 = vmatprep.mubr.bf16.mxu0 0
        %2565 = vmatmul.mubr.bf16.gmra.mxu0 %v2410
        %v2566 = vpop.f32.mrf.mxu0
        %v2567 = vadd.f32 0.0, %v2566
        %v2568 = vpop.f32.mrf.mxu0
        %v2569 = vpop.f32.mrf.mxu0
        %v2570 = vadd.f32 0.0, %v2569
        %v2571 = vpop.f32.mrf.mxu0
        %2572 = vdwg.mxu0
        %v2573 = vadd.f32 %v1965, %v2447
        %v2574 = vadd.f32 %v1968, %v2450
        %v2575 = vadd.f32 %v1973, %v2455
        %v2576 = vadd.f32 %v1976, %v2458
        %v2577 = vadd.f32 %v1981, %v2463
        %v2578 = vadd.f32 %v1984, %v2466
        %v2579 = vadd.f32 %v1989, %v2471
        %v2580 = vadd.f32 %v1992, %v2474
        %v2581 = vadd.f32 %v1997, %v2479
        %v2582 = vadd.f32 %v2000, %v2482
        %v2583 = vadd.f32 %v2005, %v2487
        %v2584 = vadd.f32 %v2008, %v2490
        %v2585 = vadd.f32 %v2013, %v2495
        %v2586 = vadd.f32 %v2016, %v2498
        %v2587 = vadd.f32 %v2021, %v2503
        %v2588 = vadd.f32 %v2024, %v2506
        %v2589 = vadd.f32 %v2029, %v2511
        %v2590 = vadd.f32 %v2032, %v2514
        %v2591 = vadd.f32 %v2037, %v2519
        %v2592 = vadd.f32 %v2040, %v2522
        %v2593 = vadd.f32 %v2045, %v2527
        %v2594 = vadd.f32 %v2048, %v2530
        %v2595 = vadd.f32 %v2053, %v2535
        %v2596 = vadd.f32 %v2056, %v2538
        %v2597 = vadd.f32 %v2061, %v2543
        %v2598 = vadd.f32 %v2064, %v2546
        %v2599 = vadd.f32 %v2069, %v2551
        %v2600 = vadd.f32 %v2072, %v2554
        %v2601 = vadd.f32 %v2077, %v2559
        %v2602 = vadd.f32 %v2080, %v2562
        %v2603 = vadd.f32 %v2085, %v2567
        %v2604 = vadd.f32 %v2088, %v2570
        %v2605 = vld [vmem:[#allocation2 + $0x17] sm:$0xff]
        %v2606 = vld [vmem:[#allocation2 + $0x1f] sm:$0xff]
        %v2607 = vld [vmem:[#allocation2 + $0x27] sm:$0xff]
        %v2608 = vld [vmem:[#allocation2 + $0x2f] sm:$0xff]
        %v2609 = vld [vmem:[#allocation2 + $0x37] sm:$0xff]
        %v2610 = vld [vmem:[#allocation2 + $0x3f] sm:$0xff]
        %v2611 = vld [vmem:[#allocation2 + $0x47] sm:$0xff]
        %v2612 = vld [vmem:[#allocation2 + $0x4f] sm:$0xff]
        %v2613 = vld [vmem:[#allocation2 + $0x57] sm:$0xff]
        %v2614 = vld [vmem:[#allocation2 + $0x5f] sm:$0xff]
        %v2615 = vld [vmem:[#allocation2 + $0x67] sm:$0xff]
        %v2616 = vld [vmem:[#allocation2 + $0x6f] sm:$0xff]
        %v2617 = vld [vmem:[#allocation2 + $0x77] sm:$0xff]
        %v2618 = vld [vmem:[#allocation2 + $0x7f] sm:$0xff]
        %v2619 = vld [vmem:[#allocation2 + $0x87] sm:$0xff]
        %v2620 = vld [vmem:[#allocation2 + $0x8f] sm:$0xff]
        %v2621 = vld [vmem:[#allocation2 + $0x97] sm:$0xff]
        %v2622 = vld [vmem:[#allocation2 + $0x9f] sm:$0xff]
        %v2623 = vld [vmem:[#allocation2 + $0xa7] sm:$0xff]
        %v2624 = vld [vmem:[#allocation2 + $0xaf] sm:$0xff]
        %v2625 = vld [vmem:[#allocation2 + $0xb7] sm:$0xff]
        %v2626 = vld [vmem:[#allocation2 + $0xbf] sm:$0xff]
        %v2627 = vld [vmem:[#allocation2 + $0xc7] sm:$0xff]
        %v2628 = vld [vmem:[#allocation2 + $0xcf] sm:$0xff]
        %v2629 = vld [vmem:[#allocation2 + $0xd7] sm:$0xff]
        %v2630 = vld [vmem:[#allocation2 + $0xdf] sm:$0xff]
        %v2631 = vld [vmem:[#allocation2 + $0xe7] sm:$0xff]
        %v2632 = vld [vmem:[#allocation2 + $0xef] sm:$0xff]
        %v2633 = vld [vmem:[#allocation2 + $0xf7] sm:$0xff]
        %v2634 = vld [vmem:[#allocation2 + $0xff] sm:$0xff]
        %v2635 = vld [vmem:[#allocation2 + $0x107] sm:$0xff]
        %v2636 = vld [vmem:[#allocation2 + $0x10f] sm:$0xff]
        %v2637 = vmul.f32 %v2605, %v1355
        %v2638 = vmul.f32 %v2606, %v1360
        %v2639 = vmul.f32 %v2607, %v1365
        %v2640 = vmul.f32 %v2608, %v1370
        %v2641 = vmul.f32 %v2609, %v1375
        %v2642 = vmul.f32 %v2610, %v1380
        %v2643 = vmul.f32 %v2611, %v1385
        %v2644 = vmul.f32 %v2612, %v1390
        %v2645 = vmul.f32 %v2613, %v1395
        %v2646 = vmul.f32 %v2614, %v1400
        %v2647 = vmul.f32 %v2615, %v1405
        %v2648 = vmul.f32 %v2616, %v1410
        %v2649 = vmul.f32 %v2617, %v1415
        %v2650 = vmul.f32 %v2618, %v1420
        %v2651 = vmul.f32 %v2619, %v1425
        %v2652 = vmul.f32 %v2620, %v1430
        %v2653 = vmul.f32 %v2621, %v1435
        %v2654 = vmul.f32 %v2622, %v1440
        %v2655 = vmul.f32 %v2623, %v1445
        %v2656 = vmul.f32 %v2624, %v1450
        %v2657 = vmul.f32 %v2625, %v1455
        %v2658 = vmul.f32 %v2626, %v1460
        %v2659 = vmul.f32 %v2627, %v1465
        %v2660 = vmul.f32 %v2628, %v1470
        %v2661 = vmul.f32 %v2629, %v1475
        %v2662 = vmul.f32 %v2630, %v1480
        %v2663 = vmul.f32 %v2631, %v1485
        %v2664 = vmul.f32 %v2632, %v1490
        %v2665 = vmul.f32 %v2633, %v1495
        %v2666 = vmul.f32 %v2634, %v1500
        %v2667 = vmul.f32 %v2635, %v1505
        %v2668 = vmul.f32 %v2636, %v1510
        %v2669 = vpack.c.bf16 %v2638, %v2637
        %v2670 = vpack.c.bf16 %v2640, %v2639
        %v2671 = vpack.c.bf16 %v2642, %v2641
        %v2672 = vpack.c.bf16 %v2644, %v2643
        %v2673 = vpack.c.bf16 %v2646, %v2645
        %v2674 = vpack.c.bf16 %v2648, %v2647
        %v2675 = vpack.c.bf16 %v2650, %v2649
        %v2676 = vpack.c.bf16 %v2652, %v2651
        %v2677 = vpack.c.bf16 %v2654, %v2653
        %v2678 = vpack.c.bf16 %v2656, %v2655
        %v2679 = vpack.c.bf16 %v2658, %v2657
        %v2680 = vpack.c.bf16 %v2660, %v2659
        %v2681 = vpack.c.bf16 %v2662, %v2661
        %v2682 = vpack.c.bf16 %v2664, %v2663
        %v2683 = vpack.c.bf16 %v2666, %v2665
        %v2684 = vpack.c.bf16 %v2668, %v2667
        %s2685 = scalar_lea.vmem %s8, 96
        %v2686 = vld [vmem:[%s2685] sm:$0xf]
        %v2687 = vld [vmem:[%s2685 + $0x4] sm:$0xf]
        %v2688 = vld [vmem:[%s2685 + $0x8] sm:$0xf]
        %v2689 = vld [vmem:[%s2685 + $0xc] sm:$0xf]
        %v2690 = vld [vmem:[%s2685 + $0x10] sm:$0xf]
        %v2691 = vld [vmem:[%s2685 + $0x14] sm:$0xf]
        %v2692 = vld [vmem:[%s2685 + $0x18] sm:$0xf]
        %v2693 = vld [vmem:[%s2685 + $0x1c] sm:$0xf]
        %v2702 = vunpack.c.l.b16 %v2686
        %v2703 = vunpack.c.l.b16 %v2687
        %v2704 = vunpack.c.l.b16 %v2688
        %v2705 = vunpack.c.l.b16 %v2689
        %v2706 = vunpack.c.l.b16 %v2690
        %v2707 = vunpack.c.l.b16 %v2691
        %v2708 = vunpack.c.l.b16 %v2692
        %v2709 = vunpack.c.l.b16 %v2693
        %v2710 = vpack.c.b16 %v2703, %v2702
        %v2711 = vpack.c.b16 %v2705, %v2704
        %v2712 = vpack.c.b16 %v2707, %v2706
        %v2713 = vpack.c.b16 %v2709, %v2708
        %v2719 = vsel %vm825, %v2669, 0
        %v2722 = vsel %vm825, %v2670, 0
        %v2725 = vsel %vm825, %v2671, 0
        %v2728 = vsel %vm825, %v2672, 0
        %v2731 = vsel %vm825, %v2673, 0
        %v2734 = vsel %vm825, %v2674, 0
        %v2737 = vsel %vm825, %v2675, 0
        %v2740 = vsel %vm825, %v2676, 0
        %v2743 = vsel %vm825, %v2677, 0
        %v2746 = vsel %vm825, %v2678, 0
        %v2749 = vsel %vm825, %v2679, 0
        %v2752 = vsel %vm825, %v2680, 0
        %v2755 = vsel %vm825, %v2681, 0
        %v2758 = vsel %vm825, %v2682, 0
        %v2761 = vsel %vm825, %v2683, 0
        %v2764 = vsel %vm825, %v2684, 0
        %2766 = vmatprep.subr.bf16.mxu0 0
        %2767 = vmatpush1.bf16.msra.mxu0 0
        %2768 = vmatprep.subr.bf16.mxu0 0
        %2769 = vmatpush1.bf16.msra.mxu0 0
        %2770 = vmatprep.subr.bf16.mxu0 0
        %2771 = vmatpush1.bf16.msra.mxu0 0
        %2772 = vmatprep.subr.bf16.mxu0 0
        %2773 = vmatpush1.bf16.msra.mxu0 0
        %2774 = vmatprep.subr.bf16.mxu0 0
        %2775 = vmatpush1.bf16.msra.mxu0 %v2713
        %2776 = vmatprep.subr.bf16.mxu0 0
        %2777 = vmatpush1.bf16.msra.mxu0 %v2712
        %2778 = vmatprep.subr.bf16.mxu0 0
        %2779 = vmatpush1.bf16.msra.mxu0 %v2711
        %2780 = vmatprep.subr.bf16.mxu0 0
        %2781 = vmatpush1.bf16.msra.mxu0 %v2710
        %2782 = vmatprep.subr.bf16.mxu0 0
        %2783 = vmatpush2.bf16.msra.mxu0 0
        %2784 = vmatprep.subr.bf16.mxu0 0
        %2785 = vmatpush2.bf16.msra.mxu0 0
        %2786 = vmatprep.subr.bf16.mxu0 0
        %2787 = vmatpush2.bf16.msra.mxu0 0
        %2788 = vmatprep.subr.bf16.mxu0 0
        %2789 = vmatpush2.bf16.msra.mxu0 0
        %2790 = vmatprep.subr.bf16.mxu0 0
        %2791 = vmatpush2.bf16.msra.mxu0 0
        %2792 = vmatprep.subr.bf16.mxu0 0
        %2793 = vmatpush2.bf16.msra.mxu0 0
        %2794 = vmatprep.subr.bf16.mxu0 0
        %2795 = vmatpush2.bf16.msra.mxu0 0
        %2796 = vmatprep.subr.bf16.mxu0 0
        %2797 = vmatpush2.bf16.msra.mxu0 0
        %2798 = vmatprep.mubr.bf16.mxu0 0
        %2799 = vmatmul.mubr.bf16.gmra.mxu0 %v2719
        %v2800 = vpop.f32.mrf.mxu0
        %v2801 = vadd.f32 0.0, %v2800
        %v2802 = vpop.f32.mrf.mxu0
        %v2803 = vpop.f32.mrf.mxu0
        %v2804 = vadd.f32 0.0, %v2803
        %v2805 = vpop.f32.mrf.mxu0
        %2806 = vmatprep.mubr.bf16.mxu0 0
        %2807 = vmatmul.mubr.bf16.gmra.mxu0 %v2722
        %v2808 = vpop.f32.mrf.mxu0
        %v2809 = vadd.f32 0.0, %v2808
        %v2810 = vpop.f32.mrf.mxu0
        %v2811 = vpop.f32.mrf.mxu0
        %v2812 = vadd.f32 0.0, %v2811
        %v2813 = vpop.f32.mrf.mxu0
        %2814 = vmatprep.mubr.bf16.mxu0 0
        %2815 = vmatmul.mubr.bf16.gmra.mxu0 %v2725
        %v2816 = vpop.f32.mrf.mxu0
        %v2817 = vadd.f32 0.0, %v2816
        %v2818 = vpop.f32.mrf.mxu0
        %v2819 = vpop.f32.mrf.mxu0
        %v2820 = vadd.f32 0.0, %v2819
        %v2821 = vpop.f32.mrf.mxu0
        %2822 = vmatprep.mubr.bf16.mxu0 0
        %2823 = vmatmul.mubr.bf16.gmra.mxu0 %v2728
        %v2824 = vpop.f32.mrf.mxu0
        %v2825 = vadd.f32 0.0, %v2824
        %v2826 = vpop.f32.mrf.mxu0
        %v2827 = vpop.f32.mrf.mxu0
        %v2828 = vadd.f32 0.0, %v2827
        %v2829 = vpop.f32.mrf.mxu0
        %2830 = vmatprep.mubr.bf16.mxu0 0
        %2831 = vmatmul.mubr.bf16.gmra.mxu0 %v2731
        %v2832 = vpop.f32.mrf.mxu0
        %v2833 = vadd.f32 0.0, %v2832
        %v2834 = vpop.f32.mrf.mxu0
        %v2835 = vpop.f32.mrf.mxu0
        %v2836 = vadd.f32 0.0, %v2835
        %v2837 = vpop.f32.mrf.mxu0
        %2838 = vmatprep.mubr.bf16.mxu0 0
        %2839 = vmatmul.mubr.bf16.gmra.mxu0 %v2734
        %v2840 = vpop.f32.mrf.mxu0
        %v2841 = vadd.f32 0.0, %v2840
        %v2842 = vpop.f32.mrf.mxu0
        %v2843 = vpop.f32.mrf.mxu0
        %v2844 = vadd.f32 0.0, %v2843
        %v2845 = vpop.f32.mrf.mxu0
        %2846 = vmatprep.mubr.bf16.mxu0 0
        %2847 = vmatmul.mubr.bf16.gmra.mxu0 %v2737
        %v2848 = vpop.f32.mrf.mxu0
        %v2849 = vadd.f32 0.0, %v2848
        %v2850 = vpop.f32.mrf.mxu0
        %v2851 = vpop.f32.mrf.mxu0
        %v2852 = vadd.f32 0.0, %v2851
        %v2853 = vpop.f32.mrf.mxu0
        %2854 = vmatprep.mubr.bf16.mxu0 0
        %2855 = vmatmul.mubr.bf16.gmra.mxu0 %v2740
        %v2856 = vpop.f32.mrf.mxu0
        %v2857 = vadd.f32 0.0, %v2856
        %v2858 = vpop.f32.mrf.mxu0
        %v2859 = vpop.f32.mrf.mxu0
        %v2860 = vadd.f32 0.0, %v2859
        %v2861 = vpop.f32.mrf.mxu0
        %2862 = vmatprep.mubr.bf16.mxu0 0
        %2863 = vmatmul.mubr.bf16.gmra.mxu0 %v2743
        %v2864 = vpop.f32.mrf.mxu0
        %v2865 = vadd.f32 0.0, %v2864
        %v2866 = vpop.f32.mrf.mxu0
        %v2867 = vpop.f32.mrf.mxu0
        %v2868 = vadd.f32 0.0, %v2867
        %v2869 = vpop.f32.mrf.mxu0
        %2870 = vmatprep.mubr.bf16.mxu0 0
        %2871 = vmatmul.mubr.bf16.gmra.mxu0 %v2746
        %v2872 = vpop.f32.mrf.mxu0
        %v2873 = vadd.f32 0.0, %v2872
        %v2874 = vpop.f32.mrf.mxu0
        %v2875 = vpop.f32.mrf.mxu0
        %v2876 = vadd.f32 0.0, %v2875
        %v2877 = vpop.f32.mrf.mxu0
        %2878 = vmatprep.mubr.bf16.mxu0 0
        %2879 = vmatmul.mubr.bf16.gmra.mxu0 %v2749
        %v2880 = vpop.f32.mrf.mxu0
        %v2881 = vadd.f32 0.0, %v2880
        %v2882 = vpop.f32.mrf.mxu0
        %v2883 = vpop.f32.mrf.mxu0
        %v2884 = vadd.f32 0.0, %v2883
        %v2885 = vpop.f32.mrf.mxu0
        %2886 = vmatprep.mubr.bf16.mxu0 0
        %2887 = vmatmul.mubr.bf16.gmra.mxu0 %v2752
        %v2888 = vpop.f32.mrf.mxu0
        %v2889 = vadd.f32 0.0, %v2888
        %v2890 = vpop.f32.mrf.mxu0
        %v2891 = vpop.f32.mrf.mxu0
        %v2892 = vadd.f32 0.0, %v2891
        %v2893 = vpop.f32.mrf.mxu0
        %2894 = vmatprep.mubr.bf16.mxu0 0
        %2895 = vmatmul.mubr.bf16.gmra.mxu0 %v2755
        %v2896 = vpop.f32.mrf.mxu0
        %v2897 = vadd.f32 0.0, %v2896
        %v2898 = vpop.f32.mrf.mxu0
        %v2899 = vpop.f32.mrf.mxu0
        %v2900 = vadd.f32 0.0, %v2899
        %v2901 = vpop.f32.mrf.mxu0
        %2902 = vmatprep.mubr.bf16.mxu0 0
        %2903 = vmatmul.mubr.bf16.gmra.mxu0 %v2758
        %v2904 = vpop.f32.mrf.mxu0
        %v2905 = vadd.f32 0.0, %v2904
        %v2906 = vpop.f32.mrf.mxu0
        %v2907 = vpop.f32.mrf.mxu0
        %v2908 = vadd.f32 0.0, %v2907
        %v2909 = vpop.f32.mrf.mxu0
        %2910 = vmatprep.mubr.bf16.mxu0 0
        %2911 = vmatmul.mubr.bf16.gmra.mxu0 %v2761
        %v2912 = vpop.f32.mrf.mxu0
        %v2913 = vadd.f32 0.0, %v2912
        %v2914 = vpop.f32.mrf.mxu0
        %v2915 = vpop.f32.mrf.mxu0
        %v2916 = vadd.f32 0.0, %v2915
        %v2917 = vpop.f32.mrf.mxu0
        %2918 = vmatprep.mubr.bf16.mxu0 0
        %2919 = vmatmul.mubr.bf16.gmra.mxu0 %v2764
        %v2920 = vpop.f32.mrf.mxu0
        %v2921 = vadd.f32 0.0, %v2920
        %v2922 = vpop.f32.mrf.mxu0
        %v2923 = vpop.f32.mrf.mxu0
        %v2924 = vadd.f32 0.0, %v2923
        %v2925 = vpop.f32.mrf.mxu0
        %2926 = vdwg.mxu0
        %v2927 = vadd.f32 %v2573, %v2801
        %v2928 = vadd.f32 %v2574, %v2804
        %v2929 = vadd.f32 %v2575, %v2809
        %v2930 = vadd.f32 %v2576, %v2812
        %v2931 = vadd.f32 %v2577, %v2817
        %v2932 = vadd.f32 %v2578, %v2820
        %v2933 = vadd.f32 %v2579, %v2825
        %v2934 = vadd.f32 %v2580, %v2828
        %v2935 = vadd.f32 %v2581, %v2833
        %v2936 = vadd.f32 %v2582, %v2836
        %v2937 = vadd.f32 %v2583, %v2841
        %v2938 = vadd.f32 %v2584, %v2844
        %v2939 = vadd.f32 %v2585, %v2849
        %v2940 = vadd.f32 %v2586, %v2852
        %v2941 = vadd.f32 %v2587, %v2857
        %v2942 = vadd.f32 %v2588, %v2860
        %v2943 = vadd.f32 %v2589, %v2865
        %v2944 = vadd.f32 %v2590, %v2868
        %v2945 = vadd.f32 %v2591, %v2873
        %v2946 = vadd.f32 %v2592, %v2876
        %v2947 = vadd.f32 %v2593, %v2881
        %v2948 = vadd.f32 %v2594, %v2884
        %v2949 = vadd.f32 %v2595, %v2889
        %v2950 = vadd.f32 %v2596, %v2892
        %v2951 = vadd.f32 %v2597, %v2897
        %v2952 = vadd.f32 %v2598, %v2900
        %v2953 = vadd.f32 %v2599, %v2905
        %v2954 = vadd.f32 %v2600, %v2908
        %v2955 = vadd.f32 %v2601, %v2913
        %v2956 = vadd.f32 %v2602, %v2916
        %v2957 = vadd.f32 %v2603, %v2921
        %v2958 = vadd.f32 %v2604, %v2924
        %v2959 = vld [vmem:[#allocation2 + $0x18] sm:$0xff]
        %v2960 = vld [vmem:[#allocation2 + $0x20] sm:$0xff]
        %v2961 = vld [vmem:[#allocation2 + $0x28] sm:$0xff]
        %v2962 = vld [vmem:[#allocation2 + $0x30] sm:$0xff]
        %v2963 = vld [vmem:[#allocation2 + $0x38] sm:$0xff]
        %v2964 = vld [vmem:[#allocation2 + $0x40] sm:$0xff]
        %v2965 = vld [vmem:[#allocation2 + $0x48] sm:$0xff]
        %v2966 = vld [vmem:[#allocation2 + $0x50] sm:$0xff]
        %v2967 = vld [vmem:[#allocation2 + $0x58] sm:$0xff]
        %v2968 = vld [vmem:[#allocation2 + $0x60] sm:$0xff]
        %v2969 = vld [vmem:[#allocation2 + $0x68] sm:$0xff]
        %v2970 = vld [vmem:[#allocation2 + $0x70] sm:$0xff]
        %v2971 = vld [vmem:[#allocation2 + $0x78] sm:$0xff]
        %v2972 = vld [vmem:[#allocation2 + $0x80] sm:$0xff]
        %v2973 = vld [vmem:[#allocation2 + $0x88] sm:$0xff]
        %v2974 = vld [vmem:[#allocation2 + $0x90] sm:$0xff]
        %v2975 = vld [vmem:[#allocation2 + $0x98] sm:$0xff]
        %v2976 = vld [vmem:[#allocation2 + $0xa0] sm:$0xff]
        %v2977 = vld [vmem:[#allocation2 + $0xa8] sm:$0xff]
        %v2978 = vld [vmem:[#allocation2 + $0xb0] sm:$0xff]
        %v2979 = vld [vmem:[#allocation2 + $0xb8] sm:$0xff]
        %v2980 = vld [vmem:[#allocation2 + $0xc0] sm:$0xff]
        %v2981 = vld [vmem:[#allocation2 + $0xc8] sm:$0xff]
        %v2982 = vld [vmem:[#allocation2 + $0xd0] sm:$0xff]
        %v2983 = vld [vmem:[#allocation2 + $0xd8] sm:$0xff]
        %v2984 = vld [vmem:[#allocation2 + $0xe0] sm:$0xff]
        %v2985 = vld [vmem:[#allocation2 + $0xe8] sm:$0xff]
        %v2986 = vld [vmem:[#allocation2 + $0xf0] sm:$0xff]
        %v2987 = vld [vmem:[#allocation2 + $0xf8] sm:$0xff]
        %v2988 = vld [vmem:[#allocation2 + $0x100] sm:$0xff]
        %v2989 = vld [vmem:[#allocation2 + $0x108] sm:$0xff]
        %v2990 = vld [vmem:[#allocation2 + $0x110] sm:$0xff]
        %v2991 = vpack.c.bf16 %v2960, %v2959
        %v2992 = vpack.c.bf16 %v2962, %v2961
        %v2993 = vpack.c.bf16 %v2964, %v2963
        %v2994 = vpack.c.bf16 %v2966, %v2965
        %v2995 = vpack.c.bf16 %v2968, %v2967
        %v2996 = vpack.c.bf16 %v2970, %v2969
        %v2997 = vpack.c.bf16 %v2972, %v2971
        %v2998 = vpack.c.bf16 %v2974, %v2973
        %v2999 = vpack.c.bf16 %v2976, %v2975
        %v3000 = vpack.c.bf16 %v2978, %v2977
        %v3001 = vpack.c.bf16 %v2980, %v2979
        %v3002 = vpack.c.bf16 %v2982, %v2981
        %v3003 = vpack.c.bf16 %v2984, %v2983
        %v3004 = vpack.c.bf16 %v2986, %v2985
        %v3005 = vpack.c.bf16 %v2988, %v2987
        %v3006 = vpack.c.bf16 %v2990, %v2989
        %s3007 = scalar_lea.vmem %s8, 128
        %v3008 = vld [vmem:[%s3007] sm:$0xf]
        %v3009 = vld [vmem:[%s3007 + $0x4] sm:$0xf]
        %v3010 = vld [vmem:[%s3007 + $0x8] sm:$0xf]
        %v3011 = vld [vmem:[%s3007 + $0xc] sm:$0xf]
        %v3012 = vld [vmem:[%s3007 + $0x10] sm:$0xf]
        %v3013 = vld [vmem:[%s3007 + $0x14] sm:$0xf]
        %v3014 = vld [vmem:[%s3007 + $0x18] sm:$0xf]
        %v3015 = vld [vmem:[%s3007 + $0x1c] sm:$0xf]
        %v3024 = vunpack.c.l.b16 %v3008
        %v3025 = vunpack.c.l.b16 %v3009
        %v3026 = vunpack.c.l.b16 %v3010
        %v3027 = vunpack.c.l.b16 %v3011
        %v3028 = vunpack.c.l.b16 %v3012
        %v3029 = vunpack.c.l.b16 %v3013
        %v3030 = vunpack.c.l.b16 %v3014
        %v3031 = vunpack.c.l.b16 %v3015
        %v3032 = vpack.c.b16 %v3025, %v3024
        %v3033 = vpack.c.b16 %v3027, %v3026
        %v3034 = vpack.c.b16 %v3029, %v3028
        %v3035 = vpack.c.b16 %v3031, %v3030
        %v3041 = vsel %vm825, %v2991, 0
        %v3044 = vsel %vm825, %v2992, 0
        %v3047 = vsel %vm825, %v2993, 0
        %v3050 = vsel %vm825, %v2994, 0
        %v3053 = vsel %vm825, %v2995, 0
        %v3056 = vsel %vm825, %v2996, 0
        %v3059 = vsel %vm825, %v2997, 0
        %v3062 = vsel %vm825, %v2998, 0
        %v3065 = vsel %vm825, %v2999, 0
        %v3068 = vsel %vm825, %v3000, 0
        %v3071 = vsel %vm825, %v3001, 0
        %v3074 = vsel %vm825, %v3002, 0
        %v3077 = vsel %vm825, %v3003, 0
        %v3080 = vsel %vm825, %v3004, 0
        %v3083 = vsel %vm825, %v3005, 0
        %v3086 = vsel %vm825, %v3006, 0
        %3088 = vmatprep.subr.bf16.mxu0 0
        %3089 = vmatpush1.bf16.msra.mxu0 0
        %3090 = vmatprep.subr.bf16.mxu0 0
        %3091 = vmatpush1.bf16.msra.mxu0 0
        %3092 = vmatprep.subr.bf16.mxu0 0
        %3093 = vmatpush1.bf16.msra.mxu0 0
        %3094 = vmatprep.subr.bf16.mxu0 0
        %3095 = vmatpush1.bf16.msra.mxu0 0
        %3096 = vmatprep.subr.bf16.mxu0 0
        %3097 = vmatpush1.bf16.msra.mxu0 %v3035
        %3098 = vmatprep.subr.bf16.mxu0 0
        %3099 = vmatpush1.bf16.msra.mxu0 %v3034
        %3100 = vmatprep.subr.bf16.mxu0 0
        %3101 = vmatpush1.bf16.msra.mxu0 %v3033
        %3102 = vmatprep.subr.bf16.mxu0 0
        %3103 = vmatpush1.bf16.msra.mxu0 %v3032
        %3104 = vmatprep.subr.bf16.mxu0 0
        %3105 = vmatpush2.bf16.msra.mxu0 0
        %3106 = vmatprep.subr.bf16.mxu0 0
        %3107 = vmatpush2.bf16.msra.mxu0 0
        %3108 = vmatprep.subr.bf16.mxu0 0
        %3109 = vmatpush2.bf16.msra.mxu0 0
        %3110 = vmatprep.subr.bf16.mxu0 0
        %3111 = vmatpush2.bf16.msra.mxu0 0
        %3112 = vmatprep.subr.bf16.mxu0 0
        %3113 = vmatpush2.bf16.msra.mxu0 0
        %3114 = vmatprep.subr.bf16.mxu0 0
        %3115 = vmatpush2.bf16.msra.mxu0 0
        %3116 = vmatprep.subr.bf16.mxu0 0
        %3117 = vmatpush2.bf16.msra.mxu0 0
        %3118 = vmatprep.subr.bf16.mxu0 0
        %3119 = vmatpush2.bf16.msra.mxu0 0
        %3120 = vmatprep.mubr.bf16.mxu0 0
        %3121 = vmatmul.mubr.bf16.gmra.mxu0 %v3041
        %v3122 = vpop.f32.mrf.mxu0
        %v3123 = vadd.f32 0.0, %v3122
        %v3124 = vpop.f32.mrf.mxu0
        %v3125 = vpop.f32.mrf.mxu0
        %v3126 = vadd.f32 0.0, %v3125
        %v3127 = vpop.f32.mrf.mxu0
        %3128 = vmatprep.mubr.bf16.mxu0 0
        %3129 = vmatmul.mubr.bf16.gmra.mxu0 %v3044
        %v3130 = vpop.f32.mrf.mxu0
        %v3131 = vadd.f32 0.0, %v3130
        %v3132 = vpop.f32.mrf.mxu0
        %v3133 = vpop.f32.mrf.mxu0
        %v3134 = vadd.f32 0.0, %v3133
        %v3135 = vpop.f32.mrf.mxu0
        %3136 = vmatprep.mubr.bf16.mxu0 0
        %3137 = vmatmul.mubr.bf16.gmra.mxu0 %v3047
        %v3138 = vpop.f32.mrf.mxu0
        %v3139 = vadd.f32 0.0, %v3138
        %v3140 = vpop.f32.mrf.mxu0
        %v3141 = vpop.f32.mrf.mxu0
        %v3142 = vadd.f32 0.0, %v3141
        %v3143 = vpop.f32.mrf.mxu0
        %3144 = vmatprep.mubr.bf16.mxu0 0
        %3145 = vmatmul.mubr.bf16.gmra.mxu0 %v3050
        %v3146 = vpop.f32.mrf.mxu0
        %v3147 = vadd.f32 0.0, %v3146
        %v3148 = vpop.f32.mrf.mxu0
        %v3149 = vpop.f32.mrf.mxu0
        %v3150 = vadd.f32 0.0, %v3149
        %v3151 = vpop.f32.mrf.mxu0
        %3152 = vmatprep.mubr.bf16.mxu0 0
        %3153 = vmatmul.mubr.bf16.gmra.mxu0 %v3053
        %v3154 = vpop.f32.mrf.mxu0
        %v3155 = vadd.f32 0.0, %v3154
        %v3156 = vpop.f32.mrf.mxu0
        %v3157 = vpop.f32.mrf.mxu0
        %v3158 = vadd.f32 0.0, %v3157
        %v3159 = vpop.f32.mrf.mxu0
        %3160 = vmatprep.mubr.bf16.mxu0 0
        %3161 = vmatmul.mubr.bf16.gmra.mxu0 %v3056
        %v3162 = vpop.f32.mrf.mxu0
        %v3163 = vadd.f32 0.0, %v3162
        %v3164 = vpop.f32.mrf.mxu0
        %v3165 = vpop.f32.mrf.mxu0
        %v3166 = vadd.f32 0.0, %v3165
        %v3167 = vpop.f32.mrf.mxu0
        %3168 = vmatprep.mubr.bf16.mxu0 0
        %3169 = vmatmul.mubr.bf16.gmra.mxu0 %v3059
        %v3170 = vpop.f32.mrf.mxu0
        %v3171 = vadd.f32 0.0, %v3170
        %v3172 = vpop.f32.mrf.mxu0
        %v3173 = vpop.f32.mrf.mxu0
        %v3174 = vadd.f32 0.0, %v3173
        %v3175 = vpop.f32.mrf.mxu0
        %3176 = vmatprep.mubr.bf16.mxu0 0
        %3177 = vmatmul.mubr.bf16.gmra.mxu0 %v3062
        %v3178 = vpop.f32.mrf.mxu0
        %v3179 = vadd.f32 0.0, %v3178
        %v3180 = vpop.f32.mrf.mxu0
        %v3181 = vpop.f32.mrf.mxu0
        %v3182 = vadd.f32 0.0, %v3181
        %v3183 = vpop.f32.mrf.mxu0
        %3184 = vmatprep.mubr.bf16.mxu0 0
        %3185 = vmatmul.mubr.bf16.gmra.mxu0 %v3065
        %v3186 = vpop.f32.mrf.mxu0
        %v3187 = vadd.f32 0.0, %v3186
        %v3188 = vpop.f32.mrf.mxu0
        %v3189 = vpop.f32.mrf.mxu0
        %v3190 = vadd.f32 0.0, %v3189
        %v3191 = vpop.f32.mrf.mxu0
        %3192 = vmatprep.mubr.bf16.mxu0 0
        %3193 = vmatmul.mubr.bf16.gmra.mxu0 %v3068
        %v3194 = vpop.f32.mrf.mxu0
        %v3195 = vadd.f32 0.0, %v3194
        %v3196 = vpop.f32.mrf.mxu0
        %v3197 = vpop.f32.mrf.mxu0
        %v3198 = vadd.f32 0.0, %v3197
        %v3199 = vpop.f32.mrf.mxu0
        %3200 = vmatprep.mubr.bf16.mxu0 0
        %3201 = vmatmul.mubr.bf16.gmra.mxu0 %v3071
        %v3202 = vpop.f32.mrf.mxu0
        %v3203 = vadd.f32 0.0, %v3202
        %v3204 = vpop.f32.mrf.mxu0
        %v3205 = vpop.f32.mrf.mxu0
        %v3206 = vadd.f32 0.0, %v3205
        %v3207 = vpop.f32.mrf.mxu0
        %3208 = vmatprep.mubr.bf16.mxu0 0
        %3209 = vmatmul.mubr.bf16.gmra.mxu0 %v3074
        %v3210 = vpop.f32.mrf.mxu0
        %v3211 = vadd.f32 0.0, %v3210
        %v3212 = vpop.f32.mrf.mxu0
        %v3213 = vpop.f32.mrf.mxu0
        %v3214 = vadd.f32 0.0, %v3213
        %v3215 = vpop.f32.mrf.mxu0
        %3216 = vmatprep.mubr.bf16.mxu0 0
        %3217 = vmatmul.mubr.bf16.gmra.mxu0 %v3077
        %v3218 = vpop.f32.mrf.mxu0
        %v3219 = vadd.f32 0.0, %v3218
        %v3220 = vpop.f32.mrf.mxu0
        %v3221 = vpop.f32.mrf.mxu0
        %v3222 = vadd.f32 0.0, %v3221
        %v3223 = vpop.f32.mrf.mxu0
        %3224 = vmatprep.mubr.bf16.mxu0 0
        %3225 = vmatmul.mubr.bf16.gmra.mxu0 %v3080
        %v3226 = vpop.f32.mrf.mxu0
        %v3227 = vadd.f32 0.0, %v3226
        %v3228 = vpop.f32.mrf.mxu0
        %v3229 = vpop.f32.mrf.mxu0
        %v3230 = vadd.f32 0.0, %v3229
        %v3231 = vpop.f32.mrf.mxu0
        %3232 = vmatprep.mubr.bf16.mxu0 0
        %3233 = vmatmul.mubr.bf16.gmra.mxu0 %v3083
        %v3234 = vpop.f32.mrf.mxu0
        %v3235 = vadd.f32 0.0, %v3234
        %v3236 = vpop.f32.mrf.mxu0
        %v3237 = vpop.f32.mrf.mxu0
        %v3238 = vadd.f32 0.0, %v3237
        %v3239 = vpop.f32.mrf.mxu0
        %3240 = vmatprep.mubr.bf16.mxu0 0
        %3241 = vmatmul.mubr.bf16.gmra.mxu0 %v3086
        %v3242 = vpop.f32.mrf.mxu0
        %v3243 = vadd.f32 0.0, %v3242
        %v3244 = vpop.f32.mrf.mxu0
        %v3245 = vpop.f32.mrf.mxu0
        %v3246 = vadd.f32 0.0, %v3245
        %v3247 = vpop.f32.mrf.mxu0
        %3248 = vdwg.mxu0
        %v3249 = vadd.f32 %v2927, %v3123
        %v3250 = vadd.f32 %v2928, %v3126
        %v3251 = vadd.f32 %v2929, %v3131
        %v3252 = vadd.f32 %v2930, %v3134
        %v3253 = vadd.f32 %v2931, %v3139
        %v3254 = vadd.f32 %v2932, %v3142
        %v3255 = vadd.f32 %v2933, %v3147
        %v3256 = vadd.f32 %v2934, %v3150
        %v3257 = vadd.f32 %v2935, %v3155
        %v3258 = vadd.f32 %v2936, %v3158
        %v3259 = vadd.f32 %v2937, %v3163
        %v3260 = vadd.f32 %v2938, %v3166
        %v3261 = vadd.f32 %v2939, %v3171
        %v3262 = vadd.f32 %v2940, %v3174
        %v3263 = vadd.f32 %v2941, %v3179
        %v3264 = vadd.f32 %v2942, %v3182
        %v3265 = vadd.f32 %v2943, %v3187
        %v3266 = vadd.f32 %v2944, %v3190
        %v3267 = vadd.f32 %v2945, %v3195
        %v3268 = vadd.f32 %v2946, %v3198
        %v3269 = vadd.f32 %v2947, %v3203
        %v3270 = vadd.f32 %v2948, %v3206
        %v3271 = vadd.f32 %v2949, %v3211
        %v3272 = vadd.f32 %v2950, %v3214
        %v3273 = vadd.f32 %v2951, %v3219
        %v3274 = vadd.f32 %v2952, %v3222
        %v3275 = vadd.f32 %v2953, %v3227
        %v3276 = vadd.f32 %v2954, %v3230
        %v3277 = vadd.f32 %v2955, %v3235
        %v3278 = vadd.f32 %v2956, %v3238
        %v3279 = vadd.f32 %v2957, %v3243
        %v3280 = vadd.f32 %v2958, %v3246
        %v3281 = vld [vmem:[#allocation2 + $0x19] sm:$0xff]
        %v3282 = vld [vmem:[#allocation2 + $0x21] sm:$0xff]
        %v3283 = vld [vmem:[#allocation2 + $0x29] sm:$0xff]
        %v3284 = vld [vmem:[#allocation2 + $0x31] sm:$0xff]
        %v3285 = vld [vmem:[#allocation2 + $0x39] sm:$0xff]
        %v3286 = vld [vmem:[#allocation2 + $0x41] sm:$0xff]
        %v3287 = vld [vmem:[#allocation2 + $0x49] sm:$0xff]
        %v3288 = vld [vmem:[#allocation2 + $0x51] sm:$0xff]
        %v3289 = vld [vmem:[#allocation2 + $0x59] sm:$0xff]
        %v3290 = vld [vmem:[#allocation2 + $0x61] sm:$0xff]
        %v3291 = vld [vmem:[#allocation2 + $0x69] sm:$0xff]
        %v3292 = vld [vmem:[#allocation2 + $0x71] sm:$0xff]
        %v3293 = vld [vmem:[#allocation2 + $0x79] sm:$0xff]
        %v3294 = vld [vmem:[#allocation2 + $0x81] sm:$0xff]
        %v3295 = vld [vmem:[#allocation2 + $0x89] sm:$0xff]
        %v3296 = vld [vmem:[#allocation2 + $0x91] sm:$0xff]
        %v3297 = vld [vmem:[#allocation2 + $0x99] sm:$0xff]
        %v3298 = vld [vmem:[#allocation2 + $0xa1] sm:$0xff]
        %v3299 = vld [vmem:[#allocation2 + $0xa9] sm:$0xff]
        %v3300 = vld [vmem:[#allocation2 + $0xb1] sm:$0xff]
        %v3301 = vld [vmem:[#allocation2 + $0xb9] sm:$0xff]
        %v3302 = vld [vmem:[#allocation2 + $0xc1] sm:$0xff]
        %v3303 = vld [vmem:[#allocation2 + $0xc9] sm:$0xff]
        %v3304 = vld [vmem:[#allocation2 + $0xd1] sm:$0xff]
        %v3305 = vld [vmem:[#allocation2 + $0xd9] sm:$0xff]
        %v3306 = vld [vmem:[#allocation2 + $0xe1] sm:$0xff]
        %v3307 = vld [vmem:[#allocation2 + $0xe9] sm:$0xff]
        %v3308 = vld [vmem:[#allocation2 + $0xf1] sm:$0xff]
        %v3309 = vld [vmem:[#allocation2 + $0xf9] sm:$0xff]
        %v3310 = vld [vmem:[#allocation2 + $0x101] sm:$0xff]
        %v3311 = vld [vmem:[#allocation2 + $0x109] sm:$0xff]
        %v3312 = vld [vmem:[#allocation2 + $0x111] sm:$0xff]
        %v3313 = vmul.f32 %v3281, %v2126
        %v3314 = vmul.f32 %v3282, %v2131
        %v3315 = vmul.f32 %v3283, %v2136
        %v3316 = vmul.f32 %v3284, %v2141
        %v3317 = vmul.f32 %v3285, %v2146
        %v3318 = vmul.f32 %v3286, %v2151
        %v3319 = vmul.f32 %v3287, %v2156
        %v3320 = vmul.f32 %v3288, %v2161
        %v3321 = vmul.f32 %v3289, %v2166
        %v3322 = vmul.f32 %v3290, %v2171
        %v3323 = vmul.f32 %v3291, %v2176
        %v3324 = vmul.f32 %v3292, %v2181
        %v3325 = vmul.f32 %v3293, %v2186
        %v3326 = vmul.f32 %v3294, %v2191
        %v3327 = vmul.f32 %v3295, %v2196
        %v3328 = vmul.f32 %v3296, %v2201
        %v3329 = vmul.f32 %v3297, %v2206
        %v3330 = vmul.f32 %v3298, %v2211
        %v3331 = vmul.f32 %v3299, %v2216
        %v3332 = vmul.f32 %v3300, %v2221
        %v3333 = vmul.f32 %v3301, %v2226
        %v3334 = vmul.f32 %v3302, %v2231
        %v3335 = vmul.f32 %v3303, %v2236
        %v3336 = vmul.f32 %v3304, %v2241
        %v3337 = vmul.f32 %v3305, %v2246
        %v3338 = vmul.f32 %v3306, %v2251
        %v3339 = vmul.f32 %v3307, %v2256
        %v3340 = vmul.f32 %v3308, %v2261
        %v3341 = vmul.f32 %v3309, %v2266
        %v3342 = vmul.f32 %v3310, %v2271
        %v3343 = vmul.f32 %v3311, %v2276
        %v3344 = vmul.f32 %v3312, %v2281
        %v3345 = vpack.c.bf16 %v3314, %v3313
        %v3346 = vpack.c.bf16 %v3316, %v3315
        %v3347 = vpack.c.bf16 %v3318, %v3317
        %v3348 = vpack.c.bf16 %v3320, %v3319
        %v3349 = vpack.c.bf16 %v3322, %v3321
        %v3350 = vpack.c.bf16 %v3324, %v3323
        %v3351 = vpack.c.bf16 %v3326, %v3325
        %v3352 = vpack.c.bf16 %v3328, %v3327
        %v3353 = vpack.c.bf16 %v3330, %v3329
        %v3354 = vpack.c.bf16 %v3332, %v3331
        %v3355 = vpack.c.bf16 %v3334, %v3333
        %v3356 = vpack.c.bf16 %v3336, %v3335
        %v3357 = vpack.c.bf16 %v3338, %v3337
        %v3358 = vpack.c.bf16 %v3340, %v3339
        %v3359 = vpack.c.bf16 %v3342, %v3341
        %v3360 = vpack.c.bf16 %v3344, %v3343
        %s3361 = scalar_lea.vmem %s8, 160
        %v3362 = vld [vmem:[%s3361] sm:$0xf]
        %v3363 = vld [vmem:[%s3361 + $0x4] sm:$0xf]
        %v3364 = vld [vmem:[%s3361 + $0x8] sm:$0xf]
        %v3365 = vld [vmem:[%s3361 + $0xc] sm:$0xf]
        %v3366 = vld [vmem:[%s3361 + $0x10] sm:$0xf]
        %v3367 = vld [vmem:[%s3361 + $0x14] sm:$0xf]
        %v3368 = vld [vmem:[%s3361 + $0x18] sm:$0xf]
        %v3369 = vld [vmem:[%s3361 + $0x1c] sm:$0xf]
        %v3378 = vunpack.c.l.b16 %v3362
        %v3379 = vunpack.c.l.b16 %v3363
        %v3380 = vunpack.c.l.b16 %v3364
        %v3381 = vunpack.c.l.b16 %v3365
        %v3382 = vunpack.c.l.b16 %v3366
        %v3383 = vunpack.c.l.b16 %v3367
        %v3384 = vunpack.c.l.b16 %v3368
        %v3385 = vunpack.c.l.b16 %v3369
        %v3386 = vpack.c.b16 %v3379, %v3378
        %v3387 = vpack.c.b16 %v3381, %v3380
        %v3388 = vpack.c.b16 %v3383, %v3382
        %v3389 = vpack.c.b16 %v3385, %v3384
        %v3395 = vsel %vm825, %v3345, 0
        %v3398 = vsel %vm825, %v3346, 0
        %v3401 = vsel %vm825, %v3347, 0
        %v3404 = vsel %vm825, %v3348, 0
        %v3407 = vsel %vm825, %v3349, 0
        %v3410 = vsel %vm825, %v3350, 0
        %v3413 = vsel %vm825, %v3351, 0
        %v3416 = vsel %vm825, %v3352, 0
        %v3419 = vsel %vm825, %v3353, 0
        %v3422 = vsel %vm825, %v3354, 0
        %v3425 = vsel %vm825, %v3355, 0
        %v3428 = vsel %vm825, %v3356, 0
        %v3431 = vsel %vm825, %v3357, 0
        %v3434 = vsel %vm825, %v3358, 0
        %v3437 = vsel %vm825, %v3359, 0
        %v3440 = vsel %vm825, %v3360, 0
        %3442 = vmatprep.subr.bf16.mxu0 0
        %3443 = vmatpush1.bf16.msra.mxu0 0
        %3444 = vmatprep.subr.bf16.mxu0 0
        %3445 = vmatpush1.bf16.msra.mxu0 0
        %3446 = vmatprep.subr.bf16.mxu0 0
        %3447 = vmatpush1.bf16.msra.mxu0 0
        %3448 = vmatprep.subr.bf16.mxu0 0
        %3449 = vmatpush1.bf16.msra.mxu0 0
        %3450 = vmatprep.subr.bf16.mxu0 0
        %3451 = vmatpush1.bf16.msra.mxu0 %v3389
        %3452 = vmatprep.subr.bf16.mxu0 0
        %3453 = vmatpush1.bf16.msra.mxu0 %v3388
        %3454 = vmatprep.subr.bf16.mxu0 0
        %3455 = vmatpush1.bf16.msra.mxu0 %v3387
        %3456 = vmatprep.subr.bf16.mxu0 0
        %3457 = vmatpush1.bf16.msra.mxu0 %v3386
        %3458 = vmatprep.subr.bf16.mxu0 0
        %3459 = vmatpush2.bf16.msra.mxu0 0
        %3460 = vmatprep.subr.bf16.mxu0 0
        %3461 = vmatpush2.bf16.msra.mxu0 0
        %3462 = vmatprep.subr.bf16.mxu0 0
        %3463 = vmatpush2.bf16.msra.mxu0 0
        %3464 = vmatprep.subr.bf16.mxu0 0
        %3465 = vmatpush2.bf16.msra.mxu0 0
        %3466 = vmatprep.subr.bf16.mxu0 0
        %3467 = vmatpush2.bf16.msra.mxu0 0
        %3468 = vmatprep.subr.bf16.mxu0 0
        %3469 = vmatpush2.bf16.msra.mxu0 0
        %3470 = vmatprep.subr.bf16.mxu0 0
        %3471 = vmatpush2.bf16.msra.mxu0 0
        %3472 = vmatprep.subr.bf16.mxu0 0
        %3473 = vmatpush2.bf16.msra.mxu0 0
        %3474 = vmatprep.mubr.bf16.mxu0 0
        %3475 = vmatmul.mubr.bf16.gmra.mxu0 %v3395
        %v3476 = vpop.f32.mrf.mxu0
        %v3477 = vadd.f32 0.0, %v3476
        %v3478 = vpop.f32.mrf.mxu0
        %v3479 = vpop.f32.mrf.mxu0
        %v3480 = vadd.f32 0.0, %v3479
        %v3481 = vpop.f32.mrf.mxu0
        %3482 = vmatprep.mubr.bf16.mxu0 0
        %3483 = vmatmul.mubr.bf16.gmra.mxu0 %v3398
        %v3484 = vpop.f32.mrf.mxu0
        %v3485 = vadd.f32 0.0, %v3484
        %v3486 = vpop.f32.mrf.mxu0
        %v3487 = vpop.f32.mrf.mxu0
        %v3488 = vadd.f32 0.0, %v3487
        %v3489 = vpop.f32.mrf.mxu0
        %3490 = vmatprep.mubr.bf16.mxu0 0
        %3491 = vmatmul.mubr.bf16.gmra.mxu0 %v3401
        %v3492 = vpop.f32.mrf.mxu0
        %v3493 = vadd.f32 0.0, %v3492
        %v3494 = vpop.f32.mrf.mxu0
        %v3495 = vpop.f32.mrf.mxu0
        %v3496 = vadd.f32 0.0, %v3495
        %v3497 = vpop.f32.mrf.mxu0
        %3498 = vmatprep.mubr.bf16.mxu0 0
        %3499 = vmatmul.mubr.bf16.gmra.mxu0 %v3404
        %v3500 = vpop.f32.mrf.mxu0
        %v3501 = vadd.f32 0.0, %v3500
        %v3502 = vpop.f32.mrf.mxu0
        %v3503 = vpop.f32.mrf.mxu0
        %v3504 = vadd.f32 0.0, %v3503
        %v3505 = vpop.f32.mrf.mxu0
        %3506 = vmatprep.mubr.bf16.mxu0 0
        %3507 = vmatmul.mubr.bf16.gmra.mxu0 %v3407
        %v3508 = vpop.f32.mrf.mxu0
        %v3509 = vadd.f32 0.0, %v3508
        %v3510 = vpop.f32.mrf.mxu0
        %v3511 = vpop.f32.mrf.mxu0
        %v3512 = vadd.f32 0.0, %v3511
        %v3513 = vpop.f32.mrf.mxu0
        %3514 = vmatprep.mubr.bf16.mxu0 0
        %3515 = vmatmul.mubr.bf16.gmra.mxu0 %v3410
        %v3516 = vpop.f32.mrf.mxu0
        %v3517 = vadd.f32 0.0, %v3516
        %v3518 = vpop.f32.mrf.mxu0
        %v3519 = vpop.f32.mrf.mxu0
        %v3520 = vadd.f32 0.0, %v3519
        %v3521 = vpop.f32.mrf.mxu0
        %3522 = vmatprep.mubr.bf16.mxu0 0
        %3523 = vmatmul.mubr.bf16.gmra.mxu0 %v3413
        %v3524 = vpop.f32.mrf.mxu0
        %v3525 = vadd.f32 0.0, %v3524
        %v3526 = vpop.f32.mrf.mxu0
        %v3527 = vpop.f32.mrf.mxu0
        %v3528 = vadd.f32 0.0, %v3527
        %v3529 = vpop.f32.mrf.mxu0
        %3530 = vmatprep.mubr.bf16.mxu0 0
        %3531 = vmatmul.mubr.bf16.gmra.mxu0 %v3416
        %v3532 = vpop.f32.mrf.mxu0
        %v3533 = vadd.f32 0.0, %v3532
        %v3534 = vpop.f32.mrf.mxu0
        %v3535 = vpop.f32.mrf.mxu0
        %v3536 = vadd.f32 0.0, %v3535
        %v3537 = vpop.f32.mrf.mxu0
        %3538 = vmatprep.mubr.bf16.mxu0 0
        %3539 = vmatmul.mubr.bf16.gmra.mxu0 %v3419
        %v3540 = vpop.f32.mrf.mxu0
        %v3541 = vadd.f32 0.0, %v3540
        %v3542 = vpop.f32.mrf.mxu0
        %v3543 = vpop.f32.mrf.mxu0
        %v3544 = vadd.f32 0.0, %v3543
        %v3545 = vpop.f32.mrf.mxu0
        %3546 = vmatprep.mubr.bf16.mxu0 0
        %3547 = vmatmul.mubr.bf16.gmra.mxu0 %v3422
        %v3548 = vpop.f32.mrf.mxu0
        %v3549 = vadd.f32 0.0, %v3548
        %v3550 = vpop.f32.mrf.mxu0
        %v3551 = vpop.f32.mrf.mxu0
        %v3552 = vadd.f32 0.0, %v3551
        %v3553 = vpop.f32.mrf.mxu0
        %3554 = vmatprep.mubr.bf16.mxu0 0
        %3555 = vmatmul.mubr.bf16.gmra.mxu0 %v3425
        %v3556 = vpop.f32.mrf.mxu0
        %v3557 = vadd.f32 0.0, %v3556
        %v3558 = vpop.f32.mrf.mxu0
        %v3559 = vpop.f32.mrf.mxu0
        %v3560 = vadd.f32 0.0, %v3559
        %v3561 = vpop.f32.mrf.mxu0
        %3562 = vmatprep.mubr.bf16.mxu0 0
        %3563 = vmatmul.mubr.bf16.gmra.mxu0 %v3428
        %v3564 = vpop.f32.mrf.mxu0
        %v3565 = vadd.f32 0.0, %v3564
        %v3566 = vpop.f32.mrf.mxu0
        %v3567 = vpop.f32.mrf.mxu0
        %v3568 = vadd.f32 0.0, %v3567
        %v3569 = vpop.f32.mrf.mxu0
        %3570 = vmatprep.mubr.bf16.mxu0 0
        %3571 = vmatmul.mubr.bf16.gmra.mxu0 %v3431
        %v3572 = vpop.f32.mrf.mxu0
        %v3573 = vadd.f32 0.0, %v3572
        %v3574 = vpop.f32.mrf.mxu0
        %v3575 = vpop.f32.mrf.mxu0
        %v3576 = vadd.f32 0.0, %v3575
        %v3577 = vpop.f32.mrf.mxu0
        %3578 = vmatprep.mubr.bf16.mxu0 0
        %3579 = vmatmul.mubr.bf16.gmra.mxu0 %v3434
        %v3580 = vpop.f32.mrf.mxu0
        %v3581 = vadd.f32 0.0, %v3580
        %v3582 = vpop.f32.mrf.mxu0
        %v3583 = vpop.f32.mrf.mxu0
        %v3584 = vadd.f32 0.0, %v3583
        %v3585 = vpop.f32.mrf.mxu0
        %3586 = vmatprep.mubr.bf16.mxu0 0
        %3587 = vmatmul.mubr.bf16.gmra.mxu0 %v3437
        %v3588 = vpop.f32.mrf.mxu0
        %v3589 = vadd.f32 0.0, %v3588
        %v3590 = vpop.f32.mrf.mxu0
        %v3591 = vpop.f32.mrf.mxu0
        %v3592 = vadd.f32 0.0, %v3591
        %v3593 = vpop.f32.mrf.mxu0
        %3594 = vmatprep.mubr.bf16.mxu0 0
        %3595 = vmatmul.mubr.bf16.gmra.mxu0 %v3440
        %v3596 = vpop.f32.mrf.mxu0
        %v3597 = vadd.f32 0.0, %v3596
        %v3598 = vpop.f32.mrf.mxu0
        %v3599 = vpop.f32.mrf.mxu0
        %v3600 = vadd.f32 0.0, %v3599
        %v3601 = vpop.f32.mrf.mxu0
        %3602 = vdwg.mxu0
        %v3603 = vadd.f32 %v3249, %v3477
        %v3604 = vadd.f32 %v3250, %v3480
        %v3605 = vadd.f32 %v3251, %v3485
        %v3606 = vadd.f32 %v3252, %v3488
        %v3607 = vadd.f32 %v3253, %v3493
        %v3608 = vadd.f32 %v3254, %v3496
        %v3609 = vadd.f32 %v3255, %v3501
        %v3610 = vadd.f32 %v3256, %v3504
        %v3611 = vadd.f32 %v3257, %v3509
        %v3612 = vadd.f32 %v3258, %v3512
        %v3613 = vadd.f32 %v3259, %v3517
        %v3614 = vadd.f32 %v3260, %v3520
        %v3615 = vadd.f32 %v3261, %v3525
        %v3616 = vadd.f32 %v3262, %v3528
        %v3617 = vadd.f32 %v3263, %v3533
        %v3618 = vadd.f32 %v3264, %v3536
        %v3619 = vadd.f32 %v3265, %v3541
        %v3620 = vadd.f32 %v3266, %v3544
        %v3621 = vadd.f32 %v3267, %v3549
        %v3622 = vadd.f32 %v3268, %v3552
        %v3623 = vadd.f32 %v3269, %v3557
        %v3624 = vadd.f32 %v3270, %v3560
        %v3625 = vadd.f32 %v3271, %v3565
        %v3626 = vadd.f32 %v3272, %v3568
        %v3627 = vadd.f32 %v3273, %v3573
        %v3628 = vadd.f32 %v3274, %v3576
        %v3629 = vadd.f32 %v3275, %v3581
        %v3630 = vadd.f32 %v3276, %v3584
        %v3631 = vadd.f32 %v3277, %v3589
        %v3632 = vadd.f32 %v3278, %v3592
        %v3633 = vadd.f32 %v3279, %v3597
        %v3634 = vadd.f32 %v3280, %v3600
        %v3635 = vld [vmem:[#allocation2 + $0x27] sm:$0xff]
        %v3636 = vld [vmem:[#allocation2 + $0x2f] sm:$0xff]
        %v3637 = vld [vmem:[#allocation2 + $0x37] sm:$0xff]
        %v3638 = vld [vmem:[#allocation2 + $0x3f] sm:$0xff]
        %v3639 = vld [vmem:[#allocation2 + $0x47] sm:$0xff]
        %v3640 = vld [vmem:[#allocation2 + $0x4f] sm:$0xff]
        %v3641 = vld [vmem:[#allocation2 + $0x57] sm:$0xff]
        %v3642 = vld [vmem:[#allocation2 + $0x5f] sm:$0xff]
        %v3643 = vld [vmem:[#allocation2 + $0x67] sm:$0xff]
        %v3644 = vld [vmem:[#allocation2 + $0x6f] sm:$0xff]
        %v3645 = vld [vmem:[#allocation2 + $0x77] sm:$0xff]
        %v3646 = vld [vmem:[#allocation2 + $0x7f] sm:$0xff]
        %v3647 = vld [vmem:[#allocation2 + $0x87] sm:$0xff]
        %v3648 = vld [vmem:[#allocation2 + $0x8f] sm:$0xff]
        %v3649 = vld [vmem:[#allocation2 + $0x97] sm:$0xff]
        %v3650 = vld [vmem:[#allocation2 + $0x9f] sm:$0xff]
        %v3651 = vld [vmem:[#allocation2 + $0xa7] sm:$0xff]
        %v3652 = vld [vmem:[#allocation2 + $0xaf] sm:$0xff]
        %v3653 = vld [vmem:[#allocation2 + $0xb7] sm:$0xff]
        %v3654 = vld [vmem:[#allocation2 + $0xbf] sm:$0xff]
        %v3655 = vld [vmem:[#allocation2 + $0xc7] sm:$0xff]
        %v3656 = vld [vmem:[#allocation2 + $0xcf] sm:$0xff]
        %v3657 = vld [vmem:[#allocation2 + $0xd7] sm:$0xff]
        %v3658 = vld [vmem:[#allocation2 + $0xdf] sm:$0xff]
        %v3659 = vld [vmem:[#allocation2 + $0xe7] sm:$0xff]
        %v3660 = vld [vmem:[#allocation2 + $0xef] sm:$0xff]
        %v3661 = vld [vmem:[#allocation2 + $0xf7] sm:$0xff]
        %v3662 = vld [vmem:[#allocation2 + $0xff] sm:$0xff]
        %v3663 = vld [vmem:[#allocation2 + $0x107] sm:$0xff]
        %v3664 = vld [vmem:[#allocation2 + $0x10f] sm:$0xff]
        %v3665 = vld [vmem:[#allocation2 + $0x117] sm:$0xff]
        %v3666 = vld [vmem:[#allocation2 + $0x11f] sm:$0xff]
        %v3667 = vmul.f32 %v3635, %v1355
        %v3668 = vmul.f32 %v3636, %v1360
        %v3669 = vmul.f32 %v3637, %v1365
        %v3670 = vmul.f32 %v3638, %v1370
        %v3671 = vmul.f32 %v3639, %v1375
        %v3672 = vmul.f32 %v3640, %v1380
        %v3673 = vmul.f32 %v3641, %v1385
        %v3674 = vmul.f32 %v3642, %v1390
        %v3675 = vmul.f32 %v3643, %v1395
        %v3676 = vmul.f32 %v3644, %v1400
        %v3677 = vmul.f32 %v3645, %v1405
        %v3678 = vmul.f32 %v3646, %v1410
        %v3679 = vmul.f32 %v3647, %v1415
        %v3680 = vmul.f32 %v3648, %v1420
        %v3681 = vmul.f32 %v3649, %v1425
        %v3682 = vmul.f32 %v3650, %v1430
        %v3683 = vmul.f32 %v3651, %v1435
        %v3684 = vmul.f32 %v3652, %v1440
        %v3685 = vmul.f32 %v3653, %v1445
        %v3686 = vmul.f32 %v3654, %v1450
        %v3687 = vmul.f32 %v3655, %v1455
        %v3688 = vmul.f32 %v3656, %v1460
        %v3689 = vmul.f32 %v3657, %v1465
        %v3690 = vmul.f32 %v3658, %v1470
        %v3691 = vmul.f32 %v3659, %v1475
        %v3692 = vmul.f32 %v3660, %v1480
        %v3693 = vmul.f32 %v3661, %v1485
        %v3694 = vmul.f32 %v3662, %v1490
        %v3695 = vmul.f32 %v3663, %v1495
        %v3696 = vmul.f32 %v3664, %v1500
        %v3697 = vmul.f32 %v3665, %v1505
        %v3698 = vmul.f32 %v3666, %v1510
        %v3699 = vpack.c.bf16 %v3668, %v3667
        %v3700 = vpack.c.bf16 %v3670, %v3669
        %v3701 = vpack.c.bf16 %v3672, %v3671
        %v3702 = vpack.c.bf16 %v3674, %v3673
        %v3703 = vpack.c.bf16 %v3676, %v3675
        %v3704 = vpack.c.bf16 %v3678, %v3677
        %v3705 = vpack.c.bf16 %v3680, %v3679
        %v3706 = vpack.c.bf16 %v3682, %v3681
        %v3707 = vpack.c.bf16 %v3684, %v3683
        %v3708 = vpack.c.bf16 %v3686, %v3685
        %v3709 = vpack.c.bf16 %v3688, %v3687
        %v3710 = vpack.c.bf16 %v3690, %v3689
        %v3711 = vpack.c.bf16 %v3692, %v3691
        %v3712 = vpack.c.bf16 %v3694, %v3693
        %v3713 = vpack.c.bf16 %v3696, %v3695
        %v3714 = vpack.c.bf16 %v3698, %v3697
        %s3715 = scalar_lea.vmem %s8, 192
        %v3716 = vld [vmem:[%s3715] sm:$0xf]
        %v3717 = vld [vmem:[%s3715 + $0x4] sm:$0xf]
        %v3718 = vld [vmem:[%s3715 + $0x8] sm:$0xf]
        %v3719 = vld [vmem:[%s3715 + $0xc] sm:$0xf]
        %v3720 = vld [vmem:[%s3715 + $0x10] sm:$0xf]
        %v3721 = vld [vmem:[%s3715 + $0x14] sm:$0xf]
        %v3722 = vld [vmem:[%s3715 + $0x18] sm:$0xf]
        %v3723 = vld [vmem:[%s3715 + $0x1c] sm:$0xf]
        %v3732 = vunpack.c.l.b16 %v3716
        %v3733 = vunpack.c.l.b16 %v3717
        %v3734 = vunpack.c.l.b16 %v3718
        %v3735 = vunpack.c.l.b16 %v3719
        %v3736 = vunpack.c.l.b16 %v3720
        %v3737 = vunpack.c.l.b16 %v3721
        %v3738 = vunpack.c.l.b16 %v3722
        %v3739 = vunpack.c.l.b16 %v3723
        %v3740 = vpack.c.b16 %v3733, %v3732
        %v3741 = vpack.c.b16 %v3735, %v3734
        %v3742 = vpack.c.b16 %v3737, %v3736
        %v3743 = vpack.c.b16 %v3739, %v3738
        %v3749 = vsel %vm825, %v3699, 0
        %v3752 = vsel %vm825, %v3700, 0
        %v3755 = vsel %vm825, %v3701, 0
        %v3758 = vsel %vm825, %v3702, 0
        %v3761 = vsel %vm825, %v3703, 0
        %v3764 = vsel %vm825, %v3704, 0
        %v3767 = vsel %vm825, %v3705, 0
        %v3770 = vsel %vm825, %v3706, 0
        %v3773 = vsel %vm825, %v3707, 0
        %v3776 = vsel %vm825, %v3708, 0
        %v3779 = vsel %vm825, %v3709, 0
        %v3782 = vsel %vm825, %v3710, 0
        %v3785 = vsel %vm825, %v3711, 0
        %v3788 = vsel %vm825, %v3712, 0
        %v3791 = vsel %vm825, %v3713, 0
        %v3794 = vsel %vm825, %v3714, 0
        %3796 = vmatprep.subr.bf16.mxu0 0
        %3797 = vmatpush1.bf16.msra.mxu0 0
        %3798 = vmatprep.subr.bf16.mxu0 0
        %3799 = vmatpush1.bf16.msra.mxu0 0
        %3800 = vmatprep.subr.bf16.mxu0 0
        %3801 = vmatpush1.bf16.msra.mxu0 0
        %3802 = vmatprep.subr.bf16.mxu0 0
        %3803 = vmatpush1.bf16.msra.mxu0 0
        %3804 = vmatprep.subr.bf16.mxu0 0
        %3805 = vmatpush1.bf16.msra.mxu0 %v3743
        %3806 = vmatprep.subr.bf16.mxu0 0
        %3807 = vmatpush1.bf16.msra.mxu0 %v3742
        %3808 = vmatprep.subr.bf16.mxu0 0
        %3809 = vmatpush1.bf16.msra.mxu0 %v3741
        %3810 = vmatprep.subr.bf16.mxu0 0
        %3811 = vmatpush1.bf16.msra.mxu0 %v3740
        %3812 = vmatprep.subr.bf16.mxu0 0
        %3813 = vmatpush2.bf16.msra.mxu0 0
        %3814 = vmatprep.subr.bf16.mxu0 0
        %3815 = vmatpush2.bf16.msra.mxu0 0
        %3816 = vmatprep.subr.bf16.mxu0 0
        %3817 = vmatpush2.bf16.msra.mxu0 0
        %3818 = vmatprep.subr.bf16.mxu0 0
        %3819 = vmatpush2.bf16.msra.mxu0 0
        %3820 = vmatprep.subr.bf16.mxu0 0
        %3821 = vmatpush2.bf16.msra.mxu0 0
        %3822 = vmatprep.subr.bf16.mxu0 0
        %3823 = vmatpush2.bf16.msra.mxu0 0
        %3824 = vmatprep.subr.bf16.mxu0 0
        %3825 = vmatpush2.bf16.msra.mxu0 0
        %3826 = vmatprep.subr.bf16.mxu0 0
        %3827 = vmatpush2.bf16.msra.mxu0 0
        %3828 = vmatprep.mubr.bf16.mxu0 0
        %3829 = vmatmul.mubr.bf16.gmra.mxu0 %v3749
        %v3830 = vpop.f32.mrf.mxu0
        %v3831 = vadd.f32 0.0, %v3830
        %v3832 = vpop.f32.mrf.mxu0
        %v3833 = vpop.f32.mrf.mxu0
        %v3834 = vadd.f32 0.0, %v3833
        %v3835 = vpop.f32.mrf.mxu0
        %3836 = vmatprep.mubr.bf16.mxu0 0
        %3837 = vmatmul.mubr.bf16.gmra.mxu0 %v3752
        %v3838 = vpop.f32.mrf.mxu0
        %v3839 = vadd.f32 0.0, %v3838
        %v3840 = vpop.f32.mrf.mxu0
        %v3841 = vpop.f32.mrf.mxu0
        %v3842 = vadd.f32 0.0, %v3841
        %v3843 = vpop.f32.mrf.mxu0
        %3844 = vmatprep.mubr.bf16.mxu0 0
        %3845 = vmatmul.mubr.bf16.gmra.mxu0 %v3755
        %v3846 = vpop.f32.mrf.mxu0
        %v3847 = vadd.f32 0.0, %v3846
        %v3848 = vpop.f32.mrf.mxu0
        %v3849 = vpop.f32.mrf.mxu0
        %v3850 = vadd.f32 0.0, %v3849
        %v3851 = vpop.f32.mrf.mxu0
        %3852 = vmatprep.mubr.bf16.mxu0 0
        %3853 = vmatmul.mubr.bf16.gmra.mxu0 %v3758
        %v3854 = vpop.f32.mrf.mxu0
        %v3855 = vadd.f32 0.0, %v3854
        %v3856 = vpop.f32.mrf.mxu0
        %v3857 = vpop.f32.mrf.mxu0
        %v3858 = vadd.f32 0.0, %v3857
        %v3859 = vpop.f32.mrf.mxu0
        %3860 = vmatprep.mubr.bf16.mxu0 0
        %3861 = vmatmul.mubr.bf16.gmra.mxu0 %v3761
        %v3862 = vpop.f32.mrf.mxu0
        %v3863 = vadd.f32 0.0, %v3862
        %v3864 = vpop.f32.mrf.mxu0
        %v3865 = vpop.f32.mrf.mxu0
        %v3866 = vadd.f32 0.0, %v3865
        %v3867 = vpop.f32.mrf.mxu0
        %3868 = vmatprep.mubr.bf16.mxu0 0
        %3869 = vmatmul.mubr.bf16.gmra.mxu0 %v3764
        %v3870 = vpop.f32.mrf.mxu0
        %v3871 = vadd.f32 0.0, %v3870
        %v3872 = vpop.f32.mrf.mxu0
        %v3873 = vpop.f32.mrf.mxu0
        %v3874 = vadd.f32 0.0, %v3873
        %v3875 = vpop.f32.mrf.mxu0
        %3876 = vmatprep.mubr.bf16.mxu0 0
        %3877 = vmatmul.mubr.bf16.gmra.mxu0 %v3767
        %v3878 = vpop.f32.mrf.mxu0
        %v3879 = vadd.f32 0.0, %v3878
        %v3880 = vpop.f32.mrf.mxu0
        %v3881 = vpop.f32.mrf.mxu0
        %v3882 = vadd.f32 0.0, %v3881
        %v3883 = vpop.f32.mrf.mxu0
        %3884 = vmatprep.mubr.bf16.mxu0 0
        %3885 = vmatmul.mubr.bf16.gmra.mxu0 %v3770
        %v3886 = vpop.f32.mrf.mxu0
        %v3887 = vadd.f32 0.0, %v3886
        %v3888 = vpop.f32.mrf.mxu0
        %v3889 = vpop.f32.mrf.mxu0
        %v3890 = vadd.f32 0.0, %v3889
        %v3891 = vpop.f32.mrf.mxu0
        %3892 = vmatprep.mubr.bf16.mxu0 0
        %3893 = vmatmul.mubr.bf16.gmra.mxu0 %v3773
        %v3894 = vpop.f32.mrf.mxu0
        %v3895 = vadd.f32 0.0, %v3894
        %v3896 = vpop.f32.mrf.mxu0
        %v3897 = vpop.f32.mrf.mxu0
        %v3898 = vadd.f32 0.0, %v3897
        %v3899 = vpop.f32.mrf.mxu0
        %3900 = vmatprep.mubr.bf16.mxu0 0
        %3901 = vmatmul.mubr.bf16.gmra.mxu0 %v3776
        %v3902 = vpop.f32.mrf.mxu0
        %v3903 = vadd.f32 0.0, %v3902
        %v3904 = vpop.f32.mrf.mxu0
        %v3905 = vpop.f32.mrf.mxu0
        %v3906 = vadd.f32 0.0, %v3905
        %v3907 = vpop.f32.mrf.mxu0
        %3908 = vmatprep.mubr.bf16.mxu0 0
        %3909 = vmatmul.mubr.bf16.gmra.mxu0 %v3779
        %v3910 = vpop.f32.mrf.mxu0
        %v3911 = vadd.f32 0.0, %v3910
        %v3912 = vpop.f32.mrf.mxu0
        %v3913 = vpop.f32.mrf.mxu0
        %v3914 = vadd.f32 0.0, %v3913
        %v3915 = vpop.f32.mrf.mxu0
        %3916 = vmatprep.mubr.bf16.mxu0 0
        %3917 = vmatmul.mubr.bf16.gmra.mxu0 %v3782
        %v3918 = vpop.f32.mrf.mxu0
        %v3919 = vadd.f32 0.0, %v3918
        %v3920 = vpop.f32.mrf.mxu0
        %v3921 = vpop.f32.mrf.mxu0
        %v3922 = vadd.f32 0.0, %v3921
        %v3923 = vpop.f32.mrf.mxu0
        %3924 = vmatprep.mubr.bf16.mxu0 0
        %3925 = vmatmul.mubr.bf16.gmra.mxu0 %v3785
        %v3926 = vpop.f32.mrf.mxu0
        %v3927 = vadd.f32 0.0, %v3926
        %v3928 = vpop.f32.mrf.mxu0
        %v3929 = vpop.f32.mrf.mxu0
        %v3930 = vadd.f32 0.0, %v3929
        %v3931 = vpop.f32.mrf.mxu0
        %3932 = vmatprep.mubr.bf16.mxu0 0
        %3933 = vmatmul.mubr.bf16.gmra.mxu0 %v3788
        %v3934 = vpop.f32.mrf.mxu0
        %v3935 = vadd.f32 0.0, %v3934
        %v3936 = vpop.f32.mrf.mxu0
        %v3937 = vpop.f32.mrf.mxu0
        %v3938 = vadd.f32 0.0, %v3937
        %v3939 = vpop.f32.mrf.mxu0
        %3940 = vmatprep.mubr.bf16.mxu0 0
        %3941 = vmatmul.mubr.bf16.gmra.mxu0 %v3791
        %v3942 = vpop.f32.mrf.mxu0
        %v3943 = vadd.f32 0.0, %v3942
        %v3944 = vpop.f32.mrf.mxu0
        %v3945 = vpop.f32.mrf.mxu0
        %v3946 = vadd.f32 0.0, %v3945
        %v3947 = vpop.f32.mrf.mxu0
        %3948 = vmatprep.mubr.bf16.mxu0 0
        %3949 = vmatmul.mubr.bf16.gmra.mxu0 %v3794
        %v3950 = vpop.f32.mrf.mxu0
        %v3951 = vadd.f32 0.0, %v3950
        %v3952 = vpop.f32.mrf.mxu0
        %v3953 = vpop.f32.mrf.mxu0
        %v3954 = vadd.f32 0.0, %v3953
        %v3955 = vpop.f32.mrf.mxu0
        %3956 = vdwg.mxu0
        %v3957 = vadd.f32 %v3603, %v3831
        %v3958 = vadd.f32 %v3604, %v3834
        %v3959 = vadd.f32 %v3605, %v3839
        %v3960 = vadd.f32 %v3606, %v3842
        %v3961 = vadd.f32 %v3607, %v3847
        %v3962 = vadd.f32 %v3608, %v3850
        %v3963 = vadd.f32 %v3609, %v3855
        %v3964 = vadd.f32 %v3610, %v3858
        %v3965 = vadd.f32 %v3611, %v3863
        %v3966 = vadd.f32 %v3612, %v3866
        %v3967 = vadd.f32 %v3613, %v3871
        %v3968 = vadd.f32 %v3614, %v3874
        %v3969 = vadd.f32 %v3615, %v3879
        %v3970 = vadd.f32 %v3616, %v3882
        %v3971 = vadd.f32 %v3617, %v3887
        %v3972 = vadd.f32 %v3618, %v3890
        %v3973 = vadd.f32 %v3619, %v3895
        %v3974 = vadd.f32 %v3620, %v3898
        %v3975 = vadd.f32 %v3621, %v3903
        %v3976 = vadd.f32 %v3622, %v3906
        %v3977 = vadd.f32 %v3623, %v3911
        %v3978 = vadd.f32 %v3624, %v3914
        %v3979 = vadd.f32 %v3625, %v3919
        %v3980 = vadd.f32 %v3626, %v3922
        %v3981 = vadd.f32 %v3627, %v3927
        %v3982 = vadd.f32 %v3628, %v3930
        %v3983 = vadd.f32 %v3629, %v3935
        %v3984 = vadd.f32 %v3630, %v3938
        %v3985 = vadd.f32 %v3631, %v3943
        %v3986 = vadd.f32 %v3632, %v3946
        %v3987 = vadd.f32 %v3633, %v3951
        %v3988 = vadd.f32 %v3634, %v3954
        %v3989 = vld [vmem:[#allocation2 + $0x28] sm:$0xff]
        %v3990 = vld [vmem:[#allocation2 + $0x30] sm:$0xff]
        %v3991 = vld [vmem:[#allocation2 + $0x38] sm:$0xff]
        %v3992 = vld [vmem:[#allocation2 + $0x40] sm:$0xff]
        %v3993 = vld [vmem:[#allocation2 + $0x48] sm:$0xff]
        %v3994 = vld [vmem:[#allocation2 + $0x50] sm:$0xff]
        %v3995 = vld [vmem:[#allocation2 + $0x58] sm:$0xff]
        %v3996 = vld [vmem:[#allocation2 + $0x60] sm:$0xff]
        %v3997 = vld [vmem:[#allocation2 + $0x68] sm:$0xff]
        %v3998 = vld [vmem:[#allocation2 + $0x70] sm:$0xff]
        %v3999 = vld [vmem:[#allocation2 + $0x78] sm:$0xff]
        %v4000 = vld [vmem:[#allocation2 + $0x80] sm:$0xff]
        %v4001 = vld [vmem:[#allocation2 + $0x88] sm:$0xff]
        %v4002 = vld [vmem:[#allocation2 + $0x90] sm:$0xff]
        %v4003 = vld [vmem:[#allocation2 + $0x98] sm:$0xff]
        %v4004 = vld [vmem:[#allocation2 + $0xa0] sm:$0xff]
        %v4005 = vld [vmem:[#allocation2 + $0xa8] sm:$0xff]
        %v4006 = vld [vmem:[#allocation2 + $0xb0] sm:$0xff]
        %v4007 = vld [vmem:[#allocation2 + $0xb8] sm:$0xff]
        %v4008 = vld [vmem:[#allocation2 + $0xc0] sm:$0xff]
        %v4009 = vld [vmem:[#allocation2 + $0xc8] sm:$0xff]
        %v4010 = vld [vmem:[#allocation2 + $0xd0] sm:$0xff]
        %v4011 = vld [vmem:[#allocation2 + $0xd8] sm:$0xff]
        %v4012 = vld [vmem:[#allocation2 + $0xe0] sm:$0xff]
        %v4013 = vld [vmem:[#allocation2 + $0xe8] sm:$0xff]
        %v4014 = vld [vmem:[#allocation2 + $0xf0] sm:$0xff]
        %v4015 = vld [vmem:[#allocation2 + $0xf8] sm:$0xff]
        %v4016 = vld [vmem:[#allocation2 + $0x100] sm:$0xff]
        %v4017 = vld [vmem:[#allocation2 + $0x108] sm:$0xff]
        %v4018 = vld [vmem:[#allocation2 + $0x110] sm:$0xff]
        %v4019 = vld [vmem:[#allocation2 + $0x118] sm:$0xff]
        %v4020 = vld [vmem:[#allocation2 + $0x120] sm:$0xff]
        %v4021 = vpack.c.bf16 %v3990, %v3989
        %v4022 = vpack.c.bf16 %v3992, %v3991
        %v4023 = vpack.c.bf16 %v3994, %v3993
        %v4024 = vpack.c.bf16 %v3996, %v3995
        %v4025 = vpack.c.bf16 %v3998, %v3997
        %v4026 = vpack.c.bf16 %v4000, %v3999
        %v4027 = vpack.c.bf16 %v4002, %v4001
        %v4028 = vpack.c.bf16 %v4004, %v4003
        %v4029 = vpack.c.bf16 %v4006, %v4005
        %v4030 = vpack.c.bf16 %v4008, %v4007
        %v4031 = vpack.c.bf16 %v4010, %v4009
        %v4032 = vpack.c.bf16 %v4012, %v4011
        %v4033 = vpack.c.bf16 %v4014, %v4013
        %v4034 = vpack.c.bf16 %v4016, %v4015
        %v4035 = vpack.c.bf16 %v4018, %v4017
        %v4036 = vpack.c.bf16 %v4020, %v4019
        %s4037 = scalar_lea.vmem %s8, 224
        %v4038 = vld [vmem:[%s4037] sm:$0xf]
        %v4039 = vld [vmem:[%s4037 + $0x4] sm:$0xf]
        %v4040 = vld [vmem:[%s4037 + $0x8] sm:$0xf]
        %v4041 = vld [vmem:[%s4037 + $0xc] sm:$0xf]
        %v4042 = vld [vmem:[%s4037 + $0x10] sm:$0xf]
        %v4043 = vld [vmem:[%s4037 + $0x14] sm:$0xf]
        %v4044 = vld [vmem:[%s4037 + $0x18] sm:$0xf]
        %v4045 = vld [vmem:[%s4037 + $0x1c] sm:$0xf]
        %v4054 = vunpack.c.l.b16 %v4038
        %v4055 = vunpack.c.l.b16 %v4039
        %v4056 = vunpack.c.l.b16 %v4040
        %v4057 = vunpack.c.l.b16 %v4041
        %v4058 = vunpack.c.l.b16 %v4042
        %v4059 = vunpack.c.l.b16 %v4043
        %v4060 = vunpack.c.l.b16 %v4044
        %v4061 = vunpack.c.l.b16 %v4045
        %v4062 = vpack.c.b16 %v4055, %v4054
        %v4063 = vpack.c.b16 %v4057, %v4056
        %v4064 = vpack.c.b16 %v4059, %v4058
        %v4065 = vpack.c.b16 %v4061, %v4060
        %v4071 = vsel %vm825, %v4021, 0
        %v4074 = vsel %vm825, %v4022, 0
        %v4077 = vsel %vm825, %v4023, 0
        %v4080 = vsel %vm825, %v4024, 0
        %v4083 = vsel %vm825, %v4025, 0
        %v4086 = vsel %vm825, %v4026, 0
        %v4089 = vsel %vm825, %v4027, 0
        %v4092 = vsel %vm825, %v4028, 0
        %v4095 = vsel %vm825, %v4029, 0
        %v4098 = vsel %vm825, %v4030, 0
        %v4101 = vsel %vm825, %v4031, 0
        %v4104 = vsel %vm825, %v4032, 0
        %v4107 = vsel %vm825, %v4033, 0
        %v4110 = vsel %vm825, %v4034, 0
        %v4113 = vsel %vm825, %v4035, 0
        %v4116 = vsel %vm825, %v4036, 0
        %4118 = vmatprep.subr.bf16.mxu0 0
        %4119 = vmatpush1.bf16.msra.mxu0 0
        %4120 = vmatprep.subr.bf16.mxu0 0
        %4121 = vmatpush1.bf16.msra.mxu0 0
        %4122 = vmatprep.subr.bf16.mxu0 0
        %4123 = vmatpush1.bf16.msra.mxu0 0
        %4124 = vmatprep.subr.bf16.mxu0 0
        %4125 = vmatpush1.bf16.msra.mxu0 0
        %4126 = vmatprep.subr.bf16.mxu0 0
        %4127 = vmatpush1.bf16.msra.mxu0 %v4065
        %4128 = vmatprep.subr.bf16.mxu0 0
        %4129 = vmatpush1.bf16.msra.mxu0 %v4064
        %4130 = vmatprep.subr.bf16.mxu0 0
        %4131 = vmatpush1.bf16.msra.mxu0 %v4063
        %4132 = vmatprep.subr.bf16.mxu0 0
        %4133 = vmatpush1.bf16.msra.mxu0 %v4062
        %4134 = vmatprep.subr.bf16.mxu0 0
        %4135 = vmatpush2.bf16.msra.mxu0 0
        %4136 = vmatprep.subr.bf16.mxu0 0
        %4137 = vmatpush2.bf16.msra.mxu0 0
        %4138 = vmatprep.subr.bf16.mxu0 0
        %4139 = vmatpush2.bf16.msra.mxu0 0
        %4140 = vmatprep.subr.bf16.mxu0 0
        %4141 = vmatpush2.bf16.msra.mxu0 0
        %4142 = vmatprep.subr.bf16.mxu0 0
        %4143 = vmatpush2.bf16.msra.mxu0 0
        %4144 = vmatprep.subr.bf16.mxu0 0
        %4145 = vmatpush2.bf16.msra.mxu0 0
        %4146 = vmatprep.subr.bf16.mxu0 0
        %4147 = vmatpush2.bf16.msra.mxu0 0
        %4148 = vmatprep.subr.bf16.mxu0 0
        %4149 = vmatpush2.bf16.msra.mxu0 0
        %4150 = vmatprep.mubr.bf16.mxu0 0
        %4151 = vmatmul.mubr.bf16.gmra.mxu0 %v4071
        %v4152 = vpop.f32.mrf.mxu0
        %v4153 = vadd.f32 0.0, %v4152
        %v4154 = vpop.f32.mrf.mxu0
        %v4155 = vpop.f32.mrf.mxu0
        %v4156 = vadd.f32 0.0, %v4155
        %v4157 = vpop.f32.mrf.mxu0
        %4158 = vmatprep.mubr.bf16.mxu0 0
        %4159 = vmatmul.mubr.bf16.gmra.mxu0 %v4074
        %v4160 = vpop.f32.mrf.mxu0
        %v4161 = vadd.f32 0.0, %v4160
        %v4162 = vpop.f32.mrf.mxu0
        %v4163 = vpop.f32.mrf.mxu0
        %v4164 = vadd.f32 0.0, %v4163
        %v4165 = vpop.f32.mrf.mxu0
        %4166 = vmatprep.mubr.bf16.mxu0 0
        %4167 = vmatmul.mubr.bf16.gmra.mxu0 %v4077
        %v4168 = vpop.f32.mrf.mxu0
        %v4169 = vadd.f32 0.0, %v4168
        %v4170 = vpop.f32.mrf.mxu0
        %v4171 = vpop.f32.mrf.mxu0
        %v4172 = vadd.f32 0.0, %v4171
        %v4173 = vpop.f32.mrf.mxu0
        %4174 = vmatprep.mubr.bf16.mxu0 0
        %4175 = vmatmul.mubr.bf16.gmra.mxu0 %v4080
        %v4176 = vpop.f32.mrf.mxu0
        %v4177 = vadd.f32 0.0, %v4176
        %v4178 = vpop.f32.mrf.mxu0
        %v4179 = vpop.f32.mrf.mxu0
        %v4180 = vadd.f32 0.0, %v4179
        %v4181 = vpop.f32.mrf.mxu0
        %4182 = vmatprep.mubr.bf16.mxu0 0
        %4183 = vmatmul.mubr.bf16.gmra.mxu0 %v4083
        %v4184 = vpop.f32.mrf.mxu0
        %v4185 = vadd.f32 0.0, %v4184
        %v4186 = vpop.f32.mrf.mxu0
        %v4187 = vpop.f32.mrf.mxu0
        %v4188 = vadd.f32 0.0, %v4187
        %v4189 = vpop.f32.mrf.mxu0
        %4190 = vmatprep.mubr.bf16.mxu0 0
        %4191 = vmatmul.mubr.bf16.gmra.mxu0 %v4086
        %v4192 = vpop.f32.mrf.mxu0
        %v4193 = vadd.f32 0.0, %v4192
        %v4194 = vpop.f32.mrf.mxu0
        %v4195 = vpop.f32.mrf.mxu0
        %v4196 = vadd.f32 0.0, %v4195
        %v4197 = vpop.f32.mrf.mxu0
        %4198 = vmatprep.mubr.bf16.mxu0 0
        %4199 = vmatmul.mubr.bf16.gmra.mxu0 %v4089
        %v4200 = vpop.f32.mrf.mxu0
        %v4201 = vadd.f32 0.0, %v4200
        %v4202 = vpop.f32.mrf.mxu0
        %v4203 = vpop.f32.mrf.mxu0
        %v4204 = vadd.f32 0.0, %v4203
        %v4205 = vpop.f32.mrf.mxu0
        %4206 = vmatprep.mubr.bf16.mxu0 0
        %4207 = vmatmul.mubr.bf16.gmra.mxu0 %v4092
        %v4208 = vpop.f32.mrf.mxu0
        %v4209 = vadd.f32 0.0, %v4208
        %v4210 = vpop.f32.mrf.mxu0
        %v4211 = vpop.f32.mrf.mxu0
        %v4212 = vadd.f32 0.0, %v4211
        %v4213 = vpop.f32.mrf.mxu0
        %4214 = vmatprep.mubr.bf16.mxu0 0
        %4215 = vmatmul.mubr.bf16.gmra.mxu0 %v4095
        %v4216 = vpop.f32.mrf.mxu0
        %v4217 = vadd.f32 0.0, %v4216
        %v4218 = vpop.f32.mrf.mxu0
        %v4219 = vpop.f32.mrf.mxu0
        %v4220 = vadd.f32 0.0, %v4219
        %v4221 = vpop.f32.mrf.mxu0
        %4222 = vmatprep.mubr.bf16.mxu0 0
        %4223 = vmatmul.mubr.bf16.gmra.mxu0 %v4098
        %v4224 = vpop.f32.mrf.mxu0
        %v4225 = vadd.f32 0.0, %v4224
        %v4226 = vpop.f32.mrf.mxu0
        %v4227 = vpop.f32.mrf.mxu0
        %v4228 = vadd.f32 0.0, %v4227
        %v4229 = vpop.f32.mrf.mxu0
        %4230 = vmatprep.mubr.bf16.mxu0 0
        %4231 = vmatmul.mubr.bf16.gmra.mxu0 %v4101
        %v4232 = vpop.f32.mrf.mxu0
        %v4233 = vadd.f32 0.0, %v4232
        %v4234 = vpop.f32.mrf.mxu0
        %v4235 = vpop.f32.mrf.mxu0
        %v4236 = vadd.f32 0.0, %v4235
        %v4237 = vpop.f32.mrf.mxu0
        %4238 = vmatprep.mubr.bf16.mxu0 0
        %4239 = vmatmul.mubr.bf16.gmra.mxu0 %v4104
        %v4240 = vpop.f32.mrf.mxu0
        %v4241 = vadd.f32 0.0, %v4240
        %v4242 = vpop.f32.mrf.mxu0
        %v4243 = vpop.f32.mrf.mxu0
        %v4244 = vadd.f32 0.0, %v4243
        %v4245 = vpop.f32.mrf.mxu0
        %4246 = vmatprep.mubr.bf16.mxu0 0
        %4247 = vmatmul.mubr.bf16.gmra.mxu0 %v4107
        %v4248 = vpop.f32.mrf.mxu0
        %v4249 = vadd.f32 0.0, %v4248
        %v4250 = vpop.f32.mrf.mxu0
        %v4251 = vpop.f32.mrf.mxu0
        %v4252 = vadd.f32 0.0, %v4251
        %v4253 = vpop.f32.mrf.mxu0
        %4254 = vmatprep.mubr.bf16.mxu0 0
        %4255 = vmatmul.mubr.bf16.gmra.mxu0 %v4110
        %v4256 = vpop.f32.mrf.mxu0
        %v4257 = vadd.f32 0.0, %v4256
        %v4258 = vpop.f32.mrf.mxu0
        %v4259 = vpop.f32.mrf.mxu0
        %v4260 = vadd.f32 0.0, %v4259
        %v4261 = vpop.f32.mrf.mxu0
        %4262 = vmatprep.mubr.bf16.mxu0 0
        %4263 = vmatmul.mubr.bf16.gmra.mxu0 %v4113
        %v4264 = vpop.f32.mrf.mxu0
        %v4265 = vadd.f32 0.0, %v4264
        %v4266 = vpop.f32.mrf.mxu0
        %v4267 = vpop.f32.mrf.mxu0
        %v4268 = vadd.f32 0.0, %v4267
        %v4269 = vpop.f32.mrf.mxu0
        %4270 = vmatprep.mubr.bf16.mxu0 0
        %4271 = vmatmul.mubr.bf16.gmra.mxu0 %v4116
        %v4272 = vpop.f32.mrf.mxu0
        %v4273 = vadd.f32 0.0, %v4272
        %v4274 = vpop.f32.mrf.mxu0
        %v4275 = vpop.f32.mrf.mxu0
        %v4276 = vadd.f32 0.0, %v4275
        %v4277 = vpop.f32.mrf.mxu0
        %4278 = vdwg.mxu0
        %v4279 = vadd.f32 %v3957, %v4153
        %v4280 = vadd.f32 %v3958, %v4156
        %v4281 = vadd.f32 %v3959, %v4161
        %v4282 = vadd.f32 %v3960, %v4164
        %v4283 = vadd.f32 %v3961, %v4169
        %v4284 = vadd.f32 %v3962, %v4172
        %v4285 = vadd.f32 %v3963, %v4177
        %v4286 = vadd.f32 %v3964, %v4180
        %v4287 = vadd.f32 %v3965, %v4185
        %v4288 = vadd.f32 %v3966, %v4188
        %v4289 = vadd.f32 %v3967, %v4193
        %v4290 = vadd.f32 %v3968, %v4196
        %v4291 = vadd.f32 %v3969, %v4201
        %v4292 = vadd.f32 %v3970, %v4204
        %v4293 = vadd.f32 %v3971, %v4209
        %v4294 = vadd.f32 %v3972, %v4212
        %v4295 = vadd.f32 %v3973, %v4217
        %v4296 = vadd.f32 %v3974, %v4220
        %v4297 = vadd.f32 %v3975, %v4225
        %v4298 = vadd.f32 %v3976, %v4228
        %v4299 = vadd.f32 %v3977, %v4233
        %v4300 = vadd.f32 %v3978, %v4236
        %v4301 = vadd.f32 %v3979, %v4241
        %v4302 = vadd.f32 %v3980, %v4244
        %v4303 = vadd.f32 %v3981, %v4249
        %v4304 = vadd.f32 %v3982, %v4252
        %v4305 = vadd.f32 %v3983, %v4257
        %v4306 = vadd.f32 %v3984, %v4260
        %v4307 = vadd.f32 %v3985, %v4265
        %v4308 = vadd.f32 %v3986, %v4268
        %v4309 = vadd.f32 %v3987, %v4273
        %v4310 = vadd.f32 %v3988, %v4276
        %v4311 = vld [vmem:[#allocation2 + $0x29] sm:$0xff]
        %v4312 = vld [vmem:[#allocation2 + $0x31] sm:$0xff]
        %v4313 = vld [vmem:[#allocation2 + $0x39] sm:$0xff]
        %v4314 = vld [vmem:[#allocation2 + $0x41] sm:$0xff]
        %v4315 = vld [vmem:[#allocation2 + $0x49] sm:$0xff]
        %v4316 = vld [vmem:[#allocation2 + $0x51] sm:$0xff]
        %v4317 = vld [vmem:[#allocation2 + $0x59] sm:$0xff]
        %v4318 = vld [vmem:[#allocation2 + $0x61] sm:$0xff]
        %v4319 = vld [vmem:[#allocation2 + $0x69] sm:$0xff]
        %v4320 = vld [vmem:[#allocation2 + $0x71] sm:$0xff]
        %v4321 = vld [vmem:[#allocation2 + $0x79] sm:$0xff]
        %v4322 = vld [vmem:[#allocation2 + $0x81] sm:$0xff]
        %v4323 = vld [vmem:[#allocation2 + $0x89] sm:$0xff]
        %v4324 = vld [vmem:[#allocation2 + $0x91] sm:$0xff]
        %v4325 = vld [vmem:[#allocation2 + $0x99] sm:$0xff]
        %v4326 = vld [vmem:[#allocation2 + $0xa1] sm:$0xff]
        %v4327 = vld [vmem:[#allocation2 + $0xa9] sm:$0xff]
        %v4328 = vld [vmem:[#allocation2 + $0xb1] sm:$0xff]
        %v4329 = vld [vmem:[#allocation2 + $0xb9] sm:$0xff]
        %v4330 = vld [vmem:[#allocation2 + $0xc1] sm:$0xff]
        %v4331 = vld [vmem:[#allocation2 + $0xc9] sm:$0xff]
        %v4332 = vld [vmem:[#allocation2 + $0xd1] sm:$0xff]
        %v4333 = vld [vmem:[#allocation2 + $0xd9] sm:$0xff]
        %v4334 = vld [vmem:[#allocation2 + $0xe1] sm:$0xff]
        %v4335 = vld [vmem:[#allocation2 + $0xe9] sm:$0xff]
        %v4336 = vld [vmem:[#allocation2 + $0xf1] sm:$0xff]
        %v4337 = vld [vmem:[#allocation2 + $0xf9] sm:$0xff]
        %v4338 = vld [vmem:[#allocation2 + $0x101] sm:$0xff]
        %v4339 = vld [vmem:[#allocation2 + $0x109] sm:$0xff]
        %v4340 = vld [vmem:[#allocation2 + $0x111] sm:$0xff]
        %v4341 = vld [vmem:[#allocation2 + $0x119] sm:$0xff]
        %v4342 = vld [vmem:[#allocation2 + $0x121] sm:$0xff]
        %v4343 = vmul.f32 %v4311, %v2126
        %v4344 = vmul.f32 %v4312, %v2131
        %v4345 = vmul.f32 %v4313, %v2136
        %v4346 = vmul.f32 %v4314, %v2141
        %v4347 = vmul.f32 %v4315, %v2146
        %v4348 = vmul.f32 %v4316, %v2151
        %v4349 = vmul.f32 %v4317, %v2156
        %v4350 = vmul.f32 %v4318, %v2161
        %v4351 = vmul.f32 %v4319, %v2166
        %v4352 = vmul.f32 %v4320, %v2171
        %v4353 = vmul.f32 %v4321, %v2176
        %v4354 = vmul.f32 %v4322, %v2181
        %v4355 = vmul.f32 %v4323, %v2186
        %v4356 = vmul.f32 %v4324, %v2191
        %v4357 = vmul.f32 %v4325, %v2196
        %v4358 = vmul.f32 %v4326, %v2201
        %v4359 = vmul.f32 %v4327, %v2206
        %v4360 = vmul.f32 %v4328, %v2211
        %v4361 = vmul.f32 %v4329, %v2216
        %v4362 = vmul.f32 %v4330, %v2221
        %v4363 = vmul.f32 %v4331, %v2226
        %v4364 = vmul.f32 %v4332, %v2231
        %v4365 = vmul.f32 %v4333, %v2236
        %v4366 = vmul.f32 %v4334, %v2241
        %v4367 = vmul.f32 %v4335, %v2246
        %v4368 = vmul.f32 %v4336, %v2251
        %v4369 = vmul.f32 %v4337, %v2256
        %v4370 = vmul.f32 %v4338, %v2261
        %v4371 = vmul.f32 %v4339, %v2266
        %v4372 = vmul.f32 %v4340, %v2271
        %v4373 = vmul.f32 %v4341, %v2276
        %v4374 = vmul.f32 %v4342, %v2281
        %v4375 = vpack.c.bf16 %v4344, %v4343
        %v4376 = vpack.c.bf16 %v4346, %v4345
        %v4377 = vpack.c.bf16 %v4348, %v4347
        %v4378 = vpack.c.bf16 %v4350, %v4349
        %v4379 = vpack.c.bf16 %v4352, %v4351
        %v4380 = vpack.c.bf16 %v4354, %v4353
        %v4381 = vpack.c.bf16 %v4356, %v4355
        %v4382 = vpack.c.bf16 %v4358, %v4357
        %v4383 = vpack.c.bf16 %v4360, %v4359
        %v4384 = vpack.c.bf16 %v4362, %v4361
        %v4385 = vpack.c.bf16 %v4364, %v4363
        %v4386 = vpack.c.bf16 %v4366, %v4365
        %v4387 = vpack.c.bf16 %v4368, %v4367
        %v4388 = vpack.c.bf16 %v4370, %v4369
        %v4389 = vpack.c.bf16 %v4372, %v4371
        %v4390 = vpack.c.bf16 %v4374, %v4373
        %s4391 = scalar_lea.vmem %s8, 256
        %v4392 = vld [vmem:[%s4391] sm:$0xf]
        %v4393 = vld [vmem:[%s4391 + $0x4] sm:$0xf]
        %v4394 = vld [vmem:[%s4391 + $0x8] sm:$0xf]
        %v4395 = vld [vmem:[%s4391 + $0xc] sm:$0xf]
        %v4396 = vld [vmem:[%s4391 + $0x10] sm:$0xf]
        %v4397 = vld [vmem:[%s4391 + $0x14] sm:$0xf]
        %v4398 = vld [vmem:[%s4391 + $0x18] sm:$0xf]
        %v4399 = vld [vmem:[%s4391 + $0x1c] sm:$0xf]
        %v4408 = vunpack.c.l.b16 %v4392
        %v4409 = vunpack.c.l.b16 %v4393
        %v4410 = vunpack.c.l.b16 %v4394
        %v4411 = vunpack.c.l.b16 %v4395
        %v4412 = vunpack.c.l.b16 %v4396
        %v4413 = vunpack.c.l.b16 %v4397
        %v4414 = vunpack.c.l.b16 %v4398
        %v4415 = vunpack.c.l.b16 %v4399
        %v4416 = vpack.c.b16 %v4409, %v4408
        %v4417 = vpack.c.b16 %v4411, %v4410
        %v4418 = vpack.c.b16 %v4413, %v4412
        %v4419 = vpack.c.b16 %v4415, %v4414
        %v4425 = vsel %vm825, %v4375, 0
        %v4428 = vsel %vm825, %v4376, 0
        %v4431 = vsel %vm825, %v4377, 0
        %v4434 = vsel %vm825, %v4378, 0
        %v4437 = vsel %vm825, %v4379, 0
        %v4440 = vsel %vm825, %v4380, 0
        %v4443 = vsel %vm825, %v4381, 0
        %v4446 = vsel %vm825, %v4382, 0
        %v4449 = vsel %vm825, %v4383, 0
        %v4452 = vsel %vm825, %v4384, 0
        %v4455 = vsel %vm825, %v4385, 0
        %v4458 = vsel %vm825, %v4386, 0
        %v4461 = vsel %vm825, %v4387, 0
        %v4464 = vsel %vm825, %v4388, 0
        %v4467 = vsel %vm825, %v4389, 0
        %v4470 = vsel %vm825, %v4390, 0
        %4472 = vmatprep.subr.bf16.mxu0 0
        %4473 = vmatpush1.bf16.msra.mxu0 0
        %4474 = vmatprep.subr.bf16.mxu0 0
        %4475 = vmatpush1.bf16.msra.mxu0 0
        %4476 = vmatprep.subr.bf16.mxu0 0
        %4477 = vmatpush1.bf16.msra.mxu0 0
        %4478 = vmatprep.subr.bf16.mxu0 0
        %4479 = vmatpush1.bf16.msra.mxu0 0
        %4480 = vmatprep.subr.bf16.mxu0 0
        %4481 = vmatpush1.bf16.msra.mxu0 %v4419
        %4482 = vmatprep.subr.bf16.mxu0 0
        %4483 = vmatpush1.bf16.msra.mxu0 %v4418
        %4484 = vmatprep.subr.bf16.mxu0 0
        %4485 = vmatpush1.bf16.msra.mxu0 %v4417
        %4486 = vmatprep.subr.bf16.mxu0 0
        %4487 = vmatpush1.bf16.msra.mxu0 %v4416
        %4488 = vmatprep.subr.bf16.mxu0 0
        %4489 = vmatpush2.bf16.msra.mxu0 0
        %4490 = vmatprep.subr.bf16.mxu0 0
        %4491 = vmatpush2.bf16.msra.mxu0 0
        %4492 = vmatprep.subr.bf16.mxu0 0
        %4493 = vmatpush2.bf16.msra.mxu0 0
        %4494 = vmatprep.subr.bf16.mxu0 0
        %4495 = vmatpush2.bf16.msra.mxu0 0
        %4496 = vmatprep.subr.bf16.mxu0 0
        %4497 = vmatpush2.bf16.msra.mxu0 0
        %4498 = vmatprep.subr.bf16.mxu0 0
        %4499 = vmatpush2.bf16.msra.mxu0 0
        %4500 = vmatprep.subr.bf16.mxu0 0
        %4501 = vmatpush2.bf16.msra.mxu0 0
        %4502 = vmatprep.subr.bf16.mxu0 0
        %4503 = vmatpush2.bf16.msra.mxu0 0
        %4504 = vmatprep.mubr.bf16.mxu0 0
        %4505 = vmatmul.mubr.bf16.gmra.mxu0 %v4425
        %v4506 = vpop.f32.mrf.mxu0
        %v4507 = vadd.f32 0.0, %v4506
        %v4508 = vpop.f32.mrf.mxu0
        %v4509 = vpop.f32.mrf.mxu0
        %v4510 = vadd.f32 0.0, %v4509
        %v4511 = vpop.f32.mrf.mxu0
        %4512 = vmatprep.mubr.bf16.mxu0 0
        %4513 = vmatmul.mubr.bf16.gmra.mxu0 %v4428
        %v4514 = vpop.f32.mrf.mxu0
        %v4515 = vadd.f32 0.0, %v4514
        %v4516 = vpop.f32.mrf.mxu0
        %v4517 = vpop.f32.mrf.mxu0
        %v4518 = vadd.f32 0.0, %v4517
        %v4519 = vpop.f32.mrf.mxu0
        %4520 = vmatprep.mubr.bf16.mxu0 0
        %4521 = vmatmul.mubr.bf16.gmra.mxu0 %v4431
        %v4522 = vpop.f32.mrf.mxu0
        %v4523 = vadd.f32 0.0, %v4522
        %v4524 = vpop.f32.mrf.mxu0
        %v4525 = vpop.f32.mrf.mxu0
        %v4526 = vadd.f32 0.0, %v4525
        %v4527 = vpop.f32.mrf.mxu0
        %4528 = vmatprep.mubr.bf16.mxu0 0
        %4529 = vmatmul.mubr.bf16.gmra.mxu0 %v4434
        %v4530 = vpop.f32.mrf.mxu0
        %v4531 = vadd.f32 0.0, %v4530
        %v4532 = vpop.f32.mrf.mxu0
        %v4533 = vpop.f32.mrf.mxu0
        %v4534 = vadd.f32 0.0, %v4533
        %v4535 = vpop.f32.mrf.mxu0
        %4536 = vmatprep.mubr.bf16.mxu0 0
        %4537 = vmatmul.mubr.bf16.gmra.mxu0 %v4437
        %v4538 = vpop.f32.mrf.mxu0
        %v4539 = vadd.f32 0.0, %v4538
        %v4540 = vpop.f32.mrf.mxu0
        %v4541 = vpop.f32.mrf.mxu0
        %v4542 = vadd.f32 0.0, %v4541
        %v4543 = vpop.f32.mrf.mxu0
        %4544 = vmatprep.mubr.bf16.mxu0 0
        %4545 = vmatmul.mubr.bf16.gmra.mxu0 %v4440
        %v4546 = vpop.f32.mrf.mxu0
        %v4547 = vadd.f32 0.0, %v4546
        %v4548 = vpop.f32.mrf.mxu0
        %v4549 = vpop.f32.mrf.mxu0
        %v4550 = vadd.f32 0.0, %v4549
        %v4551 = vpop.f32.mrf.mxu0
        %4552 = vmatprep.mubr.bf16.mxu0 0
        %4553 = vmatmul.mubr.bf16.gmra.mxu0 %v4443
        %v4554 = vpop.f32.mrf.mxu0
        %v4555 = vadd.f32 0.0, %v4554
        %v4556 = vpop.f32.mrf.mxu0
        %v4557 = vpop.f32.mrf.mxu0
        %v4558 = vadd.f32 0.0, %v4557
        %v4559 = vpop.f32.mrf.mxu0
        %4560 = vmatprep.mubr.bf16.mxu0 0
        %4561 = vmatmul.mubr.bf16.gmra.mxu0 %v4446
        %v4562 = vpop.f32.mrf.mxu0
        %v4563 = vadd.f32 0.0, %v4562
        %v4564 = vpop.f32.mrf.mxu0
        %v4565 = vpop.f32.mrf.mxu0
        %v4566 = vadd.f32 0.0, %v4565
        %v4567 = vpop.f32.mrf.mxu0
        %4568 = vmatprep.mubr.bf16.mxu0 0
        %4569 = vmatmul.mubr.bf16.gmra.mxu0 %v4449
        %v4570 = vpop.f32.mrf.mxu0
        %v4571 = vadd.f32 0.0, %v4570
        %v4572 = vpop.f32.mrf.mxu0
        %v4573 = vpop.f32.mrf.mxu0
        %v4574 = vadd.f32 0.0, %v4573
        %v4575 = vpop.f32.mrf.mxu0
        %4576 = vmatprep.mubr.bf16.mxu0 0
        %4577 = vmatmul.mubr.bf16.gmra.mxu0 %v4452
        %v4578 = vpop.f32.mrf.mxu0
        %v4579 = vadd.f32 0.0, %v4578
        %v4580 = vpop.f32.mrf.mxu0
        %v4581 = vpop.f32.mrf.mxu0
        %v4582 = vadd.f32 0.0, %v4581
        %v4583 = vpop.f32.mrf.mxu0
        %4584 = vmatprep.mubr.bf16.mxu0 0
        %4585 = vmatmul.mubr.bf16.gmra.mxu0 %v4455
        %v4586 = vpop.f32.mrf.mxu0
        %v4587 = vadd.f32 0.0, %v4586
        %v4588 = vpop.f32.mrf.mxu0
        %v4589 = vpop.f32.mrf.mxu0
        %v4590 = vadd.f32 0.0, %v4589
        %v4591 = vpop.f32.mrf.mxu0
        %4592 = vmatprep.mubr.bf16.mxu0 0
        %4593 = vmatmul.mubr.bf16.gmra.mxu0 %v4458
        %v4594 = vpop.f32.mrf.mxu0
        %v4595 = vadd.f32 0.0, %v4594
        %v4596 = vpop.f32.mrf.mxu0
        %v4597 = vpop.f32.mrf.mxu0
        %v4598 = vadd.f32 0.0, %v4597
        %v4599 = vpop.f32.mrf.mxu0
        %4600 = vmatprep.mubr.bf16.mxu0 0
        %4601 = vmatmul.mubr.bf16.gmra.mxu0 %v4461
        %v4602 = vpop.f32.mrf.mxu0
        %v4603 = vadd.f32 0.0, %v4602
        %v4604 = vpop.f32.mrf.mxu0
        %v4605 = vpop.f32.mrf.mxu0
        %v4606 = vadd.f32 0.0, %v4605
        %v4607 = vpop.f32.mrf.mxu0
        %4608 = vmatprep.mubr.bf16.mxu0 0
        %4609 = vmatmul.mubr.bf16.gmra.mxu0 %v4464
        %v4610 = vpop.f32.mrf.mxu0
        %v4611 = vadd.f32 0.0, %v4610
        %v4612 = vpop.f32.mrf.mxu0
        %v4613 = vpop.f32.mrf.mxu0
        %v4614 = vadd.f32 0.0, %v4613
        %v4615 = vpop.f32.mrf.mxu0
        %4616 = vmatprep.mubr.bf16.mxu0 0
        %4617 = vmatmul.mubr.bf16.gmra.mxu0 %v4467
        %v4618 = vpop.f32.mrf.mxu0
        %v4619 = vadd.f32 0.0, %v4618
        %v4620 = vpop.f32.mrf.mxu0
        %v4621 = vpop.f32.mrf.mxu0
        %v4622 = vadd.f32 0.0, %v4621
        %v4623 = vpop.f32.mrf.mxu0
        %4624 = vmatprep.mubr.bf16.mxu0 0
        %4625 = vmatmul.mubr.bf16.gmra.mxu0 %v4470
        %v4626 = vpop.f32.mrf.mxu0
        %v4627 = vadd.f32 0.0, %v4626
        %v4628 = vpop.f32.mrf.mxu0
        %v4629 = vpop.f32.mrf.mxu0
        %v4630 = vadd.f32 0.0, %v4629
        %v4631 = vpop.f32.mrf.mxu0
        %4632 = vdwg.mxu0
        %v4633 = vadd.f32 %v4279, %v4507
        %v4634 = vadd.f32 %v4280, %v4510
        %v4635 = vadd.f32 %v4281, %v4515
        %v4636 = vadd.f32 %v4282, %v4518
        %v4637 = vadd.f32 %v4283, %v4523
        %v4638 = vadd.f32 %v4284, %v4526
        %v4639 = vadd.f32 %v4285, %v4531
        %v4640 = vadd.f32 %v4286, %v4534
        %v4641 = vadd.f32 %v4287, %v4539
        %v4642 = vadd.f32 %v4288, %v4542
        %v4643 = vadd.f32 %v4289, %v4547
        %v4644 = vadd.f32 %v4290, %v4550
        %v4645 = vadd.f32 %v4291, %v4555
        %v4646 = vadd.f32 %v4292, %v4558
        %v4647 = vadd.f32 %v4293, %v4563
        %v4648 = vadd.f32 %v4294, %v4566
        %v4649 = vadd.f32 %v4295, %v4571
        %v4650 = vadd.f32 %v4296, %v4574
        %v4651 = vadd.f32 %v4297, %v4579
        %v4652 = vadd.f32 %v4298, %v4582
        %v4653 = vadd.f32 %v4299, %v4587
        %v4654 = vadd.f32 %v4300, %v4590
        %v4655 = vadd.f32 %v4301, %v4595
        %v4656 = vadd.f32 %v4302, %v4598
        %v4657 = vadd.f32 %v4303, %v4603
        %v4658 = vadd.f32 %v4304, %v4606
        %v4659 = vadd.f32 %v4305, %v4611
        %v4660 = vadd.f32 %v4306, %v4614
        %v4661 = vadd.f32 %v4307, %v4619
        %v4662 = vadd.f32 %v4308, %v4622
        %v4663 = vadd.f32 %v4309, %v4627
        %v4664 = vadd.f32 %v4310, %v4630
        %v4665 = vld [vmem:[%s9] sm:$0x1]
        %v4667 = vlaneseq
        %v4668 = vshrl.u32 %v4667, 7
        %v4669 = vsub.s32 0, %v4668
        %v4670 = vrot.slane %v4665, %v4669
        %v4672 = vadd.f32 %v4633, %v4670
        %v4673 = vadd.f32 %v4634, %v4670
        %v4674 = vadd.f32 %v4635, %v4670
        %v4675 = vadd.f32 %v4636, %v4670
        %v4676 = vadd.f32 %v4637, %v4670
        %v4677 = vadd.f32 %v4638, %v4670
        %v4678 = vadd.f32 %v4639, %v4670
        %v4679 = vadd.f32 %v4640, %v4670
        %v4680 = vadd.f32 %v4641, %v4670
        %v4681 = vadd.f32 %v4642, %v4670
        %v4682 = vadd.f32 %v4643, %v4670
        %v4683 = vadd.f32 %v4644, %v4670
        %v4684 = vadd.f32 %v4645, %v4670
        %v4685 = vadd.f32 %v4646, %v4670
        %v4686 = vadd.f32 %v4647, %v4670
        %v4687 = vadd.f32 %v4648, %v4670
        %v4688 = vadd.f32 %v4649, %v4670
        %v4689 = vadd.f32 %v4650, %v4670
        %v4690 = vadd.f32 %v4651, %v4670
        %v4691 = vadd.f32 %v4652, %v4670
        %v4692 = vadd.f32 %v4653, %v4670
        %v4693 = vadd.f32 %v4654, %v4670
        %v4694 = vadd.f32 %v4655, %v4670
        %v4695 = vadd.f32 %v4656, %v4670
        %v4696 = vadd.f32 %v4657, %v4670
        %v4697 = vadd.f32 %v4658, %v4670
        %v4698 = vadd.f32 %v4659, %v4670
        %v4699 = vadd.f32 %v4660, %v4670
        %v4700 = vadd.f32 %v4661, %v4670
        %v4701 = vadd.f32 %v4662, %v4670
        %v4702 = vadd.f32 %v4663, %v4670
        %v4703 = vadd.f32 %v4664, %v4670
        %v4704 = vmax.f32 %v4672, 0.0
        %v4705 = vmax.f32 %v4673, 0.0
        %v4706 = vmax.f32 %v4674, 0.0
        %v4707 = vmax.f32 %v4675, 0.0
        %v4708 = vmax.f32 %v4676, 0.0
        %v4709 = vmax.f32 %v4677, 0.0
        %v4710 = vmax.f32 %v4678, 0.0
        %v4711 = vmax.f32 %v4679, 0.0
        %v4712 = vmax.f32 %v4680, 0.0
        %v4713 = vmax.f32 %v4681, 0.0
        %v4714 = vmax.f32 %v4682, 0.0
        %v4715 = vmax.f32 %v4683, 0.0
        %v4716 = vmax.f32 %v4684, 0.0
        %v4717 = vmax.f32 %v4685, 0.0
        %v4718 = vmax.f32 %v4686, 0.0
        %v4719 = vmax.f32 %v4687, 0.0
        %v4720 = vmax.f32 %v4688, 0.0
        %v4721 = vmax.f32 %v4689, 0.0
        %v4722 = vmax.f32 %v4690, 0.0
        %v4723 = vmax.f32 %v4691, 0.0
        %v4724 = vmax.f32 %v4692, 0.0
        %v4725 = vmax.f32 %v4693, 0.0
        %v4726 = vmax.f32 %v4694, 0.0
        %v4727 = vmax.f32 %v4695, 0.0
        %v4728 = vmax.f32 %v4696, 0.0
        %v4729 = vmax.f32 %v4697, 0.0
        %v4730 = vmax.f32 %v4698, 0.0
        %v4731 = vmax.f32 %v4699, 0.0
        %v4732 = vmax.f32 %v4700, 0.0
        %v4733 = vmax.f32 %v4701, 0.0
        %v4734 = vmax.f32 %v4702, 0.0
        %v4735 = vmax.f32 %v4703, 0.0
        %4736 = vst.msk [vmem:[%s367] sm:$0xff] %vm825, %v4704
        %4737 = vst.msk [vmem:[%s367 + $0x8] sm:$0xff] %vm825, %v4705
        %4738 = vst.msk [vmem:[%s367 + $0x10] sm:$0xff] %vm825, %v4706
        %4739 = vst.msk [vmem:[%s367 + $0x18] sm:$0xff] %vm825, %v4707
        %4740 = vst.msk [vmem:[%s367 + $0x20] sm:$0xff] %vm825, %v4708
        %4741 = vst.msk [vmem:[%s367 + $0x28] sm:$0xff] %vm825, %v4709
        %4742 = vst.msk [vmem:[%s367 + $0x30] sm:$0xff] %vm825, %v4710
        %4743 = vst.msk [vmem:[%s367 + $0x38] sm:$0xff] %vm825, %v4711
        %4744 = vst.msk [vmem:[%s367 + $0x40] sm:$0xff] %vm825, %v4712
        %4745 = vst.msk [vmem:[%s367 + $0x48] sm:$0xff] %vm825, %v4713
        %4746 = vst.msk [vmem:[%s367 + $0x50] sm:$0xff] %vm825, %v4714
        %4747 = vst.msk [vmem:[%s367 + $0x58] sm:$0xff] %vm825, %v4715
        %4748 = vst.msk [vmem:[%s367 + $0x60] sm:$0xff] %vm825, %v4716
        %4749 = vst.msk [vmem:[%s367 + $0x68] sm:$0xff] %vm825, %v4717
        %4750 = vst.msk [vmem:[%s367 + $0x70] sm:$0xff] %vm825, %v4718
        %4751 = vst.msk [vmem:[%s367 + $0x78] sm:$0xff] %vm825, %v4719
        %4752 = vst.msk [vmem:[%s367 + $0x80] sm:$0xff] %vm825, %v4720
        %4753 = vst.msk [vmem:[%s367 + $0x88] sm:$0xff] %vm825, %v4721
        %4754 = vst.msk [vmem:[%s367 + $0x90] sm:$0xff] %vm825, %v4722
        %4755 = vst.msk [vmem:[%s367 + $0x98] sm:$0xff] %vm825, %v4723
        %4756 = vst.msk [vmem:[%s367 + $0xa0] sm:$0xff] %vm825, %v4724
        %4757 = vst.msk [vmem:[%s367 + $0xa8] sm:$0xff] %vm825, %v4725
        %4758 = vst.msk [vmem:[%s367 + $0xb0] sm:$0xff] %vm825, %v4726
        %4759 = vst.msk [vmem:[%s367 + $0xb8] sm:$0xff] %vm825, %v4727
        %4760 = vst.msk [vmem:[%s367 + $0xc0] sm:$0xff] %vm825, %v4728
        %4761 = vst.msk [vmem:[%s367 + $0xc8] sm:$0xff] %vm825, %v4729
        %4762 = vst.msk [vmem:[%s367 + $0xd0] sm:$0xff] %vm825, %v4730
        %4763 = vst.msk [vmem:[%s367 + $0xd8] sm:$0xff] %vm825, %v4731
        %4764 = vst.msk [vmem:[%s367 + $0xe0] sm:$0xff] %vm825, %v4732
        %4765 = vst.msk [vmem:[%s367 + $0xe8] sm:$0xff] %vm825, %v4733
        %4766 = vst.msk [vmem:[%s367 + $0xf0] sm:$0xff] %vm825, %v4734
        %4767 = vst.msk [vmem:[%s367 + $0xf8] sm:$0xff] %vm825, %v4735
        %s4768 = sand.u32 %s252, 1
        %s4769 = scalar_lea.sflag [#allocation4], %s4768
        %s4770 = sand.u32 %s252, 1
        %s4771 = smul.addr %s4770, 256
        %s4772 = scalar_lea.vmem [#allocation3], %s4771
        // Predicated region
        $region61: #{backend_forward.5} parent=59 // pred_check
          %p4773 = pneg %p262
        $region62: #{backend_forward.5} parent=59 // pred_check_branch
          %4775 = sbr.rel (%p4773) target = $region64
        $region63: #{backend_forward.5} parent=59 // pred_region
          %s4777 = ssub.s32 4096, 4096
          %4778 = vsyncadd %s4769, %s4777
          %s4779 = smul.addr %s24, 32
          %s4780 = smul.addr %s4779, 128
          %s4781 = scalar_lea.hbm %s10, %s4780
          %s4782 = sshll.u32 %s4772, 4
          %s4783 = int_to_ptr.vmem [resolvable:$true] %s4782
          %4788 = dma.vmem_to_hbm [thread:$0]  %s4783, 4096, %s4781, %s4769, 128, 128, 8
        $region64: #{backend_forward.5} parent=59 // pred_fallthru
          _
      $region60: #{backend_forward.5} parent=5 // pred_fallthru
        _
      %p4789 = scmp.le.s32.totalorder 2, %s19
      // Predicated region
      $region65: #{backend_forward.5} parent=5 // pred_check
        %p4790 = pneg %p4789
      $region66: #{backend_forward.5} parent=5 // pred_check_branch
        %4792 = sbr.rel (%p4790) target = $region68
      $region67: #{backend_forward.5} parent=5 // pred_region
        %s4793 = ssub.s32 %s19, 2
        // Predicated region
        $region69: #{backend_forward.5} parent=67 // pred_check
          %p4794 = pneg %p268
        $region70: #{backend_forward.5} parent=67 // pred_check_branch
          %4796 = sbr.rel (%p4794) target = $region72
        $region71: #{backend_forward.5} parent=67 // pred_region
          %s4797 = sand.u32 %s253, 1
          %s4798 = scalar_lea.sflag [#allocation4], %s4797
          %s4799 = sand.u32 %s253, 1
          %s4800 = smul.addr %s4799, 256
          %s4801 = scalar_lea.vmem [#allocation3], %s4800
          %4802 = dma.done %s4798, 4096
        $region72: #{backend_forward.5} parent=67 // pred_fallthru
          _
      $region68: #{backend_forward.5} parent=5 // pred_fallthru
        _
    $region6: #{backend_forward.5} parent=1 // loop_footer
      %s23 = sadd.s32 1, %s19
    $region7: #{backend_forward.5} parent=1 // loop_footer_branch
      %18 = sbr.rel target = $region3
    $region8: #{backend_forward.5} parent=1 // loop_exit
      _
    %4803 = vsyncpa [#allocation4], 1
    %s4804 = scalar_lea.sflag [#allocation4], 1
    %4805 = vsyncpa %s4804, 1

// kernel: backend_forward.3
$region0: #{backend_forward.3}
  #allocation0 [shape = 'u32[]', space=smem, size = 0x4, offset = 0x4, fixed_abs, tag = 'smem constant byte address 0x4 - core index']
  #allocation1 [shape = 'u32[144,128]{1,0:T(1,128)}', space=vmem, size = 0x12000, scoped, tag = 'internal scratch']
  #allocation2 [shape = 'f32[32,256]{1,0:T(8,128)}', space=vmem, size = 0x8000, scoped, tag = 'scratch operand']
  %s0 = inlined_call_operand.vmem [shape: f32[2,4,512], index: 0, kind: input, shape index: {}]
  %s1 = inlined_call_operand.vmem [shape: f32[2,16,512], index: 1, kind: input, shape index: {}]
  %s2 = inlined_call_operand.hbm [shape: f32[16,4], index: 2, kind: input, shape index: {}]
  %s3 = inlined_call_operand.hbm [shape: f32[16,1], index: 3, kind: input, shape index: {}]
  %s4 = inlined_call_operand.hbm [shape: f32[16,1], index: 4, kind: input, shape index: {}]
  %s5 = inlined_call_operand.hbm [shape: bf16[512,256], index: 5, kind: input, shape index: {}]
  %s6 = inlined_call_operand.hbm [shape: bf16[512,256], index: 6, kind: input, shape index: {}]
  %s7 = inlined_call_operand.hbm [shape: f32[1,256], index: 7, kind: input, shape index: {}]
  %s8 = inlined_call_operand.hbm [shape: bf16[9,256,256], index: 8, kind: input, shape index: {}]
  %s9 = inlined_call_operand.hbm [shape: f32[1,256], index: 9, kind: input, shape index: {}]
  %s10 = inlined_call_operand.vmem [shape: f32[2,16,256], index: 10, kind: output, shape index: {}]
  %s11 = sld [smem:[#allocation0]]
  $region105: #{backend_forward.3} parent=0
    _
  %s13 = ssub.s32 1, %s11
  %s14 = scalar_select 0, %s13, %s11
  $region1: #{backend_forward.3} parent=0
    #allocation3 [shape = 'u8[8192]{0}', space=vmem, size = 0x2000, scoped, tag = 'input window, operand 2, single buffered']
    #allocation4 [shape = 's32[2]{0}', space=sflag, size = 0x8, scoped, tag = 'scoped memory for backend_forward.3']
    #allocation5 [shape = 'u8[8192]{0}', space=vmem, size = 0x2000, scoped, tag = 'input window, operand 3, single buffered']
    #allocation6 [shape = 's32[1]{0}', space=sflag, size = 0x4, scoped, tag = 'scoped memory for backend_forward.3']
    #allocation7 [shape = 'u8[8192]{0}', space=vmem, size = 0x2000, scoped, tag = 'input window, operand 4, single buffered']
    #allocation8 [shape = 'u8[262144]{0}', space=vmem, size = 0x40000, scoped, tag = 'input window, operand 5, single buffered']
    #allocation9 [shape = 's32[1]{0}', space=sflag, size = 0x4, scoped, tag = 'scoped memory for backend_forward.3']
    #allocation10 [shape = 'u8[262144]{0}', space=vmem, size = 0x40000, scoped, tag = 'input window, operand 6, single buffered']
    #allocation11 [shape = 'u8[1024]{0}', space=vmem, size = 0x400, scoped, tag = 'input window, operand 7, single buffered']
    #allocation12 [shape = 's32[1]{0}', space=sflag, size = 0x4, scoped, tag = 'scoped memory for backend_forward.3']
    #allocation13 [shape = 'u8[1179648]{0}', space=vmem, size = 0x120000, scoped, tag = 'input window, operand 8, single buffered']
    #allocation14 [shape = 'u8[1024]{0}', space=vmem, size = 0x400, scoped, tag = 'input window, operand 9, single buffered']
    #allocation15 [shape = 's32[1]{0}', space=sflag, size = 0x4, scoped, tag = 'scoped memory for backend_forward.3']
    %15 = vsyncpa [#allocation4], 0
    %16 = vsyncpa [#allocation6], 0
    %17 = vsyncpa [#allocation9], 0
    %18 = vsyncpa [#allocation12], 0
    %19 = vsyncpa [#allocation15], 0
    loop: start=0, step=1, limit=4
    $region2: #{backend_forward.3} parent=1 // loop_pre_header
      _
    $region3: #{backend_forward.3} parent=1 // loop_header
      %s21 = sphi 0, %s25
      %p22 = scmp.ge.s32.totalorder %s21, 4
      %s31 = sphi 0, %s33
      %s34 = sphi 0, %s31
      %s35 = sphi 0, %s34
      %s51 = sphi 0, %s35
      %s57 = sphi 0, %s59
      %s60 = sphi 0, %s57
      %s61 = sphi 0, %s60
      %s77 = sphi 0, %s61
      %s81 = sphi 0, %s81
      %s83 = sphi 0, %s81
      %s84 = sphi 0, %s83
      %s98 = sphi 0, %s84
      %s102 = sphi 0, %s102
      %s104 = sphi 0, %s102
      %s105 = sphi 0, %s104
      %s119 = sphi 0, %s105
      %s123 = sphi 0, %s123
      %s125 = sphi 0, %s123
      %s126 = sphi 0, %s125
      %s140 = sphi 0, %s126
      %s144 = sphi 0, %s144
      %s146 = sphi 0, %s144
      %s147 = sphi 0, %s146
      %s161 = sphi 0, %s147
      %s165 = sphi 0, %s165
      %s167 = sphi 0, %s165
      %s168 = sphi 0, %s167
      %s182 = sphi 0, %s168
      %s186 = sphi 0, %s186
      %s188 = sphi 0, %s186
      %s189 = sphi 0, %s188
      %s203 = sphi 0, %s189
      %s207 = sphi 0, %s207
      %s209 = sphi 0, %s207
      %s210 = sphi 0, %s209
      %s224 = sphi 0, %s210
      %s228 = sphi 0, %s228
      %s230 = sphi 0, %s228
      %s231 = sphi 0, %s230
      %s245 = sphi 0, %s231
      %s251 = sphi 0, %s253
      %s254 = sphi 0, %s251
      %s255 = sphi 0, %s254
      %s271 = sphi 0, %s255
    $region4: #{backend_forward.3} parent=1 // loop_header_branch
      %24 = sbr.rel (%p22) target = $region8
    $region5: #{backend_forward.3} parent=1 // loop_body
      %s26 = ssub.s32 %s21, 1
      %s27 = ssub.s32 %s21, 2
      %s28 = sadd.s32 %s21, 1
      %s29 = ssub.s32 %s21, %s28
      %p30 = scmp.eq.s32.totalorder %s29, 0
      %s32 = sadd.s32 %s31, 1
      %s33 = scalar_select %p30, %s31, %s32
      %p36 = pneg %p30
      %p37 = scmp.eq.s32.totalorder %s21, 1
      %p38 = por %p36, %p37
      %p39 = scmp.ne.s32.totalorder %s31, %s34
      %p40 = scmp.eq.s32.totalorder %s21, 0
      %p41 = por %p39, %p40
      %p42 = scmp.ne.s32.totalorder %s31, %s34
      %p43 = scmp.eq.s32.totalorder %s26, 1
      %p44 = por %p42, %p43
      %p45 = scmp.ne.s32.totalorder %s34, %s35
      %p46 = scmp.eq.s32.totalorder %s26, 0
      %p47 = por %p45, %p46
      %p48 = scmp.ne.s32.totalorder %s34, %s35
      %p49 = scmp.eq.s32.totalorder %s27, 1
      %p50 = por %p48, %p49
      %p52 = scmp.ne.s32.totalorder %s35, %s51
      %p53 = scmp.eq.s32.totalorder %s27, 0
      %p54 = por %p52, %p53
      %s55 = ssub.s32 %s21, %s28
      %p56 = scmp.eq.s32.totalorder %s55, 0
      %s58 = sadd.s32 %s57, 1
      %s59 = scalar_select %p56, %s57, %s58
      %p62 = pneg %p56
      %p63 = scmp.eq.s32.totalorder %s21, 1
      %p64 = por %p62, %p63
      %p65 = scmp.ne.s32.totalorder %s57, %s60
      %p66 = scmp.eq.s32.totalorder %s21, 0
      %p67 = por %p65, %p66
      %p68 = scmp.ne.s32.totalorder %s57, %s60
      %p69 = scmp.eq.s32.totalorder %s26, 1
      %p70 = por %p68, %p69
      %p71 = scmp.ne.s32.totalorder %s60, %s61
      %p72 = scmp.eq.s32.totalorder %s26, 0
      %p73 = por %p71, %p72
      %p74 = scmp.ne.s32.totalorder %s60, %s61
      %p75 = scmp.eq.s32.totalorder %s27, 1
      %p76 = por %p74, %p75
      %p78 = scmp.ne.s32.totalorder %s61, %s77
      %p79 = scmp.eq.s32.totalorder %s27, 0
      %p80 = por %p78, %p79
      %s82 = sadd.s32 %s81, 1
      %p85 = scmp.eq.s32.totalorder %s21, 1
      %p86 = scmp.ne.s32.totalorder %s81, %s83
      %p87 = scmp.eq.s32.totalorder %s21, 0
      %p88 = por %p86, %p87
      %p89 = scmp.ne.s32.totalorder %s81, %s83
      %p90 = scmp.eq.s32.totalorder %s26, 1
      %p91 = por %p89, %p90
      %p92 = scmp.ne.s32.totalorder %s83, %s84
      %p93 = scmp.eq.s32.totalorder %s26, 0
      %p94 = por %p92, %p93
      %p95 = scmp.ne.s32.totalorder %s83, %s84
      %p96 = scmp.eq.s32.totalorder %s27, 1
      %p97 = por %p95, %p96
      %p99 = scmp.ne.s32.totalorder %s84, %s98
      %p100 = scmp.eq.s32.totalorder %s27, 0
      %p101 = por %p99, %p100
      %s103 = sadd.s32 %s102, 1
      %p106 = scmp.eq.s32.totalorder %s21, 1
      %p107 = scmp.ne.s32.totalorder %s102, %s104
      %p108 = scmp.eq.s32.totalorder %s21, 0
      %p109 = por %p107, %p108
      %p110 = scmp.ne.s32.totalorder %s102, %s104
      %p111 = scmp.eq.s32.totalorder %s26, 1
      %p112 = por %p110, %p111
      %p113 = scmp.ne.s32.totalorder %s104, %s105
      %p114 = scmp.eq.s32.totalorder %s26, 0
      %p115 = por %p113, %p114
      %p116 = scmp.ne.s32.totalorder %s104, %s105
      %p117 = scmp.eq.s32.totalorder %s27, 1
      %p118 = por %p116, %p117
      %p120 = scmp.ne.s32.totalorder %s105, %s119
      %p121 = scmp.eq.s32.totalorder %s27, 0
      %p122 = por %p120, %p121
      %s124 = sadd.s32 %s123, 1
      %p127 = scmp.eq.s32.totalorder %s21, 1
      %p128 = scmp.ne.s32.totalorder %s123, %s125
      %p129 = scmp.eq.s32.totalorder %s21, 0
      %p130 = por %p128, %p129
      %p131 = scmp.ne.s32.totalorder %s123, %s125
      %p132 = scmp.eq.s32.totalorder %s26, 1
      %p133 = por %p131, %p132
      %p134 = scmp.ne.s32.totalorder %s125, %s126
      %p135 = scmp.eq.s32.totalorder %s26, 0
      %p136 = por %p134, %p135
      %p137 = scmp.ne.s32.totalorder %s125, %s126
      %p138 = scmp.eq.s32.totalorder %s27, 1
      %p139 = por %p137, %p138
      %p141 = scmp.ne.s32.totalorder %s126, %s140
      %p142 = scmp.eq.s32.totalorder %s27, 0
      %p143 = por %p141, %p142
      %s145 = sadd.s32 %s144, 1
      %p148 = scmp.eq.s32.totalorder %s21, 1
      %p149 = scmp.ne.s32.totalorder %s144, %s146
      %p150 = scmp.eq.s32.totalorder %s21, 0
      %p151 = por %p149, %p150
      %p152 = scmp.ne.s32.totalorder %s144, %s146
      %p153 = scmp.eq.s32.totalorder %s26, 1
      %p154 = por %p152, %p153
      %p155 = scmp.ne.s32.totalorder %s146, %s147
      %p156 = scmp.eq.s32.totalorder %s26, 0
      %p157 = por %p155, %p156
      %p158 = scmp.ne.s32.totalorder %s146, %s147
      %p159 = scmp.eq.s32.totalorder %s27, 1
      %p160 = por %p158, %p159
      %p162 = scmp.ne.s32.totalorder %s147, %s161
      %p163 = scmp.eq.s32.totalorder %s27, 0
      %p164 = por %p162, %p163
      %s166 = sadd.s32 %s165, 1
      %p169 = scmp.eq.s32.totalorder %s21, 1
      %p170 = scmp.ne.s32.totalorder %s165, %s167
      %p171 = scmp.eq.s32.totalorder %s21, 0
      %p172 = por %p170, %p171
      %p173 = scmp.ne.s32.totalorder %s165, %s167
      %p174 = scmp.eq.s32.totalorder %s26, 1
      %p175 = por %p173, %p174
      %p176 = scmp.ne.s32.totalorder %s167, %s168
      %p177 = scmp.eq.s32.totalorder %s26, 0
      %p178 = por %p176, %p177
      %p179 = scmp.ne.s32.totalorder %s167, %s168
      %p180 = scmp.eq.s32.totalorder %s27, 1
      %p181 = por %p179, %p180
      %p183 = scmp.ne.s32.totalorder %s168, %s182
      %p184 = scmp.eq.s32.totalorder %s27, 0
      %p185 = por %p183, %p184
      %s187 = sadd.s32 %s186, 1
      %p190 = scmp.eq.s32.totalorder %s21, 1
      %p191 = scmp.ne.s32.totalorder %s186, %s188
      %p192 = scmp.eq.s32.totalorder %s21, 0
      %p193 = por %p191, %p192
      %p194 = scmp.ne.s32.totalorder %s186, %s188
      %p195 = scmp.eq.s32.totalorder %s26, 1
      %p196 = por %p194, %p195
      %p197 = scmp.ne.s32.totalorder %s188, %s189
      %p198 = scmp.eq.s32.totalorder %s26, 0
      %p199 = por %p197, %p198
      %p200 = scmp.ne.s32.totalorder %s188, %s189
      %p201 = scmp.eq.s32.totalorder %s27, 1
      %p202 = por %p200, %p201
      %p204 = scmp.ne.s32.totalorder %s189, %s203
      %p205 = scmp.eq.s32.totalorder %s27, 0
      %p206 = por %p204, %p205
      %s208 = sadd.s32 %s207, 1
      %p211 = scmp.eq.s32.totalorder %s21, 1
      %p212 = scmp.ne.s32.totalorder %s207, %s209
      %p213 = scmp.eq.s32.totalorder %s21, 0
      %p214 = por %p212, %p213
      %p215 = scmp.ne.s32.totalorder %s207, %s209
      %p216 = scmp.eq.s32.totalorder %s26, 1
      %p217 = por %p215, %p216
      %p218 = scmp.ne.s32.totalorder %s209, %s210
      %p219 = scmp.eq.s32.totalorder %s26, 0
      %p220 = por %p218, %p219
      %p221 = scmp.ne.s32.totalorder %s209, %s210
      %p222 = scmp.eq.s32.totalorder %s27, 1
      %p223 = por %p221, %p222
      %p225 = scmp.ne.s32.totalorder %s210, %s224
      %p226 = scmp.eq.s32.totalorder %s27, 0
      %p227 = por %p225, %p226
      %s229 = sadd.s32 %s228, 1
      %p232 = scmp.eq.s32.totalorder %s21, 1
      %p233 = scmp.ne.s32.totalorder %s228, %s230
      %p234 = scmp.eq.s32.totalorder %s21, 0
      %p235 = por %p233, %p234
      %p236 = scmp.ne.s32.totalorder %s228, %s230
      %p237 = scmp.eq.s32.totalorder %s26, 1
      %p238 = por %p236, %p237
      %p239 = scmp.ne.s32.totalorder %s230, %s231
      %p240 = scmp.eq.s32.totalorder %s26, 0
      %p241 = por %p239, %p240
      %p242 = scmp.ne.s32.totalorder %s230, %s231
      %p243 = scmp.eq.s32.totalorder %s27, 1
      %p244 = por %p242, %p243
      %p246 = scmp.ne.s32.totalorder %s231, %s245
      %p247 = scmp.eq.s32.totalorder %s27, 0
      %p248 = por %p246, %p247
      %s249 = ssub.s32 %s21, %s28
      %p250 = scmp.eq.s32.totalorder %s249, 0
      %s252 = sadd.s32 %s251, 1
      %s253 = scalar_select %p250, %s251, %s252
      %p256 = pneg %p250
      %p257 = scmp.eq.s32.totalorder %s21, 1
      %p258 = por %p256, %p257
      %p259 = scmp.ne.s32.totalorder %s251, %s254
      %p260 = scmp.eq.s32.totalorder %s21, 0
      %p261 = por %p259, %p260
      %p262 = scmp.ne.s32.totalorder %s251, %s254
      %p263 = scmp.eq.s32.totalorder %s26, 1
      %p264 = por %p262, %p263
      %p265 = scmp.ne.s32.totalorder %s254, %s255
      %p266 = scmp.eq.s32.totalorder %s26, 0
      %p267 = por %p265, %p266
      %p268 = scmp.ne.s32.totalorder %s254, %s255
      %p269 = scmp.eq.s32.totalorder %s27, 1
      %p270 = por %p268, %p269
      %p272 = scmp.ne.s32.totalorder %s255, %s271
      %p273 = scmp.eq.s32.totalorder %s27, 0
      %p274 = por %p272, %p273
      %p275 = scmp.le.s32.totalorder 1, %s21
      %p276 = scmp.lt.s32.totalorder %s21, 3
      %p277 = pnand %p275, %p276
      %p278 = pneg %p277
      // Predicated region
      $region9: #{backend_forward.3} parent=5 // pred_check
        _
      $region10: #{backend_forward.3} parent=5 // pred_check_branch
        %280 = sbr.rel (%p277) target = $region12
      $region11: #{backend_forward.3} parent=5 // pred_region
        %s281 = ssub.s32 %s21, 1
        // Predicated region
        $region13: #{backend_forward.3} parent=11 // pred_check
          %p282 = pneg %p94
        $region14: #{backend_forward.3} parent=11 // pred_check_branch
          %284 = sbr.rel (%p282) target = $region16
        $region15: #{backend_forward.3} parent=11 // pred_region
          %s286 = ssub.s32 256, 256
          %287 = vsyncadd [#allocation4], %s286
          %s288 = sshll.u32 [#allocation3], 4
          %s289 = int_to_ptr.vmem [resolvable:$true] %s288
          %294 = dma.hbm_to_vmem [thread:$0]  %s2, 256, %s289, [#allocation4], 128, 128, 8
        $region16: #{backend_forward.3} parent=11 // pred_fallthru
          _
        // Predicated region
        $region17: #{backend_forward.3} parent=11 // pred_check
          %p295 = pneg %p115
        $region18: #{backend_forward.3} parent=11 // pred_check_branch
          %297 = sbr.rel (%p295) target = $region20
        $region19: #{backend_forward.3} parent=11 // pred_region
          %s299 = ssub.s32 256, 256
          %300 = vsyncadd [#allocation6], %s299
          %s301 = sshll.u32 [#allocation5], 4
          %s302 = int_to_ptr.vmem [resolvable:$true] %s301
          %307 = dma.hbm_to_vmem [thread:$0]  %s3, 256, %s302, [#allocation6], 128, 128, 8
        $region20: #{backend_forward.3} parent=11 // pred_fallthru
          _
        // Predicated region
        $region21: #{backend_forward.3} parent=11 // pred_check
          %p308 = pneg %p136
        $region22: #{backend_forward.3} parent=11 // pred_check_branch
          %310 = sbr.rel (%p308) target = $region24
        $region23: #{backend_forward.3} parent=11 // pred_region
          %s312 = ssub.s32 256, 256
          %313 = vsyncadd [#allocation6], %s312
          %s314 = sshll.u32 [#allocation7], 4
          %s315 = int_to_ptr.vmem [resolvable:$true] %s314
          %320 = dma.hbm_to_vmem [thread:$0]  %s4, 256, %s315, [#allocation6], 128, 128, 8
        $region24: #{backend_forward.3} parent=11 // pred_fallthru
          _
        // Predicated region
        $region25: #{backend_forward.3} parent=11 // pred_check
          %p321 = pneg %p157
        $region26: #{backend_forward.3} parent=11 // pred_check_branch
          %323 = sbr.rel (%p321) target = $region28
        $region27: #{backend_forward.3} parent=11 // pred_region
          %s325 = ssub.s32 8192, 8192
          %326 = vsyncadd [#allocation9], %s325
          %s327 = sshll.u32 [#allocation8], 4
          %s328 = int_to_ptr.vmem [resolvable:$true] %s327
          %333 = dma.hbm_to_vmem [thread:$0]  %s5, 8192, %s328, [#allocation9], 128, 128, 8
        $region28: #{backend_forward.3} parent=11 // pred_fallthru
          _
        // Predicated region
        $region29: #{backend_forward.3} parent=11 // pred_check
          %p334 = pneg %p178
        $region30: #{backend_forward.3} parent=11 // pred_check_branch
          %336 = sbr.rel (%p334) target = $region32
        $region31: #{backend_forward.3} parent=11 // pred_region
          %s338 = ssub.s32 8192, 8192
          %339 = vsyncadd [#allocation9], %s338
          %s340 = sshll.u32 [#allocation10], 4
          %s341 = int_to_ptr.vmem [resolvable:$true] %s340
          %346 = dma.hbm_to_vmem [thread:$0]  %s6, 8192, %s341, [#allocation9], 128, 128, 8
        $region32: #{backend_forward.3} parent=11 // pred_fallthru
          _
        // Predicated region
        $region33: #{backend_forward.3} parent=11 // pred_check
          %p347 = pneg %p199
        $region34: #{backend_forward.3} parent=11 // pred_check_branch
          %349 = sbr.rel (%p347) target = $region36
        $region35: #{backend_forward.3} parent=11 // pred_region
          %s351 = ssub.s32 32, 32
          %352 = vsyncadd [#allocation12], %s351
          %s354 = sshll.u32 [#allocation11], 4
          %s355 = int_to_ptr.vmem [resolvable:$true] %s354
          %357 = dma.hbm_to_vmem [thread:$0]  %s7, 32, %s355, [#allocation12]
        $region36: #{backend_forward.3} parent=11 // pred_fallthru
          _
        // Predicated region
        $region37: #{backend_forward.3} parent=11 // pred_check
          %p358 = pneg %p220
        $region38: #{backend_forward.3} parent=11 // pred_check_branch
          %360 = sbr.rel (%p358) target = $region40
        $region39: #{backend_forward.3} parent=11 // pred_region
          %s362 = ssub.s32 36864, 36864
          %363 = vsyncadd [#allocation12], %s362
          %s364 = sshll.u32 [#allocation13], 4
          %s365 = int_to_ptr.vmem [resolvable:$true] %s364
          %370 = dma.hbm_to_vmem [thread:$0]  %s8, 36864, %s365, [#allocation12], 128, 128, 8
        $region40: #{backend_forward.3} parent=11 // pred_fallthru
          _
        // Predicated region
        $region41: #{backend_forward.3} parent=11 // pred_check
          %p371 = pneg %p241
        $region42: #{backend_forward.3} parent=11 // pred_check_branch
          %373 = sbr.rel (%p371) target = $region44
        $region43: #{backend_forward.3} parent=11 // pred_region
          %s375 = ssub.s32 32, 32
          %376 = vsyncadd [#allocation15], %s375
          %s378 = sshll.u32 [#allocation14], 4
          %s379 = int_to_ptr.vmem [resolvable:$true] %s378
          %381 = dma.hbm_to_vmem [thread:$0]  %s9, 32, %s379, [#allocation15]
        $region44: #{backend_forward.3} parent=11 // pred_fallthru
          _
      $region12: #{backend_forward.3} parent=5 // pred_fallthru
        _
      %p382 = scmp.lt.s32.totalorder %s21, 2
      // Predicated region
      $region45: #{backend_forward.3} parent=5 // pred_check
        %p383 = pneg %p382
      $region46: #{backend_forward.3} parent=5 // pred_check_branch
        %385 = sbr.rel (%p383) target = $region48
      $region47: #{backend_forward.3} parent=5 // pred_region
        // Predicated region
        $region49: #{backend_forward.3} parent=47 // pred_check
          %p386 = pneg %p41
        $region50: #{backend_forward.3} parent=47 // pred_check_branch
          %388 = sbr.rel (%p386) target = $region52
        $region51: #{backend_forward.3} parent=47 // pred_region
          %p389 = scmp.lt.s32.totalorder %s21, 1
          %s390 = scalar_select %p389, %s21, 1
          %s391 = smul.addr %s390, 4
          %s392 = smul.addr %s391, 4
          %s393 = scalar_lea.vmem %s0, %s392
        $region52: #{backend_forward.3} parent=47 // pred_fallthru
          _
        // Predicated region
        $region53: #{backend_forward.3} parent=47 // pred_check
          %p394 = pneg %p67
        $region54: #{backend_forward.3} parent=47 // pred_check_branch
          %396 = sbr.rel (%p394) target = $region56
        $region55: #{backend_forward.3} parent=47 // pred_region
          %p397 = scmp.lt.s32.totalorder %s21, 1
          %s398 = scalar_select %p397, %s21, 1
          %s399 = smul.addr %s398, 8
          %s400 = smul.addr %s399, 8
          %s401 = scalar_lea.vmem %s1, %s400
        $region56: #{backend_forward.3} parent=47 // pred_fallthru
          _
      $region48: #{backend_forward.3} parent=5 // pred_fallthru
        _
      %p402 = scmp.le.s32.totalorder 1, %s21
      %p403 = scmp.lt.s32.totalorder %s21, 3
      %p404 = pnand %p402, %p403
      %p405 = pneg %p404
      // Predicated region
      $region57: #{backend_forward.3} parent=5 // pred_check
        _
      $region58: #{backend_forward.3} parent=5 // pred_check_branch
        %407 = sbr.rel (%p404) target = $region60
      $region59: #{backend_forward.3} parent=5 // pred_region
        %s408 = ssub.s32 %s21, 1
        // Predicated region
        $region61: #{backend_forward.3} parent=59 // pred_check
          %p409 = pneg %p94
        $region62: #{backend_forward.3} parent=59 // pred_check_branch
          %411 = sbr.rel (%p409) target = $region64
        $region63: #{backend_forward.3} parent=59 // pred_region
          %412 = dma.done [#allocation4], 256
        $region64: #{backend_forward.3} parent=59 // pred_fallthru
          _
        // Predicated region
        $region65: #{backend_forward.3} parent=59 // pred_check
          %p413 = pneg %p115
        $region66: #{backend_forward.3} parent=59 // pred_check_branch
          %415 = sbr.rel (%p413) target = $region68
        $region67: #{backend_forward.3} parent=59 // pred_region
          %416 = dma.done [#allocation6], 256
        $region68: #{backend_forward.3} parent=59 // pred_fallthru
          _
        // Predicated region
        $region69: #{backend_forward.3} parent=59 // pred_check
          %p417 = pneg %p136
        $region70: #{backend_forward.3} parent=59 // pred_check_branch
          %419 = sbr.rel (%p417) target = $region72
        $region71: #{backend_forward.3} parent=59 // pred_region
          %420 = dma.done [#allocation6], 256
        $region72: #{backend_forward.3} parent=59 // pred_fallthru
          _
        // Predicated region
        $region73: #{backend_forward.3} parent=59 // pred_check
          %p421 = pneg %p157
        $region74: #{backend_forward.3} parent=59 // pred_check_branch
          %423 = sbr.rel (%p421) target = $region76
        $region75: #{backend_forward.3} parent=59 // pred_region
          %424 = dma.done [#allocation9], 8192
        $region76: #{backend_forward.3} parent=59 // pred_fallthru
          _
        // Predicated region
        $region77: #{backend_forward.3} parent=59 // pred_check
          %p425 = pneg %p178
        $region78: #{backend_forward.3} parent=59 // pred_check_branch
          %427 = sbr.rel (%p425) target = $region80
        $region79: #{backend_forward.3} parent=59 // pred_region
          %428 = dma.done [#allocation9], 8192
        $region80: #{backend_forward.3} parent=59 // pred_fallthru
          _
        // Predicated region
        $region81: #{backend_forward.3} parent=59 // pred_check
          %p429 = pneg %p199
        $region82: #{backend_forward.3} parent=59 // pred_check_branch
          %431 = sbr.rel (%p429) target = $region84
        $region83: #{backend_forward.3} parent=59 // pred_region
          %432 = dma.done [#allocation12], 32
        $region84: #{backend_forward.3} parent=59 // pred_fallthru
          _
        // Predicated region
        $region85: #{backend_forward.3} parent=59 // pred_check
          %p433 = pneg %p220
        $region86: #{backend_forward.3} parent=59 // pred_check_branch
          %435 = sbr.rel (%p433) target = $region88
        $region87: #{backend_forward.3} parent=59 // pred_region
          %436 = dma.done [#allocation12], 36864
        $region88: #{backend_forward.3} parent=59 // pred_fallthru
          _
        // Predicated region
        $region89: #{backend_forward.3} parent=59 // pred_check
          %p437 = pneg %p241
        $region90: #{backend_forward.3} parent=59 // pred_check_branch
          %439 = sbr.rel (%p437) target = $region92
        $region91: #{backend_forward.3} parent=59 // pred_region
          %440 = dma.done [#allocation15], 32
        $region92: #{backend_forward.3} parent=59 // pred_fallthru
          _
        %p441 = scmp.lt.s32.totalorder %s26, 1
        %s442 = scalar_select %p441, %s26, 1
        %s443 = smul.addr %s442, 4
        %s444 = smul.addr %s443, 4
        %s445 = scalar_lea.vmem %s0, %s444
        %p446 = pneg %p47
        %p447 = pneg %p44
        %p448 = scmp.lt.s32.totalorder %s26, 1
        %s449 = scalar_select %p448, %s26, 1
        %s450 = smul.addr %s449, 8
        %s451 = smul.addr %s450, 8
        %s452 = scalar_lea.vmem %s1, %s451
        %p453 = pneg %p73
        %p454 = pneg %p70
        %p455 = pneg %p94
        %p456 = pneg %p91
        %p457 = pneg %p115
        %p458 = pneg %p112
        %p459 = pneg %p136
        %p460 = pneg %p133
        %p461 = pneg %p157
        %p462 = pneg %p154
        %p463 = pneg %p178
        %p464 = pneg %p175
        %p465 = pneg %p199
        %p466 = pneg %p196
        %p467 = pneg %p220
        %p468 = pneg %p217
        %p469 = pneg %p241
        %p470 = pneg %p238
        %p471 = pneg %p267
        %p472 = pneg %p264
        %p473 = scmp.lt.s32.totalorder %s26, 1
        %s474 = scalar_select %p473, %s26, 1
        %s475 = smul.addr %s474, 4
        %s476 = smul.addr %s475, 8
        %s477 = scalar_lea.vmem %s10, %s476
        %p478 = scmp.lt.s32.totalorder %s26, 1
        %s479 = scalar_select %p478, %s26, 1
        %s480 = smul.addr %s479, 4
        %s481 = smul.addr %s480, 4
        %s482 = scalar_lea.vmem %s0, %s481
        %p483 = scmp.lt.s32.totalorder %s26, 1
        %s484 = scalar_select %p483, %s26, 1
        %s485 = smul.addr %s484, 8
        %s486 = smul.addr %s485, 8
        %s487 = scalar_lea.vmem %s1, %s486
        %p488 = scmp.lt.s32.totalorder %s26, 1
        %s489 = scalar_select %p488, %s26, 1
        %s490 = smul.addr %s489, 4
        %s491 = smul.addr %s490, 8
        %s492 = scalar_lea.vmem %s10, %s491
        %v493 = vld [vmem:[%s482] sm:$0xff]
        %v494 = vld [vmem:[%s482 + $0x8] sm:$0xff]
        %v497 = vcombine.high %v493, %v493
        %v498 = vcombine.high %v494, %v494
        %v501 = vpack.c.bf16 %v493, %v493
        %v502 = vpack.c.bf16 %v497, %v497
        %v503 = vpack.c.bf16 %v494, %v494
        %v504 = vpack.c.bf16 %v498, %v498
        %v505 = vld [vmem:[#allocation8] sm:$0xff]
        %v506 = vld [vmem:[#allocation8 + $0x8] sm:$0xff]
        %v507 = vld [vmem:[#allocation8 + $0x10] sm:$0xff]
        %v508 = vld [vmem:[#allocation8 + $0x18] sm:$0xff]
        %v509 = vld [vmem:[#allocation8 + $0x20] sm:$0xff]
        %v510 = vld [vmem:[#allocation8 + $0x28] sm:$0xff]
        %v511 = vld [vmem:[#allocation8 + $0x30] sm:$0xff]
        %v512 = vld [vmem:[#allocation8 + $0x38] sm:$0xff]
        %v513 = vld [vmem:[#allocation8 + $0x40] sm:$0xff]
        %v514 = vld [vmem:[#allocation8 + $0x48] sm:$0xff]
        %v515 = vld [vmem:[#allocation8 + $0x50] sm:$0xff]
        %v516 = vld [vmem:[#allocation8 + $0x58] sm:$0xff]
        %v517 = vld [vmem:[#allocation8 + $0x60] sm:$0xff]
        %v518 = vld [vmem:[#allocation8 + $0x68] sm:$0xff]
        %v519 = vld [vmem:[#allocation8 + $0x70] sm:$0xff]
        %v520 = vld [vmem:[#allocation8 + $0x78] sm:$0xff]
        %v521 = vld [vmem:[#allocation8 + $0x80] sm:$0xff]
        %v522 = vld [vmem:[#allocation8 + $0x88] sm:$0xff]
        %v523 = vld [vmem:[#allocation8 + $0x90] sm:$0xff]
        %v524 = vld [vmem:[#allocation8 + $0x98] sm:$0xff]
        %v525 = vld [vmem:[#allocation8 + $0xa0] sm:$0xff]
        %v526 = vld [vmem:[#allocation8 + $0xa8] sm:$0xff]
        %v527 = vld [vmem:[#allocation8 + $0xb0] sm:$0xff]
        %v528 = vld [vmem:[#allocation8 + $0xb8] sm:$0xff]
        %v529 = vld [vmem:[#allocation8 + $0xc0] sm:$0xff]
        %v530 = vld [vmem:[#allocation8 + $0xc8] sm:$0xff]
        %v531 = vld [vmem:[#allocation8 + $0xd0] sm:$0xff]
        %v532 = vld [vmem:[#allocation8 + $0xd8] sm:$0xff]
        %v533 = vld [vmem:[#allocation8 + $0xe0] sm:$0xff]
        %v534 = vld [vmem:[#allocation8 + $0xe8] sm:$0xff]
        %v535 = vld [vmem:[#allocation8 + $0xf0] sm:$0xff]
        %v536 = vld [vmem:[#allocation8 + $0xf8] sm:$0xff]
        %v537 = vld [vmem:[#allocation8 + $0x100] sm:$0xff]
        %v538 = vld [vmem:[#allocation8 + $0x108] sm:$0xff]
        %v539 = vld [vmem:[#allocation8 + $0x110] sm:$0xff]
        %v540 = vld [vmem:[#allocation8 + $0x118] sm:$0xff]
        %v541 = vld [vmem:[#allocation8 + $0x120] sm:$0xff]
        %v542 = vld [vmem:[#allocation8 + $0x128] sm:$0xff]
        %v543 = vld [vmem:[#allocation8 + $0x130] sm:$0xff]
        %v544 = vld [vmem:[#allocation8 + $0x138] sm:$0xff]
        %v545 = vld [vmem:[#allocation8 + $0x140] sm:$0xff]
        %v546 = vld [vmem:[#allocation8 + $0x148] sm:$0xff]
        %v547 = vld [vmem:[#allocation8 + $0x150] sm:$0xff]
        %v548 = vld [vmem:[#allocation8 + $0x158] sm:$0xff]
        %v549 = vld [vmem:[#allocation8 + $0x160] sm:$0xff]
        %v550 = vld [vmem:[#allocation8 + $0x168] sm:$0xff]
        %v551 = vld [vmem:[#allocation8 + $0x170] sm:$0xff]
        %v552 = vld [vmem:[#allocation8 + $0x178] sm:$0xff]
        %v553 = vld [vmem:[#allocation8 + $0x180] sm:$0xff]
        %v554 = vld [vmem:[#allocation8 + $0x188] sm:$0xff]
        %v555 = vld [vmem:[#allocation8 + $0x190] sm:$0xff]
        %v556 = vld [vmem:[#allocation8 + $0x198] sm:$0xff]
        %v557 = vld [vmem:[#allocation8 + $0x1a0] sm:$0xff]
        %v558 = vld [vmem:[#allocation8 + $0x1a8] sm:$0xff]
        %v559 = vld [vmem:[#allocation8 + $0x1b0] sm:$0xff]
        %v560 = vld [vmem:[#allocation8 + $0x1b8] sm:$0xff]
        %v561 = vld [vmem:[#allocation8 + $0x1c0] sm:$0xff]
        %v562 = vld [vmem:[#allocation8 + $0x1c8] sm:$0xff]
        %v563 = vld [vmem:[#allocation8 + $0x1d0] sm:$0xff]
        %v564 = vld [vmem:[#allocation8 + $0x1d8] sm:$0xff]
        %v565 = vld [vmem:[#allocation8 + $0x1e0] sm:$0xff]
        %v566 = vld [vmem:[#allocation8 + $0x1e8] sm:$0xff]
        %v567 = vld [vmem:[#allocation8 + $0x1f0] sm:$0xff]
        %v568 = vld [vmem:[#allocation8 + $0x1f8] sm:$0xff]
        %v633 = vunpack.c.l.b16 %v505
        %v634 = vunpack.c.h.b16 %v505
        %v635 = vunpack.c.l.b16 %v506
        %v636 = vunpack.c.h.b16 %v506
        %v637 = vunpack.c.l.b16 %v507
        %v638 = vunpack.c.h.b16 %v507
        %v639 = vunpack.c.l.b16 %v508
        %v640 = vunpack.c.h.b16 %v508
        %v641 = vunpack.c.l.b16 %v509
        %v642 = vunpack.c.h.b16 %v509
        %v643 = vunpack.c.l.b16 %v510
        %v644 = vunpack.c.h.b16 %v510
        %v645 = vunpack.c.l.b16 %v511
        %v646 = vunpack.c.h.b16 %v511
        %v647 = vunpack.c.l.b16 %v512
        %v648 = vunpack.c.h.b16 %v512
        %v649 = vunpack.c.l.b16 %v513
        %v650 = vunpack.c.h.b16 %v513
        %v651 = vunpack.c.l.b16 %v514
        %v652 = vunpack.c.h.b16 %v514
        %v653 = vunpack.c.l.b16 %v515
        %v654 = vunpack.c.h.b16 %v515
        %v655 = vunpack.c.l.b16 %v516
        %v656 = vunpack.c.h.b16 %v516
        %v657 = vunpack.c.l.b16 %v517
        %v658 = vunpack.c.h.b16 %v517
        %v659 = vunpack.c.l.b16 %v518
        %v660 = vunpack.c.h.b16 %v518
        %v661 = vunpack.c.l.b16 %v519
        %v662 = vunpack.c.h.b16 %v519
        %v663 = vunpack.c.l.b16 %v520
        %v664 = vunpack.c.h.b16 %v520
        %v665 = vunpack.c.l.b16 %v521
        %v666 = vunpack.c.h.b16 %v521
        %v667 = vunpack.c.l.b16 %v522
        %v668 = vunpack.c.h.b16 %v522
        %v669 = vunpack.c.l.b16 %v523
        %v670 = vunpack.c.h.b16 %v523
        %v671 = vunpack.c.l.b16 %v524
        %v672 = vunpack.c.h.b16 %v524
        %v673 = vunpack.c.l.b16 %v525
        %v674 = vunpack.c.h.b16 %v525
        %v675 = vunpack.c.l.b16 %v526
        %v676 = vunpack.c.h.b16 %v526
        %v677 = vunpack.c.l.b16 %v527
        %v678 = vunpack.c.h.b16 %v527
        %v679 = vunpack.c.l.b16 %v528
        %v680 = vunpack.c.h.b16 %v528
        %v681 = vunpack.c.l.b16 %v529
        %v682 = vunpack.c.h.b16 %v529
        %v683 = vunpack.c.l.b16 %v530
        %v684 = vunpack.c.h.b16 %v530
        %v685 = vunpack.c.l.b16 %v531
        %v686 = vunpack.c.h.b16 %v531
        %v687 = vunpack.c.l.b16 %v532
        %v688 = vunpack.c.h.b16 %v532
        %v689 = vunpack.c.l.b16 %v533
        %v690 = vunpack.c.h.b16 %v533
        %v691 = vunpack.c.l.b16 %v534
        %v692 = vunpack.c.h.b16 %v534
        %v693 = vunpack.c.l.b16 %v535
        %v694 = vunpack.c.h.b16 %v535
        %v695 = vunpack.c.l.b16 %v536
        %v696 = vunpack.c.h.b16 %v536
        %v697 = vunpack.c.l.b16 %v537
        %v698 = vunpack.c.h.b16 %v537
        %v699 = vunpack.c.l.b16 %v538
        %v700 = vunpack.c.h.b16 %v538
        %v701 = vunpack.c.l.b16 %v539
        %v702 = vunpack.c.h.b16 %v539
        %v703 = vunpack.c.l.b16 %v540
        %v704 = vunpack.c.h.b16 %v540
        %v705 = vunpack.c.l.b16 %v541
        %v706 = vunpack.c.h.b16 %v541
        %v707 = vunpack.c.l.b16 %v542
        %v708 = vunpack.c.h.b16 %v542
        %v709 = vunpack.c.l.b16 %v543
        %v710 = vunpack.c.h.b16 %v543
        %v711 = vunpack.c.l.b16 %v544
        %v712 = vunpack.c.h.b16 %v544
        %v713 = vunpack.c.l.b16 %v545
        %v714 = vunpack.c.h.b16 %v545
        %v715 = vunpack.c.l.b16 %v546
        %v716 = vunpack.c.h.b16 %v546
        %v717 = vunpack.c.l.b16 %v547
        %v718 = vunpack.c.h.b16 %v547
        %v719 = vunpack.c.l.b16 %v548
        %v720 = vunpack.c.h.b16 %v548
        %v721 = vunpack.c.l.b16 %v549
        %v722 = vunpack.c.h.b16 %v549
        %v723 = vunpack.c.l.b16 %v550
        %v724 = vunpack.c.h.b16 %v550
        %v725 = vunpack.c.l.b16 %v551
        %v726 = vunpack.c.h.b16 %v551
        %v727 = vunpack.c.l.b16 %v552
        %v728 = vunpack.c.h.b16 %v552
        %v729 = vunpack.c.l.b16 %v553
        %v730 = vunpack.c.h.b16 %v553
        %v731 = vunpack.c.l.b16 %v554
        %v732 = vunpack.c.h.b16 %v554
        %v733 = vunpack.c.l.b16 %v555
        %v734 = vunpack.c.h.b16 %v555
        %v735 = vunpack.c.l.b16 %v556
        %v736 = vunpack.c.h.b16 %v556
        %v737 = vunpack.c.l.b16 %v557
        %v738 = vunpack.c.h.b16 %v557
        %v739 = vunpack.c.l.b16 %v558
        %v740 = vunpack.c.h.b16 %v558
        %v741 = vunpack.c.l.b16 %v559
        %v742 = vunpack.c.h.b16 %v559
        %v743 = vunpack.c.l.b16 %v560
        %v744 = vunpack.c.h.b16 %v560
        %v745 = vunpack.c.l.b16 %v561
        %v746 = vunpack.c.h.b16 %v561
        %v747 = vunpack.c.l.b16 %v562
        %v748 = vunpack.c.h.b16 %v562
        %v749 = vunpack.c.l.b16 %v563
        %v750 = vunpack.c.h.b16 %v563
        %v751 = vunpack.c.l.b16 %v564
        %v752 = vunpack.c.h.b16 %v564
        %v753 = vunpack.c.l.b16 %v565
        %v754 = vunpack.c.h.b16 %v565
        %v755 = vunpack.c.l.b16 %v566
        %v756 = vunpack.c.h.b16 %v566
        %v757 = vunpack.c.l.b16 %v567
        %v758 = vunpack.c.h.b16 %v567
        %v759 = vunpack.c.l.b16 %v568
        %v760 = vunpack.c.h.b16 %v568
        %v761 = vpack.c.b16 %v635, %v633
        %v762 = vpack.c.b16 %v636, %v634
        %v763 = vpack.c.b16 %v639, %v637
        %v764 = vpack.c.b16 %v640, %v638
        %v765 = vpack.c.b16 %v643, %v641
        %v766 = vpack.c.b16 %v644, %v642
        %v767 = vpack.c.b16 %v647, %v645
        %v768 = vpack.c.b16 %v648, %v646
        %v769 = vpack.c.b16 %v651, %v649
        %v770 = vpack.c.b16 %v652, %v650
        %v771 = vpack.c.b16 %v655, %v653
        %v772 = vpack.c.b16 %v656, %v654
        %v773 = vpack.c.b16 %v659, %v657
        %v774 = vpack.c.b16 %v660, %v658
        %v775 = vpack.c.b16 %v663, %v661
        %v776 = vpack.c.b16 %v664, %v662
        %v777 = vpack.c.b16 %v667, %v665
        %v778 = vpack.c.b16 %v668, %v666
        %v779 = vpack.c.b16 %v671, %v669
        %v780 = vpack.c.b16 %v672, %v670
        %v781 = vpack.c.b16 %v675, %v673
        %v782 = vpack.c.b16 %v676, %v674
        %v783 = vpack.c.b16 %v679, %v677
        %v784 = vpack.c.b16 %v680, %v678
        %v785 = vpack.c.b16 %v683, %v681
        %v786 = vpack.c.b16 %v684, %v682
        %v787 = vpack.c.b16 %v687, %v685
        %v788 = vpack.c.b16 %v688, %v686
        %v789 = vpack.c.b16 %v691, %v689
        %v790 = vpack.c.b16 %v692, %v690
        %v791 = vpack.c.b16 %v695, %v693
        %v792 = vpack.c.b16 %v696, %v694
        %v793 = vpack.c.b16 %v699, %v697
        %v794 = vpack.c.b16 %v700, %v698
        %v795 = vpack.c.b16 %v703, %v701
        %v796 = vpack.c.b16 %v704, %v702
        %v797 = vpack.c.b16 %v707, %v705
        %v798 = vpack.c.b16 %v708, %v706
        %v799 = vpack.c.b16 %v711, %v709
        %v800 = vpack.c.b16 %v712, %v710
        %v801 = vpack.c.b16 %v715, %v713
        %v802 = vpack.c.b16 %v716, %v714
        %v803 = vpack.c.b16 %v719, %v717
        %v804 = vpack.c.b16 %v720, %v718
        %v805 = vpack.c.b16 %v723, %v721
        %v806 = vpack.c.b16 %v724, %v722
        %v807 = vpack.c.b16 %v727, %v725
        %v808 = vpack.c.b16 %v728, %v726
        %v809 = vpack.c.b16 %v731, %v729
        %v810 = vpack.c.b16 %v732, %v730
        %v811 = vpack.c.b16 %v735, %v733
        %v812 = vpack.c.b16 %v736, %v734
        %v813 = vpack.c.b16 %v739, %v737
        %v814 = vpack.c.b16 %v740, %v738
        %v815 = vpack.c.b16 %v743, %v741
        %v816 = vpack.c.b16 %v744, %v742
        %v817 = vpack.c.b16 %v747, %v745
        %v818 = vpack.c.b16 %v748, %v746
        %v819 = vpack.c.b16 %v751, %v749
        %v820 = vpack.c.b16 %v752, %v750
        %v821 = vpack.c.b16 %v755, %v753
        %v822 = vpack.c.b16 %v756, %v754
        %v823 = vpack.c.b16 %v759, %v757
        %v824 = vpack.c.b16 %v760, %v758
        %889 = vmatprep.subr.bf16.mxu0 %v776
        %890 = vmatpush1.bf16.msra.mxu0 %v775
        %891 = vmatprep.subr.bf16.mxu0 %v774
        %892 = vmatpush1.bf16.msra.mxu0 %v773
        %893 = vmatprep.subr.bf16.mxu0 %v772
        %894 = vmatpush1.bf16.msra.mxu0 %v771
        %895 = vmatprep.subr.bf16.mxu0 %v770
        %896 = vmatpush1.bf16.msra.mxu0 %v769
        %897 = vmatprep.subr.bf16.mxu0 %v768
        %898 = vmatpush1.bf16.msra.mxu0 %v767
        %899 = vmatprep.subr.bf16.mxu0 %v766
        %900 = vmatpush1.bf16.msra.mxu0 %v765
        %901 = vmatprep.subr.bf16.mxu0 %v764
        %902 = vmatpush1.bf16.msra.mxu0 %v763
        %903 = vmatprep.subr.bf16.mxu0 %v762
        %904 = vmatpush1.bf16.msra.mxu0 %v761
        %905 = vmatprep.subr.bf16.mxu0 %v792
        %906 = vmatpush2.bf16.msra.mxu0 %v791
        %907 = vmatprep.subr.bf16.mxu0 %v790
        %908 = vmatpush2.bf16.msra.mxu0 %v789
        %909 = vmatprep.subr.bf16.mxu0 %v788
        %910 = vmatpush2.bf16.msra.mxu0 %v787
        %911 = vmatprep.subr.bf16.mxu0 %v786
        %912 = vmatpush2.bf16.msra.mxu0 %v785
        %913 = vmatprep.subr.bf16.mxu0 %v784
        %914 = vmatpush2.bf16.msra.mxu0 %v783
        %915 = vmatprep.subr.bf16.mxu0 %v782
        %916 = vmatpush2.bf16.msra.mxu0 %v781
        %917 = vmatprep.subr.bf16.mxu0 %v780
        %918 = vmatpush2.bf16.msra.mxu0 %v779
        %919 = vmatprep.subr.bf16.mxu0 %v778
        %920 = vmatpush2.bf16.msra.mxu0 %v777
        %921 = vmatprep.mubr.bf16.mxu0 %v502
        %922 = vmatmul.mubr.bf16.gmra.mxu0 %v501
        %v923 = vpop.f32.mrf.mxu0
        %v924 = vadd.f32 0.0, %v923
        %v925 = vpop.f32.mrf.mxu0
        %v926 = vadd.f32 0.0, %v925
        %v927 = vpop.f32.mrf.mxu0
        %v928 = vpop.f32.mrf.mxu0
        %929 = vdwg.mxu0
        %930 = vmatprep.subr.bf16.mxu0 %v808
        %931 = vmatpush1.bf16.msra.mxu0 %v807
        %932 = vmatprep.subr.bf16.mxu0 %v806
        %933 = vmatpush1.bf16.msra.mxu0 %v805
        %934 = vmatprep.subr.bf16.mxu0 %v804
        %935 = vmatpush1.bf16.msra.mxu0 %v803
        %936 = vmatprep.subr.bf16.mxu0 %v802
        %937 = vmatpush1.bf16.msra.mxu0 %v801
        %938 = vmatprep.subr.bf16.mxu0 %v800
        %939 = vmatpush1.bf16.msra.mxu0 %v799
        %940 = vmatprep.subr.bf16.mxu0 %v798
        %941 = vmatpush1.bf16.msra.mxu0 %v797
        %942 = vmatprep.subr.bf16.mxu0 %v796
        %943 = vmatpush1.bf16.msra.mxu0 %v795
        %944 = vmatprep.subr.bf16.mxu0 %v794
        %945 = vmatpush1.bf16.msra.mxu0 %v793
        %946 = vmatprep.subr.bf16.mxu0 %v824
        %947 = vmatpush2.bf16.msra.mxu0 %v823
        %948 = vmatprep.subr.bf16.mxu0 %v822
        %949 = vmatpush2.bf16.msra.mxu0 %v821
        %950 = vmatprep.subr.bf16.mxu0 %v820
        %951 = vmatpush2.bf16.msra.mxu0 %v819
        %952 = vmatprep.subr.bf16.mxu0 %v818
        %953 = vmatpush2.bf16.msra.mxu0 %v817
        %954 = vmatprep.subr.bf16.mxu0 %v816
        %955 = vmatpush2.bf16.msra.mxu0 %v815
        %956 = vmatprep.subr.bf16.mxu0 %v814
        %957 = vmatpush2.bf16.msra.mxu0 %v813
        %958 = vmatprep.subr.bf16.mxu0 %v812
        %959 = vmatpush2.bf16.msra.mxu0 %v811
        %960 = vmatprep.subr.bf16.mxu0 %v810
        %961 = vmatpush2.bf16.msra.mxu0 %v809
        %962 = vmatprep.mubr.bf16.mxu0 %v504
        %963 = vmatmul.mubr.bf16.gmra.mxu0 %v503
        %v964 = vpop.f32.mrf.mxu0
        %v965 = vadd.f32 %v924, %v964
        %v966 = vpop.f32.mrf.mxu0
        %v967 = vadd.f32 %v926, %v966
        %v968 = vpop.f32.mrf.mxu0
        %v969 = vpop.f32.mrf.mxu0
        %970 = vdwg.mxu0
        %v971 = vld [vmem:[#allocation3] sm:$0xff]
        %v972 = vld [vmem:[#allocation3 + $0x8] sm:$0xff]
        %v973 = vld [vmem:[%s487] sm:$0xff]
        %v974 = vld [vmem:[%s487 + $0x8] sm:$0xff]
        %v975 = vld [vmem:[%s487 + $0x10] sm:$0xff]
        %v976 = vld [vmem:[%s487 + $0x18] sm:$0xff]
        %v977 = vld [vmem:[%s487 + $0x20] sm:$0xff]
        %v978 = vld [vmem:[%s487 + $0x28] sm:$0xff]
        %v979 = vld [vmem:[%s487 + $0x30] sm:$0xff]
        %v980 = vld [vmem:[%s487 + $0x38] sm:$0xff]
        %v981 = vpack.c.bf16 %v977, %v973
        %v982 = vpack.c.bf16 %v978, %v974
        %v983 = vpack.c.bf16 %v979, %v975
        %v984 = vpack.c.bf16 %v980, %v976
        %v985 = vld [vmem:[#allocation10] sm:$0xff]
        %v986 = vld [vmem:[#allocation10 + $0x8] sm:$0xff]
        %v987 = vld [vmem:[#allocation10 + $0x10] sm:$0xff]
        %v988 = vld [vmem:[#allocation10 + $0x18] sm:$0xff]
        %v989 = vld [vmem:[#allocation10 + $0x20] sm:$0xff]
        %v990 = vld [vmem:[#allocation10 + $0x28] sm:$0xff]
        %v991 = vld [vmem:[#allocation10 + $0x30] sm:$0xff]
        %v992 = vld [vmem:[#allocation10 + $0x38] sm:$0xff]
        %v993 = vld [vmem:[#allocation10 + $0x40] sm:$0xff]
        %v994 = vld [vmem:[#allocation10 + $0x48] sm:$0xff]
        %v995 = vld [vmem:[#allocation10 + $0x50] sm:$0xff]
        %v996 = vld [vmem:[#allocation10 + $0x58] sm:$0xff]
        %v997 = vld [vmem:[#allocation10 + $0x60] sm:$0xff]
        %v998 = vld [vmem:[#allocation10 + $0x68] sm:$0xff]
        %v999 = vld [vmem:[#allocation10 + $0x70] sm:$0xff]
        %v1000 = vld [vmem:[#allocation10 + $0x78] sm:$0xff]
        %v1001 = vld [vmem:[#allocation10 + $0x80] sm:$0xff]
        %v1002 = vld [vmem:[#allocation10 + $0x88] sm:$0xff]
        %v1003 = vld [vmem:[#allocation10 + $0x90] sm:$0xff]
        %v1004 = vld [vmem:[#allocation10 + $0x98] sm:$0xff]
        %v1005 = vld [vmem:[#allocation10 + $0xa0] sm:$0xff]
        %v1006 = vld [vmem:[#allocation10 + $0xa8] sm:$0xff]
        %v1007 = vld [vmem:[#allocation10 + $0xb0] sm:$0xff]
        %v1008 = vld [vmem:[#allocation10 + $0xb8] sm:$0xff]
        %v1009 = vld [vmem:[#allocation10 + $0xc0] sm:$0xff]
        %v1010 = vld [vmem:[#allocation10 + $0xc8] sm:$0xff]
        %v1011 = vld [vmem:[#allocation10 + $0xd0] sm:$0xff]
        %v1012 = vld [vmem:[#allocation10 + $0xd8] sm:$0xff]
        %v1013 = vld [vmem:[#allocation10 + $0xe0] sm:$0xff]
        %v1014 = vld [vmem:[#allocation10 + $0xe8] sm:$0xff]
        %v1015 = vld [vmem:[#allocation10 + $0xf0] sm:$0xff]
        %v1016 = vld [vmem:[#allocation10 + $0xf8] sm:$0xff]
        %v1017 = vld [vmem:[#allocation10 + $0x100] sm:$0xff]
        %v1018 = vld [vmem:[#allocation10 + $0x108] sm:$0xff]
        %v1019 = vld [vmem:[#allocation10 + $0x110] sm:$0xff]
        %v1020 = vld [vmem:[#allocation10 + $0x118] sm:$0xff]
        %v1021 = vld [vmem:[#allocation10 + $0x120] sm:$0xff]
        %v1022 = vld [vmem:[#allocation10 + $0x128] sm:$0xff]
        %v1023 = vld [vmem:[#allocation10 + $0x130] sm:$0xff]
        %v1024 = vld [vmem:[#allocation10 + $0x138] sm:$0xff]
        %v1025 = vld [vmem:[#allocation10 + $0x140] sm:$0xff]
        %v1026 = vld [vmem:[#allocation10 + $0x148] sm:$0xff]
        %v1027 = vld [vmem:[#allocation10 + $0x150] sm:$0xff]
        %v1028 = vld [vmem:[#allocation10 + $0x158] sm:$0xff]
        %v1029 = vld [vmem:[#allocation10 + $0x160] sm:$0xff]
        %v1030 = vld [vmem:[#allocation10 + $0x168] sm:$0xff]
        %v1031 = vld [vmem:[#allocation10 + $0x170] sm:$0xff]
        %v1032 = vld [vmem:[#allocation10 + $0x178] sm:$0xff]
        %v1033 = vld [vmem:[#allocation10 + $0x180] sm:$0xff]
        %v1034 = vld [vmem:[#allocation10 + $0x188] sm:$0xff]
        %v1035 = vld [vmem:[#allocation10 + $0x190] sm:$0xff]
        %v1036 = vld [vmem:[#allocation10 + $0x198] sm:$0xff]
        %v1037 = vld [vmem:[#allocation10 + $0x1a0] sm:$0xff]
        %v1038 = vld [vmem:[#allocation10 + $0x1a8] sm:$0xff]
        %v1039 = vld [vmem:[#allocation10 + $0x1b0] sm:$0xff]
        %v1040 = vld [vmem:[#allocation10 + $0x1b8] sm:$0xff]
        %v1041 = vld [vmem:[#allocation10 + $0x1c0] sm:$0xff]
        %v1042 = vld [vmem:[#allocation10 + $0x1c8] sm:$0xff]
        %v1043 = vld [vmem:[#allocation10 + $0x1d0] sm:$0xff]
        %v1044 = vld [vmem:[#allocation10 + $0x1d8] sm:$0xff]
        %v1045 = vld [vmem:[#allocation10 + $0x1e0] sm:$0xff]
        %v1046 = vld [vmem:[#allocation10 + $0x1e8] sm:$0xff]
        %v1047 = vld [vmem:[#allocation10 + $0x1f0] sm:$0xff]
        %v1048 = vld [vmem:[#allocation10 + $0x1f8] sm:$0xff]
        %v1113 = vunpack.c.l.b16 %v985
        %v1114 = vunpack.c.h.b16 %v985
        %v1115 = vunpack.c.l.b16 %v986
        %v1116 = vunpack.c.h.b16 %v986
        %v1117 = vunpack.c.l.b16 %v987
        %v1118 = vunpack.c.h.b16 %v987
        %v1119 = vunpack.c.l.b16 %v988
        %v1120 = vunpack.c.h.b16 %v988
        %v1121 = vunpack.c.l.b16 %v989
        %v1122 = vunpack.c.h.b16 %v989
        %v1123 = vunpack.c.l.b16 %v990
        %v1124 = vunpack.c.h.b16 %v990
        %v1125 = vunpack.c.l.b16 %v991
        %v1126 = vunpack.c.h.b16 %v991
        %v1127 = vunpack.c.l.b16 %v992
        %v1128 = vunpack.c.h.b16 %v992
        %v1129 = vunpack.c.l.b16 %v993
        %v1130 = vunpack.c.h.b16 %v993
        %v1131 = vunpack.c.l.b16 %v994
        %v1132 = vunpack.c.h.b16 %v994
        %v1133 = vunpack.c.l.b16 %v995
        %v1134 = vunpack.c.h.b16 %v995
        %v1135 = vunpack.c.l.b16 %v996
        %v1136 = vunpack.c.h.b16 %v996
        %v1137 = vunpack.c.l.b16 %v997
        %v1138 = vunpack.c.h.b16 %v997
        %v1139 = vunpack.c.l.b16 %v998
        %v1140 = vunpack.c.h.b16 %v998
        %v1141 = vunpack.c.l.b16 %v999
        %v1142 = vunpack.c.h.b16 %v999
        %v1143 = vunpack.c.l.b16 %v1000
        %v1144 = vunpack.c.h.b16 %v1000
        %v1145 = vunpack.c.l.b16 %v1001
        %v1146 = vunpack.c.h.b16 %v1001
        %v1147 = vunpack.c.l.b16 %v1002
        %v1148 = vunpack.c.h.b16 %v1002
        %v1149 = vunpack.c.l.b16 %v1003
        %v1150 = vunpack.c.h.b16 %v1003
        %v1151 = vunpack.c.l.b16 %v1004
        %v1152 = vunpack.c.h.b16 %v1004
        %v1153 = vunpack.c.l.b16 %v1005
        %v1154 = vunpack.c.h.b16 %v1005
        %v1155 = vunpack.c.l.b16 %v1006
        %v1156 = vunpack.c.h.b16 %v1006
        %v1157 = vunpack.c.l.b16 %v1007
        %v1158 = vunpack.c.h.b16 %v1007
        %v1159 = vunpack.c.l.b16 %v1008
        %v1160 = vunpack.c.h.b16 %v1008
        %v1161 = vunpack.c.l.b16 %v1009
        %v1162 = vunpack.c.h.b16 %v1009
        %v1163 = vunpack.c.l.b16 %v1010
        %v1164 = vunpack.c.h.b16 %v1010
        %v1165 = vunpack.c.l.b16 %v1011
        %v1166 = vunpack.c.h.b16 %v1011
        %v1167 = vunpack.c.l.b16 %v1012
        %v1168 = vunpack.c.h.b16 %v1012
        %v1169 = vunpack.c.l.b16 %v1013
        %v1170 = vunpack.c.h.b16 %v1013
        %v1171 = vunpack.c.l.b16 %v1014
        %v1172 = vunpack.c.h.b16 %v1014
        %v1173 = vunpack.c.l.b16 %v1015
        %v1174 = vunpack.c.h.b16 %v1015
        %v1175 = vunpack.c.l.b16 %v1016
        %v1176 = vunpack.c.h.b16 %v1016
        %v1177 = vunpack.c.l.b16 %v1017
        %v1178 = vunpack.c.h.b16 %v1017
        %v1179 = vunpack.c.l.b16 %v1018
        %v1180 = vunpack.c.h.b16 %v1018
        %v1181 = vunpack.c.l.b16 %v1019
        %v1182 = vunpack.c.h.b16 %v1019
        %v1183 = vunpack.c.l.b16 %v1020
        %v1184 = vunpack.c.h.b16 %v1020
        %v1185 = vunpack.c.l.b16 %v1021
        %v1186 = vunpack.c.h.b16 %v1021
        %v1187 = vunpack.c.l.b16 %v1022
        %v1188 = vunpack.c.h.b16 %v1022
        %v1189 = vunpack.c.l.b16 %v1023
        %v1190 = vunpack.c.h.b16 %v1023
        %v1191 = vunpack.c.l.b16 %v1024
        %v1192 = vunpack.c.h.b16 %v1024
        %v1193 = vunpack.c.l.b16 %v1025
        %v1194 = vunpack.c.h.b16 %v1025
        %v1195 = vunpack.c.l.b16 %v1026
        %v1196 = vunpack.c.h.b16 %v1026
        %v1197 = vunpack.c.l.b16 %v1027
        %v1198 = vunpack.c.h.b16 %v1027
        %v1199 = vunpack.c.l.b16 %v1028
        %v1200 = vunpack.c.h.b16 %v1028
        %v1201 = vunpack.c.l.b16 %v1029
        %v1202 = vunpack.c.h.b16 %v1029
        %v1203 = vunpack.c.l.b16 %v1030
        %v1204 = vunpack.c.h.b16 %v1030
        %v1205 = vunpack.c.l.b16 %v1031
        %v1206 = vunpack.c.h.b16 %v1031
        %v1207 = vunpack.c.l.b16 %v1032
        %v1208 = vunpack.c.h.b16 %v1032
        %v1209 = vunpack.c.l.b16 %v1033
        %v1210 = vunpack.c.h.b16 %v1033
        %v1211 = vunpack.c.l.b16 %v1034
        %v1212 = vunpack.c.h.b16 %v1034
        %v1213 = vunpack.c.l.b16 %v1035
        %v1214 = vunpack.c.h.b16 %v1035
        %v1215 = vunpack.c.l.b16 %v1036
        %v1216 = vunpack.c.h.b16 %v1036
        %v1217 = vunpack.c.l.b16 %v1037
        %v1218 = vunpack.c.h.b16 %v1037
        %v1219 = vunpack.c.l.b16 %v1038
        %v1220 = vunpack.c.h.b16 %v1038
        %v1221 = vunpack.c.l.b16 %v1039
        %v1222 = vunpack.c.h.b16 %v1039
        %v1223 = vunpack.c.l.b16 %v1040
        %v1224 = vunpack.c.h.b16 %v1040
        %v1225 = vunpack.c.l.b16 %v1041
        %v1226 = vunpack.c.h.b16 %v1041
        %v1227 = vunpack.c.l.b16 %v1042
        %v1228 = vunpack.c.h.b16 %v1042
        %v1229 = vunpack.c.l.b16 %v1043
        %v1230 = vunpack.c.h.b16 %v1043
        %v1231 = vunpack.c.l.b16 %v1044
        %v1232 = vunpack.c.h.b16 %v1044
        %v1233 = vunpack.c.l.b16 %v1045
        %v1234 = vunpack.c.h.b16 %v1045
        %v1235 = vunpack.c.l.b16 %v1046
        %v1236 = vunpack.c.h.b16 %v1046
        %v1237 = vunpack.c.l.b16 %v1047
        %v1238 = vunpack.c.h.b16 %v1047
        %v1239 = vunpack.c.l.b16 %v1048
        %v1240 = vunpack.c.h.b16 %v1048
        %v1241 = vpack.c.b16 %v1115, %v1113
        %v1242 = vpack.c.b16 %v1116, %v1114
        %v1243 = vpack.c.b16 %v1119, %v1117
        %v1244 = vpack.c.b16 %v1120, %v1118
        %v1245 = vpack.c.b16 %v1123, %v1121
        %v1246 = vpack.c.b16 %v1124, %v1122
        %v1247 = vpack.c.b16 %v1127, %v1125
        %v1248 = vpack.c.b16 %v1128, %v1126
        %v1249 = vpack.c.b16 %v1131, %v1129
        %v1250 = vpack.c.b16 %v1132, %v1130
        %v1251 = vpack.c.b16 %v1135, %v1133
        %v1252 = vpack.c.b16 %v1136, %v1134
        %v1253 = vpack.c.b16 %v1139, %v1137
        %v1254 = vpack.c.b16 %v1140, %v1138
        %v1255 = vpack.c.b16 %v1143, %v1141
        %v1256 = vpack.c.b16 %v1144, %v1142
        %v1257 = vpack.c.b16 %v1147, %v1145
        %v1258 = vpack.c.b16 %v1148, %v1146
        %v1259 = vpack.c.b16 %v1151, %v1149
        %v1260 = vpack.c.b16 %v1152, %v1150
        %v1261 = vpack.c.b16 %v1155, %v1153
        %v1262 = vpack.c.b16 %v1156, %v1154
        %v1263 = vpack.c.b16 %v1159, %v1157
        %v1264 = vpack.c.b16 %v1160, %v1158
        %v1265 = vpack.c.b16 %v1163, %v1161
        %v1266 = vpack.c.b16 %v1164, %v1162
        %v1267 = vpack.c.b16 %v1167, %v1165
        %v1268 = vpack.c.b16 %v1168, %v1166
        %v1269 = vpack.c.b16 %v1171, %v1169
        %v1270 = vpack.c.b16 %v1172, %v1170
        %v1271 = vpack.c.b16 %v1175, %v1173
        %v1272 = vpack.c.b16 %v1176, %v1174
        %v1273 = vpack.c.b16 %v1179, %v1177
        %v1274 = vpack.c.b16 %v1180, %v1178
        %v1275 = vpack.c.b16 %v1183, %v1181
        %v1276 = vpack.c.b16 %v1184, %v1182
        %v1277 = vpack.c.b16 %v1187, %v1185
        %v1278 = vpack.c.b16 %v1188, %v1186
        %v1279 = vpack.c.b16 %v1191, %v1189
        %v1280 = vpack.c.b16 %v1192, %v1190
        %v1281 = vpack.c.b16 %v1195, %v1193
        %v1282 = vpack.c.b16 %v1196, %v1194
        %v1283 = vpack.c.b16 %v1199, %v1197
        %v1284 = vpack.c.b16 %v1200, %v1198
        %v1285 = vpack.c.b16 %v1203, %v1201
        %v1286 = vpack.c.b16 %v1204, %v1202
        %v1287 = vpack.c.b16 %v1207, %v1205
        %v1288 = vpack.c.b16 %v1208, %v1206
        %v1289 = vpack.c.b16 %v1211, %v1209
        %v1290 = vpack.c.b16 %v1212, %v1210
        %v1291 = vpack.c.b16 %v1215, %v1213
        %v1292 = vpack.c.b16 %v1216, %v1214
        %v1293 = vpack.c.b16 %v1219, %v1217
        %v1294 = vpack.c.b16 %v1220, %v1218
        %v1295 = vpack.c.b16 %v1223, %v1221
        %v1296 = vpack.c.b16 %v1224, %v1222
        %v1297 = vpack.c.b16 %v1227, %v1225
        %v1298 = vpack.c.b16 %v1228, %v1226
        %v1299 = vpack.c.b16 %v1231, %v1229
        %v1300 = vpack.c.b16 %v1232, %v1230
        %v1301 = vpack.c.b16 %v1235, %v1233
        %v1302 = vpack.c.b16 %v1236, %v1234
        %v1303 = vpack.c.b16 %v1239, %v1237
        %v1304 = vpack.c.b16 %v1240, %v1238
        %1369 = vmatprep.subr.bf16.mxu0 %v1256
        %1370 = vmatpush1.bf16.msra.mxu0 %v1255
        %1371 = vmatprep.subr.bf16.mxu0 %v1254
        %1372 = vmatpush1.bf16.msra.mxu0 %v1253
        %1373 = vmatprep.subr.bf16.mxu0 %v1252
        %1374 = vmatpush1.bf16.msra.mxu0 %v1251
        %1375 = vmatprep.subr.bf16.mxu0 %v1250
        %1376 = vmatpush1.bf16.msra.mxu0 %v1249
        %1377 = vmatprep.subr.bf16.mxu0 %v1248
        %1378 = vmatpush1.bf16.msra.mxu0 %v1247
        %1379 = vmatprep.subr.bf16.mxu0 %v1246
        %1380 = vmatpush1.bf16.msra.mxu0 %v1245
        %1381 = vmatprep.subr.bf16.mxu0 %v1244
        %1382 = vmatpush1.bf16.msra.mxu0 %v1243
        %1383 = vmatprep.subr.bf16.mxu0 %v1242
        %1384 = vmatpush1.bf16.msra.mxu0 %v1241
        %1385 = vmatprep.subr.bf16.mxu0 %v1272
        %1386 = vmatpush2.bf16.msra.mxu0 %v1271
        %1387 = vmatprep.subr.bf16.mxu0 %v1270
        %1388 = vmatpush2.bf16.msra.mxu0 %v1269
        %1389 = vmatprep.subr.bf16.mxu0 %v1268
        %1390 = vmatpush2.bf16.msra.mxu0 %v1267
        %1391 = vmatprep.subr.bf16.mxu0 %v1266
        %1392 = vmatpush2.bf16.msra.mxu0 %v1265
        %1393 = vmatprep.subr.bf16.mxu0 %v1264
        %1394 = vmatpush2.bf16.msra.mxu0 %v1263
        %1395 = vmatprep.subr.bf16.mxu0 %v1262
        %1396 = vmatpush2.bf16.msra.mxu0 %v1261
        %1397 = vmatprep.subr.bf16.mxu0 %v1260
        %1398 = vmatpush2.bf16.msra.mxu0 %v1259
        %1399 = vmatprep.subr.bf16.mxu0 %v1258
        %1400 = vmatpush2.bf16.msra.mxu0 %v1257
        %1401 = vmatprep.mubr.bf16.mxu0 %v982
        %1402 = vmatmul.mubr.bf16.gmra.mxu0 %v981
        %v1403 = vpop.f32.mrf.mxu0
        %v1404 = vadd.f32 0.0, %v1403
        %v1405 = vpop.f32.mrf.mxu0
        %v1406 = vadd.f32 0.0, %v1405
        %v1407 = vpop.f32.mrf.mxu0
        %v1408 = vadd.f32 0.0, %v1407
        %v1409 = vpop.f32.mrf.mxu0
        %v1410 = vadd.f32 0.0, %v1409
        %1411 = vdwg.mxu0
        %1412 = vmatprep.subr.bf16.mxu0 %v1288
        %1413 = vmatpush1.bf16.msra.mxu0 %v1287
        %1414 = vmatprep.subr.bf16.mxu0 %v1286
        %1415 = vmatpush1.bf16.msra.mxu0 %v1285
        %1416 = vmatprep.subr.bf16.mxu0 %v1284
        %1417 = vmatpush1.bf16.msra.mxu0 %v1283
        %1418 = vmatprep.subr.bf16.mxu0 %v1282
        %1419 = vmatpush1.bf16.msra.mxu0 %v1281
        %1420 = vmatprep.subr.bf16.mxu0 %v1280
        %1421 = vmatpush1.bf16.msra.mxu0 %v1279
        %1422 = vmatprep.subr.bf16.mxu0 %v1278
        %1423 = vmatpush1.bf16.msra.mxu0 %v1277
        %1424 = vmatprep.subr.bf16.mxu0 %v1276
        %1425 = vmatpush1.bf16.msra.mxu0 %v1275
        %1426 = vmatprep.subr.bf16.mxu0 %v1274
        %1427 = vmatpush1.bf16.msra.mxu0 %v1273
        %1428 = vmatprep.subr.bf16.mxu0 %v1304
        %1429 = vmatpush2.bf16.msra.mxu0 %v1303
        %1430 = vmatprep.subr.bf16.mxu0 %v1302
        %1431 = vmatpush2.bf16.msra.mxu0 %v1301
        %1432 = vmatprep.subr.bf16.mxu0 %v1300
        %1433 = vmatpush2.bf16.msra.mxu0 %v1299
        %1434 = vmatprep.subr.bf16.mxu0 %v1298
        %1435 = vmatpush2.bf16.msra.mxu0 %v1297
        %1436 = vmatprep.subr.bf16.mxu0 %v1296
        %1437 = vmatpush2.bf16.msra.mxu0 %v1295
        %1438 = vmatprep.subr.bf16.mxu0 %v1294
        %1439 = vmatpush2.bf16.msra.mxu0 %v1293
        %1440 = vmatprep.subr.bf16.mxu0 %v1292
        %1441 = vmatpush2.bf16.msra.mxu0 %v1291
        %1442 = vmatprep.subr.bf16.mxu0 %v1290
        %1443 = vmatpush2.bf16.msra.mxu0 %v1289
        %1444 = vmatprep.mubr.bf16.mxu0 %v984
        %1445 = vmatmul.mubr.bf16.gmra.mxu0 %v983
        %v1446 = vpop.f32.mrf.mxu0
        %v1447 = vadd.f32 %v1404, %v1446
        %v1448 = vpop.f32.mrf.mxu0
        %v1449 = vadd.f32 %v1406, %v1448
        %v1450 = vpop.f32.mrf.mxu0
        %v1451 = vadd.f32 %v1408, %v1450
        %v1452 = vpop.f32.mrf.mxu0
        %v1453 = vadd.f32 %v1410, %v1452
        %1454 = vdwg.mxu0
        %vm1455 = vcmask 31744
        %v1457 = vsel %vm1455, %v971, 0
        %v1460 = vsel %vm1455, %v972, 0
        %vm1462 = vcmask 1043456
        %v1464 = vsel %vm1462, %v965, 0
        %v1467 = vsel %vm1462, %v967, 0
        %1469 = vmatprep.subr.mxu0 0.0
        %1470 = vmatpush1.msra.mxu0 0.0
        %1471 = vmatprep.subr.mxu0 0.0
        %1472 = vmatpush1.msra.mxu0 0.0
        %1473 = vmatprep.subr.mxu0 0.0
        %1474 = vmatpush1.msra.mxu0 0.0
        %1475 = vmatprep.subr.mxu0 0.0
        %1476 = vmatpush1.msra.mxu0 0.0
        %1477 = vmatprep.subr.mxu0 0.0
        %1478 = vmatpush1.msra.mxu0 0.0
        %1479 = vmatprep.subr.mxu0 0.0
        %1480 = vmatpush1.msra.mxu0 0.0
        %1481 = vmatprep.subr.mxu0 0.0
        %1482 = vmatpush1.msra.mxu0 0.0
        %1483 = vmatprep.subr.mxu0 0.0
        %1484 = vmatpush1.msra.mxu0 0.0
        %1485 = vmatprep.subr.mxu0 0.0
        %1486 = vmatpush1.msra.mxu0 0.0
        %1487 = vmatprep.subr.mxu0 0.0
        %1488 = vmatpush1.msra.mxu0 0.0
        %1489 = vmatprep.subr.mxu0 0.0
        %1490 = vmatpush1.msra.mxu0 0.0
        %1491 = vmatprep.subr.mxu0 0.0
        %1492 = vmatpush1.msra.mxu0 0.0
        %1493 = vmatprep.subr.mxu0 0.0
        %1494 = vmatpush1.msra.mxu0 0.0
        %1495 = vmatprep.subr.mxu0 0.0
        %1496 = vmatpush1.msra.mxu0 0.0
        %1497 = vmatprep.subr.mxu0 0.0
        %1498 = vmatpush1.msra.mxu0 0.0
        %1499 = vmatprep.subr.mxu0 %v1467
        %1500 = vmatpush1.msra.mxu0 %v1464
        %1501 = vmatprep.subr.mxu0 0.0
        %1502 = vmatpush2.msra.mxu0 0.0
        %1503 = vmatprep.subr.mxu0 0.0
        %1504 = vmatpush2.msra.mxu0 0.0
        %1505 = vmatprep.subr.mxu0 0.0
        %1506 = vmatpush2.msra.mxu0 0.0
        %1507 = vmatprep.subr.mxu0 0.0
        %1508 = vmatpush2.msra.mxu0 0.0
        %1509 = vmatprep.subr.mxu0 0.0
        %1510 = vmatpush2.msra.mxu0 0.0
        %1511 = vmatprep.subr.mxu0 0.0
        %1512 = vmatpush2.msra.mxu0 0.0
        %1513 = vmatprep.subr.mxu0 0.0
        %1514 = vmatpush2.msra.mxu0 0.0
        %1515 = vmatprep.subr.mxu0 0.0
        %1516 = vmatpush2.msra.mxu0 0.0
        %1517 = vmatprep.subr.mxu0 0.0
        %1518 = vmatpush2.msra.mxu0 0.0
        %1519 = vmatprep.subr.mxu0 0.0
        %1520 = vmatpush2.msra.mxu0 0.0
        %1521 = vmatprep.subr.mxu0 0.0
        %1522 = vmatpush2.msra.mxu0 0.0
        %1523 = vmatprep.subr.mxu0 0.0
        %1524 = vmatpush2.msra.mxu0 0.0
        %1525 = vmatprep.subr.mxu0 0.0
        %1526 = vmatpush2.msra.mxu0 0.0
        %1527 = vmatprep.subr.mxu0 0.0
        %1528 = vmatpush2.msra.mxu0 0.0
        %1529 = vmatprep.subr.mxu0 0.0
        %1530 = vmatpush2.msra.mxu0 0.0
        %1531 = vmatprep.subr.mxu0 0.0
        %1532 = vmatpush2.msra.mxu0 0.0
        %1533 = vmatprep.mubr.f32.mxu0 0.0
        %1534 = vmatmul.mubr.f32.gmra.mxu0 %v1457
        %v1535 = vpop.f32.mrf.mxu0
        %v1536 = vadd.f32 %v1447, %v1535
        %v1537 = vpop.f32.mrf.mxu0
        %v1538 = vadd.f32 %v1449, %v1537
        %1539 = vmatprep.mubr.f32.mxu0 0.0
        %1540 = vmatmul.mubr.f32.gmra.mxu0 %v1460
        %v1541 = vpop.f32.mrf.mxu0
        %v1542 = vadd.f32 %v1451, %v1541
        %v1543 = vpop.f32.mrf.mxu0
        %v1544 = vadd.f32 %v1453, %v1543
        %1545 = vdwg.mxu0
        %v1546 = vld [vmem:[#allocation11] sm:$0x3]
        %v1548 = vlaneseq
        %v1549 = vshrl.u32 %v1548, 7
        %v1550 = vsub.s32 0, %v1549
        %v1551 = vrot.slane %v1546, %v1550
        %v1552 = vlaneseq
        %v1553 = vshrl.u32 %v1552, 7
        %v1554 = vsub.s32 1, %v1553
        %v1555 = vrot.slane %v1546, %v1554
        %v1558 = vadd.f32 %v1536, %v1551
        %v1559 = vadd.f32 %v1538, %v1555
        %v1560 = vadd.f32 %v1542, %v1551
        %v1561 = vadd.f32 %v1544, %v1555
        %v1562 = vmax.f32 %v1558, 0.0
        %v1563 = vmax.f32 %v1559, 0.0
        %v1564 = vmax.f32 %v1560, 0.0
        %v1565 = vmax.f32 %v1561, 0.0
        %1566 = vst [vmem:[#allocation2] sm:$0xff] 0.0
        %1567 = vst [vmem:[#allocation2 + $0x8] sm:$0xff] 0.0
        %1568 = vst [vmem:[#allocation2 + $0x30] sm:$0xff] 0.0
        %1569 = vst [vmem:[#allocation2 + $0x38] sm:$0xff] 0.0
        %1570 = vst [vmem:[#allocation2 + $0x10] sm:$0xff] %v1562
        %1571 = vst [vmem:[#allocation2 + $0x18] sm:$0xff] %v1563
        %1572 = vst [vmem:[#allocation2 + $0x20] sm:$0xff] %v1564
        %1573 = vst [vmem:[#allocation2 + $0x28] sm:$0xff] %v1565
        %v1574 = vld [vmem:[#allocation5] sm:$0xff]
        %v1575 = vld [vmem:[#allocation5 + $0x8] sm:$0xff]
        %v1576 = vld [vmem:[#allocation7] sm:$0xff]
        %v1577 = vld [vmem:[#allocation7 + $0x8] sm:$0xff]
        %v1578 = vld [vmem:[#allocation2] sm:$0xf8]
        %v1579 = vld [vmem:[#allocation2 + $0x8] sm:$0xf8]
        %v1580 = vld [vmem:[#allocation2 + $0x10] sm:$0xff]
        %v1581 = vld [vmem:[#allocation2 + $0x18] sm:$0xff]
        %v1582 = vld [vmem:[#allocation2 + $0x20] sm:$0x7]
        %v1583 = vld [vmem:[#allocation2 + $0x28] sm:$0x7]
        %1585 = vset.pattern.permute.xlu0 0
        %1586 = vperm.xlu0 %1585, %v1574
        %v1587 = vpop.permute.xlu0 %1586
        %1589 = vset.pattern.permute.xlu0 0
        %1590 = vperm.xlu0 %1589, %v1575
        %v1591 = vpop.permute.xlu0 %1590
        %vm1592 = vcmask 1042432
        %v1593 = vrot.slane %v1587, 5
        %v1594 = vrot.slane %v1591, 5
        %v1595 = vsel %vm1592, %v1593, %v1594
        %v1599 = vmul.f32 %v1578, %v1593
        %v1600 = vmul.f32 %v1579, %v1593
        %v1601 = vmul.f32 %v1580, %v1595
        %v1602 = vmul.f32 %v1581, %v1595
        %v1603 = vmul.f32 %v1582, %v1594
        %v1604 = vmul.f32 %v1583, %v1594
        %v1605 = vpack.c.bf16 %v1601, %v1599
        %v1606 = vpack.c.bf16 %v1602, %v1600
        %v1607 = vpack.c.bf16 %v1603, %v1603
        %v1608 = vpack.c.bf16 %v1604, %v1604
        %v1609 = vld [vmem:[#allocation13] sm:$0xff]
        %v1610 = vld [vmem:[#allocation13 + $0x8] sm:$0xff]
        %v1611 = vld [vmem:[#allocation13 + $0x10] sm:$0xff]
        %v1612 = vld [vmem:[#allocation13 + $0x18] sm:$0xff]
        %v1613 = vld [vmem:[#allocation13 + $0x20] sm:$0xff]
        %v1614 = vld [vmem:[#allocation13 + $0x28] sm:$0xff]
        %v1615 = vld [vmem:[#allocation13 + $0x30] sm:$0xff]
        %v1616 = vld [vmem:[#allocation13 + $0x38] sm:$0xff]
        %v1617 = vld [vmem:[#allocation13 + $0x40] sm:$0xff]
        %v1618 = vld [vmem:[#allocation13 + $0x48] sm:$0xff]
        %v1619 = vld [vmem:[#allocation13 + $0x50] sm:$0xff]
        %v1620 = vld [vmem:[#allocation13 + $0x58] sm:$0xff]
        %v1621 = vld [vmem:[#allocation13 + $0x60] sm:$0xff]
        %v1622 = vld [vmem:[#allocation13 + $0x68] sm:$0xff]
        %v1623 = vld [vmem:[#allocation13 + $0x70] sm:$0xff]
        %v1624 = vld [vmem:[#allocation13 + $0x78] sm:$0xff]
        %v1625 = vld [vmem:[#allocation13 + $0x80] sm:$0xff]
        %v1626 = vld [vmem:[#allocation13 + $0x88] sm:$0xff]
        %v1627 = vld [vmem:[#allocation13 + $0x90] sm:$0xff]
        %v1628 = vld [vmem:[#allocation13 + $0x98] sm:$0xff]
        %v1629 = vld [vmem:[#allocation13 + $0xa0] sm:$0xff]
        %v1630 = vld [vmem:[#allocation13 + $0xa8] sm:$0xff]
        %v1631 = vld [vmem:[#allocation13 + $0xb0] sm:$0xff]
        %v1632 = vld [vmem:[#allocation13 + $0xb8] sm:$0xff]
        %v1633 = vld [vmem:[#allocation13 + $0xc0] sm:$0xff]
        %v1634 = vld [vmem:[#allocation13 + $0xc8] sm:$0xff]
        %v1635 = vld [vmem:[#allocation13 + $0xd0] sm:$0xff]
        %v1636 = vld [vmem:[#allocation13 + $0xd8] sm:$0xff]
        %v1637 = vld [vmem:[#allocation13 + $0xe0] sm:$0xff]
        %v1638 = vld [vmem:[#allocation13 + $0xe8] sm:$0xff]
        %v1639 = vld [vmem:[#allocation13 + $0xf0] sm:$0xff]
        %v1640 = vld [vmem:[#allocation13 + $0xf8] sm:$0xff]
        %v1641 = vld [vmem:[#allocation2] sm:$0xf0]
        %v1642 = vld [vmem:[#allocation2 + $0x8] sm:$0xf0]
        %v1643 = vld [vmem:[#allocation2 + $0x20] sm:$0xf]
        %v1644 = vld [vmem:[#allocation2 + $0x28] sm:$0xf]
        %v1645 = vpack.c.bf16 %v1580, %v1641
        %v1646 = vpack.c.bf16 %v1581, %v1642
        %v1647 = vpack.c.bf16 %v1643, %v1643
        %v1648 = vpack.c.bf16 %v1644, %v1644
        %s1649 = scalar_lea.vmem [#allocation13], 256
        %v1650 = vld [vmem:[%s1649] sm:$0xff]
        %v1651 = vld [vmem:[%s1649 + $0x8] sm:$0xff]
        %v1652 = vld [vmem:[%s1649 + $0x10] sm:$0xff]
        %v1653 = vld [vmem:[%s1649 + $0x18] sm:$0xff]
        %v1654 = vld [vmem:[%s1649 + $0x20] sm:$0xff]
        %v1655 = vld [vmem:[%s1649 + $0x28] sm:$0xff]
        %v1656 = vld [vmem:[%s1649 + $0x30] sm:$0xff]
        %v1657 = vld [vmem:[%s1649 + $0x38] sm:$0xff]
        %v1658 = vld [vmem:[%s1649 + $0x40] sm:$0xff]
        %v1659 = vld [vmem:[%s1649 + $0x48] sm:$0xff]
        %v1660 = vld [vmem:[%s1649 + $0x50] sm:$0xff]
        %v1661 = vld [vmem:[%s1649 + $0x58] sm:$0xff]
        %v1662 = vld [vmem:[%s1649 + $0x60] sm:$0xff]
        %v1663 = vld [vmem:[%s1649 + $0x68] sm:$0xff]
        %v1664 = vld [vmem:[%s1649 + $0x70] sm:$0xff]
        %v1665 = vld [vmem:[%s1649 + $0x78] sm:$0xff]
        %v1666 = vld [vmem:[%s1649 + $0x80] sm:$0xff]
        %v1667 = vld [vmem:[%s1649 + $0x88] sm:$0xff]
        %v1668 = vld [vmem:[%s1649 + $0x90] sm:$0xff]
        %v1669 = vld [vmem:[%s1649 + $0x98] sm:$0xff]
        %v1670 = vld [vmem:[%s1649 + $0xa0] sm:$0xff]
        %v1671 = vld [vmem:[%s1649 + $0xa8] sm:$0xff]
        %v1672 = vld [vmem:[%s1649 + $0xb0] sm:$0xff]
        %v1673 = vld [vmem:[%s1649 + $0xb8] sm:$0xff]
        %v1674 = vld [vmem:[%s1649 + $0xc0] sm:$0xff]
        %v1675 = vld [vmem:[%s1649 + $0xc8] sm:$0xff]
        %v1676 = vld [vmem:[%s1649 + $0xd0] sm:$0xff]
        %v1677 = vld [vmem:[%s1649 + $0xd8] sm:$0xff]
        %v1678 = vld [vmem:[%s1649 + $0xe0] sm:$0xff]
        %v1679 = vld [vmem:[%s1649 + $0xe8] sm:$0xff]
        %v1680 = vld [vmem:[%s1649 + $0xf0] sm:$0xff]
        %v1681 = vld [vmem:[%s1649 + $0xf8] sm:$0xff]
        %vm1686 = vcmask 1045504
        %v1687 = vrot.slane %v1645, 2
        %v1688 = vrot.slane %v1647, 2
        %v1689 = vsel %vm1686, %v1687, %v1688
        %v1690 = vrot.slane %v1646, 2
        %v1691 = vrot.slane %v1648, 2
        %v1692 = vsel %vm1686, %v1690, %v1691
        %v1727 = vunpack.c.l.b16 %v1650
        %v1728 = vunpack.c.h.b16 %v1650
        %v1729 = vunpack.c.l.b16 %v1651
        %v1730 = vunpack.c.h.b16 %v1651
        %v1731 = vunpack.c.l.b16 %v1652
        %v1732 = vunpack.c.h.b16 %v1652
        %v1733 = vunpack.c.l.b16 %v1653
        %v1734 = vunpack.c.h.b16 %v1653
        %v1735 = vunpack.c.l.b16 %v1654
        %v1736 = vunpack.c.h.b16 %v1654
        %v1737 = vunpack.c.l.b16 %v1655
        %v1738 = vunpack.c.h.b16 %v1655
        %v1739 = vunpack.c.l.b16 %v1656
        %v1740 = vunpack.c.h.b16 %v1656
        %v1741 = vunpack.c.l.b16 %v1657
        %v1742 = vunpack.c.h.b16 %v1657
        %v1743 = vunpack.c.l.b16 %v1658
        %v1744 = vunpack.c.h.b16 %v1658
        %v1745 = vunpack.c.l.b16 %v1659
        %v1746 = vunpack.c.h.b16 %v1659
        %v1747 = vunpack.c.l.b16 %v1660
        %v1748 = vunpack.c.h.b16 %v1660
        %v1749 = vunpack.c.l.b16 %v1661
        %v1750 = vunpack.c.h.b16 %v1661
        %v1751 = vunpack.c.l.b16 %v1662
        %v1752 = vunpack.c.h.b16 %v1662
        %v1753 = vunpack.c.l.b16 %v1663
        %v1754 = vunpack.c.h.b16 %v1663
        %v1755 = vunpack.c.l.b16 %v1664
        %v1756 = vunpack.c.h.b16 %v1664
        %v1757 = vunpack.c.l.b16 %v1665
        %v1758 = vunpack.c.h.b16 %v1665
        %v1759 = vunpack.c.l.b16 %v1666
        %v1760 = vunpack.c.h.b16 %v1666
        %v1761 = vunpack.c.l.b16 %v1667
        %v1762 = vunpack.c.h.b16 %v1667
        %v1763 = vunpack.c.l.b16 %v1668
        %v1764 = vunpack.c.h.b16 %v1668
        %v1765 = vunpack.c.l.b16 %v1669
        %v1766 = vunpack.c.h.b16 %v1669
        %v1767 = vunpack.c.l.b16 %v1670
        %v1768 = vunpack.c.h.b16 %v1670
        %v1769 = vunpack.c.l.b16 %v1671
        %v1770 = vunpack.c.h.b16 %v1671
        %v1771 = vunpack.c.l.b16 %v1672
        %v1772 = vunpack.c.h.b16 %v1672
        %v1773 = vunpack.c.l.b16 %v1673
        %v1774 = vunpack.c.h.b16 %v1673
        %v1775 = vunpack.c.l.b16 %v1674
        %v1776 = vunpack.c.h.b16 %v1674
        %v1777 = vunpack.c.l.b16 %v1675
        %v1778 = vunpack.c.h.b16 %v1675
        %v1779 = vunpack.c.l.b16 %v1676
        %v1780 = vunpack.c.h.b16 %v1676
        %v1781 = vunpack.c.l.b16 %v1677
        %v1782 = vunpack.c.h.b16 %v1677
        %v1783 = vunpack.c.l.b16 %v1678
        %v1784 = vunpack.c.h.b16 %v1678
        %v1785 = vunpack.c.l.b16 %v1679
        %v1786 = vunpack.c.h.b16 %v1679
        %v1787 = vunpack.c.l.b16 %v1680
        %v1788 = vunpack.c.h.b16 %v1680
        %v1789 = vunpack.c.l.b16 %v1681
        %v1790 = vunpack.c.h.b16 %v1681
        %v1791 = vpack.c.b16 %v1729, %v1727
        %v1792 = vpack.c.b16 %v1730, %v1728
        %v1793 = vpack.c.b16 %v1733, %v1731
        %v1794 = vpack.c.b16 %v1734, %v1732
        %v1795 = vpack.c.b16 %v1737, %v1735
        %v1796 = vpack.c.b16 %v1738, %v1736
        %v1797 = vpack.c.b16 %v1741, %v1739
        %v1798 = vpack.c.b16 %v1742, %v1740
        %v1799 = vpack.c.b16 %v1745, %v1743
        %v1800 = vpack.c.b16 %v1746, %v1744
        %v1801 = vpack.c.b16 %v1749, %v1747
        %v1802 = vpack.c.b16 %v1750, %v1748
        %v1803 = vpack.c.b16 %v1753, %v1751
        %v1804 = vpack.c.b16 %v1754, %v1752
        %v1805 = vpack.c.b16 %v1757, %v1755
        %v1806 = vpack.c.b16 %v1758, %v1756
        %v1807 = vpack.c.b16 %v1761, %v1759
        %v1808 = vpack.c.b16 %v1762, %v1760
        %v1809 = vpack.c.b16 %v1765, %v1763
        %v1810 = vpack.c.b16 %v1766, %v1764
        %v1811 = vpack.c.b16 %v1769, %v1767
        %v1812 = vpack.c.b16 %v1770, %v1768
        %v1813 = vpack.c.b16 %v1773, %v1771
        %v1814 = vpack.c.b16 %v1774, %v1772
        %v1815 = vpack.c.b16 %v1777, %v1775
        %v1816 = vpack.c.b16 %v1778, %v1776
        %v1817 = vpack.c.b16 %v1781, %v1779
        %v1818 = vpack.c.b16 %v1782, %v1780
        %v1819 = vpack.c.b16 %v1785, %v1783
        %v1820 = vpack.c.b16 %v1786, %v1784
        %v1821 = vpack.c.b16 %v1789, %v1787
        %v1822 = vpack.c.b16 %v1790, %v1788
        %1855 = vmatprep.subr.bf16.mxu0 %v1806
        %1856 = vmatpush1.bf16.msra.mxu0 %v1805
        %1857 = vmatprep.subr.bf16.mxu0 %v1804
        %1858 = vmatpush1.bf16.msra.mxu0 %v1803
        %1859 = vmatprep.subr.bf16.mxu0 %v1802
        %1860 = vmatpush1.bf16.msra.mxu0 %v1801
        %1861 = vmatprep.subr.bf16.mxu0 %v1800
        %1862 = vmatpush1.bf16.msra.mxu0 %v1799
        %1863 = vmatprep.subr.bf16.mxu0 %v1798
        %1864 = vmatpush1.bf16.msra.mxu0 %v1797
        %1865 = vmatprep.subr.bf16.mxu0 %v1796
        %1866 = vmatpush1.bf16.msra.mxu0 %v1795
        %1867 = vmatprep.subr.bf16.mxu0 %v1794
        %1868 = vmatpush1.bf16.msra.mxu0 %v1793
        %1869 = vmatprep.subr.bf16.mxu0 %v1792
        %1870 = vmatpush1.bf16.msra.mxu0 %v1791
        %1871 = vmatprep.subr.bf16.mxu0 %v1822
        %1872 = vmatpush2.bf16.msra.mxu0 %v1821
        %1873 = vmatprep.subr.bf16.mxu0 %v1820
        %1874 = vmatpush2.bf16.msra.mxu0 %v1819
        %1875 = vmatprep.subr.bf16.mxu0 %v1818
        %1876 = vmatpush2.bf16.msra.mxu0 %v1817
        %1877 = vmatprep.subr.bf16.mxu0 %v1816
        %1878 = vmatpush2.bf16.msra.mxu0 %v1815
        %1879 = vmatprep.subr.bf16.mxu0 %v1814
        %1880 = vmatpush2.bf16.msra.mxu0 %v1813
        %1881 = vmatprep.subr.bf16.mxu0 %v1812
        %1882 = vmatpush2.bf16.msra.mxu0 %v1811
        %1883 = vmatprep.subr.bf16.mxu0 %v1810
        %1884 = vmatpush2.bf16.msra.mxu0 %v1809
        %1885 = vmatprep.subr.bf16.mxu0 %v1808
        %1886 = vmatpush2.bf16.msra.mxu0 %v1807
        %1887 = vmatprep.mubr.bf16.mxu0 %v1692
        %1888 = vmatmul.mubr.bf16.gmra.mxu0 %v1689
        %v1889 = vpop.f32.mrf.mxu0
        %v1890 = vadd.f32 0.0, %v1889
        %v1891 = vpop.f32.mrf.mxu0
        %v1892 = vadd.f32 0.0, %v1891
        %v1893 = vpop.f32.mrf.mxu0
        %v1894 = vadd.f32 0.0, %v1893
        %v1895 = vpop.f32.mrf.mxu0
        %v1896 = vadd.f32 0.0, %v1895
        %1897 = vdwg.mxu0
        %vm1898 = vsmask.f32 6400
        %v1900 = vshrl.u32 %v1605, 16
        %v1902 = vrot.slane %v1900, 1
        %v1903 = vshll.u32 %v1605, 16
        %v1905 = vrot.slane %v1903, 2
        %v1906 = vor.u32 %v1902, %v1905
        %v1908 = vshrl.u32 %v1607, 16
        %v1910 = vrot.slane %v1908, 1
        %v1911 = vshll.u32 %v1607, 16
        %v1913 = vrot.slane %v1911, 2
        %v1914 = vor.u32 %v1910, %v1913
        %v1915 = vsel %vm1898, %v1906, %v1914
        %v1917 = vshrl.u32 %v1606, 16
        %v1919 = vrot.slane %v1917, 1
        %v1920 = vshll.u32 %v1606, 16
        %v1922 = vrot.slane %v1920, 2
        %v1923 = vor.u32 %v1919, %v1922
        %v1925 = vshrl.u32 %v1608, 16
        %v1927 = vrot.slane %v1925, 1
        %v1928 = vshll.u32 %v1608, 16
        %v1930 = vrot.slane %v1928, 2
        %v1931 = vor.u32 %v1927, %v1930
        %v1932 = vsel %vm1898, %v1923, %v1931
        %v1967 = vunpack.c.l.b16 %v1609
        %v1968 = vunpack.c.h.b16 %v1609
        %v1969 = vunpack.c.l.b16 %v1610
        %v1970 = vunpack.c.h.b16 %v1610
        %v1971 = vunpack.c.l.b16 %v1611
        %v1972 = vunpack.c.h.b16 %v1611
        %v1973 = vunpack.c.l.b16 %v1612
        %v1974 = vunpack.c.h.b16 %v1612
        %v1975 = vunpack.c.l.b16 %v1613
        %v1976 = vunpack.c.h.b16 %v1613
        %v1977 = vunpack.c.l.b16 %v1614
        %v1978 = vunpack.c.h.b16 %v1614
        %v1979 = vunpack.c.l.b16 %v1615
        %v1980 = vunpack.c.h.b16 %v1615
        %v1981 = vunpack.c.l.b16 %v1616
        %v1982 = vunpack.c.h.b16 %v1616
        %v1983 = vunpack.c.l.b16 %v1617
        %v1984 = vunpack.c.h.b16 %v1617
        %v1985 = vunpack.c.l.b16 %v1618
        %v1986 = vunpack.c.h.b16 %v1618
        %v1987 = vunpack.c.l.b16 %v1619
        %v1988 = vunpack.c.h.b16 %v1619
        %v1989 = vunpack.c.l.b16 %v1620
        %v1990 = vunpack.c.h.b16 %v1620
        %v1991 = vunpack.c.l.b16 %v1621
        %v1992 = vunpack.c.h.b16 %v1621
        %v1993 = vunpack.c.l.b16 %v1622
        %v1994 = vunpack.c.h.b16 %v1622
        %v1995 = vunpack.c.l.b16 %v1623
        %v1996 = vunpack.c.h.b16 %v1623
        %v1997 = vunpack.c.l.b16 %v1624
        %v1998 = vunpack.c.h.b16 %v1624
        %v1999 = vunpack.c.l.b16 %v1625
        %v2000 = vunpack.c.h.b16 %v1625
        %v2001 = vunpack.c.l.b16 %v1626
        %v2002 = vunpack.c.h.b16 %v1626
        %v2003 = vunpack.c.l.b16 %v1627
        %v2004 = vunpack.c.h.b16 %v1627
        %v2005 = vunpack.c.l.b16 %v1628
        %v2006 = vunpack.c.h.b16 %v1628
        %v2007 = vunpack.c.l.b16 %v1629
        %v2008 = vunpack.c.h.b16 %v1629
        %v2009 = vunpack.c.l.b16 %v1630
        %v2010 = vunpack.c.h.b16 %v1630
        %v2011 = vunpack.c.l.b16 %v1631
        %v2012 = vunpack.c.h.b16 %v1631
        %v2013 = vunpack.c.l.b16 %v1632
        %v2014 = vunpack.c.h.b16 %v1632
        %v2015 = vunpack.c.l.b16 %v1633
        %v2016 = vunpack.c.h.b16 %v1633
        %v2017 = vunpack.c.l.b16 %v1634
        %v2018 = vunpack.c.h.b16 %v1634
        %v2019 = vunpack.c.l.b16 %v1635
        %v2020 = vunpack.c.h.b16 %v1635
        %v2021 = vunpack.c.l.b16 %v1636
        %v2022 = vunpack.c.h.b16 %v1636
        %v2023 = vunpack.c.l.b16 %v1637
        %v2024 = vunpack.c.h.b16 %v1637
        %v2025 = vunpack.c.l.b16 %v1638
        %v2026 = vunpack.c.h.b16 %v1638
        %v2027 = vunpack.c.l.b16 %v1639
        %v2028 = vunpack.c.h.b16 %v1639
        %v2029 = vunpack.c.l.b16 %v1640
        %v2030 = vunpack.c.h.b16 %v1640
        %v2031 = vpack.c.b16 %v1969, %v1967
        %v2032 = vpack.c.b16 %v1970, %v1968
        %v2033 = vpack.c.b16 %v1973, %v1971
        %v2034 = vpack.c.b16 %v1974, %v1972
        %v2035 = vpack.c.b16 %v1977, %v1975
        %v2036 = vpack.c.b16 %v1978, %v1976
        %v2037 = vpack.c.b16 %v1981, %v1979
        %v2038 = vpack.c.b16 %v1982, %v1980
        %v2039 = vpack.c.b16 %v1985, %v1983
        %v2040 = vpack.c.b16 %v1986, %v1984
        %v2041 = vpack.c.b16 %v1989, %v1987
        %v2042 = vpack.c.b16 %v1990, %v1988
        %v2043 = vpack.c.b16 %v1993, %v1991
        %v2044 = vpack.c.b16 %v1994, %v1992
        %v2045 = vpack.c.b16 %v1997, %v1995
        %v2046 = vpack.c.b16 %v1998, %v1996
        %v2047 = vpack.c.b16 %v2001, %v1999
        %v2048 = vpack.c.b16 %v2002, %v2000
        %v2049 = vpack.c.b16 %v2005, %v2003
        %v2050 = vpack.c.b16 %v2006, %v2004
        %v2051 = vpack.c.b16 %v2009, %v2007
        %v2052 = vpack.c.b16 %v2010, %v2008
        %v2053 = vpack.c.b16 %v2013, %v2011
        %v2054 = vpack.c.b16 %v2014, %v2012
        %v2055 = vpack.c.b16 %v2017, %v2015
        %v2056 = vpack.c.b16 %v2018, %v2016
        %v2057 = vpack.c.b16 %v2021, %v2019
        %v2058 = vpack.c.b16 %v2022, %v2020
        %v2059 = vpack.c.b16 %v2025, %v2023
        %v2060 = vpack.c.b16 %v2026, %v2024
        %v2061 = vpack.c.b16 %v2029, %v2027
        %v2062 = vpack.c.b16 %v2030, %v2028
        %2095 = vmatprep.subr.bf16.mxu0 %v2046
        %2096 = vmatpush1.bf16.msra.mxu0 %v2045
        %2097 = vmatprep.subr.bf16.mxu0 %v2044
        %2098 = vmatpush1.bf16.msra.mxu0 %v2043
        %2099 = vmatprep.subr.bf16.mxu0 %v2042
        %2100 = vmatpush1.bf16.msra.mxu0 %v2041
        %2101 = vmatprep.subr.bf16.mxu0 %v2040
        %2102 = vmatpush1.bf16.msra.mxu0 %v2039
        %2103 = vmatprep.subr.bf16.mxu0 %v2038
        %2104 = vmatpush1.bf16.msra.mxu0 %v2037
        %2105 = vmatprep.subr.bf16.mxu0 %v2036
        %2106 = vmatpush1.bf16.msra.mxu0 %v2035
        %2107 = vmatprep.subr.bf16.mxu0 %v2034
        %2108 = vmatpush1.bf16.msra.mxu0 %v2033
        %2109 = vmatprep.subr.bf16.mxu0 %v2032
        %2110 = vmatpush1.bf16.msra.mxu0 %v2031
        %2111 = vmatprep.subr.bf16.mxu0 %v2062
        %2112 = vmatpush2.bf16.msra.mxu0 %v2061
        %2113 = vmatprep.subr.bf16.mxu0 %v2060
        %2114 = vmatpush2.bf16.msra.mxu0 %v2059
        %2115 = vmatprep.subr.bf16.mxu0 %v2058
        %2116 = vmatpush2.bf16.msra.mxu0 %v2057
        %2117 = vmatprep.subr.bf16.mxu0 %v2056
        %2118 = vmatpush2.bf16.msra.mxu0 %v2055
        %2119 = vmatprep.subr.bf16.mxu0 %v2054
        %2120 = vmatpush2.bf16.msra.mxu0 %v2053
        %2121 = vmatprep.subr.bf16.mxu0 %v2052
        %2122 = vmatpush2.bf16.msra.mxu0 %v2051
        %2123 = vmatprep.subr.bf16.mxu0 %v2050
        %2124 = vmatpush2.bf16.msra.mxu0 %v2049
        %2125 = vmatprep.subr.bf16.mxu0 %v2048
        %2126 = vmatpush2.bf16.msra.mxu0 %v2047
        %2127 = vmatprep.mubr.bf16.mxu0 %v1932
        %2128 = vmatmul.mubr.bf16.gmra.mxu0 %v1915
        %v2129 = vpop.f32.mrf.mxu0
        %v2130 = vadd.f32 %v1890, %v2129
        %v2131 = vpop.f32.mrf.mxu0
        %v2132 = vadd.f32 %v1892, %v2131
        %v2133 = vpop.f32.mrf.mxu0
        %v2134 = vadd.f32 %v1894, %v2133
        %v2135 = vpop.f32.mrf.mxu0
        %v2136 = vadd.f32 %v1896, %v2135
        %2137 = vdwg.mxu0
        %v2138 = vld [vmem:[#allocation2] sm:$0xe0]
        %v2139 = vld [vmem:[#allocation2 + $0x8] sm:$0xe0]
        %v2140 = vld [vmem:[#allocation2 + $0x20] sm:$0x1f]
        %v2141 = vld [vmem:[#allocation2 + $0x28] sm:$0x1f]
        %2143 = vset.pattern.permute.xlu0 0
        %2144 = vperm.xlu0 %2143, %v1576
        %v2145 = vpop.permute.xlu0 %2144
        %2147 = vset.pattern.permute.xlu0 0
        %2148 = vperm.xlu0 %2147, %v1577
        %v2149 = vpop.permute.xlu0 %2148
        %vm2150 = vcmask 1044480
        %v2151 = vrot.slane %v2145, 3
        %v2152 = vrot.slane %v2149, 3
        %v2153 = vsel %vm2150, %v2151, %v2152
        %v2157 = vmul.f32 %v2138, %v2151
        %v2158 = vmul.f32 %v2139, %v2151
        %v2159 = vmul.f32 %v1580, %v2153
        %v2160 = vmul.f32 %v1581, %v2153
        %v2161 = vmul.f32 %v2140, %v2152
        %v2162 = vmul.f32 %v2141, %v2152
        %v2163 = vpack.c.bf16 %v2159, %v2157
        %v2164 = vpack.c.bf16 %v2160, %v2158
        %v2165 = vpack.c.bf16 %v2161, %v2161
        %v2166 = vpack.c.bf16 %v2162, %v2162
        %s2167 = scalar_lea.vmem [#allocation13], 512
        %v2168 = vld [vmem:[%s2167] sm:$0xff]
        %v2169 = vld [vmem:[%s2167 + $0x8] sm:$0xff]
        %v2170 = vld [vmem:[%s2167 + $0x10] sm:$0xff]
        %v2171 = vld [vmem:[%s2167 + $0x18] sm:$0xff]
        %v2172 = vld [vmem:[%s2167 + $0x20] sm:$0xff]
        %v2173 = vld [vmem:[%s2167 + $0x28] sm:$0xff]
        %v2174 = vld [vmem:[%s2167 + $0x30] sm:$0xff]
        %v2175 = vld [vmem:[%s2167 + $0x38] sm:$0xff]
        %v2176 = vld [vmem:[%s2167 + $0x40] sm:$0xff]
        %v2177 = vld [vmem:[%s2167 + $0x48] sm:$0xff]
        %v2178 = vld [vmem:[%s2167 + $0x50] sm:$0xff]
        %v2179 = vld [vmem:[%s2167 + $0x58] sm:$0xff]
        %v2180 = vld [vmem:[%s2167 + $0x60] sm:$0xff]
        %v2181 = vld [vmem:[%s2167 + $0x68] sm:$0xff]
        %v2182 = vld [vmem:[%s2167 + $0x70] sm:$0xff]
        %v2183 = vld [vmem:[%s2167 + $0x78] sm:$0xff]
        %v2184 = vld [vmem:[%s2167 + $0x80] sm:$0xff]
        %v2185 = vld [vmem:[%s2167 + $0x88] sm:$0xff]
        %v2186 = vld [vmem:[%s2167 + $0x90] sm:$0xff]
        %v2187 = vld [vmem:[%s2167 + $0x98] sm:$0xff]
        %v2188 = vld [vmem:[%s2167 + $0xa0] sm:$0xff]
        %v2189 = vld [vmem:[%s2167 + $0xa8] sm:$0xff]
        %v2190 = vld [vmem:[%s2167 + $0xb0] sm:$0xff]
        %v2191 = vld [vmem:[%s2167 + $0xb8] sm:$0xff]
        %v2192 = vld [vmem:[%s2167 + $0xc0] sm:$0xff]
        %v2193 = vld [vmem:[%s2167 + $0xc8] sm:$0xff]
        %v2194 = vld [vmem:[%s2167 + $0xd0] sm:$0xff]
        %v2195 = vld [vmem:[%s2167 + $0xd8] sm:$0xff]
        %v2196 = vld [vmem:[%s2167 + $0xe0] sm:$0xff]
        %v2197 = vld [vmem:[%s2167 + $0xe8] sm:$0xff]
        %v2198 = vld [vmem:[%s2167 + $0xf0] sm:$0xff]
        %v2199 = vld [vmem:[%s2167 + $0xf8] sm:$0xff]
        %vm2200 = vsmask.f32 5376
        %v2202 = vshrl.u32 %v2163, 16
        %v2204 = vrot.slane %v2202, 2
        %v2205 = vshll.u32 %v2163, 16
        %v2207 = vrot.slane %v2205, 3
        %v2208 = vor.u32 %v2204, %v2207
        %v2210 = vshrl.u32 %v2165, 16
        %v2212 = vrot.slane %v2210, 2
        %v2213 = vshll.u32 %v2165, 16
        %v2215 = vrot.slane %v2213, 3
        %v2216 = vor.u32 %v2212, %v2215
        %v2217 = vsel %vm2200, %v2208, %v2216
        %v2219 = vshrl.u32 %v2164, 16
        %v2221 = vrot.slane %v2219, 2
        %v2222 = vshll.u32 %v2164, 16
        %v2224 = vrot.slane %v2222, 3
        %v2225 = vor.u32 %v2221, %v2224
        %v2227 = vshrl.u32 %v2166, 16
        %v2229 = vrot.slane %v2227, 2
        %v2230 = vshll.u32 %v2166, 16
        %v2232 = vrot.slane %v2230, 3
        %v2233 = vor.u32 %v2229, %v2232
        %v2234 = vsel %vm2200, %v2225, %v2233
        %v2269 = vunpack.c.l.b16 %v2168
        %v2270 = vunpack.c.h.b16 %v2168
        %v2271 = vunpack.c.l.b16 %v2169
        %v2272 = vunpack.c.h.b16 %v2169
        %v2273 = vunpack.c.l.b16 %v2170
        %v2274 = vunpack.c.h.b16 %v2170
        %v2275 = vunpack.c.l.b16 %v2171
        %v2276 = vunpack.c.h.b16 %v2171
        %v2277 = vunpack.c.l.b16 %v2172
        %v2278 = vunpack.c.h.b16 %v2172
        %v2279 = vunpack.c.l.b16 %v2173
        %v2280 = vunpack.c.h.b16 %v2173
        %v2281 = vunpack.c.l.b16 %v2174
        %v2282 = vunpack.c.h.b16 %v2174
        %v2283 = vunpack.c.l.b16 %v2175
        %v2284 = vunpack.c.h.b16 %v2175
        %v2285 = vunpack.c.l.b16 %v2176
        %v2286 = vunpack.c.h.b16 %v2176
        %v2287 = vunpack.c.l.b16 %v2177
        %v2288 = vunpack.c.h.b16 %v2177
        %v2289 = vunpack.c.l.b16 %v2178
        %v2290 = vunpack.c.h.b16 %v2178
        %v2291 = vunpack.c.l.b16 %v2179
        %v2292 = vunpack.c.h.b16 %v2179
        %v2293 = vunpack.c.l.b16 %v2180
        %v2294 = vunpack.c.h.b16 %v2180
        %v2295 = vunpack.c.l.b16 %v2181
        %v2296 = vunpack.c.h.b16 %v2181
        %v2297 = vunpack.c.l.b16 %v2182
        %v2298 = vunpack.c.h.b16 %v2182
        %v2299 = vunpack.c.l.b16 %v2183
        %v2300 = vunpack.c.h.b16 %v2183
        %v2301 = vunpack.c.l.b16 %v2184
        %v2302 = vunpack.c.h.b16 %v2184
        %v2303 = vunpack.c.l.b16 %v2185
        %v2304 = vunpack.c.h.b16 %v2185
        %v2305 = vunpack.c.l.b16 %v2186
        %v2306 = vunpack.c.h.b16 %v2186
        %v2307 = vunpack.c.l.b16 %v2187
        %v2308 = vunpack.c.h.b16 %v2187
        %v2309 = vunpack.c.l.b16 %v2188
        %v2310 = vunpack.c.h.b16 %v2188
        %v2311 = vunpack.c.l.b16 %v2189
        %v2312 = vunpack.c.h.b16 %v2189
        %v2313 = vunpack.c.l.b16 %v2190
        %v2314 = vunpack.c.h.b16 %v2190
        %v2315 = vunpack.c.l.b16 %v2191
        %v2316 = vunpack.c.h.b16 %v2191
        %v2317 = vunpack.c.l.b16 %v2192
        %v2318 = vunpack.c.h.b16 %v2192
        %v2319 = vunpack.c.l.b16 %v2193
        %v2320 = vunpack.c.h.b16 %v2193
        %v2321 = vunpack.c.l.b16 %v2194
        %v2322 = vunpack.c.h.b16 %v2194
        %v2323 = vunpack.c.l.b16 %v2195
        %v2324 = vunpack.c.h.b16 %v2195
        %v2325 = vunpack.c.l.b16 %v2196
        %v2326 = vunpack.c.h.b16 %v2196
        %v2327 = vunpack.c.l.b16 %v2197
        %v2328 = vunpack.c.h.b16 %v2197
        %v2329 = vunpack.c.l.b16 %v2198
        %v2330 = vunpack.c.h.b16 %v2198
        %v2331 = vunpack.c.l.b16 %v2199
        %v2332 = vunpack.c.h.b16 %v2199
        %v2333 = vpack.c.b16 %v2271, %v2269
        %v2334 = vpack.c.b16 %v2272, %v2270
        %v2335 = vpack.c.b16 %v2275, %v2273
        %v2336 = vpack.c.b16 %v2276, %v2274
        %v2337 = vpack.c.b16 %v2279, %v2277
        %v2338 = vpack.c.b16 %v2280, %v2278
        %v2339 = vpack.c.b16 %v2283, %v2281
        %v2340 = vpack.c.b16 %v2284, %v2282
        %v2341 = vpack.c.b16 %v2287, %v2285
        %v2342 = vpack.c.b16 %v2288, %v2286
        %v2343 = vpack.c.b16 %v2291, %v2289
        %v2344 = vpack.c.b16 %v2292, %v2290
        %v2345 = vpack.c.b16 %v2295, %v2293
        %v2346 = vpack.c.b16 %v2296, %v2294
        %v2347 = vpack.c.b16 %v2299, %v2297
        %v2348 = vpack.c.b16 %v2300, %v2298
        %v2349 = vpack.c.b16 %v2303, %v2301
        %v2350 = vpack.c.b16 %v2304, %v2302
        %v2351 = vpack.c.b16 %v2307, %v2305
        %v2352 = vpack.c.b16 %v2308, %v2306
        %v2353 = vpack.c.b16 %v2311, %v2309
        %v2354 = vpack.c.b16 %v2312, %v2310
        %v2355 = vpack.c.b16 %v2315, %v2313
        %v2356 = vpack.c.b16 %v2316, %v2314
        %v2357 = vpack.c.b16 %v2319, %v2317
        %v2358 = vpack.c.b16 %v2320, %v2318
        %v2359 = vpack.c.b16 %v2323, %v2321
        %v2360 = vpack.c.b16 %v2324, %v2322
        %v2361 = vpack.c.b16 %v2327, %v2325
        %v2362 = vpack.c.b16 %v2328, %v2326
        %v2363 = vpack.c.b16 %v2331, %v2329
        %v2364 = vpack.c.b16 %v2332, %v2330
        %2397 = vmatprep.subr.bf16.mxu0 %v2348
        %2398 = vmatpush1.bf16.msra.mxu0 %v2347
        %2399 = vmatprep.subr.bf16.mxu0 %v2346
        %2400 = vmatpush1.bf16.msra.mxu0 %v2345
        %2401 = vmatprep.subr.bf16.mxu0 %v2344
        %2402 = vmatpush1.bf16.msra.mxu0 %v2343
        %2403 = vmatprep.subr.bf16.mxu0 %v2342
        %2404 = vmatpush1.bf16.msra.mxu0 %v2341
        %2405 = vmatprep.subr.bf16.mxu0 %v2340
        %2406 = vmatpush1.bf16.msra.mxu0 %v2339
        %2407 = vmatprep.subr.bf16.mxu0 %v2338
        %2408 = vmatpush1.bf16.msra.mxu0 %v2337
        %2409 = vmatprep.subr.bf16.mxu0 %v2336
        %2410 = vmatpush1.bf16.msra.mxu0 %v2335
        %2411 = vmatprep.subr.bf16.mxu0 %v2334
        %2412 = vmatpush1.bf16.msra.mxu0 %v2333
        %2413 = vmatprep.subr.bf16.mxu0 %v2364
        %2414 = vmatpush2.bf16.msra.mxu0 %v2363
        %2415 = vmatprep.subr.bf16.mxu0 %v2362
        %2416 = vmatpush2.bf16.msra.mxu0 %v2361
        %2417 = vmatprep.subr.bf16.mxu0 %v2360
        %2418 = vmatpush2.bf16.msra.mxu0 %v2359
        %2419 = vmatprep.subr.bf16.mxu0 %v2358
        %2420 = vmatpush2.bf16.msra.mxu0 %v2357
        %2421 = vmatprep.subr.bf16.mxu0 %v2356
        %2422 = vmatpush2.bf16.msra.mxu0 %v2355
        %2423 = vmatprep.subr.bf16.mxu0 %v2354
        %2424 = vmatpush2.bf16.msra.mxu0 %v2353
        %2425 = vmatprep.subr.bf16.mxu0 %v2352
        %2426 = vmatpush2.bf16.msra.mxu0 %v2351
        %2427 = vmatprep.subr.bf16.mxu0 %v2350
        %2428 = vmatpush2.bf16.msra.mxu0 %v2349
        %2429 = vmatprep.mubr.bf16.mxu0 %v2234
        %2430 = vmatmul.mubr.bf16.gmra.mxu0 %v2217
        %v2431 = vpop.f32.mrf.mxu0
        %v2432 = vadd.f32 0.0, %v2431
        %v2433 = vpop.f32.mrf.mxu0
        %v2434 = vadd.f32 0.0, %v2433
        %v2435 = vpop.f32.mrf.mxu0
        %v2436 = vadd.f32 0.0, %v2435
        %v2437 = vpop.f32.mrf.mxu0
        %v2438 = vadd.f32 0.0, %v2437
        %2439 = vdwg.mxu0
        %v2440 = vadd.f32 %v2130, %v2432
        %v2441 = vadd.f32 %v2132, %v2434
        %v2442 = vadd.f32 %v2134, %v2436
        %v2443 = vadd.f32 %v2136, %v2438
        %v2444 = vld [vmem:[#allocation2] sm:$0x80]
        %v2445 = vld [vmem:[#allocation2 + $0x8] sm:$0x80]
        %v2446 = vld [vmem:[#allocation2 + $0x20] sm:$0x7f]
        %v2447 = vld [vmem:[#allocation2 + $0x28] sm:$0x7f]
        %vm2448 = vcmask 1046528
        %v2449 = vrot.slane %v1587, 1
        %v2450 = vrot.slane %v1591, 1
        %v2451 = vsel %vm2448, %v2449, %v2450
        %v2455 = vmul.f32 %v2444, %v2449
        %v2456 = vmul.f32 %v2445, %v2449
        %v2457 = vmul.f32 %v1580, %v2451
        %v2458 = vmul.f32 %v1581, %v2451
        %v2459 = vmul.f32 %v2446, %v2450
        %v2460 = vmul.f32 %v2447, %v2450
        %v2461 = vpack.c.bf16 %v2457, %v2455
        %v2462 = vpack.c.bf16 %v2458, %v2456
        %v2463 = vpack.c.bf16 %v2459, %v2459
        %v2464 = vpack.c.bf16 %v2460, %v2460
        %s2465 = scalar_lea.vmem [#allocation13], 768
        %v2466 = vld [vmem:[%s2465] sm:$0xff]
        %v2467 = vld [vmem:[%s2465 + $0x8] sm:$0xff]
        %v2468 = vld [vmem:[%s2465 + $0x10] sm:$0xff]
        %v2469 = vld [vmem:[%s2465 + $0x18] sm:$0xff]
        %v2470 = vld [vmem:[%s2465 + $0x20] sm:$0xff]
        %v2471 = vld [vmem:[%s2465 + $0x28] sm:$0xff]
        %v2472 = vld [vmem:[%s2465 + $0x30] sm:$0xff]
        %v2473 = vld [vmem:[%s2465 + $0x38] sm:$0xff]
        %v2474 = vld [vmem:[%s2465 + $0x40] sm:$0xff]
        %v2475 = vld [vmem:[%s2465 + $0x48] sm:$0xff]
        %v2476 = vld [vmem:[%s2465 + $0x50] sm:$0xff]
        %v2477 = vld [vmem:[%s2465 + $0x58] sm:$0xff]
        %v2478 = vld [vmem:[%s2465 + $0x60] sm:$0xff]
        %v2479 = vld [vmem:[%s2465 + $0x68] sm:$0xff]
        %v2480 = vld [vmem:[%s2465 + $0x70] sm:$0xff]
        %v2481 = vld [vmem:[%s2465 + $0x78] sm:$0xff]
        %v2482 = vld [vmem:[%s2465 + $0x80] sm:$0xff]
        %v2483 = vld [vmem:[%s2465 + $0x88] sm:$0xff]
        %v2484 = vld [vmem:[%s2465 + $0x90] sm:$0xff]
        %v2485 = vld [vmem:[%s2465 + $0x98] sm:$0xff]
        %v2486 = vld [vmem:[%s2465 + $0xa0] sm:$0xff]
        %v2487 = vld [vmem:[%s2465 + $0xa8] sm:$0xff]
        %v2488 = vld [vmem:[%s2465 + $0xb0] sm:$0xff]
        %v2489 = vld [vmem:[%s2465 + $0xb8] sm:$0xff]
        %v2490 = vld [vmem:[%s2465 + $0xc0] sm:$0xff]
        %v2491 = vld [vmem:[%s2465 + $0xc8] sm:$0xff]
        %v2492 = vld [vmem:[%s2465 + $0xd0] sm:$0xff]
        %v2493 = vld [vmem:[%s2465 + $0xd8] sm:$0xff]
        %v2494 = vld [vmem:[%s2465 + $0xe0] sm:$0xff]
        %v2495 = vld [vmem:[%s2465 + $0xe8] sm:$0xff]
        %v2496 = vld [vmem:[%s2465 + $0xf0] sm:$0xff]
        %v2497 = vld [vmem:[%s2465 + $0xf8] sm:$0xff]
        %vm2498 = vsmask.f32 4352
        %v2500 = vshrl.u32 %v2461, 16
        %v2502 = vrot.slane %v2500, 3
        %v2503 = vshll.u32 %v2461, 16
        %v2505 = vrot.slane %v2503, 4
        %v2506 = vor.u32 %v2502, %v2505
        %v2508 = vshrl.u32 %v2463, 16
        %v2510 = vrot.slane %v2508, 3
        %v2511 = vshll.u32 %v2463, 16
        %v2513 = vrot.slane %v2511, 4
        %v2514 = vor.u32 %v2510, %v2513
        %v2515 = vsel %vm2498, %v2506, %v2514
        %v2517 = vshrl.u32 %v2462, 16
        %v2519 = vrot.slane %v2517, 3
        %v2520 = vshll.u32 %v2462, 16
        %v2522 = vrot.slane %v2520, 4
        %v2523 = vor.u32 %v2519, %v2522
        %v2525 = vshrl.u32 %v2464, 16
        %v2527 = vrot.slane %v2525, 3
        %v2528 = vshll.u32 %v2464, 16
        %v2530 = vrot.slane %v2528, 4
        %v2531 = vor.u32 %v2527, %v2530
        %v2532 = vsel %vm2498, %v2523, %v2531
        %v2567 = vunpack.c.l.b16 %v2466
        %v2568 = vunpack.c.h.b16 %v2466
        %v2569 = vunpack.c.l.b16 %v2467
        %v2570 = vunpack.c.h.b16 %v2467
        %v2571 = vunpack.c.l.b16 %v2468
        %v2572 = vunpack.c.h.b16 %v2468
        %v2573 = vunpack.c.l.b16 %v2469
        %v2574 = vunpack.c.h.b16 %v2469
        %v2575 = vunpack.c.l.b16 %v2470
        %v2576 = vunpack.c.h.b16 %v2470
        %v2577 = vunpack.c.l.b16 %v2471
        %v2578 = vunpack.c.h.b16 %v2471
        %v2579 = vunpack.c.l.b16 %v2472
        %v2580 = vunpack.c.h.b16 %v2472
        %v2581 = vunpack.c.l.b16 %v2473
        %v2582 = vunpack.c.h.b16 %v2473
        %v2583 = vunpack.c.l.b16 %v2474
        %v2584 = vunpack.c.h.b16 %v2474
        %v2585 = vunpack.c.l.b16 %v2475
        %v2586 = vunpack.c.h.b16 %v2475
        %v2587 = vunpack.c.l.b16 %v2476
        %v2588 = vunpack.c.h.b16 %v2476
        %v2589 = vunpack.c.l.b16 %v2477
        %v2590 = vunpack.c.h.b16 %v2477
        %v2591 = vunpack.c.l.b16 %v2478
        %v2592 = vunpack.c.h.b16 %v2478
        %v2593 = vunpack.c.l.b16 %v2479
        %v2594 = vunpack.c.h.b16 %v2479
        %v2595 = vunpack.c.l.b16 %v2480
        %v2596 = vunpack.c.h.b16 %v2480
        %v2597 = vunpack.c.l.b16 %v2481
        %v2598 = vunpack.c.h.b16 %v2481
        %v2599 = vunpack.c.l.b16 %v2482
        %v2600 = vunpack.c.h.b16 %v2482
        %v2601 = vunpack.c.l.b16 %v2483
        %v2602 = vunpack.c.h.b16 %v2483
        %v2603 = vunpack.c.l.b16 %v2484
        %v2604 = vunpack.c.h.b16 %v2484
        %v2605 = vunpack.c.l.b16 %v2485
        %v2606 = vunpack.c.h.b16 %v2485
        %v2607 = vunpack.c.l.b16 %v2486
        %v2608 = vunpack.c.h.b16 %v2486
        %v2609 = vunpack.c.l.b16 %v2487
        %v2610 = vunpack.c.h.b16 %v2487
        %v2611 = vunpack.c.l.b16 %v2488
        %v2612 = vunpack.c.h.b16 %v2488
        %v2613 = vunpack.c.l.b16 %v2489
        %v2614 = vunpack.c.h.b16 %v2489
        %v2615 = vunpack.c.l.b16 %v2490
        %v2616 = vunpack.c.h.b16 %v2490
        %v2617 = vunpack.c.l.b16 %v2491
        %v2618 = vunpack.c.h.b16 %v2491
        %v2619 = vunpack.c.l.b16 %v2492
        %v2620 = vunpack.c.h.b16 %v2492
        %v2621 = vunpack.c.l.b16 %v2493
        %v2622 = vunpack.c.h.b16 %v2493
        %v2623 = vunpack.c.l.b16 %v2494
        %v2624 = vunpack.c.h.b16 %v2494
        %v2625 = vunpack.c.l.b16 %v2495
        %v2626 = vunpack.c.h.b16 %v2495
        %v2627 = vunpack.c.l.b16 %v2496
        %v2628 = vunpack.c.h.b16 %v2496
        %v2629 = vunpack.c.l.b16 %v2497
        %v2630 = vunpack.c.h.b16 %v2497
        %v2631 = vpack.c.b16 %v2569, %v2567
        %v2632 = vpack.c.b16 %v2570, %v2568
        %v2633 = vpack.c.b16 %v2573, %v2571
        %v2634 = vpack.c.b16 %v2574, %v2572
        %v2635 = vpack.c.b16 %v2577, %v2575
        %v2636 = vpack.c.b16 %v2578, %v2576
        %v2637 = vpack.c.b16 %v2581, %v2579
        %v2638 = vpack.c.b16 %v2582, %v2580
        %v2639 = vpack.c.b16 %v2585, %v2583
        %v2640 = vpack.c.b16 %v2586, %v2584
        %v2641 = vpack.c.b16 %v2589, %v2587
        %v2642 = vpack.c.b16 %v2590, %v2588
        %v2643 = vpack.c.b16 %v2593, %v2591
        %v2644 = vpack.c.b16 %v2594, %v2592
        %v2645 = vpack.c.b16 %v2597, %v2595
        %v2646 = vpack.c.b16 %v2598, %v2596
        %v2647 = vpack.c.b16 %v2601, %v2599
        %v2648 = vpack.c.b16 %v2602, %v2600
        %v2649 = vpack.c.b16 %v2605, %v2603
        %v2650 = vpack.c.b16 %v2606, %v2604
        %v2651 = vpack.c.b16 %v2609, %v2607
        %v2652 = vpack.c.b16 %v2610, %v2608
        %v2653 = vpack.c.b16 %v2613, %v2611
        %v2654 = vpack.c.b16 %v2614, %v2612
        %v2655 = vpack.c.b16 %v2617, %v2615
        %v2656 = vpack.c.b16 %v2618, %v2616
        %v2657 = vpack.c.b16 %v2621, %v2619
        %v2658 = vpack.c.b16 %v2622, %v2620
        %v2659 = vpack.c.b16 %v2625, %v2623
        %v2660 = vpack.c.b16 %v2626, %v2624
        %v2661 = vpack.c.b16 %v2629, %v2627
        %v2662 = vpack.c.b16 %v2630, %v2628
        %2695 = vmatprep.subr.bf16.mxu0 %v2646
        %2696 = vmatpush1.bf16.msra.mxu0 %v2645
        %2697 = vmatprep.subr.bf16.mxu0 %v2644
        %2698 = vmatpush1.bf16.msra.mxu0 %v2643
        %2699 = vmatprep.subr.bf16.mxu0 %v2642
        %2700 = vmatpush1.bf16.msra.mxu0 %v2641
        %2701 = vmatprep.subr.bf16.mxu0 %v2640
        %2702 = vmatpush1.bf16.msra.mxu0 %v2639
        %2703 = vmatprep.subr.bf16.mxu0 %v2638
        %2704 = vmatpush1.bf16.msra.mxu0 %v2637
        %2705 = vmatprep.subr.bf16.mxu0 %v2636
        %2706 = vmatpush1.bf16.msra.mxu0 %v2635
        %2707 = vmatprep.subr.bf16.mxu0 %v2634
        %2708 = vmatpush1.bf16.msra.mxu0 %v2633
        %2709 = vmatprep.subr.bf16.mxu0 %v2632
        %2710 = vmatpush1.bf16.msra.mxu0 %v2631
        %2711 = vmatprep.subr.bf16.mxu0 %v2662
        %2712 = vmatpush2.bf16.msra.mxu0 %v2661
        %2713 = vmatprep.subr.bf16.mxu0 %v2660
        %2714 = vmatpush2.bf16.msra.mxu0 %v2659
        %2715 = vmatprep.subr.bf16.mxu0 %v2658
        %2716 = vmatpush2.bf16.msra.mxu0 %v2657
        %2717 = vmatprep.subr.bf16.mxu0 %v2656
        %2718 = vmatpush2.bf16.msra.mxu0 %v2655
        %2719 = vmatprep.subr.bf16.mxu0 %v2654
        %2720 = vmatpush2.bf16.msra.mxu0 %v2653
        %2721 = vmatprep.subr.bf16.mxu0 %v2652
        %2722 = vmatpush2.bf16.msra.mxu0 %v2651
        %2723 = vmatprep.subr.bf16.mxu0 %v2650
        %2724 = vmatpush2.bf16.msra.mxu0 %v2649
        %2725 = vmatprep.subr.bf16.mxu0 %v2648
        %2726 = vmatpush2.bf16.msra.mxu0 %v2647
        %2727 = vmatprep.mubr.bf16.mxu0 %v2532
        %2728 = vmatmul.mubr.bf16.gmra.mxu0 %v2515
        %v2729 = vpop.f32.mrf.mxu0
        %v2730 = vadd.f32 0.0, %v2729
        %v2731 = vpop.f32.mrf.mxu0
        %v2732 = vadd.f32 0.0, %v2731
        %v2733 = vpop.f32.mrf.mxu0
        %v2734 = vadd.f32 0.0, %v2733
        %v2735 = vpop.f32.mrf.mxu0
        %v2736 = vadd.f32 0.0, %v2735
        %2737 = vdwg.mxu0
        %v2738 = vadd.f32 %v2440, %v2730
        %v2739 = vadd.f32 %v2441, %v2732
        %v2740 = vadd.f32 %v2442, %v2734
        %v2741 = vadd.f32 %v2443, %v2736
        %v2742 = vld [vmem:[#allocation2 + $0x20] sm:$0xff]
        %v2743 = vld [vmem:[#allocation2 + $0x28] sm:$0xff]
        %v2744 = vpack.c.bf16 %v2742, %v1580
        %v2745 = vpack.c.bf16 %v2743, %v1581
        %s2746 = scalar_lea.vmem [#allocation13], 1024
        %v2747 = vld [vmem:[%s2746] sm:$0xff]
        %v2748 = vld [vmem:[%s2746 + $0x8] sm:$0xff]
        %v2749 = vld [vmem:[%s2746 + $0x10] sm:$0xff]
        %v2750 = vld [vmem:[%s2746 + $0x18] sm:$0xff]
        %v2751 = vld [vmem:[%s2746 + $0x20] sm:$0xff]
        %v2752 = vld [vmem:[%s2746 + $0x28] sm:$0xff]
        %v2753 = vld [vmem:[%s2746 + $0x30] sm:$0xff]
        %v2754 = vld [vmem:[%s2746 + $0x38] sm:$0xff]
        %v2755 = vld [vmem:[%s2746 + $0x40] sm:$0xff]
        %v2756 = vld [vmem:[%s2746 + $0x48] sm:$0xff]
        %v2757 = vld [vmem:[%s2746 + $0x50] sm:$0xff]
        %v2758 = vld [vmem:[%s2746 + $0x58] sm:$0xff]
        %v2759 = vld [vmem:[%s2746 + $0x60] sm:$0xff]
        %v2760 = vld [vmem:[%s2746 + $0x68] sm:$0xff]
        %v2761 = vld [vmem:[%s2746 + $0x70] sm:$0xff]
        %v2762 = vld [vmem:[%s2746 + $0x78] sm:$0xff]
        %v2763 = vld [vmem:[%s2746 + $0x80] sm:$0xff]
        %v2764 = vld [vmem:[%s2746 + $0x88] sm:$0xff]
        %v2765 = vld [vmem:[%s2746 + $0x90] sm:$0xff]
        %v2766 = vld [vmem:[%s2746 + $0x98] sm:$0xff]
        %v2767 = vld [vmem:[%s2746 + $0xa0] sm:$0xff]
        %v2768 = vld [vmem:[%s2746 + $0xa8] sm:$0xff]
        %v2769 = vld [vmem:[%s2746 + $0xb0] sm:$0xff]
        %v2770 = vld [vmem:[%s2746 + $0xb8] sm:$0xff]
        %v2771 = vld [vmem:[%s2746 + $0xc0] sm:$0xff]
        %v2772 = vld [vmem:[%s2746 + $0xc8] sm:$0xff]
        %v2773 = vld [vmem:[%s2746 + $0xd0] sm:$0xff]
        %v2774 = vld [vmem:[%s2746 + $0xd8] sm:$0xff]
        %v2775 = vld [vmem:[%s2746 + $0xe0] sm:$0xff]
        %v2776 = vld [vmem:[%s2746 + $0xe8] sm:$0xff]
        %v2777 = vld [vmem:[%s2746 + $0xf0] sm:$0xff]
        %v2778 = vld [vmem:[%s2746 + $0xf8] sm:$0xff]
        %v2811 = vunpack.c.l.b16 %v2747
        %v2812 = vunpack.c.h.b16 %v2747
        %v2813 = vunpack.c.l.b16 %v2748
        %v2814 = vunpack.c.h.b16 %v2748
        %v2815 = vunpack.c.l.b16 %v2749
        %v2816 = vunpack.c.h.b16 %v2749
        %v2817 = vunpack.c.l.b16 %v2750
        %v2818 = vunpack.c.h.b16 %v2750
        %v2819 = vunpack.c.l.b16 %v2751
        %v2820 = vunpack.c.h.b16 %v2751
        %v2821 = vunpack.c.l.b16 %v2752
        %v2822 = vunpack.c.h.b16 %v2752
        %v2823 = vunpack.c.l.b16 %v2753
        %v2824 = vunpack.c.h.b16 %v2753
        %v2825 = vunpack.c.l.b16 %v2754
        %v2826 = vunpack.c.h.b16 %v2754
        %v2827 = vunpack.c.l.b16 %v2755
        %v2828 = vunpack.c.h.b16 %v2755
        %v2829 = vunpack.c.l.b16 %v2756
        %v2830 = vunpack.c.h.b16 %v2756
        %v2831 = vunpack.c.l.b16 %v2757
        %v2832 = vunpack.c.h.b16 %v2757
        %v2833 = vunpack.c.l.b16 %v2758
        %v2834 = vunpack.c.h.b16 %v2758
        %v2835 = vunpack.c.l.b16 %v2759
        %v2836 = vunpack.c.h.b16 %v2759
        %v2837 = vunpack.c.l.b16 %v2760
        %v2838 = vunpack.c.h.b16 %v2760
        %v2839 = vunpack.c.l.b16 %v2761
        %v2840 = vunpack.c.h.b16 %v2761
        %v2841 = vunpack.c.l.b16 %v2762
        %v2842 = vunpack.c.h.b16 %v2762
        %v2843 = vunpack.c.l.b16 %v2763
        %v2844 = vunpack.c.h.b16 %v2763
        %v2845 = vunpack.c.l.b16 %v2764
        %v2846 = vunpack.c.h.b16 %v2764
        %v2847 = vunpack.c.l.b16 %v2765
        %v2848 = vunpack.c.h.b16 %v2765
        %v2849 = vunpack.c.l.b16 %v2766
        %v2850 = vunpack.c.h.b16 %v2766
        %v2851 = vunpack.c.l.b16 %v2767
        %v2852 = vunpack.c.h.b16 %v2767
        %v2853 = vunpack.c.l.b16 %v2768
        %v2854 = vunpack.c.h.b16 %v2768
        %v2855 = vunpack.c.l.b16 %v2769
        %v2856 = vunpack.c.h.b16 %v2769
        %v2857 = vunpack.c.l.b16 %v2770
        %v2858 = vunpack.c.h.b16 %v2770
        %v2859 = vunpack.c.l.b16 %v2771
        %v2860 = vunpack.c.h.b16 %v2771
        %v2861 = vunpack.c.l.b16 %v2772
        %v2862 = vunpack.c.h.b16 %v2772
        %v2863 = vunpack.c.l.b16 %v2773
        %v2864 = vunpack.c.h.b16 %v2773
        %v2865 = vunpack.c.l.b16 %v2774
        %v2866 = vunpack.c.h.b16 %v2774
        %v2867 = vunpack.c.l.b16 %v2775
        %v2868 = vunpack.c.h.b16 %v2775
        %v2869 = vunpack.c.l.b16 %v2776
        %v2870 = vunpack.c.h.b16 %v2776
        %v2871 = vunpack.c.l.b16 %v2777
        %v2872 = vunpack.c.h.b16 %v2777
        %v2873 = vunpack.c.l.b16 %v2778
        %v2874 = vunpack.c.h.b16 %v2778
        %v2875 = vpack.c.b16 %v2813, %v2811
        %v2876 = vpack.c.b16 %v2814, %v2812
        %v2877 = vpack.c.b16 %v2817, %v2815
        %v2878 = vpack.c.b16 %v2818, %v2816
        %v2879 = vpack.c.b16 %v2821, %v2819
        %v2880 = vpack.c.b16 %v2822, %v2820
        %v2881 = vpack.c.b16 %v2825, %v2823
        %v2882 = vpack.c.b16 %v2826, %v2824
        %v2883 = vpack.c.b16 %v2829, %v2827
        %v2884 = vpack.c.b16 %v2830, %v2828
        %v2885 = vpack.c.b16 %v2833, %v2831
        %v2886 = vpack.c.b16 %v2834, %v2832
        %v2887 = vpack.c.b16 %v2837, %v2835
        %v2888 = vpack.c.b16 %v2838, %v2836
        %v2889 = vpack.c.b16 %v2841, %v2839
        %v2890 = vpack.c.b16 %v2842, %v2840
        %v2891 = vpack.c.b16 %v2845, %v2843
        %v2892 = vpack.c.b16 %v2846, %v2844
        %v2893 = vpack.c.b16 %v2849, %v2847
        %v2894 = vpack.c.b16 %v2850, %v2848
        %v2895 = vpack.c.b16 %v2853, %v2851
        %v2896 = vpack.c.b16 %v2854, %v2852
        %v2897 = vpack.c.b16 %v2857, %v2855
        %v2898 = vpack.c.b16 %v2858, %v2856
        %v2899 = vpack.c.b16 %v2861, %v2859
        %v2900 = vpack.c.b16 %v2862, %v2860
        %v2901 = vpack.c.b16 %v2865, %v2863
        %v2902 = vpack.c.b16 %v2866, %v2864
        %v2903 = vpack.c.b16 %v2869, %v2867
        %v2904 = vpack.c.b16 %v2870, %v2868
        %v2905 = vpack.c.b16 %v2873, %v2871
        %v2906 = vpack.c.b16 %v2874, %v2872
        %2939 = vmatprep.subr.bf16.mxu0 %v2890
        %2940 = vmatpush1.bf16.msra.mxu0 %v2889
        %2941 = vmatprep.subr.bf16.mxu0 %v2888
        %2942 = vmatpush1.bf16.msra.mxu0 %v2887
        %2943 = vmatprep.subr.bf16.mxu0 %v2886
        %2944 = vmatpush1.bf16.msra.mxu0 %v2885
        %2945 = vmatprep.subr.bf16.mxu0 %v2884
        %2946 = vmatpush1.bf16.msra.mxu0 %v2883
        %2947 = vmatprep.subr.bf16.mxu0 %v2882
        %2948 = vmatpush1.bf16.msra.mxu0 %v2881
        %2949 = vmatprep.subr.bf16.mxu0 %v2880
        %2950 = vmatpush1.bf16.msra.mxu0 %v2879
        %2951 = vmatprep.subr.bf16.mxu0 %v2878
        %2952 = vmatpush1.bf16.msra.mxu0 %v2877
        %2953 = vmatprep.subr.bf16.mxu0 %v2876
        %2954 = vmatpush1.bf16.msra.mxu0 %v2875
        %2955 = vmatprep.subr.bf16.mxu0 %v2906
        %2956 = vmatpush2.bf16.msra.mxu0 %v2905
        %2957 = vmatprep.subr.bf16.mxu0 %v2904
        %2958 = vmatpush2.bf16.msra.mxu0 %v2903
        %2959 = vmatprep.subr.bf16.mxu0 %v2902
        %2960 = vmatpush2.bf16.msra.mxu0 %v2901
        %2961 = vmatprep.subr.bf16.mxu0 %v2900
        %2962 = vmatpush2.bf16.msra.mxu0 %v2899
        %2963 = vmatprep.subr.bf16.mxu0 %v2898
        %2964 = vmatpush2.bf16.msra.mxu0 %v2897
        %2965 = vmatprep.subr.bf16.mxu0 %v2896
        %2966 = vmatpush2.bf16.msra.mxu0 %v2895
        %2967 = vmatprep.subr.bf16.mxu0 %v2894
        %2968 = vmatpush2.bf16.msra.mxu0 %v2893
        %2969 = vmatprep.subr.bf16.mxu0 %v2892
        %2970 = vmatpush2.bf16.msra.mxu0 %v2891
        %2971 = vmatprep.mubr.bf16.mxu0 %v2745
        %2972 = vmatmul.mubr.bf16.gmra.mxu0 %v2744
        %v2973 = vpop.f32.mrf.mxu0
        %v2974 = vadd.f32 0.0, %v2973
        %v2975 = vpop.f32.mrf.mxu0
        %v2976 = vadd.f32 0.0, %v2975
        %v2977 = vpop.f32.mrf.mxu0
        %v2978 = vadd.f32 0.0, %v2977
        %v2979 = vpop.f32.mrf.mxu0
        %v2980 = vadd.f32 0.0, %v2979
        %2981 = vdwg.mxu0
        %v2982 = vadd.f32 %v2738, %v2974
        %v2983 = vadd.f32 %v2739, %v2976
        %v2984 = vadd.f32 %v2740, %v2978
        %v2985 = vadd.f32 %v2741, %v2980
        %v2986 = vld [vmem:[#allocation2 + $0x10] sm:$0xfe]
        %v2987 = vld [vmem:[#allocation2 + $0x18] sm:$0xfe]
        %v2988 = vld [vmem:[#allocation2 + $0x20] sm:$0xff]
        %v2989 = vld [vmem:[#allocation2 + $0x28] sm:$0xff]
        %v2990 = vld [vmem:[#allocation2 + $0x30] sm:$0x1]
        %v2991 = vld [vmem:[#allocation2 + $0x38] sm:$0x1]
        %vm2992 = vcmask 1040384
        %v2993 = vrot.slane %v2145, 7
        %v2994 = vrot.slane %v2149, 7
        %v2995 = vsel %vm2992, %v2993, %v2994
        %v2999 = vmul.f32 %v2986, %v2993
        %v3000 = vmul.f32 %v2987, %v2993
        %v3001 = vmul.f32 %v2988, %v2995
        %v3002 = vmul.f32 %v2989, %v2995
        %v3003 = vmul.f32 %v2990, %v2994
        %v3004 = vmul.f32 %v2991, %v2994
        %v3005 = vpack.c.bf16 %v3001, %v2999
        %v3006 = vpack.c.bf16 %v3002, %v3000
        %v3007 = vpack.c.bf16 %v3003, %v3003
        %v3008 = vpack.c.bf16 %v3004, %v3004
        %s3009 = scalar_lea.vmem [#allocation13], 1280
        %v3010 = vld [vmem:[%s3009] sm:$0xff]
        %v3011 = vld [vmem:[%s3009 + $0x8] sm:$0xff]
        %v3012 = vld [vmem:[%s3009 + $0x10] sm:$0xff]
        %v3013 = vld [vmem:[%s3009 + $0x18] sm:$0xff]
        %v3014 = vld [vmem:[%s3009 + $0x20] sm:$0xff]
        %v3015 = vld [vmem:[%s3009 + $0x28] sm:$0xff]
        %v3016 = vld [vmem:[%s3009 + $0x30] sm:$0xff]
        %v3017 = vld [vmem:[%s3009 + $0x38] sm:$0xff]
        %v3018 = vld [vmem:[%s3009 + $0x40] sm:$0xff]
        %v3019 = vld [vmem:[%s3009 + $0x48] sm:$0xff]
        %v3020 = vld [vmem:[%s3009 + $0x50] sm:$0xff]
        %v3021 = vld [vmem:[%s3009 + $0x58] sm:$0xff]
        %v3022 = vld [vmem:[%s3009 + $0x60] sm:$0xff]
        %v3023 = vld [vmem:[%s3009 + $0x68] sm:$0xff]
        %v3024 = vld [vmem:[%s3009 + $0x70] sm:$0xff]
        %v3025 = vld [vmem:[%s3009 + $0x78] sm:$0xff]
        %v3026 = vld [vmem:[%s3009 + $0x80] sm:$0xff]
        %v3027 = vld [vmem:[%s3009 + $0x88] sm:$0xff]
        %v3028 = vld [vmem:[%s3009 + $0x90] sm:$0xff]
        %v3029 = vld [vmem:[%s3009 + $0x98] sm:$0xff]
        %v3030 = vld [vmem:[%s3009 + $0xa0] sm:$0xff]
        %v3031 = vld [vmem:[%s3009 + $0xa8] sm:$0xff]
        %v3032 = vld [vmem:[%s3009 + $0xb0] sm:$0xff]
        %v3033 = vld [vmem:[%s3009 + $0xb8] sm:$0xff]
        %v3034 = vld [vmem:[%s3009 + $0xc0] sm:$0xff]
        %v3035 = vld [vmem:[%s3009 + $0xc8] sm:$0xff]
        %v3036 = vld [vmem:[%s3009 + $0xd0] sm:$0xff]
        %v3037 = vld [vmem:[%s3009 + $0xd8] sm:$0xff]
        %v3038 = vld [vmem:[%s3009 + $0xe0] sm:$0xff]
        %v3039 = vld [vmem:[%s3009 + $0xe8] sm:$0xff]
        %v3040 = vld [vmem:[%s3009 + $0xf0] sm:$0xff]
        %v3041 = vld [vmem:[%s3009 + $0xf8] sm:$0xff]
        %vm3042 = vsmask.f32 7424
        %v3044 = vshrl.u32 %v3005, 16
        %v3046 = vshll.u32 %v3005, 16
        %v3048 = vrot.slane %v3046, 1
        %v3049 = vor.u32 %v3044, %v3048
        %v3051 = vshll.u32 %v3007, 16
        %v3053 = vrot.slane %v3051, 1
        %v3054 = vsel %vm3042, %v3049, %v3053
        %v3056 = vshrl.u32 %v3006, 16
        %v3058 = vshll.u32 %v3006, 16
        %v3060 = vrot.slane %v3058, 1
        %v3061 = vor.u32 %v3056, %v3060
        %v3063 = vshll.u32 %v3008, 16
        %v3065 = vrot.slane %v3063, 1
        %v3066 = vsel %vm3042, %v3061, %v3065
        %v3101 = vunpack.c.l.b16 %v3010
        %v3102 = vunpack.c.h.b16 %v3010
        %v3103 = vunpack.c.l.b16 %v3011
        %v3104 = vunpack.c.h.b16 %v3011
        %v3105 = vunpack.c.l.b16 %v3012
        %v3106 = vunpack.c.h.b16 %v3012
        %v3107 = vunpack.c.l.b16 %v3013
        %v3108 = vunpack.c.h.b16 %v3013
        %v3109 = vunpack.c.l.b16 %v3014
        %v3110 = vunpack.c.h.b16 %v3014
        %v3111 = vunpack.c.l.b16 %v3015
        %v3112 = vunpack.c.h.b16 %v3015
        %v3113 = vunpack.c.l.b16 %v3016
        %v3114 = vunpack.c.h.b16 %v3016
        %v3115 = vunpack.c.l.b16 %v3017
        %v3116 = vunpack.c.h.b16 %v3017
        %v3117 = vunpack.c.l.b16 %v3018
        %v3118 = vunpack.c.h.b16 %v3018
        %v3119 = vunpack.c.l.b16 %v3019
        %v3120 = vunpack.c.h.b16 %v3019
        %v3121 = vunpack.c.l.b16 %v3020
        %v3122 = vunpack.c.h.b16 %v3020
        %v3123 = vunpack.c.l.b16 %v3021
        %v3124 = vunpack.c.h.b16 %v3021
        %v3125 = vunpack.c.l.b16 %v3022
        %v3126 = vunpack.c.h.b16 %v3022
        %v3127 = vunpack.c.l.b16 %v3023
        %v3128 = vunpack.c.h.b16 %v3023
        %v3129 = vunpack.c.l.b16 %v3024
        %v3130 = vunpack.c.h.b16 %v3024
        %v3131 = vunpack.c.l.b16 %v3025
        %v3132 = vunpack.c.h.b16 %v3025
        %v3133 = vunpack.c.l.b16 %v3026
        %v3134 = vunpack.c.h.b16 %v3026
        %v3135 = vunpack.c.l.b16 %v3027
        %v3136 = vunpack.c.h.b16 %v3027
        %v3137 = vunpack.c.l.b16 %v3028
        %v3138 = vunpack.c.h.b16 %v3028
        %v3139 = vunpack.c.l.b16 %v3029
        %v3140 = vunpack.c.h.b16 %v3029
        %v3141 = vunpack.c.l.b16 %v3030
        %v3142 = vunpack.c.h.b16 %v3030
        %v3143 = vunpack.c.l.b16 %v3031
        %v3144 = vunpack.c.h.b16 %v3031
        %v3145 = vunpack.c.l.b16 %v3032
        %v3146 = vunpack.c.h.b16 %v3032
        %v3147 = vunpack.c.l.b16 %v3033
        %v3148 = vunpack.c.h.b16 %v3033
        %v3149 = vunpack.c.l.b16 %v3034
        %v3150 = vunpack.c.h.b16 %v3034
        %v3151 = vunpack.c.l.b16 %v3035
        %v3152 = vunpack.c.h.b16 %v3035
        %v3153 = vunpack.c.l.b16 %v3036
        %v3154 = vunpack.c.h.b16 %v3036
        %v3155 = vunpack.c.l.b16 %v3037
        %v3156 = vunpack.c.h.b16 %v3037
        %v3157 = vunpack.c.l.b16 %v3038
        %v3158 = vunpack.c.h.b16 %v3038
        %v3159 = vunpack.c.l.b16 %v3039
        %v3160 = vunpack.c.h.b16 %v3039
        %v3161 = vunpack.c.l.b16 %v3040
        %v3162 = vunpack.c.h.b16 %v3040
        %v3163 = vunpack.c.l.b16 %v3041
        %v3164 = vunpack.c.h.b16 %v3041
        %v3165 = vpack.c.b16 %v3103, %v3101
        %v3166 = vpack.c.b16 %v3104, %v3102
        %v3167 = vpack.c.b16 %v3107, %v3105
        %v3168 = vpack.c.b16 %v3108, %v3106
        %v3169 = vpack.c.b16 %v3111, %v3109
        %v3170 = vpack.c.b16 %v3112, %v3110
        %v3171 = vpack.c.b16 %v3115, %v3113
        %v3172 = vpack.c.b16 %v3116, %v3114
        %v3173 = vpack.c.b16 %v3119, %v3117
        %v3174 = vpack.c.b16 %v3120, %v3118
        %v3175 = vpack.c.b16 %v3123, %v3121
        %v3176 = vpack.c.b16 %v3124, %v3122
        %v3177 = vpack.c.b16 %v3127, %v3125
        %v3178 = vpack.c.b16 %v3128, %v3126
        %v3179 = vpack.c.b16 %v3131, %v3129
        %v3180 = vpack.c.b16 %v3132, %v3130
        %v3181 = vpack.c.b16 %v3135, %v3133
        %v3182 = vpack.c.b16 %v3136, %v3134
        %v3183 = vpack.c.b16 %v3139, %v3137
        %v3184 = vpack.c.b16 %v3140, %v3138
        %v3185 = vpack.c.b16 %v3143, %v3141
        %v3186 = vpack.c.b16 %v3144, %v3142
        %v3187 = vpack.c.b16 %v3147, %v3145
        %v3188 = vpack.c.b16 %v3148, %v3146
        %v3189 = vpack.c.b16 %v3151, %v3149
        %v3190 = vpack.c.b16 %v3152, %v3150
        %v3191 = vpack.c.b16 %v3155, %v3153
        %v3192 = vpack.c.b16 %v3156, %v3154
        %v3193 = vpack.c.b16 %v3159, %v3157
        %v3194 = vpack.c.b16 %v3160, %v3158
        %v3195 = vpack.c.b16 %v3163, %v3161
        %v3196 = vpack.c.b16 %v3164, %v3162
        %3229 = vmatprep.subr.bf16.mxu0 %v3180
        %3230 = vmatpush1.bf16.msra.mxu0 %v3179
        %3231 = vmatprep.subr.bf16.mxu0 %v3178
        %3232 = vmatpush1.bf16.msra.mxu0 %v3177
        %3233 = vmatprep.subr.bf16.mxu0 %v3176
        %3234 = vmatpush1.bf16.msra.mxu0 %v3175
        %3235 = vmatprep.subr.bf16.mxu0 %v3174
        %3236 = vmatpush1.bf16.msra.mxu0 %v3173
        %3237 = vmatprep.subr.bf16.mxu0 %v3172
        %3238 = vmatpush1.bf16.msra.mxu0 %v3171
        %3239 = vmatprep.subr.bf16.mxu0 %v3170
        %3240 = vmatpush1.bf16.msra.mxu0 %v3169
        %3241 = vmatprep.subr.bf16.mxu0 %v3168
        %3242 = vmatpush1.bf16.msra.mxu0 %v3167
        %3243 = vmatprep.subr.bf16.mxu0 %v3166
        %3244 = vmatpush1.bf16.msra.mxu0 %v3165
        %3245 = vmatprep.subr.bf16.mxu0 %v3196
        %3246 = vmatpush2.bf16.msra.mxu0 %v3195
        %3247 = vmatprep.subr.bf16.mxu0 %v3194
        %3248 = vmatpush2.bf16.msra.mxu0 %v3193
        %3249 = vmatprep.subr.bf16.mxu0 %v3192
        %3250 = vmatpush2.bf16.msra.mxu0 %v3191
        %3251 = vmatprep.subr.bf16.mxu0 %v3190
        %3252 = vmatpush2.bf16.msra.mxu0 %v3189
        %3253 = vmatprep.subr.bf16.mxu0 %v3188
        %3254 = vmatpush2.bf16.msra.mxu0 %v3187
        %3255 = vmatprep.subr.bf16.mxu0 %v3186
        %3256 = vmatpush2.bf16.msra.mxu0 %v3185
        %3257 = vmatprep.subr.bf16.mxu0 %v3184
        %3258 = vmatpush2.bf16.msra.mxu0 %v3183
        %3259 = vmatprep.subr.bf16.mxu0 %v3182
        %3260 = vmatpush2.bf16.msra.mxu0 %v3181
        %3261 = vmatprep.mubr.bf16.mxu0 %v3066
        %3262 = vmatmul.mubr.bf16.gmra.mxu0 %v3054
        %v3263 = vpop.f32.mrf.mxu0
        %v3264 = vadd.f32 0.0, %v3263
        %v3265 = vpop.f32.mrf.mxu0
        %v3266 = vadd.f32 0.0, %v3265
        %v3267 = vpop.f32.mrf.mxu0
        %v3268 = vadd.f32 0.0, %v3267
        %v3269 = vpop.f32.mrf.mxu0
        %v3270 = vadd.f32 0.0, %v3269
        %3271 = vdwg.mxu0
        %v3272 = vadd.f32 %v2982, %v3264
        %v3273 = vadd.f32 %v2983, %v3266
        %v3274 = vadd.f32 %v2984, %v3268
        %v3275 = vadd.f32 %v2985, %v3270
        %v3276 = vld [vmem:[#allocation2 + $0x10] sm:$0xf8]
        %v3277 = vld [vmem:[#allocation2 + $0x18] sm:$0xf8]
        %v3278 = vld [vmem:[#allocation2 + $0x30] sm:$0x7]
        %v3279 = vld [vmem:[#allocation2 + $0x38] sm:$0x7]
        %v3280 = vmul.f32 %v3276, %v1593
        %v3281 = vmul.f32 %v3277, %v1593
        %v3282 = vmul.f32 %v2988, %v1595
        %v3283 = vmul.f32 %v2989, %v1595
        %v3284 = vmul.f32 %v3278, %v1594
        %v3285 = vmul.f32 %v3279, %v1594
        %v3286 = vpack.c.bf16 %v3282, %v3280
        %v3287 = vpack.c.bf16 %v3283, %v3281
        %v3288 = vpack.c.bf16 %v3284, %v3284
        %v3289 = vpack.c.bf16 %v3285, %v3285
        %s3290 = scalar_lea.vmem [#allocation13], 1536
        %v3291 = vld [vmem:[%s3290] sm:$0xff]
        %v3292 = vld [vmem:[%s3290 + $0x8] sm:$0xff]
        %v3293 = vld [vmem:[%s3290 + $0x10] sm:$0xff]
        %v3294 = vld [vmem:[%s3290 + $0x18] sm:$0xff]
        %v3295 = vld [vmem:[%s3290 + $0x20] sm:$0xff]
        %v3296 = vld [vmem:[%s3290 + $0x28] sm:$0xff]
        %v3297 = vld [vmem:[%s3290 + $0x30] sm:$0xff]
        %v3298 = vld [vmem:[%s3290 + $0x38] sm:$0xff]
        %v3299 = vld [vmem:[%s3290 + $0x40] sm:$0xff]
        %v3300 = vld [vmem:[%s3290 + $0x48] sm:$0xff]
        %v3301 = vld [vmem:[%s3290 + $0x50] sm:$0xff]
        %v3302 = vld [vmem:[%s3290 + $0x58] sm:$0xff]
        %v3303 = vld [vmem:[%s3290 + $0x60] sm:$0xff]
        %v3304 = vld [vmem:[%s3290 + $0x68] sm:$0xff]
        %v3305 = vld [vmem:[%s3290 + $0x70] sm:$0xff]
        %v3306 = vld [vmem:[%s3290 + $0x78] sm:$0xff]
        %v3307 = vld [vmem:[%s3290 + $0x80] sm:$0xff]
        %v3308 = vld [vmem:[%s3290 + $0x88] sm:$0xff]
        %v3309 = vld [vmem:[%s3290 + $0x90] sm:$0xff]
        %v3310 = vld [vmem:[%s3290 + $0x98] sm:$0xff]
        %v3311 = vld [vmem:[%s3290 + $0xa0] sm:$0xff]
        %v3312 = vld [vmem:[%s3290 + $0xa8] sm:$0xff]
        %v3313 = vld [vmem:[%s3290 + $0xb0] sm:$0xff]
        %v3314 = vld [vmem:[%s3290 + $0xb8] sm:$0xff]
        %v3315 = vld [vmem:[%s3290 + $0xc0] sm:$0xff]
        %v3316 = vld [vmem:[%s3290 + $0xc8] sm:$0xff]
        %v3317 = vld [vmem:[%s3290 + $0xd0] sm:$0xff]
        %v3318 = vld [vmem:[%s3290 + $0xd8] sm:$0xff]
        %v3319 = vld [vmem:[%s3290 + $0xe0] sm:$0xff]
        %v3320 = vld [vmem:[%s3290 + $0xe8] sm:$0xff]
        %v3321 = vld [vmem:[%s3290 + $0xf0] sm:$0xff]
        %v3322 = vld [vmem:[%s3290 + $0xf8] sm:$0xff]
        %v3324 = vshrl.u32 %v3286, 16
        %v3326 = vrot.slane %v3324, 1
        %v3327 = vshll.u32 %v3286, 16
        %v3329 = vrot.slane %v3327, 2
        %v3330 = vor.u32 %v3326, %v3329
        %v3332 = vshrl.u32 %v3288, 16
        %v3334 = vrot.slane %v3332, 1
        %v3335 = vshll.u32 %v3288, 16
        %v3337 = vrot.slane %v3335, 2
        %v3338 = vor.u32 %v3334, %v3337
        %v3339 = vsel %vm1898, %v3330, %v3338
        %v3341 = vshrl.u32 %v3287, 16
        %v3343 = vrot.slane %v3341, 1
        %v3344 = vshll.u32 %v3287, 16
        %v3346 = vrot.slane %v3344, 2
        %v3347 = vor.u32 %v3343, %v3346
        %v3349 = vshrl.u32 %v3289, 16
        %v3351 = vrot.slane %v3349, 1
        %v3352 = vshll.u32 %v3289, 16
        %v3354 = vrot.slane %v3352, 2
        %v3355 = vor.u32 %v3351, %v3354
        %v3356 = vsel %vm1898, %v3347, %v3355
        %v3391 = vunpack.c.l.b16 %v3291
        %v3392 = vunpack.c.h.b16 %v3291
        %v3393 = vunpack.c.l.b16 %v3292
        %v3394 = vunpack.c.h.b16 %v3292
        %v3395 = vunpack.c.l.b16 %v3293
        %v3396 = vunpack.c.h.b16 %v3293
        %v3397 = vunpack.c.l.b16 %v3294
        %v3398 = vunpack.c.h.b16 %v3294
        %v3399 = vunpack.c.l.b16 %v3295
        %v3400 = vunpack.c.h.b16 %v3295
        %v3401 = vunpack.c.l.b16 %v3296
        %v3402 = vunpack.c.h.b16 %v3296
        %v3403 = vunpack.c.l.b16 %v3297
        %v3404 = vunpack.c.h.b16 %v3297
        %v3405 = vunpack.c.l.b16 %v3298
        %v3406 = vunpack.c.h.b16 %v3298
        %v3407 = vunpack.c.l.b16 %v3299
        %v3408 = vunpack.c.h.b16 %v3299
        %v3409 = vunpack.c.l.b16 %v3300
        %v3410 = vunpack.c.h.b16 %v3300
        %v3411 = vunpack.c.l.b16 %v3301
        %v3412 = vunpack.c.h.b16 %v3301
        %v3413 = vunpack.c.l.b16 %v3302
        %v3414 = vunpack.c.h.b16 %v3302
        %v3415 = vunpack.c.l.b16 %v3303
        %v3416 = vunpack.c.h.b16 %v3303
        %v3417 = vunpack.c.l.b16 %v3304
        %v3418 = vunpack.c.h.b16 %v3304
        %v3419 = vunpack.c.l.b16 %v3305
        %v3420 = vunpack.c.h.b16 %v3305
        %v3421 = vunpack.c.l.b16 %v3306
        %v3422 = vunpack.c.h.b16 %v3306
        %v3423 = vunpack.c.l.b16 %v3307
        %v3424 = vunpack.c.h.b16 %v3307
        %v3425 = vunpack.c.l.b16 %v3308
        %v3426 = vunpack.c.h.b16 %v3308
        %v3427 = vunpack.c.l.b16 %v3309
        %v3428 = vunpack.c.h.b16 %v3309
        %v3429 = vunpack.c.l.b16 %v3310
        %v3430 = vunpack.c.h.b16 %v3310
        %v3431 = vunpack.c.l.b16 %v3311
        %v3432 = vunpack.c.h.b16 %v3311
        %v3433 = vunpack.c.l.b16 %v3312
        %v3434 = vunpack.c.h.b16 %v3312
        %v3435 = vunpack.c.l.b16 %v3313
        %v3436 = vunpack.c.h.b16 %v3313
        %v3437 = vunpack.c.l.b16 %v3314
        %v3438 = vunpack.c.h.b16 %v3314
        %v3439 = vunpack.c.l.b16 %v3315
        %v3440 = vunpack.c.h.b16 %v3315
        %v3441 = vunpack.c.l.b16 %v3316
        %v3442 = vunpack.c.h.b16 %v3316
        %v3443 = vunpack.c.l.b16 %v3317
        %v3444 = vunpack.c.h.b16 %v3317
        %v3445 = vunpack.c.l.b16 %v3318
        %v3446 = vunpack.c.h.b16 %v3318
        %v3447 = vunpack.c.l.b16 %v3319
        %v3448 = vunpack.c.h.b16 %v3319
        %v3449 = vunpack.c.l.b16 %v3320
        %v3450 = vunpack.c.h.b16 %v3320
        %v3451 = vunpack.c.l.b16 %v3321
        %v3452 = vunpack.c.h.b16 %v3321
        %v3453 = vunpack.c.l.b16 %v3322
        %v3454 = vunpack.c.h.b16 %v3322
        %v3455 = vpack.c.b16 %v3393, %v3391
        %v3456 = vpack.c.b16 %v3394, %v3392
        %v3457 = vpack.c.b16 %v3397, %v3395
        %v3458 = vpack.c.b16 %v3398, %v3396
        %v3459 = vpack.c.b16 %v3401, %v3399
        %v3460 = vpack.c.b16 %v3402, %v3400
        %v3461 = vpack.c.b16 %v3405, %v3403
        %v3462 = vpack.c.b16 %v3406, %v3404
        %v3463 = vpack.c.b16 %v3409, %v3407
        %v3464 = vpack.c.b16 %v3410, %v3408
        %v3465 = vpack.c.b16 %v3413, %v3411
        %v3466 = vpack.c.b16 %v3414, %v3412
        %v3467 = vpack.c.b16 %v3417, %v3415
        %v3468 = vpack.c.b16 %v3418, %v3416
        %v3469 = vpack.c.b16 %v3421, %v3419
        %v3470 = vpack.c.b16 %v3422, %v3420
        %v3471 = vpack.c.b16 %v3425, %v3423
        %v3472 = vpack.c.b16 %v3426, %v3424
        %v3473 = vpack.c.b16 %v3429, %v3427
        %v3474 = vpack.c.b16 %v3430, %v3428
        %v3475 = vpack.c.b16 %v3433, %v3431
        %v3476 = vpack.c.b16 %v3434, %v3432
        %v3477 = vpack.c.b16 %v3437, %v3435
        %v3478 = vpack.c.b16 %v3438, %v3436
        %v3479 = vpack.c.b16 %v3441, %v3439
        %v3480 = vpack.c.b16 %v3442, %v3440
        %v3481 = vpack.c.b16 %v3445, %v3443
        %v3482 = vpack.c.b16 %v3446, %v3444
        %v3483 = vpack.c.b16 %v3449, %v3447
        %v3484 = vpack.c.b16 %v3450, %v3448
        %v3485 = vpack.c.b16 %v3453, %v3451
        %v3486 = vpack.c.b16 %v3454, %v3452
        %3519 = vmatprep.subr.bf16.mxu0 %v3470
        %3520 = vmatpush1.bf16.msra.mxu0 %v3469
        %3521 = vmatprep.subr.bf16.mxu0 %v3468
        %3522 = vmatpush1.bf16.msra.mxu0 %v3467
        %3523 = vmatprep.subr.bf16.mxu0 %v3466
        %3524 = vmatpush1.bf16.msra.mxu0 %v3465
        %3525 = vmatprep.subr.bf16.mxu0 %v3464
        %3526 = vmatpush1.bf16.msra.mxu0 %v3463
        %3527 = vmatprep.subr.bf16.mxu0 %v3462
        %3528 = vmatpush1.bf16.msra.mxu0 %v3461
        %3529 = vmatprep.subr.bf16.mxu0 %v3460
        %3530 = vmatpush1.bf16.msra.mxu0 %v3459
        %3531 = vmatprep.subr.bf16.mxu0 %v3458
        %3532 = vmatpush1.bf16.msra.mxu0 %v3457
        %3533 = vmatprep.subr.bf16.mxu0 %v3456
        %3534 = vmatpush1.bf16.msra.mxu0 %v3455
        %3535 = vmatprep.subr.bf16.mxu0 %v3486
        %3536 = vmatpush2.bf16.msra.mxu0 %v3485
        %3537 = vmatprep.subr.bf16.mxu0 %v3484
        %3538 = vmatpush2.bf16.msra.mxu0 %v3483
        %3539 = vmatprep.subr.bf16.mxu0 %v3482
        %3540 = vmatpush2.bf16.msra.mxu0 %v3481
        %3541 = vmatprep.subr.bf16.mxu0 %v3480
        %3542 = vmatpush2.bf16.msra.mxu0 %v3479
        %3543 = vmatprep.subr.bf16.mxu0 %v3478
        %3544 = vmatpush2.bf16.msra.mxu0 %v3477
        %3545 = vmatprep.subr.bf16.mxu0 %v3476
        %3546 = vmatpush2.bf16.msra.mxu0 %v3475
        %3547 = vmatprep.subr.bf16.mxu0 %v3474
        %3548 = vmatpush2.bf16.msra.mxu0 %v3473
        %3549 = vmatprep.subr.bf16.mxu0 %v3472
        %3550 = vmatpush2.bf16.msra.mxu0 %v3471
        %3551 = vmatprep.mubr.bf16.mxu0 %v3356
        %3552 = vmatmul.mubr.bf16.gmra.mxu0 %v3339
        %v3553 = vpop.f32.mrf.mxu0
        %v3554 = vadd.f32 0.0, %v3553
        %v3555 = vpop.f32.mrf.mxu0
        %v3556 = vadd.f32 0.0, %v3555
        %v3557 = vpop.f32.mrf.mxu0
        %v3558 = vadd.f32 0.0, %v3557
        %v3559 = vpop.f32.mrf.mxu0
        %v3560 = vadd.f32 0.0, %v3559
        %3561 = vdwg.mxu0
        %v3562 = vadd.f32 %v3272, %v3554
        %v3563 = vadd.f32 %v3273, %v3556
        %v3564 = vadd.f32 %v3274, %v3558
        %v3565 = vadd.f32 %v3275, %v3560
        %v3566 = vld [vmem:[#allocation2 + $0x10] sm:$0xf0]
        %v3567 = vld [vmem:[#allocation2 + $0x18] sm:$0xf0]
        %v3568 = vld [vmem:[#allocation2 + $0x30] sm:$0xf]
        %v3569 = vld [vmem:[#allocation2 + $0x38] sm:$0xf]
        %v3570 = vpack.c.bf16 %v2988, %v3566
        %v3571 = vpack.c.bf16 %v2989, %v3567
        %v3572 = vpack.c.bf16 %v3568, %v3568
        %v3573 = vpack.c.bf16 %v3569, %v3569
        %s3574 = scalar_lea.vmem [#allocation13], 1792
        %v3575 = vld [vmem:[%s3574] sm:$0xff]
        %v3576 = vld [vmem:[%s3574 + $0x8] sm:$0xff]
        %v3577 = vld [vmem:[%s3574 + $0x10] sm:$0xff]
        %v3578 = vld [vmem:[%s3574 + $0x18] sm:$0xff]
        %v3579 = vld [vmem:[%s3574 + $0x20] sm:$0xff]
        %v3580 = vld [vmem:[%s3574 + $0x28] sm:$0xff]
        %v3581 = vld [vmem:[%s3574 + $0x30] sm:$0xff]
        %v3582 = vld [vmem:[%s3574 + $0x38] sm:$0xff]
        %v3583 = vld [vmem:[%s3574 + $0x40] sm:$0xff]
        %v3584 = vld [vmem:[%s3574 + $0x48] sm:$0xff]
        %v3585 = vld [vmem:[%s3574 + $0x50] sm:$0xff]
        %v3586 = vld [vmem:[%s3574 + $0x58] sm:$0xff]
        %v3587 = vld [vmem:[%s3574 + $0x60] sm:$0xff]
        %v3588 = vld [vmem:[%s3574 + $0x68] sm:$0xff]
        %v3589 = vld [vmem:[%s3574 + $0x70] sm:$0xff]
        %v3590 = vld [vmem:[%s3574 + $0x78] sm:$0xff]
        %v3591 = vld [vmem:[%s3574 + $0x80] sm:$0xff]
        %v3592 = vld [vmem:[%s3574 + $0x88] sm:$0xff]
        %v3593 = vld [vmem:[%s3574 + $0x90] sm:$0xff]
        %v3594 = vld [vmem:[%s3574 + $0x98] sm:$0xff]
        %v3595 = vld [vmem:[%s3574 + $0xa0] sm:$0xff]
        %v3596 = vld [vmem:[%s3574 + $0xa8] sm:$0xff]
        %v3597 = vld [vmem:[%s3574 + $0xb0] sm:$0xff]
        %v3598 = vld [vmem:[%s3574 + $0xb8] sm:$0xff]
        %v3599 = vld [vmem:[%s3574 + $0xc0] sm:$0xff]
        %v3600 = vld [vmem:[%s3574 + $0xc8] sm:$0xff]
        %v3601 = vld [vmem:[%s3574 + $0xd0] sm:$0xff]
        %v3602 = vld [vmem:[%s3574 + $0xd8] sm:$0xff]
        %v3603 = vld [vmem:[%s3574 + $0xe0] sm:$0xff]
        %v3604 = vld [vmem:[%s3574 + $0xe8] sm:$0xff]
        %v3605 = vld [vmem:[%s3574 + $0xf0] sm:$0xff]
        %v3606 = vld [vmem:[%s3574 + $0xf8] sm:$0xff]
        %v3611 = vrot.slane %v3570, 2
        %v3612 = vrot.slane %v3572, 2
        %v3613 = vsel %vm1686, %v3611, %v3612
        %v3614 = vrot.slane %v3571, 2
        %v3615 = vrot.slane %v3573, 2
        %v3616 = vsel %vm1686, %v3614, %v3615
        %v3651 = vunpack.c.l.b16 %v3575
        %v3652 = vunpack.c.h.b16 %v3575
        %v3653 = vunpack.c.l.b16 %v3576
        %v3654 = vunpack.c.h.b16 %v3576
        %v3655 = vunpack.c.l.b16 %v3577
        %v3656 = vunpack.c.h.b16 %v3577
        %v3657 = vunpack.c.l.b16 %v3578
        %v3658 = vunpack.c.h.b16 %v3578
        %v3659 = vunpack.c.l.b16 %v3579
        %v3660 = vunpack.c.h.b16 %v3579
        %v3661 = vunpack.c.l.b16 %v3580
        %v3662 = vunpack.c.h.b16 %v3580
        %v3663 = vunpack.c.l.b16 %v3581
        %v3664 = vunpack.c.h.b16 %v3581
        %v3665 = vunpack.c.l.b16 %v3582
        %v3666 = vunpack.c.h.b16 %v3582
        %v3667 = vunpack.c.l.b16 %v3583
        %v3668 = vunpack.c.h.b16 %v3583
        %v3669 = vunpack.c.l.b16 %v3584
        %v3670 = vunpack.c.h.b16 %v3584
        %v3671 = vunpack.c.l.b16 %v3585
        %v3672 = vunpack.c.h.b16 %v3585
        %v3673 = vunpack.c.l.b16 %v3586
        %v3674 = vunpack.c.h.b16 %v3586
        %v3675 = vunpack.c.l.b16 %v3587
        %v3676 = vunpack.c.h.b16 %v3587
        %v3677 = vunpack.c.l.b16 %v3588
        %v3678 = vunpack.c.h.b16 %v3588
        %v3679 = vunpack.c.l.b16 %v3589
        %v3680 = vunpack.c.h.b16 %v3589
        %v3681 = vunpack.c.l.b16 %v3590
        %v3682 = vunpack.c.h.b16 %v3590
        %v3683 = vunpack.c.l.b16 %v3591
        %v3684 = vunpack.c.h.b16 %v3591
        %v3685 = vunpack.c.l.b16 %v3592
        %v3686 = vunpack.c.h.b16 %v3592
        %v3687 = vunpack.c.l.b16 %v3593
        %v3688 = vunpack.c.h.b16 %v3593
        %v3689 = vunpack.c.l.b16 %v3594
        %v3690 = vunpack.c.h.b16 %v3594
        %v3691 = vunpack.c.l.b16 %v3595
        %v3692 = vunpack.c.h.b16 %v3595
        %v3693 = vunpack.c.l.b16 %v3596
        %v3694 = vunpack.c.h.b16 %v3596
        %v3695 = vunpack.c.l.b16 %v3597
        %v3696 = vunpack.c.h.b16 %v3597
        %v3697 = vunpack.c.l.b16 %v3598
        %v3698 = vunpack.c.h.b16 %v3598
        %v3699 = vunpack.c.l.b16 %v3599
        %v3700 = vunpack.c.h.b16 %v3599
        %v3701 = vunpack.c.l.b16 %v3600
        %v3702 = vunpack.c.h.b16 %v3600
        %v3703 = vunpack.c.l.b16 %v3601
        %v3704 = vunpack.c.h.b16 %v3601
        %v3705 = vunpack.c.l.b16 %v3602
        %v3706 = vunpack.c.h.b16 %v3602
        %v3707 = vunpack.c.l.b16 %v3603
        %v3708 = vunpack.c.h.b16 %v3603
        %v3709 = vunpack.c.l.b16 %v3604
        %v3710 = vunpack.c.h.b16 %v3604
        %v3711 = vunpack.c.l.b16 %v3605
        %v3712 = vunpack.c.h.b16 %v3605
        %v3713 = vunpack.c.l.b16 %v3606
        %v3714 = vunpack.c.h.b16 %v3606
        %v3715 = vpack.c.b16 %v3653, %v3651
        %v3716 = vpack.c.b16 %v3654, %v3652
        %v3717 = vpack.c.b16 %v3657, %v3655
        %v3718 = vpack.c.b16 %v3658, %v3656
        %v3719 = vpack.c.b16 %v3661, %v3659
        %v3720 = vpack.c.b16 %v3662, %v3660
        %v3721 = vpack.c.b16 %v3665, %v3663
        %v3722 = vpack.c.b16 %v3666, %v3664
        %v3723 = vpack.c.b16 %v3669, %v3667
        %v3724 = vpack.c.b16 %v3670, %v3668
        %v3725 = vpack.c.b16 %v3673, %v3671
        %v3726 = vpack.c.b16 %v3674, %v3672
        %v3727 = vpack.c.b16 %v3677, %v3675
        %v3728 = vpack.c.b16 %v3678, %v3676
        %v3729 = vpack.c.b16 %v3681, %v3679
        %v3730 = vpack.c.b16 %v3682, %v3680
        %v3731 = vpack.c.b16 %v3685, %v3683
        %v3732 = vpack.c.b16 %v3686, %v3684
        %v3733 = vpack.c.b16 %v3689, %v3687
        %v3734 = vpack.c.b16 %v3690, %v3688
        %v3735 = vpack.c.b16 %v3693, %v3691
        %v3736 = vpack.c.b16 %v3694, %v3692
        %v3737 = vpack.c.b16 %v3697, %v3695
        %v3738 = vpack.c.b16 %v3698, %v3696
        %v3739 = vpack.c.b16 %v3701, %v3699
        %v3740 = vpack.c.b16 %v3702, %v3700
        %v3741 = vpack.c.b16 %v3705, %v3703
        %v3742 = vpack.c.b16 %v3706, %v3704
        %v3743 = vpack.c.b16 %v3709, %v3707
        %v3744 = vpack.c.b16 %v3710, %v3708
        %v3745 = vpack.c.b16 %v3713, %v3711
        %v3746 = vpack.c.b16 %v3714, %v3712
        %3779 = vmatprep.subr.bf16.mxu0 %v3730
        %3780 = vmatpush1.bf16.msra.mxu0 %v3729
        %3781 = vmatprep.subr.bf16.mxu0 %v3728
        %3782 = vmatpush1.bf16.msra.mxu0 %v3727
        %3783 = vmatprep.subr.bf16.mxu0 %v3726
        %3784 = vmatpush1.bf16.msra.mxu0 %v3725
        %3785 = vmatprep.subr.bf16.mxu0 %v3724
        %3786 = vmatpush1.bf16.msra.mxu0 %v3723
        %3787 = vmatprep.subr.bf16.mxu0 %v3722
        %3788 = vmatpush1.bf16.msra.mxu0 %v3721
        %3789 = vmatprep.subr.bf16.mxu0 %v3720
        %3790 = vmatpush1.bf16.msra.mxu0 %v3719
        %3791 = vmatprep.subr.bf16.mxu0 %v3718
        %3792 = vmatpush1.bf16.msra.mxu0 %v3717
        %3793 = vmatprep.subr.bf16.mxu0 %v3716
        %3794 = vmatpush1.bf16.msra.mxu0 %v3715
        %3795 = vmatprep.subr.bf16.mxu0 %v3746
        %3796 = vmatpush2.bf16.msra.mxu0 %v3745
        %3797 = vmatprep.subr.bf16.mxu0 %v3744
        %3798 = vmatpush2.bf16.msra.mxu0 %v3743
        %3799 = vmatprep.subr.bf16.mxu0 %v3742
        %3800 = vmatpush2.bf16.msra.mxu0 %v3741
        %3801 = vmatprep.subr.bf16.mxu0 %v3740
        %3802 = vmatpush2.bf16.msra.mxu0 %v3739
        %3803 = vmatprep.subr.bf16.mxu0 %v3738
        %3804 = vmatpush2.bf16.msra.mxu0 %v3737
        %3805 = vmatprep.subr.bf16.mxu0 %v3736
        %3806 = vmatpush2.bf16.msra.mxu0 %v3735
        %3807 = vmatprep.subr.bf16.mxu0 %v3734
        %3808 = vmatpush2.bf16.msra.mxu0 %v3733
        %3809 = vmatprep.subr.bf16.mxu0 %v3732
        %3810 = vmatpush2.bf16.msra.mxu0 %v3731
        %3811 = vmatprep.mubr.bf16.mxu0 %v3616
        %3812 = vmatmul.mubr.bf16.gmra.mxu0 %v3613
        %v3813 = vpop.f32.mrf.mxu0
        %v3814 = vadd.f32 0.0, %v3813
        %v3815 = vpop.f32.mrf.mxu0
        %v3816 = vadd.f32 0.0, %v3815
        %v3817 = vpop.f32.mrf.mxu0
        %v3818 = vadd.f32 0.0, %v3817
        %v3819 = vpop.f32.mrf.mxu0
        %v3820 = vadd.f32 0.0, %v3819
        %3821 = vdwg.mxu0
        %v3822 = vadd.f32 %v3562, %v3814
        %v3823 = vadd.f32 %v3563, %v3816
        %v3824 = vadd.f32 %v3564, %v3818
        %v3825 = vadd.f32 %v3565, %v3820
        %v3826 = vld [vmem:[#allocation2 + $0x10] sm:$0xe0]
        %v3827 = vld [vmem:[#allocation2 + $0x18] sm:$0xe0]
        %v3828 = vld [vmem:[#allocation2 + $0x30] sm:$0x1f]
        %v3829 = vld [vmem:[#allocation2 + $0x38] sm:$0x1f]
        %v3830 = vmul.f32 %v3826, %v2151
        %v3831 = vmul.f32 %v3827, %v2151
        %v3832 = vmul.f32 %v2988, %v2153
        %v3833 = vmul.f32 %v2989, %v2153
        %v3834 = vmul.f32 %v3828, %v2152
        %v3835 = vmul.f32 %v3829, %v2152
        %v3836 = vpack.c.bf16 %v3832, %v3830
        %v3837 = vpack.c.bf16 %v3833, %v3831
        %v3838 = vpack.c.bf16 %v3834, %v3834
        %v3839 = vpack.c.bf16 %v3835, %v3835
        %s3840 = scalar_lea.vmem [#allocation13], 2048
        %v3841 = vld [vmem:[%s3840] sm:$0xff]
        %v3842 = vld [vmem:[%s3840 + $0x8] sm:$0xff]
        %v3843 = vld [vmem:[%s3840 + $0x10] sm:$0xff]
        %v3844 = vld [vmem:[%s3840 + $0x18] sm:$0xff]
        %v3845 = vld [vmem:[%s3840 + $0x20] sm:$0xff]
        %v3846 = vld [vmem:[%s3840 + $0x28] sm:$0xff]
        %v3847 = vld [vmem:[%s3840 + $0x30] sm:$0xff]
        %v3848 = vld [vmem:[%s3840 + $0x38] sm:$0xff]
        %v3849 = vld [vmem:[%s3840 + $0x40] sm:$0xff]
        %v3850 = vld [vmem:[%s3840 + $0x48] sm:$0xff]
        %v3851 = vld [vmem:[%s3840 + $0x50] sm:$0xff]
        %v3852 = vld [vmem:[%s3840 + $0x58] sm:$0xff]
        %v3853 = vld [vmem:[%s3840 + $0x60] sm:$0xff]
        %v3854 = vld [vmem:[%s3840 + $0x68] sm:$0xff]
        %v3855 = vld [vmem:[%s3840 + $0x70] sm:$0xff]
        %v3856 = vld [vmem:[%s3840 + $0x78] sm:$0xff]
        %v3857 = vld [vmem:[%s3840 + $0x80] sm:$0xff]
        %v3858 = vld [vmem:[%s3840 + $0x88] sm:$0xff]
        %v3859 = vld [vmem:[%s3840 + $0x90] sm:$0xff]
        %v3860 = vld [vmem:[%s3840 + $0x98] sm:$0xff]
        %v3861 = vld [vmem:[%s3840 + $0xa0] sm:$0xff]
        %v3862 = vld [vmem:[%s3840 + $0xa8] sm:$0xff]
        %v3863 = vld [vmem:[%s3840 + $0xb0] sm:$0xff]
        %v3864 = vld [vmem:[%s3840 + $0xb8] sm:$0xff]
        %v3865 = vld [vmem:[%s3840 + $0xc0] sm:$0xff]
        %v3866 = vld [vmem:[%s3840 + $0xc8] sm:$0xff]
        %v3867 = vld [vmem:[%s3840 + $0xd0] sm:$0xff]
        %v3868 = vld [vmem:[%s3840 + $0xd8] sm:$0xff]
        %v3869 = vld [vmem:[%s3840 + $0xe0] sm:$0xff]
        %v3870 = vld [vmem:[%s3840 + $0xe8] sm:$0xff]
        %v3871 = vld [vmem:[%s3840 + $0xf0] sm:$0xff]
        %v3872 = vld [vmem:[%s3840 + $0xf8] sm:$0xff]
        %v3874 = vshrl.u32 %v3836, 16
        %v3876 = vrot.slane %v3874, 2
        %v3877 = vshll.u32 %v3836, 16
        %v3879 = vrot.slane %v3877, 3
        %v3880 = vor.u32 %v3876, %v3879
        %v3882 = vshrl.u32 %v3838, 16
        %v3884 = vrot.slane %v3882, 2
        %v3885 = vshll.u32 %v3838, 16
        %v3887 = vrot.slane %v3885, 3
        %v3888 = vor.u32 %v3884, %v3887
        %v3889 = vsel %vm2200, %v3880, %v3888
        %v3891 = vshrl.u32 %v3837, 16
        %v3893 = vrot.slane %v3891, 2
        %v3894 = vshll.u32 %v3837, 16
        %v3896 = vrot.slane %v3894, 3
        %v3897 = vor.u32 %v3893, %v3896
        %v3899 = vshrl.u32 %v3839, 16
        %v3901 = vrot.slane %v3899, 2
        %v3902 = vshll.u32 %v3839, 16
        %v3904 = vrot.slane %v3902, 3
        %v3905 = vor.u32 %v3901, %v3904
        %v3906 = vsel %vm2200, %v3897, %v3905
        %v3941 = vunpack.c.l.b16 %v3841
        %v3942 = vunpack.c.h.b16 %v3841
        %v3943 = vunpack.c.l.b16 %v3842
        %v3944 = vunpack.c.h.b16 %v3842
        %v3945 = vunpack.c.l.b16 %v3843
        %v3946 = vunpack.c.h.b16 %v3843
        %v3947 = vunpack.c.l.b16 %v3844
        %v3948 = vunpack.c.h.b16 %v3844
        %v3949 = vunpack.c.l.b16 %v3845
        %v3950 = vunpack.c.h.b16 %v3845
        %v3951 = vunpack.c.l.b16 %v3846
        %v3952 = vunpack.c.h.b16 %v3846
        %v3953 = vunpack.c.l.b16 %v3847
        %v3954 = vunpack.c.h.b16 %v3847
        %v3955 = vunpack.c.l.b16 %v3848
        %v3956 = vunpack.c.h.b16 %v3848
        %v3957 = vunpack.c.l.b16 %v3849
        %v3958 = vunpack.c.h.b16 %v3849
        %v3959 = vunpack.c.l.b16 %v3850
        %v3960 = vunpack.c.h.b16 %v3850
        %v3961 = vunpack.c.l.b16 %v3851
        %v3962 = vunpack.c.h.b16 %v3851
        %v3963 = vunpack.c.l.b16 %v3852
        %v3964 = vunpack.c.h.b16 %v3852
        %v3965 = vunpack.c.l.b16 %v3853
        %v3966 = vunpack.c.h.b16 %v3853
        %v3967 = vunpack.c.l.b16 %v3854
        %v3968 = vunpack.c.h.b16 %v3854
        %v3969 = vunpack.c.l.b16 %v3855
        %v3970 = vunpack.c.h.b16 %v3855
        %v3971 = vunpack.c.l.b16 %v3856
        %v3972 = vunpack.c.h.b16 %v3856
        %v3973 = vunpack.c.l.b16 %v3857
        %v3974 = vunpack.c.h.b16 %v3857
        %v3975 = vunpack.c.l.b16 %v3858
        %v3976 = vunpack.c.h.b16 %v3858
        %v3977 = vunpack.c.l.b16 %v3859
        %v3978 = vunpack.c.h.b16 %v3859
        %v3979 = vunpack.c.l.b16 %v3860
        %v3980 = vunpack.c.h.b16 %v3860
        %v3981 = vunpack.c.l.b16 %v3861
        %v3982 = vunpack.c.h.b16 %v3861
        %v3983 = vunpack.c.l.b16 %v3862
        %v3984 = vunpack.c.h.b16 %v3862
        %v3985 = vunpack.c.l.b16 %v3863
        %v3986 = vunpack.c.h.b16 %v3863
        %v3987 = vunpack.c.l.b16 %v3864
        %v3988 = vunpack.c.h.b16 %v3864
        %v3989 = vunpack.c.l.b16 %v3865
        %v3990 = vunpack.c.h.b16 %v3865
        %v3991 = vunpack.c.l.b16 %v3866
        %v3992 = vunpack.c.h.b16 %v3866
        %v3993 = vunpack.c.l.b16 %v3867
        %v3994 = vunpack.c.h.b16 %v3867
        %v3995 = vunpack.c.l.b16 %v3868
        %v3996 = vunpack.c.h.b16 %v3868
        %v3997 = vunpack.c.l.b16 %v3869
        %v3998 = vunpack.c.h.b16 %v3869
        %v3999 = vunpack.c.l.b16 %v3870
        %v4000 = vunpack.c.h.b16 %v3870
        %v4001 = vunpack.c.l.b16 %v3871
        %v4002 = vunpack.c.h.b16 %v3871
        %v4003 = vunpack.c.l.b16 %v3872
        %v4004 = vunpack.c.h.b16 %v3872
        %v4005 = vpack.c.b16 %v3943, %v3941
        %v4006 = vpack.c.b16 %v3944, %v3942
        %v4007 = vpack.c.b16 %v3947, %v3945
        %v4008 = vpack.c.b16 %v3948, %v3946
        %v4009 = vpack.c.b16 %v3951, %v3949
        %v4010 = vpack.c.b16 %v3952, %v3950
        %v4011 = vpack.c.b16 %v3955, %v3953
        %v4012 = vpack.c.b16 %v3956, %v3954
        %v4013 = vpack.c.b16 %v3959, %v3957
        %v4014 = vpack.c.b16 %v3960, %v3958
        %v4015 = vpack.c.b16 %v3963, %v3961
        %v4016 = vpack.c.b16 %v3964, %v3962
        %v4017 = vpack.c.b16 %v3967, %v3965
        %v4018 = vpack.c.b16 %v3968, %v3966
        %v4019 = vpack.c.b16 %v3971, %v3969
        %v4020 = vpack.c.b16 %v3972, %v3970
        %v4021 = vpack.c.b16 %v3975, %v3973
        %v4022 = vpack.c.b16 %v3976, %v3974
        %v4023 = vpack.c.b16 %v3979, %v3977
        %v4024 = vpack.c.b16 %v3980, %v3978
        %v4025 = vpack.c.b16 %v3983, %v3981
        %v4026 = vpack.c.b16 %v3984, %v3982
        %v4027 = vpack.c.b16 %v3987, %v3985
        %v4028 = vpack.c.b16 %v3988, %v3986
        %v4029 = vpack.c.b16 %v3991, %v3989
        %v4030 = vpack.c.b16 %v3992, %v3990
        %v4031 = vpack.c.b16 %v3995, %v3993
        %v4032 = vpack.c.b16 %v3996, %v3994
        %v4033 = vpack.c.b16 %v3999, %v3997
        %v4034 = vpack.c.b16 %v4000, %v3998
        %v4035 = vpack.c.b16 %v4003, %v4001
        %v4036 = vpack.c.b16 %v4004, %v4002
        %4069 = vmatprep.subr.bf16.mxu0 %v4020
        %4070 = vmatpush1.bf16.msra.mxu0 %v4019
        %4071 = vmatprep.subr.bf16.mxu0 %v4018
        %4072 = vmatpush1.bf16.msra.mxu0 %v4017
        %4073 = vmatprep.subr.bf16.mxu0 %v4016
        %4074 = vmatpush1.bf16.msra.mxu0 %v4015
        %4075 = vmatprep.subr.bf16.mxu0 %v4014
        %4076 = vmatpush1.bf16.msra.mxu0 %v4013
        %4077 = vmatprep.subr.bf16.mxu0 %v4012
        %4078 = vmatpush1.bf16.msra.mxu0 %v4011
        %4079 = vmatprep.subr.bf16.mxu0 %v4010
        %4080 = vmatpush1.bf16.msra.mxu0 %v4009
        %4081 = vmatprep.subr.bf16.mxu0 %v4008
        %4082 = vmatpush1.bf16.msra.mxu0 %v4007
        %4083 = vmatprep.subr.bf16.mxu0 %v4006
        %4084 = vmatpush1.bf16.msra.mxu0 %v4005
        %4085 = vmatprep.subr.bf16.mxu0 %v4036
        %4086 = vmatpush2.bf16.msra.mxu0 %v4035
        %4087 = vmatprep.subr.bf16.mxu0 %v4034
        %4088 = vmatpush2.bf16.msra.mxu0 %v4033
        %4089 = vmatprep.subr.bf16.mxu0 %v4032
        %4090 = vmatpush2.bf16.msra.mxu0 %v4031
        %4091 = vmatprep.subr.bf16.mxu0 %v4030
        %4092 = vmatpush2.bf16.msra.mxu0 %v4029
        %4093 = vmatprep.subr.bf16.mxu0 %v4028
        %4094 = vmatpush2.bf16.msra.mxu0 %v4027
        %4095 = vmatprep.subr.bf16.mxu0 %v4026
        %4096 = vmatpush2.bf16.msra.mxu0 %v4025
        %4097 = vmatprep.subr.bf16.mxu0 %v4024
        %4098 = vmatpush2.bf16.msra.mxu0 %v4023
        %4099 = vmatprep.subr.bf16.mxu0 %v4022
        %4100 = vmatpush2.bf16.msra.mxu0 %v4021
        %4101 = vmatprep.mubr.bf16.mxu0 %v3906
        %4102 = vmatmul.mubr.bf16.gmra.mxu0 %v3889
        %v4103 = vpop.f32.mrf.mxu0
        %v4104 = vadd.f32 0.0, %v4103
        %v4105 = vpop.f32.mrf.mxu0
        %v4106 = vadd.f32 0.0, %v4105
        %v4107 = vpop.f32.mrf.mxu0
        %v4108 = vadd.f32 0.0, %v4107
        %v4109 = vpop.f32.mrf.mxu0
        %v4110 = vadd.f32 0.0, %v4109
        %4111 = vdwg.mxu0
        %v4112 = vadd.f32 %v3822, %v4104
        %v4113 = vadd.f32 %v3823, %v4106
        %v4114 = vadd.f32 %v3824, %v4108
        %v4115 = vadd.f32 %v3825, %v4110
        %v4116 = vld [vmem:[#allocation14] sm:$0x3]
        %v4118 = vlaneseq
        %v4119 = vshrl.u32 %v4118, 7
        %v4120 = vsub.s32 0, %v4119
        %v4121 = vrot.slane %v4116, %v4120
        %v4122 = vlaneseq
        %v4123 = vshrl.u32 %v4122, 7
        %v4124 = vsub.s32 1, %v4123
        %v4125 = vrot.slane %v4116, %v4124
        %v4128 = vadd.f32 %v4112, %v4121
        %v4129 = vadd.f32 %v4113, %v4125
        %v4130 = vadd.f32 %v4114, %v4121
        %v4131 = vadd.f32 %v4115, %v4125
        %v4132 = vmax.f32 %v4128, 0.0
        %v4133 = vmax.f32 %v4129, 0.0
        %v4134 = vmax.f32 %v4130, 0.0
        %v4135 = vmax.f32 %v4131, 0.0
        %4136 = vst [vmem:[%s492] sm:$0xff] %v4132
        %4137 = vst [vmem:[%s492 + $0x8] sm:$0xff] %v4133
        %4138 = vst [vmem:[%s492 + $0x10] sm:$0xff] %v4134
        %4139 = vst [vmem:[%s492 + $0x18] sm:$0xff] %v4135
        %p4140 = scmp.lt.s32.totalorder %s26, 1
        %s4141 = scalar_select %p4140, %s26, 1
        %s4142 = smul.addr %s4141, 4
        %s4143 = smul.addr %s4142, 8
        %s4144 = scalar_lea.vmem %s10, %s4143
        // Predicated region
        $region93: #{backend_forward.3} parent=59 // pred_check
          %p4145 = pneg %p264
        $region94: #{backend_forward.3} parent=59 // pred_check_branch
          %4147 = sbr.rel (%p4145) target = $region96
        $region95: #{backend_forward.3} parent=59 // pred_region
          _
        $region96: #{backend_forward.3} parent=59 // pred_fallthru
          _
      $region60: #{backend_forward.3} parent=5 // pred_fallthru
        _
      %p4148 = scmp.le.s32.totalorder 2, %s21
      // Predicated region
      $region97: #{backend_forward.3} parent=5 // pred_check
        %p4149 = pneg %p4148
      $region98: #{backend_forward.3} parent=5 // pred_check_branch
        %4151 = sbr.rel (%p4149) target = $region100
      $region99: #{backend_forward.3} parent=5 // pred_region
        %s4152 = ssub.s32 %s21, 2
        // Predicated region
        $region101: #{backend_forward.3} parent=99 // pred_check
          %p4153 = pneg %p270
        $region102: #{backend_forward.3} parent=99 // pred_check_branch
          %4155 = sbr.rel (%p4153) target = $region104
        $region103: #{backend_forward.3} parent=99 // pred_region
          %p4156 = scmp.lt.s32.totalorder %s27, 1
          %s4157 = scalar_select %p4156, %s27, 1
          %s4158 = smul.addr %s4157, 4
          %s4159 = smul.addr %s4158, 8
          %s4160 = scalar_lea.vmem %s10, %s4159
        $region104: #{backend_forward.3} parent=99 // pred_fallthru
          _
      $region100: #{backend_forward.3} parent=5 // pred_fallthru
        _
    $region6: #{backend_forward.3} parent=1 // loop_footer
      %s25 = sadd.s32 1, %s21
    $region7: #{backend_forward.3} parent=1 // loop_footer_branch
      %20 = sbr.rel target = $region3
    $region8: #{backend_forward.3} parent=1 // loop_exit
      _
    %4161 = vsyncpa [#allocation4], 1
    %s4162 = scalar_lea.sflag [#allocation4], 1
    %4163 = vsyncpa %s4162, 1
    %4164 = vsyncpa [#allocation6], 1
    %4165 = vsyncpa [#allocation9], 1
    %4166 = vsyncpa [#allocation12], 1
    %4167 = vsyncpa [#allocation15], 1

// kernel: backend_forward.4
$region0: #{backend_forward.4}
  #allocation0 [shape = 'u32[]', space=smem, size = 0x4, offset = 0x4, fixed_abs, tag = 'smem constant byte address 0x4 - core index']
  #allocation1 [shape = 'u32[144,128]{1,0:T(1,128)}', space=vmem, size = 0x12000, scoped, tag = 'internal scratch']
  #allocation2 [shape = 'f32[96,128]{1,0:T(8,128)}', space=vmem, size = 0xc000, scoped, tag = 'scratch operand']
  %s0 = inlined_call_operand.vmem [shape: f32[2,16,256], index: 0, kind: input, shape index: {}]
  %s1 = inlined_call_operand.vmem [shape: f32[2,64,256], index: 1, kind: input, shape index: {}]
  %s2 = inlined_call_operand.vmem [shape: f32[64,16], index: 2, kind: input, shape index: {}]
  %s3 = inlined_call_operand.vmem [shape: f32[64,1], index: 3, kind: input, shape index: {}]
  %s4 = inlined_call_operand.vmem [shape: f32[64,1], index: 4, kind: input, shape index: {}]
  %s5 = inlined_call_operand.vmem [shape: bf16[256,128], index: 5, kind: input, shape index: {}]
  %s6 = inlined_call_operand.vmem [shape: bf16[256,128], index: 6, kind: input, shape index: {}]
  %s7 = inlined_call_operand.vmem [shape: f32[1,128], index: 7, kind: input, shape index: {}]
  %s8 = inlined_call_operand.vmem [shape: bf16[9,128,128], index: 8, kind: input, shape index: {}]
  %s9 = inlined_call_operand.vmem [shape: f32[1,128], index: 9, kind: input, shape index: {}]
  %s10 = inlined_call_operand.vmem [shape: f32[2,64,128], index: 10, kind: output, shape index: {}]
  %s11 = sld [smem:[#allocation0]]
  $region73: #{backend_forward.4} parent=0
    _
  %s13 = ssub.s32 1, %s11
  %s14 = scalar_select 0, %s13, %s11
  loop: start=0, step=1, limit=4
  $region2: #{backend_forward.4} parent=0 // loop_pre_header
    _
  $region3: #{backend_forward.4} parent=0 // loop_header
    %s16 = sphi 0, %s20
    %p17 = scmp.ge.s32.totalorder %s16, 4
    %s26 = sphi 0, %s28
    %s29 = sphi 0, %s26
    %s30 = sphi 0, %s29
    %s46 = sphi 0, %s30
    %s52 = sphi 0, %s54
    %s55 = sphi 0, %s52
    %s56 = sphi 0, %s55
    %s72 = sphi 0, %s56
    %s76 = sphi 0, %s76
    %s78 = sphi 0, %s76
    %s79 = sphi 0, %s78
    %s93 = sphi 0, %s79
    %s97 = sphi 0, %s97
    %s99 = sphi 0, %s97
    %s100 = sphi 0, %s99
    %s114 = sphi 0, %s100
    %s118 = sphi 0, %s118
    %s120 = sphi 0, %s118
    %s121 = sphi 0, %s120
    %s135 = sphi 0, %s121
    %s139 = sphi 0, %s139
    %s141 = sphi 0, %s139
    %s142 = sphi 0, %s141
    %s156 = sphi 0, %s142
    %s160 = sphi 0, %s160
    %s162 = sphi 0, %s160
    %s163 = sphi 0, %s162
    %s177 = sphi 0, %s163
    %s181 = sphi 0, %s181
    %s183 = sphi 0, %s181
    %s184 = sphi 0, %s183
    %s198 = sphi 0, %s184
    %s202 = sphi 0, %s202
    %s204 = sphi 0, %s202
    %s205 = sphi 0, %s204
    %s219 = sphi 0, %s205
    %s223 = sphi 0, %s223
    %s225 = sphi 0, %s223
    %s226 = sphi 0, %s225
    %s240 = sphi 0, %s226
    %s246 = sphi 0, %s248
    %s249 = sphi 0, %s246
    %s250 = sphi 0, %s249
    %s266 = sphi 0, %s250
  $region4: #{backend_forward.4} parent=0 // loop_header_branch
    %19 = sbr.rel (%p17) target = $region8
  $region5: #{backend_forward.4} parent=0 // loop_body
    %s21 = ssub.s32 %s16, 1
    %s22 = ssub.s32 %s16, 2
    %s23 = sadd.s32 %s16, 1
    %s24 = ssub.s32 %s16, %s23
    %p25 = scmp.eq.s32.totalorder %s24, 0
    %s27 = sadd.s32 %s26, 1
    %s28 = scalar_select %p25, %s26, %s27
    %p31 = pneg %p25
    %p32 = scmp.eq.s32.totalorder %s16, 1
    %p33 = por %p31, %p32
    %p34 = scmp.ne.s32.totalorder %s26, %s29
    %p35 = scmp.eq.s32.totalorder %s16, 0
    %p36 = por %p34, %p35
    %p37 = scmp.ne.s32.totalorder %s26, %s29
    %p38 = scmp.eq.s32.totalorder %s21, 1
    %p39 = por %p37, %p38
    %p40 = scmp.ne.s32.totalorder %s29, %s30
    %p41 = scmp.eq.s32.totalorder %s21, 0
    %p42 = por %p40, %p41
    %p43 = scmp.ne.s32.totalorder %s29, %s30
    %p44 = scmp.eq.s32.totalorder %s22, 1
    %p45 = por %p43, %p44
    %p47 = scmp.ne.s32.totalorder %s30, %s46
    %p48 = scmp.eq.s32.totalorder %s22, 0
    %p49 = por %p47, %p48
    %s50 = ssub.s32 %s16, %s23
    %p51 = scmp.eq.s32.totalorder %s50, 0
    %s53 = sadd.s32 %s52, 1
    %s54 = scalar_select %p51, %s52, %s53
    %p57 = pneg %p51
    %p58 = scmp.eq.s32.totalorder %s16, 1
    %p59 = por %p57, %p58
    %p60 = scmp.ne.s32.totalorder %s52, %s55
    %p61 = scmp.eq.s32.totalorder %s16, 0
    %p62 = por %p60, %p61
    %p63 = scmp.ne.s32.totalorder %s52, %s55
    %p64 = scmp.eq.s32.totalorder %s21, 1
    %p65 = por %p63, %p64
    %p66 = scmp.ne.s32.totalorder %s55, %s56
    %p67 = scmp.eq.s32.totalorder %s21, 0
    %p68 = por %p66, %p67
    %p69 = scmp.ne.s32.totalorder %s55, %s56
    %p70 = scmp.eq.s32.totalorder %s22, 1
    %p71 = por %p69, %p70
    %p73 = scmp.ne.s32.totalorder %s56, %s72
    %p74 = scmp.eq.s32.totalorder %s22, 0
    %p75 = por %p73, %p74
    %s77 = sadd.s32 %s76, 1
    %p80 = scmp.eq.s32.totalorder %s16, 1
    %p81 = scmp.ne.s32.totalorder %s76, %s78
    %p82 = scmp.eq.s32.totalorder %s16, 0
    %p83 = por %p81, %p82
    %p84 = scmp.ne.s32.totalorder %s76, %s78
    %p85 = scmp.eq.s32.totalorder %s21, 1
    %p86 = por %p84, %p85
    %p87 = scmp.ne.s32.totalorder %s78, %s79
    %p88 = scmp.eq.s32.totalorder %s21, 0
    %p89 = por %p87, %p88
    %p90 = scmp.ne.s32.totalorder %s78, %s79
    %p91 = scmp.eq.s32.totalorder %s22, 1
    %p92 = por %p90, %p91
    %p94 = scmp.ne.s32.totalorder %s79, %s93
    %p95 = scmp.eq.s32.totalorder %s22, 0
    %p96 = por %p94, %p95
    %s98 = sadd.s32 %s97, 1
    %p101 = scmp.eq.s32.totalorder %s16, 1
    %p102 = scmp.ne.s32.totalorder %s97, %s99
    %p103 = scmp.eq.s32.totalorder %s16, 0
    %p104 = por %p102, %p103
    %p105 = scmp.ne.s32.totalorder %s97, %s99
    %p106 = scmp.eq.s32.totalorder %s21, 1
    %p107 = por %p105, %p106
    %p108 = scmp.ne.s32.totalorder %s99, %s100
    %p109 = scmp.eq.s32.totalorder %s21, 0
    %p110 = por %p108, %p109
    %p111 = scmp.ne.s32.totalorder %s99, %s100
    %p112 = scmp.eq.s32.totalorder %s22, 1
    %p113 = por %p111, %p112
    %p115 = scmp.ne.s32.totalorder %s100, %s114
    %p116 = scmp.eq.s32.totalorder %s22, 0
    %p117 = por %p115, %p116
    %s119 = sadd.s32 %s118, 1
    %p122 = scmp.eq.s32.totalorder %s16, 1
    %p123 = scmp.ne.s32.totalorder %s118, %s120
    %p124 = scmp.eq.s32.totalorder %s16, 0
    %p125 = por %p123, %p124
    %p126 = scmp.ne.s32.totalorder %s118, %s120
    %p127 = scmp.eq.s32.totalorder %s21, 1
    %p128 = por %p126, %p127
    %p129 = scmp.ne.s32.totalorder %s120, %s121
    %p130 = scmp.eq.s32.totalorder %s21, 0
    %p131 = por %p129, %p130
    %p132 = scmp.ne.s32.totalorder %s120, %s121
    %p133 = scmp.eq.s32.totalorder %s22, 1
    %p134 = por %p132, %p133
    %p136 = scmp.ne.s32.totalorder %s121, %s135
    %p137 = scmp.eq.s32.totalorder %s22, 0
    %p138 = por %p136, %p137
    %s140 = sadd.s32 %s139, 1
    %p143 = scmp.eq.s32.totalorder %s16, 1
    %p144 = scmp.ne.s32.totalorder %s139, %s141
    %p145 = scmp.eq.s32.totalorder %s16, 0
    %p146 = por %p144, %p145
    %p147 = scmp.ne.s32.totalorder %s139, %s141
    %p148 = scmp.eq.s32.totalorder %s21, 1
    %p149 = por %p147, %p148
    %p150 = scmp.ne.s32.totalorder %s141, %s142
    %p151 = scmp.eq.s32.totalorder %s21, 0
    %p152 = por %p150, %p151
    %p153 = scmp.ne.s32.totalorder %s141, %s142
    %p154 = scmp.eq.s32.totalorder %s22, 1
    %p155 = por %p153, %p154
    %p157 = scmp.ne.s32.totalorder %s142, %s156
    %p158 = scmp.eq.s32.totalorder %s22, 0
    %p159 = por %p157, %p158
    %s161 = sadd.s32 %s160, 1
    %p164 = scmp.eq.s32.totalorder %s16, 1
    %p165 = scmp.ne.s32.totalorder %s160, %s162
    %p166 = scmp.eq.s32.totalorder %s16, 0
    %p167 = por %p165, %p166
    %p168 = scmp.ne.s32.totalorder %s160, %s162
    %p169 = scmp.eq.s32.totalorder %s21, 1
    %p170 = por %p168, %p169
    %p171 = scmp.ne.s32.totalorder %s162, %s163
    %p172 = scmp.eq.s32.totalorder %s21, 0
    %p173 = por %p171, %p172
    %p174 = scmp.ne.s32.totalorder %s162, %s163
    %p175 = scmp.eq.s32.totalorder %s22, 1
    %p176 = por %p174, %p175
    %p178 = scmp.ne.s32.totalorder %s163, %s177
    %p179 = scmp.eq.s32.totalorder %s22, 0
    %p180 = por %p178, %p179
    %s182 = sadd.s32 %s181, 1
    %p185 = scmp.eq.s32.totalorder %s16, 1
    %p186 = scmp.ne.s32.totalorder %s181, %s183
    %p187 = scmp.eq.s32.totalorder %s16, 0
    %p188 = por %p186, %p187
    %p189 = scmp.ne.s32.totalorder %s181, %s183
    %p190 = scmp.eq.s32.totalorder %s21, 1
    %p191 = por %p189, %p190
    %p192 = scmp.ne.s32.totalorder %s183, %s184
    %p193 = scmp.eq.s32.totalorder %s21, 0
    %p194 = por %p192, %p193
    %p195 = scmp.ne.s32.totalorder %s183, %s184
    %p196 = scmp.eq.s32.totalorder %s22, 1
    %p197 = por %p195, %p196
    %p199 = scmp.ne.s32.totalorder %s184, %s198
    %p200 = scmp.eq.s32.totalorder %s22, 0
    %p201 = por %p199, %p200
    %s203 = sadd.s32 %s202, 1
    %p206 = scmp.eq.s32.totalorder %s16, 1
    %p207 = scmp.ne.s32.totalorder %s202, %s204
    %p208 = scmp.eq.s32.totalorder %s16, 0
    %p209 = por %p207, %p208
    %p210 = scmp.ne.s32.totalorder %s202, %s204
    %p211 = scmp.eq.s32.totalorder %s21, 1
    %p212 = por %p210, %p211
    %p213 = scmp.ne.s32.totalorder %s204, %s205
    %p214 = scmp.eq.s32.totalorder %s21, 0
    %p215 = por %p213, %p214
    %p216 = scmp.ne.s32.totalorder %s204, %s205
    %p217 = scmp.eq.s32.totalorder %s22, 1
    %p218 = por %p216, %p217
    %p220 = scmp.ne.s32.totalorder %s205, %s219
    %p221 = scmp.eq.s32.totalorder %s22, 0
    %p222 = por %p220, %p221
    %s224 = sadd.s32 %s223, 1
    %p227 = scmp.eq.s32.totalorder %s16, 1
    %p228 = scmp.ne.s32.totalorder %s223, %s225
    %p229 = scmp.eq.s32.totalorder %s16, 0
    %p230 = por %p228, %p229
    %p231 = scmp.ne.s32.totalorder %s223, %s225
    %p232 = scmp.eq.s32.totalorder %s21, 1
    %p233 = por %p231, %p232
    %p234 = scmp.ne.s32.totalorder %s225, %s226
    %p235 = scmp.eq.s32.totalorder %s21, 0
    %p236 = por %p234, %p235
    %p237 = scmp.ne.s32.totalorder %s225, %s226
    %p238 = scmp.eq.s32.totalorder %s22, 1
    %p239 = por %p237, %p238
    %p241 = scmp.ne.s32.totalorder %s226, %s240
    %p242 = scmp.eq.s32.totalorder %s22, 0
    %p243 = por %p241, %p242
    %s244 = ssub.s32 %s16, %s23
    %p245 = scmp.eq.s32.totalorder %s244, 0
    %s247 = sadd.s32 %s246, 1
    %s248 = scalar_select %p245, %s246, %s247
    %p251 = pneg %p245
    %p252 = scmp.eq.s32.totalorder %s16, 1
    %p253 = por %p251, %p252
    %p254 = scmp.ne.s32.totalorder %s246, %s249
    %p255 = scmp.eq.s32.totalorder %s16, 0
    %p256 = por %p254, %p255
    %p257 = scmp.ne.s32.totalorder %s246, %s249
    %p258 = scmp.eq.s32.totalorder %s21, 1
    %p259 = por %p257, %p258
    %p260 = scmp.ne.s32.totalorder %s249, %s250
    %p261 = scmp.eq.s32.totalorder %s21, 0
    %p262 = por %p260, %p261
    %p263 = scmp.ne.s32.totalorder %s249, %s250
    %p264 = scmp.eq.s32.totalorder %s22, 1
    %p265 = por %p263, %p264
    %p267 = scmp.ne.s32.totalorder %s250, %s266
    %p268 = scmp.eq.s32.totalorder %s22, 0
    %p269 = por %p267, %p268
    %p270 = scmp.le.s32.totalorder 1, %s16
    %p271 = scmp.lt.s32.totalorder %s16, 3
    %p272 = pnand %p270, %p271
    %p273 = pneg %p272
    // Predicated region
    $region9: #{backend_forward.4} parent=5 // pred_check
      _
    $region10: #{backend_forward.4} parent=5 // pred_check_branch
      %275 = sbr.rel (%p272) target = $region12
    $region11: #{backend_forward.4} parent=5 // pred_region
      %s276 = ssub.s32 %s16, 1
      // Predicated region
      $region13: #{backend_forward.4} parent=11 // pred_check
        %p277 = pneg %p89
      $region14: #{backend_forward.4} parent=11 // pred_check_branch
        %279 = sbr.rel (%p277) target = $region16
      $region15: #{backend_forward.4} parent=11 // pred_region
        _
      $region16: #{backend_forward.4} parent=11 // pred_fallthru
        _
      // Predicated region
      $region17: #{backend_forward.4} parent=11 // pred_check
        %p280 = pneg %p110
      $region18: #{backend_forward.4} parent=11 // pred_check_branch
        %282 = sbr.rel (%p280) target = $region20
      $region19: #{backend_forward.4} parent=11 // pred_region
        _
      $region20: #{backend_forward.4} parent=11 // pred_fallthru
        _
      // Predicated region
      $region21: #{backend_forward.4} parent=11 // pred_check
        %p283 = pneg %p131
      $region22: #{backend_forward.4} parent=11 // pred_check_branch
        %285 = sbr.rel (%p283) target = $region24
      $region23: #{backend_forward.4} parent=11 // pred_region
        _
      $region24: #{backend_forward.4} parent=11 // pred_fallthru
        _
      // Predicated region
      $region25: #{backend_forward.4} parent=11 // pred_check
        %p286 = pneg %p152
      $region26: #{backend_forward.4} parent=11 // pred_check_branch
        %288 = sbr.rel (%p286) target = $region28
      $region27: #{backend_forward.4} parent=11 // pred_region
        _
      $region28: #{backend_forward.4} parent=11 // pred_fallthru
        _
      // Predicated region
      $region29: #{backend_forward.4} parent=11 // pred_check
        %p289 = pneg %p173
      $region30: #{backend_forward.4} parent=11 // pred_check_branch
        %291 = sbr.rel (%p289) target = $region32
      $region31: #{backend_forward.4} parent=11 // pred_region
        _
      $region32: #{backend_forward.4} parent=11 // pred_fallthru
        _
      // Predicated region
      $region33: #{backend_forward.4} parent=11 // pred_check
        %p292 = pneg %p194
      $region34: #{backend_forward.4} parent=11 // pred_check_branch
        %294 = sbr.rel (%p292) target = $region36
      $region35: #{backend_forward.4} parent=11 // pred_region
        _
      $region36: #{backend_forward.4} parent=11 // pred_fallthru
        _
      // Predicated region
      $region37: #{backend_forward.4} parent=11 // pred_check
        %p295 = pneg %p215
      $region38: #{backend_forward.4} parent=11 // pred_check_branch
        %297 = sbr.rel (%p295) target = $region40
      $region39: #{backend_forward.4} parent=11 // pred_region
        _
      $region40: #{backend_forward.4} parent=11 // pred_fallthru
        _
      // Predicated region
      $region41: #{backend_forward.4} parent=11 // pred_check
        %p298 = pneg %p236
      $region42: #{backend_forward.4} parent=11 // pred_check_branch
        %300 = sbr.rel (%p298) target = $region44
      $region43: #{backend_forward.4} parent=11 // pred_region
        _
      $region44: #{backend_forward.4} parent=11 // pred_fallthru
        _
    $region12: #{backend_forward.4} parent=5 // pred_fallthru
      _
    %p301 = scmp.lt.s32.totalorder %s16, 2
    // Predicated region
    $region45: #{backend_forward.4} parent=5 // pred_check
      %p302 = pneg %p301
    $region46: #{backend_forward.4} parent=5 // pred_check_branch
      %304 = sbr.rel (%p302) target = $region48
    $region47: #{backend_forward.4} parent=5 // pred_region
      // Predicated region
      $region49: #{backend_forward.4} parent=47 // pred_check
        %p305 = pneg %p36
      $region50: #{backend_forward.4} parent=47 // pred_check_branch
        %307 = sbr.rel (%p305) target = $region52
      $region51: #{backend_forward.4} parent=47 // pred_region
        %p308 = scmp.lt.s32.totalorder %s16, 1
        %s309 = scalar_select %p308, %s16, 1
        %s310 = smul.addr %s309, 4
        %s311 = smul.addr %s310, 8
        %s312 = scalar_lea.vmem %s0, %s311
      $region52: #{backend_forward.4} parent=47 // pred_fallthru
        _
      // Predicated region
      $region53: #{backend_forward.4} parent=47 // pred_check
        %p313 = pneg %p62
      $region54: #{backend_forward.4} parent=47 // pred_check_branch
        %315 = sbr.rel (%p313) target = $region56
      $region55: #{backend_forward.4} parent=47 // pred_region
        %p316 = scmp.lt.s32.totalorder %s16, 1
        %s317 = scalar_select %p316, %s16, 1
        %s318 = smul.addr %s317, 16
        %s319 = smul.addr %s318, 8
        %s320 = scalar_lea.vmem %s1, %s319
      $region56: #{backend_forward.4} parent=47 // pred_fallthru
        _
    $region48: #{backend_forward.4} parent=5 // pred_fallthru
      _
    %p321 = scmp.le.s32.totalorder 1, %s16
    %p322 = scmp.lt.s32.totalorder %s16, 3
    %p323 = pnand %p321, %p322
    %p324 = pneg %p323
    // Predicated region
    $region57: #{backend_forward.4} parent=5 // pred_check
      _
    $region58: #{backend_forward.4} parent=5 // pred_check_branch
      %326 = sbr.rel (%p323) target = $region60
    $region59: #{backend_forward.4} parent=5 // pred_region
      %s327 = ssub.s32 %s16, 1
      %p328 = scmp.lt.s32.totalorder %s21, 1
      %s329 = scalar_select %p328, %s21, 1
      %s330 = smul.addr %s329, 4
      %s331 = smul.addr %s330, 8
      %s332 = scalar_lea.vmem %s0, %s331
      %p333 = pneg %p42
      %p334 = pneg %p39
      %p335 = scmp.lt.s32.totalorder %s21, 1
      %s336 = scalar_select %p335, %s21, 1
      %s337 = smul.addr %s336, 16
      %s338 = smul.addr %s337, 8
      %s339 = scalar_lea.vmem %s1, %s338
      %p340 = pneg %p68
      %p341 = pneg %p65
      %p342 = pneg %p89
      %p343 = pneg %p86
      %p344 = pneg %p110
      %p345 = pneg %p107
      %p346 = pneg %p131
      %p347 = pneg %p128
      %p348 = pneg %p152
      %p349 = pneg %p149
      %p350 = pneg %p173
      %p351 = pneg %p170
      %p352 = pneg %p194
      %p353 = pneg %p191
      %p354 = pneg %p215
      %p355 = pneg %p212
      %p356 = pneg %p236
      %p357 = pneg %p233
      %p358 = pneg %p262
      %p359 = pneg %p259
      %p360 = scmp.lt.s32.totalorder %s21, 1
      %s361 = scalar_select %p360, %s21, 1
      %s362 = smul.addr %s361, 8
      %s363 = smul.addr %s362, 8
      %s364 = scalar_lea.vmem %s10, %s363
      %p365 = scmp.lt.s32.totalorder %s21, 1
      %s366 = scalar_select %p365, %s21, 1
      %s367 = smul.addr %s366, 4
      %s368 = smul.addr %s367, 8
      %s369 = scalar_lea.vmem %s0, %s368
      %p370 = scmp.lt.s32.totalorder %s21, 1
      %s371 = scalar_select %p370, %s21, 1
      %s372 = smul.addr %s371, 16
      %s373 = smul.addr %s372, 8
      %s374 = scalar_lea.vmem %s1, %s373
      %p375 = scmp.lt.s32.totalorder %s21, 1
      %s376 = scalar_select %p375, %s21, 1
      %s377 = smul.addr %s376, 8
      %s378 = smul.addr %s377, 8
      %s379 = scalar_lea.vmem %s10, %s378
      %v381 = vld [vmem:[%s369] sm:$0xff]
      %v382 = vld [vmem:[%s369 + $0x8] sm:$0xff]
      %v383 = vld [vmem:[%s369 + $0x10] sm:$0xff]
      %v384 = vld [vmem:[%s369 + $0x18] sm:$0xff]
      %v385 = vpack.c.bf16 %v383, %v381
      %v386 = vpack.c.bf16 %v384, %v382
      %v387 = vld [vmem:[%s5] sm:$0xf]
      %v388 = vld [vmem:[%s5 + $0x4] sm:$0xf]
      %v389 = vld [vmem:[%s5 + $0x8] sm:$0xf]
      %v390 = vld [vmem:[%s5 + $0xc] sm:$0xf]
      %v391 = vld [vmem:[%s5 + $0x10] sm:$0xf]
      %v392 = vld [vmem:[%s5 + $0x14] sm:$0xf]
      %v393 = vld [vmem:[%s5 + $0x18] sm:$0xf]
      %v394 = vld [vmem:[%s5 + $0x1c] sm:$0xf]
      %v395 = vld [vmem:[%s5 + $0x20] sm:$0xf]
      %v396 = vld [vmem:[%s5 + $0x24] sm:$0xf]
      %v397 = vld [vmem:[%s5 + $0x28] sm:$0xf]
      %v398 = vld [vmem:[%s5 + $0x2c] sm:$0xf]
      %v399 = vld [vmem:[%s5 + $0x30] sm:$0xf]
      %v400 = vld [vmem:[%s5 + $0x34] sm:$0xf]
      %v401 = vld [vmem:[%s5 + $0x38] sm:$0xf]
      %v402 = vld [vmem:[%s5 + $0x3c] sm:$0xf]
      %v403 = vld [vmem:[%s5 + $0x40] sm:$0xf]
      %v404 = vld [vmem:[%s5 + $0x44] sm:$0xf]
      %v405 = vld [vmem:[%s5 + $0x48] sm:$0xf]
      %v406 = vld [vmem:[%s5 + $0x4c] sm:$0xf]
      %v407 = vld [vmem:[%s5 + $0x50] sm:$0xf]
      %v408 = vld [vmem:[%s5 + $0x54] sm:$0xf]
      %v409 = vld [vmem:[%s5 + $0x58] sm:$0xf]
      %v410 = vld [vmem:[%s5 + $0x5c] sm:$0xf]
      %v411 = vld [vmem:[%s5 + $0x60] sm:$0xf]
      %v412 = vld [vmem:[%s5 + $0x64] sm:$0xf]
      %v413 = vld [vmem:[%s5 + $0x68] sm:$0xf]
      %v414 = vld [vmem:[%s5 + $0x6c] sm:$0xf]
      %v415 = vld [vmem:[%s5 + $0x70] sm:$0xf]
      %v416 = vld [vmem:[%s5 + $0x74] sm:$0xf]
      %v417 = vld [vmem:[%s5 + $0x78] sm:$0xf]
      %v418 = vld [vmem:[%s5 + $0x7c] sm:$0xf]
      %v451 = vunpack.c.l.b16 %v387
      %v452 = vunpack.c.l.b16 %v388
      %v453 = vunpack.c.l.b16 %v389
      %v454 = vunpack.c.l.b16 %v390
      %v455 = vunpack.c.l.b16 %v391
      %v456 = vunpack.c.l.b16 %v392
      %v457 = vunpack.c.l.b16 %v393
      %v458 = vunpack.c.l.b16 %v394
      %v459 = vunpack.c.l.b16 %v395
      %v460 = vunpack.c.l.b16 %v396
      %v461 = vunpack.c.l.b16 %v397
      %v462 = vunpack.c.l.b16 %v398
      %v463 = vunpack.c.l.b16 %v399
      %v464 = vunpack.c.l.b16 %v400
      %v465 = vunpack.c.l.b16 %v401
      %v466 = vunpack.c.l.b16 %v402
      %v467 = vunpack.c.l.b16 %v403
      %v468 = vunpack.c.l.b16 %v404
      %v469 = vunpack.c.l.b16 %v405
      %v470 = vunpack.c.l.b16 %v406
      %v471 = vunpack.c.l.b16 %v407
      %v472 = vunpack.c.l.b16 %v408
      %v473 = vunpack.c.l.b16 %v409
      %v474 = vunpack.c.l.b16 %v410
      %v475 = vunpack.c.l.b16 %v411
      %v476 = vunpack.c.l.b16 %v412
      %v477 = vunpack.c.l.b16 %v413
      %v478 = vunpack.c.l.b16 %v414
      %v479 = vunpack.c.l.b16 %v415
      %v480 = vunpack.c.l.b16 %v416
      %v481 = vunpack.c.l.b16 %v417
      %v482 = vunpack.c.l.b16 %v418
      %v483 = vpack.c.b16 %v452, %v451
      %v484 = vpack.c.b16 %v454, %v453
      %v485 = vpack.c.b16 %v456, %v455
      %v486 = vpack.c.b16 %v458, %v457
      %v487 = vpack.c.b16 %v460, %v459
      %v488 = vpack.c.b16 %v462, %v461
      %v489 = vpack.c.b16 %v464, %v463
      %v490 = vpack.c.b16 %v466, %v465
      %v491 = vpack.c.b16 %v468, %v467
      %v492 = vpack.c.b16 %v470, %v469
      %v493 = vpack.c.b16 %v472, %v471
      %v494 = vpack.c.b16 %v474, %v473
      %v495 = vpack.c.b16 %v476, %v475
      %v496 = vpack.c.b16 %v478, %v477
      %v497 = vpack.c.b16 %v480, %v479
      %v498 = vpack.c.b16 %v482, %v481
      %515 = vmatprep.subr.bf16.mxu0 0
      %516 = vmatpush1.bf16.msra.mxu0 %v490
      %517 = vmatprep.subr.bf16.mxu0 0
      %518 = vmatpush1.bf16.msra.mxu0 %v489
      %519 = vmatprep.subr.bf16.mxu0 0
      %520 = vmatpush1.bf16.msra.mxu0 %v488
      %521 = vmatprep.subr.bf16.mxu0 0
      %522 = vmatpush1.bf16.msra.mxu0 %v487
      %523 = vmatprep.subr.bf16.mxu0 0
      %524 = vmatpush1.bf16.msra.mxu0 %v486
      %525 = vmatprep.subr.bf16.mxu0 0
      %526 = vmatpush1.bf16.msra.mxu0 %v485
      %527 = vmatprep.subr.bf16.mxu0 0
      %528 = vmatpush1.bf16.msra.mxu0 %v484
      %529 = vmatprep.subr.bf16.mxu0 0
      %530 = vmatpush1.bf16.msra.mxu0 %v483
      %531 = vmatprep.subr.bf16.mxu0 0
      %532 = vmatpush2.bf16.msra.mxu0 %v498
      %533 = vmatprep.subr.bf16.mxu0 0
      %534 = vmatpush2.bf16.msra.mxu0 %v497
      %535 = vmatprep.subr.bf16.mxu0 0
      %536 = vmatpush2.bf16.msra.mxu0 %v496
      %537 = vmatprep.subr.bf16.mxu0 0
      %538 = vmatpush2.bf16.msra.mxu0 %v495
      %539 = vmatprep.subr.bf16.mxu0 0
      %540 = vmatpush2.bf16.msra.mxu0 %v494
      %541 = vmatprep.subr.bf16.mxu0 0
      %542 = vmatpush2.bf16.msra.mxu0 %v493
      %543 = vmatprep.subr.bf16.mxu0 0
      %544 = vmatpush2.bf16.msra.mxu0 %v492
      %545 = vmatprep.subr.bf16.mxu0 0
      %546 = vmatpush2.bf16.msra.mxu0 %v491
      %547 = vmatprep.mubr.bf16.mxu0 %v386
      %548 = vmatmul.mubr.bf16.gmra.mxu0 %v385
      %v549 = vpop.f32.mrf.mxu0
      %v550 = vadd.f32 0.0, %v549
      %v551 = vpop.f32.mrf.mxu0
      %v552 = vpop.f32.mrf.mxu0
      %v553 = vadd.f32 0.0, %v552
      %v554 = vpop.f32.mrf.mxu0
      %555 = vdwg.mxu0
      %v556 = vld [vmem:[%s2] sm:$0xff]
      %v557 = vld [vmem:[%s2 + $0x8] sm:$0xff]
      %v558 = vld [vmem:[%s2 + $0x10] sm:$0xff]
      %v559 = vld [vmem:[%s2 + $0x18] sm:$0xff]
      %v560 = vld [vmem:[%s2 + $0x20] sm:$0xff]
      %v561 = vld [vmem:[%s2 + $0x28] sm:$0xff]
      %v562 = vld [vmem:[%s2 + $0x30] sm:$0xff]
      %v563 = vld [vmem:[%s2 + $0x38] sm:$0xff]
      %v564 = vld [vmem:[%s374] sm:$0xff]
      %v565 = vld [vmem:[%s374 + $0x8] sm:$0xff]
      %v566 = vld [vmem:[%s374 + $0x10] sm:$0xff]
      %v567 = vld [vmem:[%s374 + $0x18] sm:$0xff]
      %v568 = vld [vmem:[%s374 + $0x20] sm:$0xff]
      %v569 = vld [vmem:[%s374 + $0x28] sm:$0xff]
      %v570 = vld [vmem:[%s374 + $0x30] sm:$0xff]
      %v571 = vld [vmem:[%s374 + $0x38] sm:$0xff]
      %v572 = vld [vmem:[%s374 + $0x40] sm:$0xff]
      %v573 = vld [vmem:[%s374 + $0x48] sm:$0xff]
      %v574 = vld [vmem:[%s374 + $0x50] sm:$0xff]
      %v575 = vld [vmem:[%s374 + $0x58] sm:$0xff]
      %v576 = vld [vmem:[%s374 + $0x60] sm:$0xff]
      %v577 = vld [vmem:[%s374 + $0x68] sm:$0xff]
      %v578 = vld [vmem:[%s374 + $0x70] sm:$0xff]
      %v579 = vld [vmem:[%s374 + $0x78] sm:$0xff]
      %v580 = vpack.c.bf16 %v566, %v564
      %v581 = vpack.c.bf16 %v567, %v565
      %v582 = vpack.c.bf16 %v570, %v568
      %v583 = vpack.c.bf16 %v571, %v569
      %v584 = vpack.c.bf16 %v574, %v572
      %v585 = vpack.c.bf16 %v575, %v573
      %v586 = vpack.c.bf16 %v578, %v576
      %v587 = vpack.c.bf16 %v579, %v577
      %v588 = vld [vmem:[%s6] sm:$0xf]
      %v589 = vld [vmem:[%s6 + $0x4] sm:$0xf]
      %v590 = vld [vmem:[%s6 + $0x8] sm:$0xf]
      %v591 = vld [vmem:[%s6 + $0xc] sm:$0xf]
      %v592 = vld [vmem:[%s6 + $0x10] sm:$0xf]
      %v593 = vld [vmem:[%s6 + $0x14] sm:$0xf]
      %v594 = vld [vmem:[%s6 + $0x18] sm:$0xf]
      %v595 = vld [vmem:[%s6 + $0x1c] sm:$0xf]
      %v596 = vld [vmem:[%s6 + $0x20] sm:$0xf]
      %v597 = vld [vmem:[%s6 + $0x24] sm:$0xf]
      %v598 = vld [vmem:[%s6 + $0x28] sm:$0xf]
      %v599 = vld [vmem:[%s6 + $0x2c] sm:$0xf]
      %v600 = vld [vmem:[%s6 + $0x30] sm:$0xf]
      %v601 = vld [vmem:[%s6 + $0x34] sm:$0xf]
      %v602 = vld [vmem:[%s6 + $0x38] sm:$0xf]
      %v603 = vld [vmem:[%s6 + $0x3c] sm:$0xf]
      %v604 = vld [vmem:[%s6 + $0x40] sm:$0xf]
      %v605 = vld [vmem:[%s6 + $0x44] sm:$0xf]
      %v606 = vld [vmem:[%s6 + $0x48] sm:$0xf]
      %v607 = vld [vmem:[%s6 + $0x4c] sm:$0xf]
      %v608 = vld [vmem:[%s6 + $0x50] sm:$0xf]
      %v609 = vld [vmem:[%s6 + $0x54] sm:$0xf]
      %v610 = vld [vmem:[%s6 + $0x58] sm:$0xf]
      %v611 = vld [vmem:[%s6 + $0x5c] sm:$0xf]
      %v612 = vld [vmem:[%s6 + $0x60] sm:$0xf]
      %v613 = vld [vmem:[%s6 + $0x64] sm:$0xf]
      %v614 = vld [vmem:[%s6 + $0x68] sm:$0xf]
      %v615 = vld [vmem:[%s6 + $0x6c] sm:$0xf]
      %v616 = vld [vmem:[%s6 + $0x70] sm:$0xf]
      %v617 = vld [vmem:[%s6 + $0x74] sm:$0xf]
      %v618 = vld [vmem:[%s6 + $0x78] sm:$0xf]
      %v619 = vld [vmem:[%s6 + $0x7c] sm:$0xf]
      %v652 = vunpack.c.l.b16 %v588
      %v653 = vunpack.c.l.b16 %v589
      %v654 = vunpack.c.l.b16 %v590
      %v655 = vunpack.c.l.b16 %v591
      %v656 = vunpack.c.l.b16 %v592
      %v657 = vunpack.c.l.b16 %v593
      %v658 = vunpack.c.l.b16 %v594
      %v659 = vunpack.c.l.b16 %v595
      %v660 = vunpack.c.l.b16 %v596
      %v661 = vunpack.c.l.b16 %v597
      %v662 = vunpack.c.l.b16 %v598
      %v663 = vunpack.c.l.b16 %v599
      %v664 = vunpack.c.l.b16 %v600
      %v665 = vunpack.c.l.b16 %v601
      %v666 = vunpack.c.l.b16 %v602
      %v667 = vunpack.c.l.b16 %v603
      %v668 = vunpack.c.l.b16 %v604
      %v669 = vunpack.c.l.b16 %v605
      %v670 = vunpack.c.l.b16 %v606
      %v671 = vunpack.c.l.b16 %v607
      %v672 = vunpack.c.l.b16 %v608
      %v673 = vunpack.c.l.b16 %v609
      %v674 = vunpack.c.l.b16 %v610
      %v675 = vunpack.c.l.b16 %v611
      %v676 = vunpack.c.l.b16 %v612
      %v677 = vunpack.c.l.b16 %v613
      %v678 = vunpack.c.l.b16 %v614
      %v679 = vunpack.c.l.b16 %v615
      %v680 = vunpack.c.l.b16 %v616
      %v681 = vunpack.c.l.b16 %v617
      %v682 = vunpack.c.l.b16 %v618
      %v683 = vunpack.c.l.b16 %v619
      %v684 = vpack.c.b16 %v653, %v652
      %v685 = vpack.c.b16 %v655, %v654
      %v686 = vpack.c.b16 %v657, %v656
      %v687 = vpack.c.b16 %v659, %v658
      %v688 = vpack.c.b16 %v661, %v660
      %v689 = vpack.c.b16 %v663, %v662
      %v690 = vpack.c.b16 %v665, %v664
      %v691 = vpack.c.b16 %v667, %v666
      %v692 = vpack.c.b16 %v669, %v668
      %v693 = vpack.c.b16 %v671, %v670
      %v694 = vpack.c.b16 %v673, %v672
      %v695 = vpack.c.b16 %v675, %v674
      %v696 = vpack.c.b16 %v677, %v676
      %v697 = vpack.c.b16 %v679, %v678
      %v698 = vpack.c.b16 %v681, %v680
      %v699 = vpack.c.b16 %v683, %v682
      %716 = vmatprep.subr.bf16.mxu0 0
      %717 = vmatpush1.bf16.msra.mxu0 %v691
      %718 = vmatprep.subr.bf16.mxu0 0
      %719 = vmatpush1.bf16.msra.mxu0 %v690
      %720 = vmatprep.subr.bf16.mxu0 0
      %721 = vmatpush1.bf16.msra.mxu0 %v689
      %722 = vmatprep.subr.bf16.mxu0 0
      %723 = vmatpush1.bf16.msra.mxu0 %v688
      %724 = vmatprep.subr.bf16.mxu0 0
      %725 = vmatpush1.bf16.msra.mxu0 %v687
      %726 = vmatprep.subr.bf16.mxu0 0
      %727 = vmatpush1.bf16.msra.mxu0 %v686
      %728 = vmatprep.subr.bf16.mxu0 0
      %729 = vmatpush1.bf16.msra.mxu0 %v685
      %730 = vmatprep.subr.bf16.mxu0 0
      %731 = vmatpush1.bf16.msra.mxu0 %v684
      %732 = vmatprep.subr.bf16.mxu0 0
      %733 = vmatpush2.bf16.msra.mxu0 %v699
      %734 = vmatprep.subr.bf16.mxu0 0
      %735 = vmatpush2.bf16.msra.mxu0 %v698
      %736 = vmatprep.subr.bf16.mxu0 0
      %737 = vmatpush2.bf16.msra.mxu0 %v697
      %738 = vmatprep.subr.bf16.mxu0 0
      %739 = vmatpush2.bf16.msra.mxu0 %v696
      %740 = vmatprep.subr.bf16.mxu0 0
      %741 = vmatpush2.bf16.msra.mxu0 %v695
      %742 = vmatprep.subr.bf16.mxu0 0
      %743 = vmatpush2.bf16.msra.mxu0 %v694
      %744 = vmatprep.subr.bf16.mxu0 0
      %745 = vmatpush2.bf16.msra.mxu0 %v693
      %746 = vmatprep.subr.bf16.mxu0 0
      %747 = vmatpush2.bf16.msra.mxu0 %v692
      %748 = vmatprep.mubr.bf16.mxu0 %v581
      %749 = vmatmul.mubr.bf16.gmra.mxu0 %v580
      %v750 = vpop.f32.mrf.mxu0
      %v751 = vadd.f32 0.0, %v750
      %v752 = vpop.f32.mrf.mxu0
      %v753 = vpop.f32.mrf.mxu0
      %v754 = vadd.f32 0.0, %v753
      %v755 = vpop.f32.mrf.mxu0
      %756 = vmatprep.mubr.bf16.mxu0 %v583
      %757 = vmatmul.mubr.bf16.gmra.mxu0 %v582
      %v758 = vpop.f32.mrf.mxu0
      %v759 = vadd.f32 0.0, %v758
      %v760 = vpop.f32.mrf.mxu0
      %v761 = vpop.f32.mrf.mxu0
      %v762 = vadd.f32 0.0, %v761
      %v763 = vpop.f32.mrf.mxu0
      %764 = vmatprep.mubr.bf16.mxu0 %v585
      %765 = vmatmul.mubr.bf16.gmra.mxu0 %v584
      %v766 = vpop.f32.mrf.mxu0
      %v767 = vadd.f32 0.0, %v766
      %v768 = vpop.f32.mrf.mxu0
      %v769 = vpop.f32.mrf.mxu0
      %v770 = vadd.f32 0.0, %v769
      %v771 = vpop.f32.mrf.mxu0
      %772 = vmatprep.mubr.bf16.mxu0 %v587
      %773 = vmatmul.mubr.bf16.gmra.mxu0 %v586
      %v774 = vpop.f32.mrf.mxu0
      %v775 = vadd.f32 0.0, %v774
      %v776 = vpop.f32.mrf.mxu0
      %v777 = vpop.f32.mrf.mxu0
      %v778 = vadd.f32 0.0, %v777
      %v779 = vpop.f32.mrf.mxu0
      %780 = vdwg.mxu0
      %vm781 = vcmask 130048
      %v783 = vsel %vm781, %v556, 0
      %v786 = vsel %vm781, %v557, 0
      %v789 = vsel %vm781, %v558, 0
      %v792 = vsel %vm781, %v559, 0
      %v795 = vsel %vm781, %v560, 0
      %v798 = vsel %vm781, %v561, 0
      %v801 = vsel %vm781, %v562, 0
      %v804 = vsel %vm781, %v563, 0
      %806 = vmatprep.subr.mxu0 0.0
      %807 = vmatpush1.msra.mxu0 0.0
      %808 = vmatprep.subr.mxu0 0.0
      %809 = vmatpush1.msra.mxu0 0.0
      %810 = vmatprep.subr.mxu0 0.0
      %811 = vmatpush1.msra.mxu0 0.0
      %812 = vmatprep.subr.mxu0 0.0
      %813 = vmatpush1.msra.mxu0 0.0
      %814 = vmatprep.subr.mxu0 0.0
      %815 = vmatpush1.msra.mxu0 0.0
      %816 = vmatprep.subr.mxu0 0.0
      %817 = vmatpush1.msra.mxu0 0.0
      %818 = vmatprep.subr.mxu0 0.0
      %819 = vmatpush1.msra.mxu0 0.0
      %820 = vmatprep.subr.mxu0 0.0
      %821 = vmatpush1.msra.mxu0 0.0
      %822 = vmatprep.subr.mxu0 0.0
      %823 = vmatpush1.msra.mxu0 0.0
      %824 = vmatprep.subr.mxu0 0.0
      %825 = vmatpush1.msra.mxu0 0.0
      %826 = vmatprep.subr.mxu0 0.0
      %827 = vmatpush1.msra.mxu0 0.0
      %828 = vmatprep.subr.mxu0 0.0
      %829 = vmatpush1.msra.mxu0 0.0
      %830 = vmatprep.subr.mxu0 0.0
      %831 = vmatpush1.msra.mxu0 0.0
      %832 = vmatprep.subr.mxu0 0.0
      %833 = vmatpush1.msra.mxu0 0.0
      %834 = vmatprep.subr.mxu0 0.0
      %835 = vmatpush1.msra.mxu0 %v553
      %836 = vmatprep.subr.mxu0 0.0
      %837 = vmatpush1.msra.mxu0 %v550
      %838 = vmatprep.subr.mxu0 0.0
      %839 = vmatpush2.msra.mxu0 0.0
      %840 = vmatprep.subr.mxu0 0.0
      %841 = vmatpush2.msra.mxu0 0.0
      %842 = vmatprep.subr.mxu0 0.0
      %843 = vmatpush2.msra.mxu0 0.0
      %844 = vmatprep.subr.mxu0 0.0
      %845 = vmatpush2.msra.mxu0 0.0
      %846 = vmatprep.subr.mxu0 0.0
      %847 = vmatpush2.msra.mxu0 0.0
      %848 = vmatprep.subr.mxu0 0.0
      %849 = vmatpush2.msra.mxu0 0.0
      %850 = vmatprep.subr.mxu0 0.0
      %851 = vmatpush2.msra.mxu0 0.0
      %852 = vmatprep.subr.mxu0 0.0
      %853 = vmatpush2.msra.mxu0 0.0
      %854 = vmatprep.subr.mxu0 0.0
      %855 = vmatpush2.msra.mxu0 0.0
      %856 = vmatprep.subr.mxu0 0.0
      %857 = vmatpush2.msra.mxu0 0.0
      %858 = vmatprep.subr.mxu0 0.0
      %859 = vmatpush2.msra.mxu0 0.0
      %860 = vmatprep.subr.mxu0 0.0
      %861 = vmatpush2.msra.mxu0 0.0
      %862 = vmatprep.subr.mxu0 0.0
      %863 = vmatpush2.msra.mxu0 0.0
      %864 = vmatprep.subr.mxu0 0.0
      %865 = vmatpush2.msra.mxu0 0.0
      %866 = vmatprep.subr.mxu0 0.0
      %867 = vmatpush2.msra.mxu0 0.0
      %868 = vmatprep.subr.mxu0 0.0
      %869 = vmatpush2.msra.mxu0 0.0
      %870 = vmatprep.mubr.f32.mxu0 0.0
      %871 = vmatmul.mubr.f32.gmra.mxu0 %v783
      %v872 = vpop.f32.mrf.mxu0
      %v873 = vadd.f32 %v751, %v872
      %v874 = vpop.f32.mrf.mxu0
      %875 = vmatprep.mubr.f32.mxu0 0.0
      %876 = vmatmul.mubr.f32.gmra.mxu0 %v786
      %v877 = vpop.f32.mrf.mxu0
      %v878 = vadd.f32 %v754, %v877
      %v879 = vpop.f32.mrf.mxu0
      %880 = vmatprep.mubr.f32.mxu0 0.0
      %881 = vmatmul.mubr.f32.gmra.mxu0 %v789
      %v882 = vpop.f32.mrf.mxu0
      %v883 = vadd.f32 %v759, %v882
      %v884 = vpop.f32.mrf.mxu0
      %885 = vmatprep.mubr.f32.mxu0 0.0
      %886 = vmatmul.mubr.f32.gmra.mxu0 %v792
      %v887 = vpop.f32.mrf.mxu0
      %v888 = vadd.f32 %v762, %v887
      %v889 = vpop.f32.mrf.mxu0
      %890 = vmatprep.mubr.f32.mxu0 0.0
      %891 = vmatmul.mubr.f32.gmra.mxu0 %v795
      %v892 = vpop.f32.mrf.mxu0
      %v893 = vadd.f32 %v767, %v892
      %v894 = vpop.f32.mrf.mxu0
      %895 = vmatprep.mubr.f32.mxu0 0.0
      %896 = vmatmul.mubr.f32.gmra.mxu0 %v798
      %v897 = vpop.f32.mrf.mxu0
      %v898 = vadd.f32 %v770, %v897
      %v899 = vpop.f32.mrf.mxu0
      %900 = vmatprep.mubr.f32.mxu0 0.0
      %901 = vmatmul.mubr.f32.gmra.mxu0 %v801
      %v902 = vpop.f32.mrf.mxu0
      %v903 = vadd.f32 %v775, %v902
      %v904 = vpop.f32.mrf.mxu0
      %905 = vmatprep.mubr.f32.mxu0 0.0
      %906 = vmatmul.mubr.f32.gmra.mxu0 %v804
      %v907 = vpop.f32.mrf.mxu0
      %v908 = vadd.f32 %v778, %v907
      %v909 = vpop.f32.mrf.mxu0
      %910 = vdwg.mxu0
      %v911 = vld [vmem:[%s7] sm:$0x1]
      %v913 = vlaneseq
      %v914 = vshrl.u32 %v913, 7
      %v915 = vsub.s32 0, %v914
      %v916 = vrot.slane %v911, %v915
      %v918 = vadd.f32 %v873, %v916
      %v919 = vadd.f32 %v878, %v916
      %v920 = vadd.f32 %v883, %v916
      %v921 = vadd.f32 %v888, %v916
      %v922 = vadd.f32 %v893, %v916
      %v923 = vadd.f32 %v898, %v916
      %v924 = vadd.f32 %v903, %v916
      %v925 = vadd.f32 %v908, %v916
      %v926 = vmax.f32 %v918, 0.0
      %v927 = vmax.f32 %v919, 0.0
      %v928 = vmax.f32 %v920, 0.0
      %v929 = vmax.f32 %v921, 0.0
      %v930 = vmax.f32 %v922, 0.0
      %v931 = vmax.f32 %v923, 0.0
      %v932 = vmax.f32 %v924, 0.0
      %v933 = vmax.f32 %v925, 0.0
      %934 = vst [vmem:[#allocation2] sm:$0xff] 0.0
      %935 = vst [vmem:[#allocation2 + $0x8] sm:$0xff] 0.0
      %936 = vst [vmem:[#allocation2 + $0x50] sm:$0xff] 0.0
      %937 = vst [vmem:[#allocation2 + $0x58] sm:$0xff] 0.0
      %938 = vst [vmem:[#allocation2 + $0x10] sm:$0xff] %v926
      %939 = vst [vmem:[#allocation2 + $0x18] sm:$0xff] %v927
      %940 = vst [vmem:[#allocation2 + $0x20] sm:$0xff] %v928
      %941 = vst [vmem:[#allocation2 + $0x28] sm:$0xff] %v929
      %942 = vst [vmem:[#allocation2 + $0x30] sm:$0xff] %v930
      %943 = vst [vmem:[#allocation2 + $0x38] sm:$0xff] %v931
      %944 = vst [vmem:[#allocation2 + $0x40] sm:$0xff] %v932
      %945 = vst [vmem:[#allocation2 + $0x48] sm:$0xff] %v933
      %v946 = vld [vmem:[%s3] sm:$0xff]
      %v947 = vld [vmem:[%s3 + $0x8] sm:$0xff]
      %v948 = vld [vmem:[%s3 + $0x10] sm:$0xff]
      %v949 = vld [vmem:[%s3 + $0x18] sm:$0xff]
      %v950 = vld [vmem:[%s3 + $0x20] sm:$0xff]
      %v951 = vld [vmem:[%s3 + $0x28] sm:$0xff]
      %v952 = vld [vmem:[%s3 + $0x30] sm:$0xff]
      %v953 = vld [vmem:[%s3 + $0x38] sm:$0xff]
      %v954 = vld [vmem:[%s4] sm:$0xff]
      %v955 = vld [vmem:[%s4 + $0x8] sm:$0xff]
      %v956 = vld [vmem:[%s4 + $0x10] sm:$0xff]
      %v957 = vld [vmem:[%s4 + $0x18] sm:$0xff]
      %v958 = vld [vmem:[%s4 + $0x20] sm:$0xff]
      %v959 = vld [vmem:[%s4 + $0x28] sm:$0xff]
      %v960 = vld [vmem:[%s4 + $0x30] sm:$0xff]
      %v961 = vld [vmem:[%s4 + $0x38] sm:$0xff]
      %v962 = vld [vmem:[#allocation2 + $0x7] sm:$0xff]
      %v963 = vld [vmem:[#allocation2 + $0xf] sm:$0xff]
      %v964 = vld [vmem:[#allocation2 + $0x17] sm:$0xff]
      %v965 = vld [vmem:[#allocation2 + $0x1f] sm:$0xff]
      %v966 = vld [vmem:[#allocation2 + $0x27] sm:$0xff]
      %v967 = vld [vmem:[#allocation2 + $0x2f] sm:$0xff]
      %v968 = vld [vmem:[#allocation2 + $0x37] sm:$0xff]
      %v969 = vld [vmem:[#allocation2 + $0x3f] sm:$0xff]
      %971 = vset.pattern.permute.xlu0 0
      %972 = vperm.xlu0 %971, %v946
      %v973 = vpop.permute.xlu0 %972
      %976 = vset.pattern.permute.xlu0 0
      %977 = vperm.xlu0 %976, %v947
      %v978 = vpop.permute.xlu0 %977
      %981 = vset.pattern.permute.xlu0 0
      %982 = vperm.xlu0 %981, %v948
      %v983 = vpop.permute.xlu0 %982
      %986 = vset.pattern.permute.xlu0 0
      %987 = vperm.xlu0 %986, %v949
      %v988 = vpop.permute.xlu0 %987
      %991 = vset.pattern.permute.xlu0 0
      %992 = vperm.xlu0 %991, %v950
      %v993 = vpop.permute.xlu0 %992
      %996 = vset.pattern.permute.xlu0 0
      %997 = vperm.xlu0 %996, %v951
      %v998 = vpop.permute.xlu0 %997
      %1001 = vset.pattern.permute.xlu0 0
      %1002 = vperm.xlu0 %1001, %v952
      %v1003 = vpop.permute.xlu0 %1002
      %1006 = vset.pattern.permute.xlu0 0
      %1007 = vperm.xlu0 %1006, %v953
      %v1008 = vpop.permute.xlu0 %1007
      %v1010 = vmul.f32 %v962, %v973
      %v1011 = vmul.f32 %v963, %v978
      %v1012 = vmul.f32 %v964, %v983
      %v1013 = vmul.f32 %v965, %v988
      %v1014 = vmul.f32 %v966, %v993
      %v1015 = vmul.f32 %v967, %v998
      %v1016 = vmul.f32 %v968, %v1003
      %v1017 = vmul.f32 %v969, %v1008
      %v1018 = vpack.c.bf16 %v1011, %v1010
      %v1019 = vpack.c.bf16 %v1013, %v1012
      %v1020 = vpack.c.bf16 %v1015, %v1014
      %v1021 = vpack.c.bf16 %v1017, %v1016
      %v1022 = vld [vmem:[%s8] sm:$0xf]
      %v1023 = vld [vmem:[%s8 + $0x4] sm:$0xf]
      %v1024 = vld [vmem:[%s8 + $0x8] sm:$0xf]
      %v1025 = vld [vmem:[%s8 + $0xc] sm:$0xf]
      %v1026 = vld [vmem:[%s8 + $0x10] sm:$0xf]
      %v1027 = vld [vmem:[%s8 + $0x14] sm:$0xf]
      %v1028 = vld [vmem:[%s8 + $0x18] sm:$0xf]
      %v1029 = vld [vmem:[%s8 + $0x1c] sm:$0xf]
      %v1030 = vld [vmem:[%s8 + $0x20] sm:$0xf]
      %v1031 = vld [vmem:[%s8 + $0x24] sm:$0xf]
      %v1032 = vld [vmem:[%s8 + $0x28] sm:$0xf]
      %v1033 = vld [vmem:[%s8 + $0x2c] sm:$0xf]
      %v1034 = vld [vmem:[%s8 + $0x30] sm:$0xf]
      %v1035 = vld [vmem:[%s8 + $0x34] sm:$0xf]
      %v1036 = vld [vmem:[%s8 + $0x38] sm:$0xf]
      %v1037 = vld [vmem:[%s8 + $0x3c] sm:$0xf]
      %v1038 = vld [vmem:[#allocation2 + $0x8] sm:$0xff]
      %v1039 = vld [vmem:[#allocation2 + $0x10] sm:$0xff]
      %v1040 = vld [vmem:[#allocation2 + $0x18] sm:$0xff]
      %v1041 = vld [vmem:[#allocation2 + $0x20] sm:$0xff]
      %v1042 = vld [vmem:[#allocation2 + $0x28] sm:$0xff]
      %v1043 = vld [vmem:[#allocation2 + $0x30] sm:$0xff]
      %v1044 = vld [vmem:[#allocation2 + $0x38] sm:$0xff]
      %v1045 = vld [vmem:[#allocation2 + $0x40] sm:$0xff]
      %v1046 = vpack.c.bf16 %v1039, %v1038
      %v1047 = vpack.c.bf16 %v1041, %v1040
      %v1048 = vpack.c.bf16 %v1043, %v1042
      %v1049 = vpack.c.bf16 %v1045, %v1044
      %s1050 = scalar_lea.vmem %s8, 64
      %v1051 = vld [vmem:[%s1050] sm:$0xf]
      %v1052 = vld [vmem:[%s1050 + $0x4] sm:$0xf]
      %v1053 = vld [vmem:[%s1050 + $0x8] sm:$0xf]
      %v1054 = vld [vmem:[%s1050 + $0xc] sm:$0xf]
      %v1055 = vld [vmem:[%s1050 + $0x10] sm:$0xf]
      %v1056 = vld [vmem:[%s1050 + $0x14] sm:$0xf]
      %v1057 = vld [vmem:[%s1050 + $0x18] sm:$0xf]
      %v1058 = vld [vmem:[%s1050 + $0x1c] sm:$0xf]
      %v1059 = vld [vmem:[%s1050 + $0x20] sm:$0xf]
      %v1060 = vld [vmem:[%s1050 + $0x24] sm:$0xf]
      %v1061 = vld [vmem:[%s1050 + $0x28] sm:$0xf]
      %v1062 = vld [vmem:[%s1050 + $0x2c] sm:$0xf]
      %v1063 = vld [vmem:[%s1050 + $0x30] sm:$0xf]
      %v1064 = vld [vmem:[%s1050 + $0x34] sm:$0xf]
      %v1065 = vld [vmem:[%s1050 + $0x38] sm:$0xf]
      %v1066 = vld [vmem:[%s1050 + $0x3c] sm:$0xf]
      %v1083 = vunpack.c.l.b16 %v1051
      %v1084 = vunpack.c.l.b16 %v1052
      %v1085 = vunpack.c.l.b16 %v1053
      %v1086 = vunpack.c.l.b16 %v1054
      %v1087 = vunpack.c.l.b16 %v1055
      %v1088 = vunpack.c.l.b16 %v1056
      %v1089 = vunpack.c.l.b16 %v1057
      %v1090 = vunpack.c.l.b16 %v1058
      %v1091 = vunpack.c.l.b16 %v1059
      %v1092 = vunpack.c.l.b16 %v1060
      %v1093 = vunpack.c.l.b16 %v1061
      %v1094 = vunpack.c.l.b16 %v1062
      %v1095 = vunpack.c.l.b16 %v1063
      %v1096 = vunpack.c.l.b16 %v1064
      %v1097 = vunpack.c.l.b16 %v1065
      %v1098 = vunpack.c.l.b16 %v1066
      %v1099 = vpack.c.b16 %v1084, %v1083
      %v1100 = vpack.c.b16 %v1086, %v1085
      %v1101 = vpack.c.b16 %v1088, %v1087
      %v1102 = vpack.c.b16 %v1090, %v1089
      %v1103 = vpack.c.b16 %v1092, %v1091
      %v1104 = vpack.c.b16 %v1094, %v1093
      %v1105 = vpack.c.b16 %v1096, %v1095
      %v1106 = vpack.c.b16 %v1098, %v1097
      %1115 = vmatprep.subr.bf16.mxu0 0
      %1116 = vmatpush1.bf16.msra.mxu0 %v1106
      %1117 = vmatprep.subr.bf16.mxu0 0
      %1118 = vmatpush1.bf16.msra.mxu0 %v1105
      %1119 = vmatprep.subr.bf16.mxu0 0
      %1120 = vmatpush1.bf16.msra.mxu0 %v1104
      %1121 = vmatprep.subr.bf16.mxu0 0
      %1122 = vmatpush1.bf16.msra.mxu0 %v1103
      %1123 = vmatprep.subr.bf16.mxu0 0
      %1124 = vmatpush1.bf16.msra.mxu0 %v1102
      %1125 = vmatprep.subr.bf16.mxu0 0
      %1126 = vmatpush1.bf16.msra.mxu0 %v1101
      %1127 = vmatprep.subr.bf16.mxu0 0
      %1128 = vmatpush1.bf16.msra.mxu0 %v1100
      %1129 = vmatprep.subr.bf16.mxu0 0
      %1130 = vmatpush1.bf16.msra.mxu0 %v1099
      %1131 = vmatprep.subr.bf16.mxu0 0
      %1132 = vmatpush2.bf16.msra.mxu0 0
      %1133 = vmatprep.subr.bf16.mxu0 0
      %1134 = vmatpush2.bf16.msra.mxu0 0
      %1135 = vmatprep.subr.bf16.mxu0 0
      %1136 = vmatpush2.bf16.msra.mxu0 0
      %1137 = vmatprep.subr.bf16.mxu0 0
      %1138 = vmatpush2.bf16.msra.mxu0 0
      %1139 = vmatprep.subr.bf16.mxu0 0
      %1140 = vmatpush2.bf16.msra.mxu0 0
      %1141 = vmatprep.subr.bf16.mxu0 0
      %1142 = vmatpush2.bf16.msra.mxu0 0
      %1143 = vmatprep.subr.bf16.mxu0 0
      %1144 = vmatpush2.bf16.msra.mxu0 0
      %1145 = vmatprep.subr.bf16.mxu0 0
      %1146 = vmatpush2.bf16.msra.mxu0 0
      %1147 = vmatprep.mubr.bf16.mxu0 0
      %1148 = vmatmul.mubr.bf16.gmra.mxu0 %v1046
      %v1149 = vpop.f32.mrf.mxu0
      %v1150 = vadd.f32 0.0, %v1149
      %v1151 = vpop.f32.mrf.mxu0
      %v1152 = vpop.f32.mrf.mxu0
      %v1153 = vadd.f32 0.0, %v1152
      %v1154 = vpop.f32.mrf.mxu0
      %1155 = vmatprep.mubr.bf16.mxu0 0
      %1156 = vmatmul.mubr.bf16.gmra.mxu0 %v1047
      %v1157 = vpop.f32.mrf.mxu0
      %v1158 = vadd.f32 0.0, %v1157
      %v1159 = vpop.f32.mrf.mxu0
      %v1160 = vpop.f32.mrf.mxu0
      %v1161 = vadd.f32 0.0, %v1160
      %v1162 = vpop.f32.mrf.mxu0
      %1163 = vmatprep.mubr.bf16.mxu0 0
      %1164 = vmatmul.mubr.bf16.gmra.mxu0 %v1048
      %v1165 = vpop.f32.mrf.mxu0
      %v1166 = vadd.f32 0.0, %v1165
      %v1167 = vpop.f32.mrf.mxu0
      %v1168 = vpop.f32.mrf.mxu0
      %v1169 = vadd.f32 0.0, %v1168
      %v1170 = vpop.f32.mrf.mxu0
      %1171 = vmatprep.mubr.bf16.mxu0 0
      %1172 = vmatmul.mubr.bf16.gmra.mxu0 %v1049
      %v1173 = vpop.f32.mrf.mxu0
      %v1174 = vadd.f32 0.0, %v1173
      %v1175 = vpop.f32.mrf.mxu0
      %v1176 = vpop.f32.mrf.mxu0
      %v1177 = vadd.f32 0.0, %v1176
      %v1178 = vpop.f32.mrf.mxu0
      %1179 = vdwg.mxu0
      %v1196 = vunpack.c.l.b16 %v1022
      %v1197 = vunpack.c.l.b16 %v1023
      %v1198 = vunpack.c.l.b16 %v1024
      %v1199 = vunpack.c.l.b16 %v1025
      %v1200 = vunpack.c.l.b16 %v1026
      %v1201 = vunpack.c.l.b16 %v1027
      %v1202 = vunpack.c.l.b16 %v1028
      %v1203 = vunpack.c.l.b16 %v1029
      %v1204 = vunpack.c.l.b16 %v1030
      %v1205 = vunpack.c.l.b16 %v1031
      %v1206 = vunpack.c.l.b16 %v1032
      %v1207 = vunpack.c.l.b16 %v1033
      %v1208 = vunpack.c.l.b16 %v1034
      %v1209 = vunpack.c.l.b16 %v1035
      %v1210 = vunpack.c.l.b16 %v1036
      %v1211 = vunpack.c.l.b16 %v1037
      %v1212 = vpack.c.b16 %v1197, %v1196
      %v1213 = vpack.c.b16 %v1199, %v1198
      %v1214 = vpack.c.b16 %v1201, %v1200
      %v1215 = vpack.c.b16 %v1203, %v1202
      %v1216 = vpack.c.b16 %v1205, %v1204
      %v1217 = vpack.c.b16 %v1207, %v1206
      %v1218 = vpack.c.b16 %v1209, %v1208
      %v1219 = vpack.c.b16 %v1211, %v1210
      %1228 = vmatprep.subr.bf16.mxu0 0
      %1229 = vmatpush1.bf16.msra.mxu0 %v1219
      %1230 = vmatprep.subr.bf16.mxu0 0
      %1231 = vmatpush1.bf16.msra.mxu0 %v1218
      %1232 = vmatprep.subr.bf16.mxu0 0
      %1233 = vmatpush1.bf16.msra.mxu0 %v1217
      %1234 = vmatprep.subr.bf16.mxu0 0
      %1235 = vmatpush1.bf16.msra.mxu0 %v1216
      %1236 = vmatprep.subr.bf16.mxu0 0
      %1237 = vmatpush1.bf16.msra.mxu0 %v1215
      %1238 = vmatprep.subr.bf16.mxu0 0
      %1239 = vmatpush1.bf16.msra.mxu0 %v1214
      %1240 = vmatprep.subr.bf16.mxu0 0
      %1241 = vmatpush1.bf16.msra.mxu0 %v1213
      %1242 = vmatprep.subr.bf16.mxu0 0
      %1243 = vmatpush1.bf16.msra.mxu0 %v1212
      %1244 = vmatprep.subr.bf16.mxu0 0
      %1245 = vmatpush2.bf16.msra.mxu0 0
      %1246 = vmatprep.subr.bf16.mxu0 0
      %1247 = vmatpush2.bf16.msra.mxu0 0
      %1248 = vmatprep.subr.bf16.mxu0 0
      %1249 = vmatpush2.bf16.msra.mxu0 0
      %1250 = vmatprep.subr.bf16.mxu0 0
      %1251 = vmatpush2.bf16.msra.mxu0 0
      %1252 = vmatprep.subr.bf16.mxu0 0
      %1253 = vmatpush2.bf16.msra.mxu0 0
      %1254 = vmatprep.subr.bf16.mxu0 0
      %1255 = vmatpush2.bf16.msra.mxu0 0
      %1256 = vmatprep.subr.bf16.mxu0 0
      %1257 = vmatpush2.bf16.msra.mxu0 0
      %1258 = vmatprep.subr.bf16.mxu0 0
      %1259 = vmatpush2.bf16.msra.mxu0 0
      %1260 = vmatprep.mubr.bf16.mxu0 0
      %1261 = vmatmul.mubr.bf16.gmra.mxu0 %v1018
      %v1262 = vpop.f32.mrf.mxu0
      %v1263 = vadd.f32 %v1150, %v1262
      %v1264 = vpop.f32.mrf.mxu0
      %v1265 = vpop.f32.mrf.mxu0
      %v1266 = vadd.f32 %v1153, %v1265
      %v1267 = vpop.f32.mrf.mxu0
      %1268 = vmatprep.mubr.bf16.mxu0 0
      %1269 = vmatmul.mubr.bf16.gmra.mxu0 %v1019
      %v1270 = vpop.f32.mrf.mxu0
      %v1271 = vadd.f32 %v1158, %v1270
      %v1272 = vpop.f32.mrf.mxu0
      %v1273 = vpop.f32.mrf.mxu0
      %v1274 = vadd.f32 %v1161, %v1273
      %v1275 = vpop.f32.mrf.mxu0
      %1276 = vmatprep.mubr.bf16.mxu0 0
      %1277 = vmatmul.mubr.bf16.gmra.mxu0 %v1020
      %v1278 = vpop.f32.mrf.mxu0
      %v1279 = vadd.f32 %v1166, %v1278
      %v1280 = vpop.f32.mrf.mxu0
      %v1281 = vpop.f32.mrf.mxu0
      %v1282 = vadd.f32 %v1169, %v1281
      %v1283 = vpop.f32.mrf.mxu0
      %1284 = vmatprep.mubr.bf16.mxu0 0
      %1285 = vmatmul.mubr.bf16.gmra.mxu0 %v1021
      %v1286 = vpop.f32.mrf.mxu0
      %v1287 = vadd.f32 %v1174, %v1286
      %v1288 = vpop.f32.mrf.mxu0
      %v1289 = vpop.f32.mrf.mxu0
      %v1290 = vadd.f32 %v1177, %v1289
      %v1291 = vpop.f32.mrf.mxu0
      %1292 = vdwg.mxu0
      %v1293 = vld [vmem:[#allocation2 + $0x9] sm:$0xff]
      %v1294 = vld [vmem:[#allocation2 + $0x11] sm:$0xff]
      %v1295 = vld [vmem:[#allocation2 + $0x19] sm:$0xff]
      %v1296 = vld [vmem:[#allocation2 + $0x21] sm:$0xff]
      %v1297 = vld [vmem:[#allocation2 + $0x29] sm:$0xff]
      %v1298 = vld [vmem:[#allocation2 + $0x31] sm:$0xff]
      %v1299 = vld [vmem:[#allocation2 + $0x39] sm:$0xff]
      %v1300 = vld [vmem:[#allocation2 + $0x41] sm:$0xff]
      %1302 = vset.pattern.permute.xlu0 0
      %1303 = vperm.xlu0 %1302, %v954
      %v1304 = vpop.permute.xlu0 %1303
      %1307 = vset.pattern.permute.xlu0 0
      %1308 = vperm.xlu0 %1307, %v955
      %v1309 = vpop.permute.xlu0 %1308
      %1312 = vset.pattern.permute.xlu0 0
      %1313 = vperm.xlu0 %1312, %v956
      %v1314 = vpop.permute.xlu0 %1313
      %1317 = vset.pattern.permute.xlu0 0
      %1318 = vperm.xlu0 %1317, %v957
      %v1319 = vpop.permute.xlu0 %1318
      %1322 = vset.pattern.permute.xlu0 0
      %1323 = vperm.xlu0 %1322, %v958
      %v1324 = vpop.permute.xlu0 %1323
      %1327 = vset.pattern.permute.xlu0 0
      %1328 = vperm.xlu0 %1327, %v959
      %v1329 = vpop.permute.xlu0 %1328
      %1332 = vset.pattern.permute.xlu0 0
      %1333 = vperm.xlu0 %1332, %v960
      %v1334 = vpop.permute.xlu0 %1333
      %1337 = vset.pattern.permute.xlu0 0
      %1338 = vperm.xlu0 %1337, %v961
      %v1339 = vpop.permute.xlu0 %1338
      %v1341 = vmul.f32 %v1293, %v1304
      %v1342 = vmul.f32 %v1294, %v1309
      %v1343 = vmul.f32 %v1295, %v1314
      %v1344 = vmul.f32 %v1296, %v1319
      %v1345 = vmul.f32 %v1297, %v1324
      %v1346 = vmul.f32 %v1298, %v1329
      %v1347 = vmul.f32 %v1299, %v1334
      %v1348 = vmul.f32 %v1300, %v1339
      %v1349 = vpack.c.bf16 %v1342, %v1341
      %v1350 = vpack.c.bf16 %v1344, %v1343
      %v1351 = vpack.c.bf16 %v1346, %v1345
      %v1352 = vpack.c.bf16 %v1348, %v1347
      %s1353 = scalar_lea.vmem %s8, 128
      %v1354 = vld [vmem:[%s1353] sm:$0xf]
      %v1355 = vld [vmem:[%s1353 + $0x4] sm:$0xf]
      %v1356 = vld [vmem:[%s1353 + $0x8] sm:$0xf]
      %v1357 = vld [vmem:[%s1353 + $0xc] sm:$0xf]
      %v1358 = vld [vmem:[%s1353 + $0x10] sm:$0xf]
      %v1359 = vld [vmem:[%s1353 + $0x14] sm:$0xf]
      %v1360 = vld [vmem:[%s1353 + $0x18] sm:$0xf]
      %v1361 = vld [vmem:[%s1353 + $0x1c] sm:$0xf]
      %v1362 = vld [vmem:[%s1353 + $0x20] sm:$0xf]
      %v1363 = vld [vmem:[%s1353 + $0x24] sm:$0xf]
      %v1364 = vld [vmem:[%s1353 + $0x28] sm:$0xf]
      %v1365 = vld [vmem:[%s1353 + $0x2c] sm:$0xf]
      %v1366 = vld [vmem:[%s1353 + $0x30] sm:$0xf]
      %v1367 = vld [vmem:[%s1353 + $0x34] sm:$0xf]
      %v1368 = vld [vmem:[%s1353 + $0x38] sm:$0xf]
      %v1369 = vld [vmem:[%s1353 + $0x3c] sm:$0xf]
      %v1386 = vunpack.c.l.b16 %v1354
      %v1387 = vunpack.c.l.b16 %v1355
      %v1388 = vunpack.c.l.b16 %v1356
      %v1389 = vunpack.c.l.b16 %v1357
      %v1390 = vunpack.c.l.b16 %v1358
      %v1391 = vunpack.c.l.b16 %v1359
      %v1392 = vunpack.c.l.b16 %v1360
      %v1393 = vunpack.c.l.b16 %v1361
      %v1394 = vunpack.c.l.b16 %v1362
      %v1395 = vunpack.c.l.b16 %v1363
      %v1396 = vunpack.c.l.b16 %v1364
      %v1397 = vunpack.c.l.b16 %v1365
      %v1398 = vunpack.c.l.b16 %v1366
      %v1399 = vunpack.c.l.b16 %v1367
      %v1400 = vunpack.c.l.b16 %v1368
      %v1401 = vunpack.c.l.b16 %v1369
      %v1402 = vpack.c.b16 %v1387, %v1386
      %v1403 = vpack.c.b16 %v1389, %v1388
      %v1404 = vpack.c.b16 %v1391, %v1390
      %v1405 = vpack.c.b16 %v1393, %v1392
      %v1406 = vpack.c.b16 %v1395, %v1394
      %v1407 = vpack.c.b16 %v1397, %v1396
      %v1408 = vpack.c.b16 %v1399, %v1398
      %v1409 = vpack.c.b16 %v1401, %v1400
      %1418 = vmatprep.subr.bf16.mxu0 0
      %1419 = vmatpush1.bf16.msra.mxu0 %v1409
      %1420 = vmatprep.subr.bf16.mxu0 0
      %1421 = vmatpush1.bf16.msra.mxu0 %v1408
      %1422 = vmatprep.subr.bf16.mxu0 0
      %1423 = vmatpush1.bf16.msra.mxu0 %v1407
      %1424 = vmatprep.subr.bf16.mxu0 0
      %1425 = vmatpush1.bf16.msra.mxu0 %v1406
      %1426 = vmatprep.subr.bf16.mxu0 0
      %1427 = vmatpush1.bf16.msra.mxu0 %v1405
      %1428 = vmatprep.subr.bf16.mxu0 0
      %1429 = vmatpush1.bf16.msra.mxu0 %v1404
      %1430 = vmatprep.subr.bf16.mxu0 0
      %1431 = vmatpush1.bf16.msra.mxu0 %v1403
      %1432 = vmatprep.subr.bf16.mxu0 0
      %1433 = vmatpush1.bf16.msra.mxu0 %v1402
      %1434 = vmatprep.subr.bf16.mxu0 0
      %1435 = vmatpush2.bf16.msra.mxu0 0
      %1436 = vmatprep.subr.bf16.mxu0 0
      %1437 = vmatpush2.bf16.msra.mxu0 0
      %1438 = vmatprep.subr.bf16.mxu0 0
      %1439 = vmatpush2.bf16.msra.mxu0 0
      %1440 = vmatprep.subr.bf16.mxu0 0
      %1441 = vmatpush2.bf16.msra.mxu0 0
      %1442 = vmatprep.subr.bf16.mxu0 0
      %1443 = vmatpush2.bf16.msra.mxu0 0
      %1444 = vmatprep.subr.bf16.mxu0 0
      %1445 = vmatpush2.bf16.msra.mxu0 0
      %1446 = vmatprep.subr.bf16.mxu0 0
      %1447 = vmatpush2.bf16.msra.mxu0 0
      %1448 = vmatprep.subr.bf16.mxu0 0
      %1449 = vmatpush2.bf16.msra.mxu0 0
      %1450 = vmatprep.mubr.bf16.mxu0 0
      %1451 = vmatmul.mubr.bf16.gmra.mxu0 %v1349
      %v1452 = vpop.f32.mrf.mxu0
      %v1453 = vadd.f32 0.0, %v1452
      %v1454 = vpop.f32.mrf.mxu0
      %v1455 = vpop.f32.mrf.mxu0
      %v1456 = vadd.f32 0.0, %v1455
      %v1457 = vpop.f32.mrf.mxu0
      %1458 = vmatprep.mubr.bf16.mxu0 0
      %1459 = vmatmul.mubr.bf16.gmra.mxu0 %v1350
      %v1460 = vpop.f32.mrf.mxu0
      %v1461 = vadd.f32 0.0, %v1460
      %v1462 = vpop.f32.mrf.mxu0
      %v1463 = vpop.f32.mrf.mxu0
      %v1464 = vadd.f32 0.0, %v1463
      %v1465 = vpop.f32.mrf.mxu0
      %1466 = vmatprep.mubr.bf16.mxu0 0
      %1467 = vmatmul.mubr.bf16.gmra.mxu0 %v1351
      %v1468 = vpop.f32.mrf.mxu0
      %v1469 = vadd.f32 0.0, %v1468
      %v1470 = vpop.f32.mrf.mxu0
      %v1471 = vpop.f32.mrf.mxu0
      %v1472 = vadd.f32 0.0, %v1471
      %v1473 = vpop.f32.mrf.mxu0
      %1474 = vmatprep.mubr.bf16.mxu0 0
      %1475 = vmatmul.mubr.bf16.gmra.mxu0 %v1352
      %v1476 = vpop.f32.mrf.mxu0
      %v1477 = vadd.f32 0.0, %v1476
      %v1478 = vpop.f32.mrf.mxu0
      %v1479 = vpop.f32.mrf.mxu0
      %v1480 = vadd.f32 0.0, %v1479
      %v1481 = vpop.f32.mrf.mxu0
      %1482 = vdwg.mxu0
      %v1483 = vadd.f32 %v1263, %v1453
      %v1484 = vadd.f32 %v1266, %v1456
      %v1485 = vadd.f32 %v1271, %v1461
      %v1486 = vadd.f32 %v1274, %v1464
      %v1487 = vadd.f32 %v1279, %v1469
      %v1488 = vadd.f32 %v1282, %v1472
      %v1489 = vadd.f32 %v1287, %v1477
      %v1490 = vadd.f32 %v1290, %v1480
      %v1491 = vld [vmem:[#allocation2 + $0xf] sm:$0xff]
      %v1492 = vld [vmem:[#allocation2 + $0x17] sm:$0xff]
      %v1493 = vld [vmem:[#allocation2 + $0x1f] sm:$0xff]
      %v1494 = vld [vmem:[#allocation2 + $0x27] sm:$0xff]
      %v1495 = vld [vmem:[#allocation2 + $0x2f] sm:$0xff]
      %v1496 = vld [vmem:[#allocation2 + $0x37] sm:$0xff]
      %v1497 = vld [vmem:[#allocation2 + $0x3f] sm:$0xff]
      %v1498 = vld [vmem:[#allocation2 + $0x47] sm:$0xff]
      %v1499 = vmul.f32 %v1491, %v973
      %v1500 = vmul.f32 %v1492, %v978
      %v1501 = vmul.f32 %v1493, %v983
      %v1502 = vmul.f32 %v1494, %v988
      %v1503 = vmul.f32 %v1495, %v993
      %v1504 = vmul.f32 %v1496, %v998
      %v1505 = vmul.f32 %v1497, %v1003
      %v1506 = vmul.f32 %v1498, %v1008
      %v1507 = vpack.c.bf16 %v1500, %v1499
      %v1508 = vpack.c.bf16 %v1502, %v1501
      %v1509 = vpack.c.bf16 %v1504, %v1503
      %v1510 = vpack.c.bf16 %v1506, %v1505
      %s1511 = scalar_lea.vmem %s8, 192
      %v1512 = vld [vmem:[%s1511] sm:$0xf]
      %v1513 = vld [vmem:[%s1511 + $0x4] sm:$0xf]
      %v1514 = vld [vmem:[%s1511 + $0x8] sm:$0xf]
      %v1515 = vld [vmem:[%s1511 + $0xc] sm:$0xf]
      %v1516 = vld [vmem:[%s1511 + $0x10] sm:$0xf]
      %v1517 = vld [vmem:[%s1511 + $0x14] sm:$0xf]
      %v1518 = vld [vmem:[%s1511 + $0x18] sm:$0xf]
      %v1519 = vld [vmem:[%s1511 + $0x1c] sm:$0xf]
      %v1520 = vld [vmem:[%s1511 + $0x20] sm:$0xf]
      %v1521 = vld [vmem:[%s1511 + $0x24] sm:$0xf]
      %v1522 = vld [vmem:[%s1511 + $0x28] sm:$0xf]
      %v1523 = vld [vmem:[%s1511 + $0x2c] sm:$0xf]
      %v1524 = vld [vmem:[%s1511 + $0x30] sm:$0xf]
      %v1525 = vld [vmem:[%s1511 + $0x34] sm:$0xf]
      %v1526 = vld [vmem:[%s1511 + $0x38] sm:$0xf]
      %v1527 = vld [vmem:[%s1511 + $0x3c] sm:$0xf]
      %v1544 = vunpack.c.l.b16 %v1512
      %v1545 = vunpack.c.l.b16 %v1513
      %v1546 = vunpack.c.l.b16 %v1514
      %v1547 = vunpack.c.l.b16 %v1515
      %v1548 = vunpack.c.l.b16 %v1516
      %v1549 = vunpack.c.l.b16 %v1517
      %v1550 = vunpack.c.l.b16 %v1518
      %v1551 = vunpack.c.l.b16 %v1519
      %v1552 = vunpack.c.l.b16 %v1520
      %v1553 = vunpack.c.l.b16 %v1521
      %v1554 = vunpack.c.l.b16 %v1522
      %v1555 = vunpack.c.l.b16 %v1523
      %v1556 = vunpack.c.l.b16 %v1524
      %v1557 = vunpack.c.l.b16 %v1525
      %v1558 = vunpack.c.l.b16 %v1526
      %v1559 = vunpack.c.l.b16 %v1527
      %v1560 = vpack.c.b16 %v1545, %v1544
      %v1561 = vpack.c.b16 %v1547, %v1546
      %v1562 = vpack.c.b16 %v1549, %v1548
      %v1563 = vpack.c.b16 %v1551, %v1550
      %v1564 = vpack.c.b16 %v1553, %v1552
      %v1565 = vpack.c.b16 %v1555, %v1554
      %v1566 = vpack.c.b16 %v1557, %v1556
      %v1567 = vpack.c.b16 %v1559, %v1558
      %1576 = vmatprep.subr.bf16.mxu0 0
      %1577 = vmatpush1.bf16.msra.mxu0 %v1567
      %1578 = vmatprep.subr.bf16.mxu0 0
      %1579 = vmatpush1.bf16.msra.mxu0 %v1566
      %1580 = vmatprep.subr.bf16.mxu0 0
      %1581 = vmatpush1.bf16.msra.mxu0 %v1565
      %1582 = vmatprep.subr.bf16.mxu0 0
      %1583 = vmatpush1.bf16.msra.mxu0 %v1564
      %1584 = vmatprep.subr.bf16.mxu0 0
      %1585 = vmatpush1.bf16.msra.mxu0 %v1563
      %1586 = vmatprep.subr.bf16.mxu0 0
      %1587 = vmatpush1.bf16.msra.mxu0 %v1562
      %1588 = vmatprep.subr.bf16.mxu0 0
      %1589 = vmatpush1.bf16.msra.mxu0 %v1561
      %1590 = vmatprep.subr.bf16.mxu0 0
      %1591 = vmatpush1.bf16.msra.mxu0 %v1560
      %1592 = vmatprep.subr.bf16.mxu0 0
      %1593 = vmatpush2.bf16.msra.mxu0 0
      %1594 = vmatprep.subr.bf16.mxu0 0
      %1595 = vmatpush2.bf16.msra.mxu0 0
      %1596 = vmatprep.subr.bf16.mxu0 0
      %1597 = vmatpush2.bf16.msra.mxu0 0
      %1598 = vmatprep.subr.bf16.mxu0 0
      %1599 = vmatpush2.bf16.msra.mxu0 0
      %1600 = vmatprep.subr.bf16.mxu0 0
      %1601 = vmatpush2.bf16.msra.mxu0 0
      %1602 = vmatprep.subr.bf16.mxu0 0
      %1603 = vmatpush2.bf16.msra.mxu0 0
      %1604 = vmatprep.subr.bf16.mxu0 0
      %1605 = vmatpush2.bf16.msra.mxu0 0
      %1606 = vmatprep.subr.bf16.mxu0 0
      %1607 = vmatpush2.bf16.msra.mxu0 0
      %1608 = vmatprep.mubr.bf16.mxu0 0
      %1609 = vmatmul.mubr.bf16.gmra.mxu0 %v1507
      %v1610 = vpop.f32.mrf.mxu0
      %v1611 = vadd.f32 0.0, %v1610
      %v1612 = vpop.f32.mrf.mxu0
      %v1613 = vpop.f32.mrf.mxu0
      %v1614 = vadd.f32 0.0, %v1613
      %v1615 = vpop.f32.mrf.mxu0
      %1616 = vmatprep.mubr.bf16.mxu0 0
      %1617 = vmatmul.mubr.bf16.gmra.mxu0 %v1508
      %v1618 = vpop.f32.mrf.mxu0
      %v1619 = vadd.f32 0.0, %v1618
      %v1620 = vpop.f32.mrf.mxu0
      %v1621 = vpop.f32.mrf.mxu0
      %v1622 = vadd.f32 0.0, %v1621
      %v1623 = vpop.f32.mrf.mxu0
      %1624 = vmatprep.mubr.bf16.mxu0 0
      %1625 = vmatmul.mubr.bf16.gmra.mxu0 %v1509
      %v1626 = vpop.f32.mrf.mxu0
      %v1627 = vadd.f32 0.0, %v1626
      %v1628 = vpop.f32.mrf.mxu0
      %v1629 = vpop.f32.mrf.mxu0
      %v1630 = vadd.f32 0.0, %v1629
      %v1631 = vpop.f32.mrf.mxu0
      %1632 = vmatprep.mubr.bf16.mxu0 0
      %1633 = vmatmul.mubr.bf16.gmra.mxu0 %v1510
      %v1634 = vpop.f32.mrf.mxu0
      %v1635 = vadd.f32 0.0, %v1634
      %v1636 = vpop.f32.mrf.mxu0
      %v1637 = vpop.f32.mrf.mxu0
      %v1638 = vadd.f32 0.0, %v1637
      %v1639 = vpop.f32.mrf.mxu0
      %1640 = vdwg.mxu0
      %v1641 = vadd.f32 %v1483, %v1611
      %v1642 = vadd.f32 %v1484, %v1614
      %v1643 = vadd.f32 %v1485, %v1619
      %v1644 = vadd.f32 %v1486, %v1622
      %v1645 = vadd.f32 %v1487, %v1627
      %v1646 = vadd.f32 %v1488, %v1630
      %v1647 = vadd.f32 %v1489, %v1635
      %v1648 = vadd.f32 %v1490, %v1638
      %v1649 = vld [vmem:[#allocation2 + $0x10] sm:$0xff]
      %v1650 = vld [vmem:[#allocation2 + $0x18] sm:$0xff]
      %v1651 = vld [vmem:[#allocation2 + $0x20] sm:$0xff]
      %v1652 = vld [vmem:[#allocation2 + $0x28] sm:$0xff]
      %v1653 = vld [vmem:[#allocation2 + $0x30] sm:$0xff]
      %v1654 = vld [vmem:[#allocation2 + $0x38] sm:$0xff]
      %v1655 = vld [vmem:[#allocation2 + $0x40] sm:$0xff]
      %v1656 = vld [vmem:[#allocation2 + $0x48] sm:$0xff]
      %v1657 = vpack.c.bf16 %v1650, %v1649
      %v1658 = vpack.c.bf16 %v1652, %v1651
      %v1659 = vpack.c.bf16 %v1654, %v1653
      %v1660 = vpack.c.bf16 %v1656, %v1655
      %s1661 = scalar_lea.vmem %s8, 256
      %v1662 = vld [vmem:[%s1661] sm:$0xf]
      %v1663 = vld [vmem:[%s1661 + $0x4] sm:$0xf]
      %v1664 = vld [vmem:[%s1661 + $0x8] sm:$0xf]
      %v1665 = vld [vmem:[%s1661 + $0xc] sm:$0xf]
      %v1666 = vld [vmem:[%s1661 + $0x10] sm:$0xf]
      %v1667 = vld [vmem:[%s1661 + $0x14] sm:$0xf]
      %v1668 = vld [vmem:[%s1661 + $0x18] sm:$0xf]
      %v1669 = vld [vmem:[%s1661 + $0x1c] sm:$0xf]
      %v1670 = vld [vmem:[%s1661 + $0x20] sm:$0xf]
      %v1671 = vld [vmem:[%s1661 + $0x24] sm:$0xf]
      %v1672 = vld [vmem:[%s1661 + $0x28] sm:$0xf]
      %v1673 = vld [vmem:[%s1661 + $0x2c] sm:$0xf]
      %v1674 = vld [vmem:[%s1661 + $0x30] sm:$0xf]
      %v1675 = vld [vmem:[%s1661 + $0x34] sm:$0xf]
      %v1676 = vld [vmem:[%s1661 + $0x38] sm:$0xf]
      %v1677 = vld [vmem:[%s1661 + $0x3c] sm:$0xf]
      %v1694 = vunpack.c.l.b16 %v1662
      %v1695 = vunpack.c.l.b16 %v1663
      %v1696 = vunpack.c.l.b16 %v1664
      %v1697 = vunpack.c.l.b16 %v1665
      %v1698 = vunpack.c.l.b16 %v1666
      %v1699 = vunpack.c.l.b16 %v1667
      %v1700 = vunpack.c.l.b16 %v1668
      %v1701 = vunpack.c.l.b16 %v1669
      %v1702 = vunpack.c.l.b16 %v1670
      %v1703 = vunpack.c.l.b16 %v1671
      %v1704 = vunpack.c.l.b16 %v1672
      %v1705 = vunpack.c.l.b16 %v1673
      %v1706 = vunpack.c.l.b16 %v1674
      %v1707 = vunpack.c.l.b16 %v1675
      %v1708 = vunpack.c.l.b16 %v1676
      %v1709 = vunpack.c.l.b16 %v1677
      %v1710 = vpack.c.b16 %v1695, %v1694
      %v1711 = vpack.c.b16 %v1697, %v1696
      %v1712 = vpack.c.b16 %v1699, %v1698
      %v1713 = vpack.c.b16 %v1701, %v1700
      %v1714 = vpack.c.b16 %v1703, %v1702
      %v1715 = vpack.c.b16 %v1705, %v1704
      %v1716 = vpack.c.b16 %v1707, %v1706
      %v1717 = vpack.c.b16 %v1709, %v1708
      %1726 = vmatprep.subr.bf16.mxu0 0
      %1727 = vmatpush1.bf16.msra.mxu0 %v1717
      %1728 = vmatprep.subr.bf16.mxu0 0
      %1729 = vmatpush1.bf16.msra.mxu0 %v1716
      %1730 = vmatprep.subr.bf16.mxu0 0
      %1731 = vmatpush1.bf16.msra.mxu0 %v1715
      %1732 = vmatprep.subr.bf16.mxu0 0
      %1733 = vmatpush1.bf16.msra.mxu0 %v1714
      %1734 = vmatprep.subr.bf16.mxu0 0
      %1735 = vmatpush1.bf16.msra.mxu0 %v1713
      %1736 = vmatprep.subr.bf16.mxu0 0
      %1737 = vmatpush1.bf16.msra.mxu0 %v1712
      %1738 = vmatprep.subr.bf16.mxu0 0
      %1739 = vmatpush1.bf16.msra.mxu0 %v1711
      %1740 = vmatprep.subr.bf16.mxu0 0
      %1741 = vmatpush1.bf16.msra.mxu0 %v1710
      %1742 = vmatprep.subr.bf16.mxu0 0
      %1743 = vmatpush2.bf16.msra.mxu0 0
      %1744 = vmatprep.subr.bf16.mxu0 0
      %1745 = vmatpush2.bf16.msra.mxu0 0
      %1746 = vmatprep.subr.bf16.mxu0 0
      %1747 = vmatpush2.bf16.msra.mxu0 0
      %1748 = vmatprep.subr.bf16.mxu0 0
      %1749 = vmatpush2.bf16.msra.mxu0 0
      %1750 = vmatprep.subr.bf16.mxu0 0
      %1751 = vmatpush2.bf16.msra.mxu0 0
      %1752 = vmatprep.subr.bf16.mxu0 0
      %1753 = vmatpush2.bf16.msra.mxu0 0
      %1754 = vmatprep.subr.bf16.mxu0 0
      %1755 = vmatpush2.bf16.msra.mxu0 0
      %1756 = vmatprep.subr.bf16.mxu0 0
      %1757 = vmatpush2.bf16.msra.mxu0 0
      %1758 = vmatprep.mubr.bf16.mxu0 0
      %1759 = vmatmul.mubr.bf16.gmra.mxu0 %v1657
      %v1760 = vpop.f32.mrf.mxu0
      %v1761 = vadd.f32 0.0, %v1760
      %v1762 = vpop.f32.mrf.mxu0
      %v1763 = vpop.f32.mrf.mxu0
      %v1764 = vadd.f32 0.0, %v1763
      %v1765 = vpop.f32.mrf.mxu0
      %1766 = vmatprep.mubr.bf16.mxu0 0
      %1767 = vmatmul.mubr.bf16.gmra.mxu0 %v1658
      %v1768 = vpop.f32.mrf.mxu0
      %v1769 = vadd.f32 0.0, %v1768
      %v1770 = vpop.f32.mrf.mxu0
      %v1771 = vpop.f32.mrf.mxu0
      %v1772 = vadd.f32 0.0, %v1771
      %v1773 = vpop.f32.mrf.mxu0
      %1774 = vmatprep.mubr.bf16.mxu0 0
      %1775 = vmatmul.mubr.bf16.gmra.mxu0 %v1659
      %v1776 = vpop.f32.mrf.mxu0
      %v1777 = vadd.f32 0.0, %v1776
      %v1778 = vpop.f32.mrf.mxu0
      %v1779 = vpop.f32.mrf.mxu0
      %v1780 = vadd.f32 0.0, %v1779
      %v1781 = vpop.f32.mrf.mxu0
      %1782 = vmatprep.mubr.bf16.mxu0 0
      %1783 = vmatmul.mubr.bf16.gmra.mxu0 %v1660
      %v1784 = vpop.f32.mrf.mxu0
      %v1785 = vadd.f32 0.0, %v1784
      %v1786 = vpop.f32.mrf.mxu0
      %v1787 = vpop.f32.mrf.mxu0
      %v1788 = vadd.f32 0.0, %v1787
      %v1789 = vpop.f32.mrf.mxu0
      %1790 = vdwg.mxu0
      %v1791 = vadd.f32 %v1641, %v1761
      %v1792 = vadd.f32 %v1642, %v1764
      %v1793 = vadd.f32 %v1643, %v1769
      %v1794 = vadd.f32 %v1644, %v1772
      %v1795 = vadd.f32 %v1645, %v1777
      %v1796 = vadd.f32 %v1646, %v1780
      %v1797 = vadd.f32 %v1647, %v1785
      %v1798 = vadd.f32 %v1648, %v1788
      %v1799 = vld [vmem:[#allocation2 + $0x11] sm:$0xff]
      %v1800 = vld [vmem:[#allocation2 + $0x19] sm:$0xff]
      %v1801 = vld [vmem:[#allocation2 + $0x21] sm:$0xff]
      %v1802 = vld [vmem:[#allocation2 + $0x29] sm:$0xff]
      %v1803 = vld [vmem:[#allocation2 + $0x31] sm:$0xff]
      %v1804 = vld [vmem:[#allocation2 + $0x39] sm:$0xff]
      %v1805 = vld [vmem:[#allocation2 + $0x41] sm:$0xff]
      %v1806 = vld [vmem:[#allocation2 + $0x49] sm:$0xff]
      %v1807 = vmul.f32 %v1799, %v1304
      %v1808 = vmul.f32 %v1800, %v1309
      %v1809 = vmul.f32 %v1801, %v1314
      %v1810 = vmul.f32 %v1802, %v1319
      %v1811 = vmul.f32 %v1803, %v1324
      %v1812 = vmul.f32 %v1804, %v1329
      %v1813 = vmul.f32 %v1805, %v1334
      %v1814 = vmul.f32 %v1806, %v1339
      %v1815 = vpack.c.bf16 %v1808, %v1807
      %v1816 = vpack.c.bf16 %v1810, %v1809
      %v1817 = vpack.c.bf16 %v1812, %v1811
      %v1818 = vpack.c.bf16 %v1814, %v1813
      %s1819 = scalar_lea.vmem %s8, 320
      %v1820 = vld [vmem:[%s1819] sm:$0xf]
      %v1821 = vld [vmem:[%s1819 + $0x4] sm:$0xf]
      %v1822 = vld [vmem:[%s1819 + $0x8] sm:$0xf]
      %v1823 = vld [vmem:[%s1819 + $0xc] sm:$0xf]
      %v1824 = vld [vmem:[%s1819 + $0x10] sm:$0xf]
      %v1825 = vld [vmem:[%s1819 + $0x14] sm:$0xf]
      %v1826 = vld [vmem:[%s1819 + $0x18] sm:$0xf]
      %v1827 = vld [vmem:[%s1819 + $0x1c] sm:$0xf]
      %v1828 = vld [vmem:[%s1819 + $0x20] sm:$0xf]
      %v1829 = vld [vmem:[%s1819 + $0x24] sm:$0xf]
      %v1830 = vld [vmem:[%s1819 + $0x28] sm:$0xf]
      %v1831 = vld [vmem:[%s1819 + $0x2c] sm:$0xf]
      %v1832 = vld [vmem:[%s1819 + $0x30] sm:$0xf]
      %v1833 = vld [vmem:[%s1819 + $0x34] sm:$0xf]
      %v1834 = vld [vmem:[%s1819 + $0x38] sm:$0xf]
      %v1835 = vld [vmem:[%s1819 + $0x3c] sm:$0xf]
      %v1852 = vunpack.c.l.b16 %v1820
      %v1853 = vunpack.c.l.b16 %v1821
      %v1854 = vunpack.c.l.b16 %v1822
      %v1855 = vunpack.c.l.b16 %v1823
      %v1856 = vunpack.c.l.b16 %v1824
      %v1857 = vunpack.c.l.b16 %v1825
      %v1858 = vunpack.c.l.b16 %v1826
      %v1859 = vunpack.c.l.b16 %v1827
      %v1860 = vunpack.c.l.b16 %v1828
      %v1861 = vunpack.c.l.b16 %v1829
      %v1862 = vunpack.c.l.b16 %v1830
      %v1863 = vunpack.c.l.b16 %v1831
      %v1864 = vunpack.c.l.b16 %v1832
      %v1865 = vunpack.c.l.b16 %v1833
      %v1866 = vunpack.c.l.b16 %v1834
      %v1867 = vunpack.c.l.b16 %v1835
      %v1868 = vpack.c.b16 %v1853, %v1852
      %v1869 = vpack.c.b16 %v1855, %v1854
      %v1870 = vpack.c.b16 %v1857, %v1856
      %v1871 = vpack.c.b16 %v1859, %v1858
      %v1872 = vpack.c.b16 %v1861, %v1860
      %v1873 = vpack.c.b16 %v1863, %v1862
      %v1874 = vpack.c.b16 %v1865, %v1864
      %v1875 = vpack.c.b16 %v1867, %v1866
      %1884 = vmatprep.subr.bf16.mxu0 0
      %1885 = vmatpush1.bf16.msra.mxu0 %v1875
      %1886 = vmatprep.subr.bf16.mxu0 0
      %1887 = vmatpush1.bf16.msra.mxu0 %v1874
      %1888 = vmatprep.subr.bf16.mxu0 0
      %1889 = vmatpush1.bf16.msra.mxu0 %v1873
      %1890 = vmatprep.subr.bf16.mxu0 0
      %1891 = vmatpush1.bf16.msra.mxu0 %v1872
      %1892 = vmatprep.subr.bf16.mxu0 0
      %1893 = vmatpush1.bf16.msra.mxu0 %v1871
      %1894 = vmatprep.subr.bf16.mxu0 0
      %1895 = vmatpush1.bf16.msra.mxu0 %v1870
      %1896 = vmatprep.subr.bf16.mxu0 0
      %1897 = vmatpush1.bf16.msra.mxu0 %v1869
      %1898 = vmatprep.subr.bf16.mxu0 0
      %1899 = vmatpush1.bf16.msra.mxu0 %v1868
      %1900 = vmatprep.subr.bf16.mxu0 0
      %1901 = vmatpush2.bf16.msra.mxu0 0
      %1902 = vmatprep.subr.bf16.mxu0 0
      %1903 = vmatpush2.bf16.msra.mxu0 0
      %1904 = vmatprep.subr.bf16.mxu0 0
      %1905 = vmatpush2.bf16.msra.mxu0 0
      %1906 = vmatprep.subr.bf16.mxu0 0
      %1907 = vmatpush2.bf16.msra.mxu0 0
      %1908 = vmatprep.subr.bf16.mxu0 0
      %1909 = vmatpush2.bf16.msra.mxu0 0
      %1910 = vmatprep.subr.bf16.mxu0 0
      %1911 = vmatpush2.bf16.msra.mxu0 0
      %1912 = vmatprep.subr.bf16.mxu0 0
      %1913 = vmatpush2.bf16.msra.mxu0 0
      %1914 = vmatprep.subr.bf16.mxu0 0
      %1915 = vmatpush2.bf16.msra.mxu0 0
      %1916 = vmatprep.mubr.bf16.mxu0 0
      %1917 = vmatmul.mubr.bf16.gmra.mxu0 %v1815
      %v1918 = vpop.f32.mrf.mxu0
      %v1919 = vadd.f32 0.0, %v1918
      %v1920 = vpop.f32.mrf.mxu0
      %v1921 = vpop.f32.mrf.mxu0
      %v1922 = vadd.f32 0.0, %v1921
      %v1923 = vpop.f32.mrf.mxu0
      %1924 = vmatprep.mubr.bf16.mxu0 0
      %1925 = vmatmul.mubr.bf16.gmra.mxu0 %v1816
      %v1926 = vpop.f32.mrf.mxu0
      %v1927 = vadd.f32 0.0, %v1926
      %v1928 = vpop.f32.mrf.mxu0
      %v1929 = vpop.f32.mrf.mxu0
      %v1930 = vadd.f32 0.0, %v1929
      %v1931 = vpop.f32.mrf.mxu0
      %1932 = vmatprep.mubr.bf16.mxu0 0
      %1933 = vmatmul.mubr.bf16.gmra.mxu0 %v1817
      %v1934 = vpop.f32.mrf.mxu0
      %v1935 = vadd.f32 0.0, %v1934
      %v1936 = vpop.f32.mrf.mxu0
      %v1937 = vpop.f32.mrf.mxu0
      %v1938 = vadd.f32 0.0, %v1937
      %v1939 = vpop.f32.mrf.mxu0
      %1940 = vmatprep.mubr.bf16.mxu0 0
      %1941 = vmatmul.mubr.bf16.gmra.mxu0 %v1818
      %v1942 = vpop.f32.mrf.mxu0
      %v1943 = vadd.f32 0.0, %v1942
      %v1944 = vpop.f32.mrf.mxu0
      %v1945 = vpop.f32.mrf.mxu0
      %v1946 = vadd.f32 0.0, %v1945
      %v1947 = vpop.f32.mrf.mxu0
      %1948 = vdwg.mxu0
      %v1949 = vadd.f32 %v1791, %v1919
      %v1950 = vadd.f32 %v1792, %v1922
      %v1951 = vadd.f32 %v1793, %v1927
      %v1952 = vadd.f32 %v1794, %v1930
      %v1953 = vadd.f32 %v1795, %v1935
      %v1954 = vadd.f32 %v1796, %v1938
      %v1955 = vadd.f32 %v1797, %v1943
      %v1956 = vadd.f32 %v1798, %v1946
      %v1957 = vld [vmem:[#allocation2 + $0x17] sm:$0xff]
      %v1958 = vld [vmem:[#allocation2 + $0x1f] sm:$0xff]
      %v1959 = vld [vmem:[#allocation2 + $0x27] sm:$0xff]
      %v1960 = vld [vmem:[#allocation2 + $0x2f] sm:$0xff]
      %v1961 = vld [vmem:[#allocation2 + $0x37] sm:$0xff]
      %v1962 = vld [vmem:[#allocation2 + $0x3f] sm:$0xff]
      %v1963 = vld [vmem:[#allocation2 + $0x47] sm:$0xff]
      %v1964 = vld [vmem:[#allocation2 + $0x4f] sm:$0xff]
      %v1965 = vmul.f32 %v1957, %v973
      %v1966 = vmul.f32 %v1958, %v978
      %v1967 = vmul.f32 %v1959, %v983
      %v1968 = vmul.f32 %v1960, %v988
      %v1969 = vmul.f32 %v1961, %v993
      %v1970 = vmul.f32 %v1962, %v998
      %v1971 = vmul.f32 %v1963, %v1003
      %v1972 = vmul.f32 %v1964, %v1008
      %v1973 = vpack.c.bf16 %v1966, %v1965
      %v1974 = vpack.c.bf16 %v1968, %v1967
      %v1975 = vpack.c.bf16 %v1970, %v1969
      %v1976 = vpack.c.bf16 %v1972, %v1971
      %s1977 = scalar_lea.vmem %s8, 384
      %v1978 = vld [vmem:[%s1977] sm:$0xf]
      %v1979 = vld [vmem:[%s1977 + $0x4] sm:$0xf]
      %v1980 = vld [vmem:[%s1977 + $0x8] sm:$0xf]
      %v1981 = vld [vmem:[%s1977 + $0xc] sm:$0xf]
      %v1982 = vld [vmem:[%s1977 + $0x10] sm:$0xf]
      %v1983 = vld [vmem:[%s1977 + $0x14] sm:$0xf]
      %v1984 = vld [vmem:[%s1977 + $0x18] sm:$0xf]
      %v1985 = vld [vmem:[%s1977 + $0x1c] sm:$0xf]
      %v1986 = vld [vmem:[%s1977 + $0x20] sm:$0xf]
      %v1987 = vld [vmem:[%s1977 + $0x24] sm:$0xf]
      %v1988 = vld [vmem:[%s1977 + $0x28] sm:$0xf]
      %v1989 = vld [vmem:[%s1977 + $0x2c] sm:$0xf]
      %v1990 = vld [vmem:[%s1977 + $0x30] sm:$0xf]
      %v1991 = vld [vmem:[%s1977 + $0x34] sm:$0xf]
      %v1992 = vld [vmem:[%s1977 + $0x38] sm:$0xf]
      %v1993 = vld [vmem:[%s1977 + $0x3c] sm:$0xf]
      %v2010 = vunpack.c.l.b16 %v1978
      %v2011 = vunpack.c.l.b16 %v1979
      %v2012 = vunpack.c.l.b16 %v1980
      %v2013 = vunpack.c.l.b16 %v1981
      %v2014 = vunpack.c.l.b16 %v1982
      %v2015 = vunpack.c.l.b16 %v1983
      %v2016 = vunpack.c.l.b16 %v1984
      %v2017 = vunpack.c.l.b16 %v1985
      %v2018 = vunpack.c.l.b16 %v1986
      %v2019 = vunpack.c.l.b16 %v1987
      %v2020 = vunpack.c.l.b16 %v1988
      %v2021 = vunpack.c.l.b16 %v1989
      %v2022 = vunpack.c.l.b16 %v1990
      %v2023 = vunpack.c.l.b16 %v1991
      %v2024 = vunpack.c.l.b16 %v1992
      %v2025 = vunpack.c.l.b16 %v1993
      %v2026 = vpack.c.b16 %v2011, %v2010
      %v2027 = vpack.c.b16 %v2013, %v2012
      %v2028 = vpack.c.b16 %v2015, %v2014
      %v2029 = vpack.c.b16 %v2017, %v2016
      %v2030 = vpack.c.b16 %v2019, %v2018
      %v2031 = vpack.c.b16 %v2021, %v2020
      %v2032 = vpack.c.b16 %v2023, %v2022
      %v2033 = vpack.c.b16 %v2025, %v2024
      %2042 = vmatprep.subr.bf16.mxu0 0
      %2043 = vmatpush1.bf16.msra.mxu0 %v2033
      %2044 = vmatprep.subr.bf16.mxu0 0
      %2045 = vmatpush1.bf16.msra.mxu0 %v2032
      %2046 = vmatprep.subr.bf16.mxu0 0
      %2047 = vmatpush1.bf16.msra.mxu0 %v2031
      %2048 = vmatprep.subr.bf16.mxu0 0
      %2049 = vmatpush1.bf16.msra.mxu0 %v2030
      %2050 = vmatprep.subr.bf16.mxu0 0
      %2051 = vmatpush1.bf16.msra.mxu0 %v2029
      %2052 = vmatprep.subr.bf16.mxu0 0
      %2053 = vmatpush1.bf16.msra.mxu0 %v2028
      %2054 = vmatprep.subr.bf16.mxu0 0
      %2055 = vmatpush1.bf16.msra.mxu0 %v2027
      %2056 = vmatprep.subr.bf16.mxu0 0
      %2057 = vmatpush1.bf16.msra.mxu0 %v2026
      %2058 = vmatprep.subr.bf16.mxu0 0
      %2059 = vmatpush2.bf16.msra.mxu0 0
      %2060 = vmatprep.subr.bf16.mxu0 0
      %2061 = vmatpush2.bf16.msra.mxu0 0
      %2062 = vmatprep.subr.bf16.mxu0 0
      %2063 = vmatpush2.bf16.msra.mxu0 0
      %2064 = vmatprep.subr.bf16.mxu0 0
      %2065 = vmatpush2.bf16.msra.mxu0 0
      %2066 = vmatprep.subr.bf16.mxu0 0
      %2067 = vmatpush2.bf16.msra.mxu0 0
      %2068 = vmatprep.subr.bf16.mxu0 0
      %2069 = vmatpush2.bf16.msra.mxu0 0
      %2070 = vmatprep.subr.bf16.mxu0 0
      %2071 = vmatpush2.bf16.msra.mxu0 0
      %2072 = vmatprep.subr.bf16.mxu0 0
      %2073 = vmatpush2.bf16.msra.mxu0 0
      %2074 = vmatprep.mubr.bf16.mxu0 0
      %2075 = vmatmul.mubr.bf16.gmra.mxu0 %v1973
      %v2076 = vpop.f32.mrf.mxu0
      %v2077 = vadd.f32 0.0, %v2076
      %v2078 = vpop.f32.mrf.mxu0
      %v2079 = vpop.f32.mrf.mxu0
      %v2080 = vadd.f32 0.0, %v2079
      %v2081 = vpop.f32.mrf.mxu0
      %2082 = vmatprep.mubr.bf16.mxu0 0
      %2083 = vmatmul.mubr.bf16.gmra.mxu0 %v1974
      %v2084 = vpop.f32.mrf.mxu0
      %v2085 = vadd.f32 0.0, %v2084
      %v2086 = vpop.f32.mrf.mxu0
      %v2087 = vpop.f32.mrf.mxu0
      %v2088 = vadd.f32 0.0, %v2087
      %v2089 = vpop.f32.mrf.mxu0
      %2090 = vmatprep.mubr.bf16.mxu0 0
      %2091 = vmatmul.mubr.bf16.gmra.mxu0 %v1975
      %v2092 = vpop.f32.mrf.mxu0
      %v2093 = vadd.f32 0.0, %v2092
      %v2094 = vpop.f32.mrf.mxu0
      %v2095 = vpop.f32.mrf.mxu0
      %v2096 = vadd.f32 0.0, %v2095
      %v2097 = vpop.f32.mrf.mxu0
      %2098 = vmatprep.mubr.bf16.mxu0 0
      %2099 = vmatmul.mubr.bf16.gmra.mxu0 %v1976
      %v2100 = vpop.f32.mrf.mxu0
      %v2101 = vadd.f32 0.0, %v2100
      %v2102 = vpop.f32.mrf.mxu0
      %v2103 = vpop.f32.mrf.mxu0
      %v2104 = vadd.f32 0.0, %v2103
      %v2105 = vpop.f32.mrf.mxu0
      %2106 = vdwg.mxu0
      %v2107 = vadd.f32 %v1949, %v2077
      %v2108 = vadd.f32 %v1950, %v2080
      %v2109 = vadd.f32 %v1951, %v2085
      %v2110 = vadd.f32 %v1952, %v2088
      %v2111 = vadd.f32 %v1953, %v2093
      %v2112 = vadd.f32 %v1954, %v2096
      %v2113 = vadd.f32 %v1955, %v2101
      %v2114 = vadd.f32 %v1956, %v2104
      %v2115 = vld [vmem:[#allocation2 + $0x18] sm:$0xff]
      %v2116 = vld [vmem:[#allocation2 + $0x20] sm:$0xff]
      %v2117 = vld [vmem:[#allocation2 + $0x28] sm:$0xff]
      %v2118 = vld [vmem:[#allocation2 + $0x30] sm:$0xff]
      %v2119 = vld [vmem:[#allocation2 + $0x38] sm:$0xff]
      %v2120 = vld [vmem:[#allocation2 + $0x40] sm:$0xff]
      %v2121 = vld [vmem:[#allocation2 + $0x48] sm:$0xff]
      %v2122 = vld [vmem:[#allocation2 + $0x50] sm:$0xff]
      %v2123 = vpack.c.bf16 %v2116, %v2115
      %v2124 = vpack.c.bf16 %v2118, %v2117
      %v2125 = vpack.c.bf16 %v2120, %v2119
      %v2126 = vpack.c.bf16 %v2122, %v2121
      %s2127 = scalar_lea.vmem %s8, 448
      %v2128 = vld [vmem:[%s2127] sm:$0xf]
      %v2129 = vld [vmem:[%s2127 + $0x4] sm:$0xf]
      %v2130 = vld [vmem:[%s2127 + $0x8] sm:$0xf]
      %v2131 = vld [vmem:[%s2127 + $0xc] sm:$0xf]
      %v2132 = vld [vmem:[%s2127 + $0x10] sm:$0xf]
      %v2133 = vld [vmem:[%s2127 + $0x14] sm:$0xf]
      %v2134 = vld [vmem:[%s2127 + $0x18] sm:$0xf]
      %v2135 = vld [vmem:[%s2127 + $0x1c] sm:$0xf]
      %v2136 = vld [vmem:[%s2127 + $0x20] sm:$0xf]
      %v2137 = vld [vmem:[%s2127 + $0x24] sm:$0xf]
      %v2138 = vld [vmem:[%s2127 + $0x28] sm:$0xf]
      %v2139 = vld [vmem:[%s2127 + $0x2c] sm:$0xf]
      %v2140 = vld [vmem:[%s2127 + $0x30] sm:$0xf]
      %v2141 = vld [vmem:[%s2127 + $0x34] sm:$0xf]
      %v2142 = vld [vmem:[%s2127 + $0x38] sm:$0xf]
      %v2143 = vld [vmem:[%s2127 + $0x3c] sm:$0xf]
      %v2160 = vunpack.c.l.b16 %v2128
      %v2161 = vunpack.c.l.b16 %v2129
      %v2162 = vunpack.c.l.b16 %v2130
      %v2163 = vunpack.c.l.b16 %v2131
      %v2164 = vunpack.c.l.b16 %v2132
      %v2165 = vunpack.c.l.b16 %v2133
      %v2166 = vunpack.c.l.b16 %v2134
      %v2167 = vunpack.c.l.b16 %v2135
      %v2168 = vunpack.c.l.b16 %v2136
      %v2169 = vunpack.c.l.b16 %v2137
      %v2170 = vunpack.c.l.b16 %v2138
      %v2171 = vunpack.c.l.b16 %v2139
      %v2172 = vunpack.c.l.b16 %v2140
      %v2173 = vunpack.c.l.b16 %v2141
      %v2174 = vunpack.c.l.b16 %v2142
      %v2175 = vunpack.c.l.b16 %v2143
      %v2176 = vpack.c.b16 %v2161, %v2160
      %v2177 = vpack.c.b16 %v2163, %v2162
      %v2178 = vpack.c.b16 %v2165, %v2164
      %v2179 = vpack.c.b16 %v2167, %v2166
      %v2180 = vpack.c.b16 %v2169, %v2168
      %v2181 = vpack.c.b16 %v2171, %v2170
      %v2182 = vpack.c.b16 %v2173, %v2172
      %v2183 = vpack.c.b16 %v2175, %v2174
      %2192 = vmatprep.subr.bf16.mxu0 0
      %2193 = vmatpush1.bf16.msra.mxu0 %v2183
      %2194 = vmatprep.subr.bf16.mxu0 0
      %2195 = vmatpush1.bf16.msra.mxu0 %v2182
      %2196 = vmatprep.subr.bf16.mxu0 0
      %2197 = vmatpush1.bf16.msra.mxu0 %v2181
      %2198 = vmatprep.subr.bf16.mxu0 0
      %2199 = vmatpush1.bf16.msra.mxu0 %v2180
      %2200 = vmatprep.subr.bf16.mxu0 0
      %2201 = vmatpush1.bf16.msra.mxu0 %v2179
      %2202 = vmatprep.subr.bf16.mxu0 0
      %2203 = vmatpush1.bf16.msra.mxu0 %v2178
      %2204 = vmatprep.subr.bf16.mxu0 0
      %2205 = vmatpush1.bf16.msra.mxu0 %v2177
      %2206 = vmatprep.subr.bf16.mxu0 0
      %2207 = vmatpush1.bf16.msra.mxu0 %v2176
      %2208 = vmatprep.subr.bf16.mxu0 0
      %2209 = vmatpush2.bf16.msra.mxu0 0
      %2210 = vmatprep.subr.bf16.mxu0 0
      %2211 = vmatpush2.bf16.msra.mxu0 0
      %2212 = vmatprep.subr.bf16.mxu0 0
      %2213 = vmatpush2.bf16.msra.mxu0 0
      %2214 = vmatprep.subr.bf16.mxu0 0
      %2215 = vmatpush2.bf16.msra.mxu0 0
      %2216 = vmatprep.subr.bf16.mxu0 0
      %2217 = vmatpush2.bf16.msra.mxu0 0
      %2218 = vmatprep.subr.bf16.mxu0 0
      %2219 = vmatpush2.bf16.msra.mxu0 0
      %2220 = vmatprep.subr.bf16.mxu0 0
      %2221 = vmatpush2.bf16.msra.mxu0 0
      %2222 = vmatprep.subr.bf16.mxu0 0
      %2223 = vmatpush2.bf16.msra.mxu0 0
      %2224 = vmatprep.mubr.bf16.mxu0 0
      %2225 = vmatmul.mubr.bf16.gmra.mxu0 %v2123
      %v2226 = vpop.f32.mrf.mxu0
      %v2227 = vadd.f32 0.0, %v2226
      %v2228 = vpop.f32.mrf.mxu0
      %v2229 = vpop.f32.mrf.mxu0
      %v2230 = vadd.f32 0.0, %v2229
      %v2231 = vpop.f32.mrf.mxu0
      %2232 = vmatprep.mubr.bf16.mxu0 0
      %2233 = vmatmul.mubr.bf16.gmra.mxu0 %v2124
      %v2234 = vpop.f32.mrf.mxu0
      %v2235 = vadd.f32 0.0, %v2234
      %v2236 = vpop.f32.mrf.mxu0
      %v2237 = vpop.f32.mrf.mxu0
      %v2238 = vadd.f32 0.0, %v2237
      %v2239 = vpop.f32.mrf.mxu0
      %2240 = vmatprep.mubr.bf16.mxu0 0
      %2241 = vmatmul.mubr.bf16.gmra.mxu0 %v2125
      %v2242 = vpop.f32.mrf.mxu0
      %v2243 = vadd.f32 0.0, %v2242
      %v2244 = vpop.f32.mrf.mxu0
      %v2245 = vpop.f32.mrf.mxu0
      %v2246 = vadd.f32 0.0, %v2245
      %v2247 = vpop.f32.mrf.mxu0
      %2248 = vmatprep.mubr.bf16.mxu0 0
      %2249 = vmatmul.mubr.bf16.gmra.mxu0 %v2126
      %v2250 = vpop.f32.mrf.mxu0
      %v2251 = vadd.f32 0.0, %v2250
      %v2252 = vpop.f32.mrf.mxu0
      %v2253 = vpop.f32.mrf.mxu0
      %v2254 = vadd.f32 0.0, %v2253
      %v2255 = vpop.f32.mrf.mxu0
      %2256 = vdwg.mxu0
      %v2257 = vadd.f32 %v2107, %v2227
      %v2258 = vadd.f32 %v2108, %v2230
      %v2259 = vadd.f32 %v2109, %v2235
      %v2260 = vadd.f32 %v2110, %v2238
      %v2261 = vadd.f32 %v2111, %v2243
      %v2262 = vadd.f32 %v2112, %v2246
      %v2263 = vadd.f32 %v2113, %v2251
      %v2264 = vadd.f32 %v2114, %v2254
      %v2265 = vld [vmem:[#allocation2 + $0x19] sm:$0xff]
      %v2266 = vld [vmem:[#allocation2 + $0x21] sm:$0xff]
      %v2267 = vld [vmem:[#allocation2 + $0x29] sm:$0xff]
      %v2268 = vld [vmem:[#allocation2 + $0x31] sm:$0xff]
      %v2269 = vld [vmem:[#allocation2 + $0x39] sm:$0xff]
      %v2270 = vld [vmem:[#allocation2 + $0x41] sm:$0xff]
      %v2271 = vld [vmem:[#allocation2 + $0x49] sm:$0xff]
      %v2272 = vld [vmem:[#allocation2 + $0x51] sm:$0xff]
      %v2273 = vmul.f32 %v2265, %v1304
      %v2274 = vmul.f32 %v2266, %v1309
      %v2275 = vmul.f32 %v2267, %v1314
      %v2276 = vmul.f32 %v2268, %v1319
      %v2277 = vmul.f32 %v2269, %v1324
      %v2278 = vmul.f32 %v2270, %v1329
      %v2279 = vmul.f32 %v2271, %v1334
      %v2280 = vmul.f32 %v2272, %v1339
      %v2281 = vpack.c.bf16 %v2274, %v2273
      %v2282 = vpack.c.bf16 %v2276, %v2275
      %v2283 = vpack.c.bf16 %v2278, %v2277
      %v2284 = vpack.c.bf16 %v2280, %v2279
      %s2285 = scalar_lea.vmem %s8, 512
      %v2286 = vld [vmem:[%s2285] sm:$0xf]
      %v2287 = vld [vmem:[%s2285 + $0x4] sm:$0xf]
      %v2288 = vld [vmem:[%s2285 + $0x8] sm:$0xf]
      %v2289 = vld [vmem:[%s2285 + $0xc] sm:$0xf]
      %v2290 = vld [vmem:[%s2285 + $0x10] sm:$0xf]
      %v2291 = vld [vmem:[%s2285 + $0x14] sm:$0xf]
      %v2292 = vld [vmem:[%s2285 + $0x18] sm:$0xf]
      %v2293 = vld [vmem:[%s2285 + $0x1c] sm:$0xf]
      %v2294 = vld [vmem:[%s2285 + $0x20] sm:$0xf]
      %v2295 = vld [vmem:[%s2285 + $0x24] sm:$0xf]
      %v2296 = vld [vmem:[%s2285 + $0x28] sm:$0xf]
      %v2297 = vld [vmem:[%s2285 + $0x2c] sm:$0xf]
      %v2298 = vld [vmem:[%s2285 + $0x30] sm:$0xf]
      %v2299 = vld [vmem:[%s2285 + $0x34] sm:$0xf]
      %v2300 = vld [vmem:[%s2285 + $0x38] sm:$0xf]
      %v2301 = vld [vmem:[%s2285 + $0x3c] sm:$0xf]
      %v2318 = vunpack.c.l.b16 %v2286
      %v2319 = vunpack.c.l.b16 %v2287
      %v2320 = vunpack.c.l.b16 %v2288
      %v2321 = vunpack.c.l.b16 %v2289
      %v2322 = vunpack.c.l.b16 %v2290
      %v2323 = vunpack.c.l.b16 %v2291
      %v2324 = vunpack.c.l.b16 %v2292
      %v2325 = vunpack.c.l.b16 %v2293
      %v2326 = vunpack.c.l.b16 %v2294
      %v2327 = vunpack.c.l.b16 %v2295
      %v2328 = vunpack.c.l.b16 %v2296
      %v2329 = vunpack.c.l.b16 %v2297
      %v2330 = vunpack.c.l.b16 %v2298
      %v2331 = vunpack.c.l.b16 %v2299
      %v2332 = vunpack.c.l.b16 %v2300
      %v2333 = vunpack.c.l.b16 %v2301
      %v2334 = vpack.c.b16 %v2319, %v2318
      %v2335 = vpack.c.b16 %v2321, %v2320
      %v2336 = vpack.c.b16 %v2323, %v2322
      %v2337 = vpack.c.b16 %v2325, %v2324
      %v2338 = vpack.c.b16 %v2327, %v2326
      %v2339 = vpack.c.b16 %v2329, %v2328
      %v2340 = vpack.c.b16 %v2331, %v2330
      %v2341 = vpack.c.b16 %v2333, %v2332
      %2350 = vmatprep.subr.bf16.mxu0 0
      %2351 = vmatpush1.bf16.msra.mxu0 %v2341
      %2352 = vmatprep.subr.bf16.mxu0 0
      %2353 = vmatpush1.bf16.msra.mxu0 %v2340
      %2354 = vmatprep.subr.bf16.mxu0 0
      %2355 = vmatpush1.bf16.msra.mxu0 %v2339
      %2356 = vmatprep.subr.bf16.mxu0 0
      %2357 = vmatpush1.bf16.msra.mxu0 %v2338
      %2358 = vmatprep.subr.bf16.mxu0 0
      %2359 = vmatpush1.bf16.msra.mxu0 %v2337
      %2360 = vmatprep.subr.bf16.mxu0 0
      %2361 = vmatpush1.bf16.msra.mxu0 %v2336
      %2362 = vmatprep.subr.bf16.mxu0 0
      %2363 = vmatpush1.bf16.msra.mxu0 %v2335
      %2364 = vmatprep.subr.bf16.mxu0 0
      %2365 = vmatpush1.bf16.msra.mxu0 %v2334
      %2366 = vmatprep.subr.bf16.mxu0 0
      %2367 = vmatpush2.bf16.msra.mxu0 0
      %2368 = vmatprep.subr.bf16.mxu0 0
      %2369 = vmatpush2.bf16.msra.mxu0 0
      %2370 = vmatprep.subr.bf16.mxu0 0
      %2371 = vmatpush2.bf16.msra.mxu0 0
      %2372 = vmatprep.subr.bf16.mxu0 0
      %2373 = vmatpush2.bf16.msra.mxu0 0
      %2374 = vmatprep.subr.bf16.mxu0 0
      %2375 = vmatpush2.bf16.msra.mxu0 0
      %2376 = vmatprep.subr.bf16.mxu0 0
      %2377 = vmatpush2.bf16.msra.mxu0 0
      %2378 = vmatprep.subr.bf16.mxu0 0
      %2379 = vmatpush2.bf16.msra.mxu0 0
      %2380 = vmatprep.subr.bf16.mxu0 0
      %2381 = vmatpush2.bf16.msra.mxu0 0
      %2382 = vmatprep.mubr.bf16.mxu0 0
      %2383 = vmatmul.mubr.bf16.gmra.mxu0 %v2281
      %v2384 = vpop.f32.mrf.mxu0
      %v2385 = vadd.f32 0.0, %v2384
      %v2386 = vpop.f32.mrf.mxu0
      %v2387 = vpop.f32.mrf.mxu0
      %v2388 = vadd.f32 0.0, %v2387
      %v2389 = vpop.f32.mrf.mxu0
      %2390 = vmatprep.mubr.bf16.mxu0 0
      %2391 = vmatmul.mubr.bf16.gmra.mxu0 %v2282
      %v2392 = vpop.f32.mrf.mxu0
      %v2393 = vadd.f32 0.0, %v2392
      %v2394 = vpop.f32.mrf.mxu0
      %v2395 = vpop.f32.mrf.mxu0
      %v2396 = vadd.f32 0.0, %v2395
      %v2397 = vpop.f32.mrf.mxu0
      %2398 = vmatprep.mubr.bf16.mxu0 0
      %2399 = vmatmul.mubr.bf16.gmra.mxu0 %v2283
      %v2400 = vpop.f32.mrf.mxu0
      %v2401 = vadd.f32 0.0, %v2400
      %v2402 = vpop.f32.mrf.mxu0
      %v2403 = vpop.f32.mrf.mxu0
      %v2404 = vadd.f32 0.0, %v2403
      %v2405 = vpop.f32.mrf.mxu0
      %2406 = vmatprep.mubr.bf16.mxu0 0
      %2407 = vmatmul.mubr.bf16.gmra.mxu0 %v2284
      %v2408 = vpop.f32.mrf.mxu0
      %v2409 = vadd.f32 0.0, %v2408
      %v2410 = vpop.f32.mrf.mxu0
      %v2411 = vpop.f32.mrf.mxu0
      %v2412 = vadd.f32 0.0, %v2411
      %v2413 = vpop.f32.mrf.mxu0
      %2414 = vdwg.mxu0
      %v2415 = vadd.f32 %v2257, %v2385
      %v2416 = vadd.f32 %v2258, %v2388
      %v2417 = vadd.f32 %v2259, %v2393
      %v2418 = vadd.f32 %v2260, %v2396
      %v2419 = vadd.f32 %v2261, %v2401
      %v2420 = vadd.f32 %v2262, %v2404
      %v2421 = vadd.f32 %v2263, %v2409
      %v2422 = vadd.f32 %v2264, %v2412
      %v2423 = vld [vmem:[%s9] sm:$0x1]
      %v2425 = vlaneseq
      %v2426 = vshrl.u32 %v2425, 7
      %v2427 = vsub.s32 0, %v2426
      %v2428 = vrot.slane %v2423, %v2427
      %v2430 = vadd.f32 %v2415, %v2428
      %v2431 = vadd.f32 %v2416, %v2428
      %v2432 = vadd.f32 %v2417, %v2428
      %v2433 = vadd.f32 %v2418, %v2428
      %v2434 = vadd.f32 %v2419, %v2428
      %v2435 = vadd.f32 %v2420, %v2428
      %v2436 = vadd.f32 %v2421, %v2428
      %v2437 = vadd.f32 %v2422, %v2428
      %v2438 = vmax.f32 %v2430, 0.0
      %v2439 = vmax.f32 %v2431, 0.0
      %v2440 = vmax.f32 %v2432, 0.0
      %v2441 = vmax.f32 %v2433, 0.0
      %v2442 = vmax.f32 %v2434, 0.0
      %v2443 = vmax.f32 %v2435, 0.0
      %v2444 = vmax.f32 %v2436, 0.0
      %v2445 = vmax.f32 %v2437, 0.0
      %2446 = vst [vmem:[%s379] sm:$0xff] %v2438
      %2447 = vst [vmem:[%s379 + $0x8] sm:$0xff] %v2439
      %2448 = vst [vmem:[%s379 + $0x10] sm:$0xff] %v2440
      %2449 = vst [vmem:[%s379 + $0x18] sm:$0xff] %v2441
      %2450 = vst [vmem:[%s379 + $0x20] sm:$0xff] %v2442
      %2451 = vst [vmem:[%s379 + $0x28] sm:$0xff] %v2443
      %2452 = vst [vmem:[%s379 + $0x30] sm:$0xff] %v2444
      %2453 = vst [vmem:[%s379 + $0x38] sm:$0xff] %v2445
      %p2454 = scmp.lt.s32.totalorder %s21, 1
      %s2455 = scalar_select %p2454, %s21, 1
      %s2456 = smul.addr %s2455, 8
      %s2457 = smul.addr %s2456, 8
      %s2458 = scalar_lea.vmem %s10, %s2457
      // Predicated region
      $region61: #{backend_forward.4} parent=59 // pred_check
        %p2459 = pneg %p259
      $region62: #{backend_forward.4} parent=59 // pred_check_branch
        %2461 = sbr.rel (%p2459) target = $region64
      $region63: #{backend_forward.4} parent=59 // pred_region
        _
      $region64: #{backend_forward.4} parent=59 // pred_fallthru
        _
    $region60: #{backend_forward.4} parent=5 // pred_fallthru
      _
    %p2462 = scmp.le.s32.totalorder 2, %s16
    // Predicated region
    $region65: #{backend_forward.4} parent=5 // pred_check
      %p2463 = pneg %p2462
    $region66: #{backend_forward.4} parent=5 // pred_check_branch
      %2465 = sbr.rel (%p2463) target = $region68
    $region67: #{backend_forward.4} parent=5 // pred_region
      %s2466 = ssub.s32 %s16, 2
      // Predicated region
      $region69: #{backend_forward.4} parent=67 // pred_check
        %p2467 = pneg %p265
      $region70: #{backend_forward.4} parent=67 // pred_check_branch
        %2469 = sbr.rel (%p2467) target = $region72
      $region71: #{backend_forward.4} parent=67 // pred_region
        %p2470 = scmp.lt.s32.totalorder %s22, 1
        %s2471 = scalar_select %p2470, %s22, 1
        %s2472 = smul.addr %s2471, 8
        %s2473 = smul.addr %s2472, 8
        %s2474 = scalar_lea.vmem %s10, %s2473
      $region72: #{backend_forward.4} parent=67 // pred_fallthru
        _
    $region68: #{backend_forward.4} parent=5 // pred_fallthru
      _
  $region6: #{backend_forward.4} parent=0 // loop_footer
    %s20 = sadd.s32 1, %s16
  $region7: #{backend_forward.4} parent=0 // loop_footer_branch
    %15 = sbr.rel target = $region3
  $region8: #{backend_forward.4} parent=0 // loop_exit
    _

</llo_original>
